<compile_context>
chip_gen: v7x
topology: tpu7x:2x2x1
jax: 0.10.0
libtpu: 0.0.40
codegen_flags: <defaults>
</compile_context>

<pallas_src>
import math

import jax
import jax.numpy as jnp
from jax.experimental import pallas as pl
from jax.experimental.pallas import tpu as pltpu

# Full-f32 matmul passes for the XLA-side matmuls (reference and wrapper) so parity with
# the in-kernel f32 MXU dots is comfortably within 1e-4.
jax.config.update("jax_default_matmul_precision", "highest")


def _round_up(x, m):
    return ((x + m - 1) // m) * m


def _full_spec(a):
    nd = a.ndim
    return pl.BlockSpec(a.shape, lambda i: (0,) * nd)


# Weight inputs of the edge kernel, in kernel-argument order.
_WKEYS = ("w1_pack", "b1", "w2_t", "b2",
          "w_hr", "w_x", "b_pre", "w_alpha_pad",
          "wt_hr", "wt_rh", "b_t")


# ---------------------------------------------------------------------------
# Fused per-edge kernel.
#   x = [rel_emb | time_bias | h_qr | hs]   (lane-dense, 4*D = 128 lanes at D=32)
#   fuse MLP  : h1 = LReLU(x @ W1_pack + b1)         (time terms via identity rows)
#               hr = LReLU(h1 @ W2 + b2) + rel
#   gate+attn : pre = hr @ W_hr + x @ W_x + b_pre    (N = update|reset|attn, padded 128)
#               update/reset = sigmoid(pre[...]);  alpha = sum(LReLU(pre) * w_alpha_pad)
#   candidate : cand = tanh(hr @ Wt_hr + (reset*hs) @ Wt_rh + b_t)
#   message   : sigmoid(alpha) * ((1-update)*hs + update*cand)
# All lane-axis concats and the chunk(2) slice from the PyTorch module are removed by
# the K/N-stacked weights built once in prepare_params.
# ---------------------------------------------------------------------------
def edge_message_kernel(x_ref, w1_ref, b1_ref, w2_ref, b2_ref,
                        whr_ref, wx_ref, bpre_ref, wal_ref,
                        wthr_ref, wtrh_ref, bt_ref, out_ref):
    f32 = jnp.float32
    D = wthr_ref.shape[0]

    x = x_ref[...]                       # [TE, 4D]
    rel = x[:, :D]
    hs = x[:, 3 * D:4 * D]

    # fuse MLP (per-edge recompute; time bias already folded into lanes D:2D)
    h1 = jax.nn.leaky_relu(
        jnp.dot(x, w1_ref[...], preferred_element_type=f32) + b1_ref[...],
        negative_slope=0.01)
    hr = jax.nn.leaky_relu(
        jnp.dot(h1, w2_ref[...], preferred_element_type=f32) + b2_ref[...],
        negative_slope=0.01) + rel

    # gate + attention pre-activations in one dense-N matmul pair
    pre = (jnp.dot(hr, whr_ref[...], preferred_element_type=f32)
           + jnp.dot(x, wx_ref[...], preferred_element_type=f32)
           + bpre_ref[...])                                   # [TE, NPRE]

    gate = jax.nn.sigmoid(pre)
    update = gate[:, :D]
    reset = gate[:, D:2 * D]
    # w_alpha_pad is zero outside the attn lanes, so the full-width reduce gives alpha.
    alpha = jnp.sum(jax.nn.leaky_relu(pre, negative_slope=0.01) * wal_ref[...],
                    axis=-1, keepdims=True)                   # [TE, 1]

    cand = jnp.tanh(
        jnp.dot(hr, wthr_ref[...], preferred_element_type=f32)
        + jnp.dot(reset * hs, wtrh_ref[...], preferred_element_type=f32)
        + bt_ref[...])
    message = (1.0 - update) * hs + update * cand
    out_ref[...] = jax.nn.sigmoid(alpha) * message


def _edge_tiles(E):
    """Large tiles amortize weight re-streaming; keep >=2 tiles for v7x's 2 TCs."""
    if E >= 2048:
        te = 1024
    elif E >= 256:
        te = _round_up((E + 1) // 2, 8)    # exactly two tiles
    else:
        te = _round_up(max(E, 8), 8)       # tiny problem: single small tile
    return te, _round_up(E, te)


def edge_message_pallas(packed, prepped):
    E, PACK = packed.shape
    D = prepped["w2_t"].shape[0]
    TE, E_pad = _edge_tiles(E)
    if E_pad != E:
        packed = jnp.pad(packed, ((0, E_pad - E), (0, 0)))

    row_in = pl.BlockSpec((TE, PACK), lambda i: (i, 0))
    row_out = pl.BlockSpec((TE, D), lambda i: (i, 0))

    out = pl.pallas_call(
        edge_message_kernel,
        out_shape=jax.ShapeDtypeStruct((E_pad, D), jnp.float32),
        grid=(E_pad // TE,),
        in_specs=[row_in] + [_full_spec(prepped[k]) for k in _WKEYS],
        out_specs=row_out,
        compiler_params=pltpu.CompilerParams(dimension_semantics=("parallel",)),
    )(packed, *[prepped[k] for k in _WKEYS])
    return out[:E]


# ---------------------------------------------------------------------------
# Full layer forward (fully jittable: gathers / sorted scatter-add stay in XLA)
# ---------------------------------------------------------------------------
def timeline_gnn_layer7_forward(prepped, q_sub, q_rel, hidden, edges, n_node,
                                time_stamp, act=lambda x: x):
    del q_sub  # unused by the PyTorch forward as well

    # Pre-sort edges by destination so the scatter-add takes the sorted fast path.
    order = jnp.argsort(edges[:, 5])
    edges = jnp.take(edges, order, axis=0)
    r_idx, rel_idx, sub, obj, ts = (edges[:, 0], edges[:, 2], edges[:, 4],
                                    edges[:, 5], edges[:, 6])

    # Per-timestamp bias of the first fuse layer (replaces two K=D/4 matmuls per row).
    # TODO(synk): time indices are clamp-gathered; PyTorch would raise on out-of-range.
    t_all = jnp.arange(prepped["time_rel_pe"].shape[0])
    time_bias = (prepped["time_rel_pe"] @ prepped["w1_trel"]
                 + jnp.take(prepped["time_abs_pe"], time_stamp - t_all, axis=0)
                 @ prepped["w1_tabs"])                                  # [max_hist, D]

    # Lane-dense per-edge pack: [rel_emb | time_bias | h_qr | hs]  ->  [E, 4*D]
    packed = jnp.concatenate(
        [jnp.take(prepped["rela_embed"], rel_idx, axis=0),
         jnp.take(time_bias, ts, axis=0),
         jnp.take(jnp.take(prepped["rela_embed"], q_rel, axis=0), r_idx, axis=0),
         jnp.take(hidden, sub, axis=0)], axis=1)

    up_message = edge_message_pallas(packed, prepped)                   # [E, D]

    # TODO(synk): data-dependent scatter-add stays in XLA (sorted segment reduction).
    message_agg = jax.ops.segment_sum(up_message, obj, num_segments=n_node,
                                      indices_are_sorted=True)
    # Tiny 32x32 projection: left to XLA so it fuses with the segment_sum epilogue.
    return act(message_agg @ prepped["w_h_t"])


# ---------------------------------------------------------------------------
# Parameters: PyTorch-style init + one-time prep (transpose / K- and N-stack weights)
# ---------------------------------------------------------------------------
def time_encoding_table(hidden_dim, max_length):
    pos = jnp.arange(max_length, dtype=jnp.float32)[:, None]
    div = jnp.exp(jnp.arange(0, hidden_dim, 2, dtype=jnp.float32)
                  * (-math.log(10000.0) / hidden_dim))
    pe = jnp.zeros((max_length, hidden_dim), jnp.float32)
    pe = pe.at[:, 0::2].set(jnp.sin(pos * div))
    pe = pe.at[:, 1::2].set(jnp.cos(pos * div))
    return pe


def init_params(key, in_dim, out_dim, attn_dim, n_rel, max_history_length):
    D, A = in_dim, attn_dim
    n_emb = 2 * n_rel + 1
    ks = jax.random.split(key, 15)

    def lin(k, fan_in, shape):
        b = 1.0 / math.sqrt(fan_in)
        return jax.random.uniform(k, shape, jnp.float32, -b, b)

    return {
        "rela_embed": jax.random.normal(ks[0], (n_emb, D), jnp.float32),
        "time_rel_pe": time_encoding_table(D // 4, max_history_length),
        "time_abs_pe": time_encoding_table(D // 4, max_history_length),
        "ws_attn": lin(ks[1], D, (A, D)),
        "wr_attn": lin(ks[2], D, (A, D)),
        "wqr_attn": lin(ks[3], D, (A, D)),
        "wqr_b": lin(ks[4], D, (A,)),
        "w_alpha": lin(ks[5], A, (1, A)),
        "fuse_w1": lin(ks[6], D // 2 * 3, (D, D // 2 * 3)),
        "fuse_b1": lin(ks[7], D // 2 * 3, (D,)),
        "fuse_w2": lin(ks[8], D, (D, D)),
        "fuse_b2": lin(ks[9], D, (D,)),
        "gate_w": lin(ks[10], 3 * D, (2 * D, 3 * D)),
        "gate_b": lin(ks[11], 3 * D, (2 * D,)),
        "trans_w": lin(ks[12], 2 * D, (D, 2 * D)),
        "trans_b": lin(ks[13], 2 * D, (D,)),
        "w_h": lin(ks[14], D, (out_dim, D)),
    }


def prepare_params(p):
    """One-time weight prep: pre-transpose and K/N-stack so the kernel never concats."""
    D = p["trans_w"].shape[0]
    A = p["w_alpha"].shape[1]
    D4 = D // 4
    PACK = 4 * D                           # packed-input lane layout: rel|tbias|hqr|hs
    NPRE = _round_up(2 * D + A, 128)       # packed pre-act lanes: update|reset|attn|pad

    w1_t = p["fuse_w1"].T                  # [3D/2, D] rows: rel | t_rel | t_abs
    w1_rel, w1_trel, w1_tabs = w1_t[:D], w1_t[D:D + D4], w1_t[D + D4:]

    # Packed fuse-layer-1 weight: rel rows = W1_rel, time-bias rows = identity.
    w1_pack = jnp.zeros((PACK, D), jnp.float32)
    w1_pack = w1_pack.at[:D].set(w1_rel)
    w1_pack = w1_pack.at[D:2 * D].set(jnp.eye(D, dtype=jnp.float32))

    gate_t = p["gate_w"].T                 # [3D, 2D] rows: hr | h_qr | hs
    w_hr = jnp.zeros((D, NPRE), jnp.float32)
    w_hr = w_hr.at[:, :2 * D].set(gate_t[:D])
    w_hr = w_hr.at[:, 2 * D:2 * D + A].set(p["wr_attn"].T)

    w_x = jnp.zeros((PACK, NPRE), jnp.float32)
    w_x = w_x.at[2 * D:3 * D, :2 * D].set(gate_t[D:2 * D])          # h_qr -> gate
    w_x = w_x.at[2 * D:3 * D, 2 * D:2 * D + A].set(p["wqr_attn"].T)  # h_qr -> attn
    w_x = w_x.at[3 * D:, :2 * D].set(gate_t[2 * D:])                 # hs   -> gate
    w_x = w_x.at[3 * D:, 2 * D:2 * D + A].set(p["ws_attn"].T)        # hs   -> attn

    b_pre = jnp.zeros((1, NPRE), jnp.float32)
    b_pre = b_pre.at[0, :2 * D].set(p["gate_b"])
    b_pre = b_pre.at[0, 2 * D:2 * D + A].set(p["wqr_b"])

    w_alpha_pad = jnp.zeros((1, NPRE), jnp.float32)
    w_alpha_pad = w_alpha_pad.at[0, 2 * D:2 * D + A].set(p["w_alpha"][0])

    trans_t = p["trans_w"].T               # [2D, D] rows: hr | reset*hs
    prepped = {
        "rela_embed": p["rela_embed"],
        "time_rel_pe": p["time_rel_pe"],
        "time_abs_pe": p["time_abs_pe"],
        "w1_trel": w1_trel, "w1_tabs": w1_tabs,        # wrapper time-bias precompute
        "w1_pack": w1_pack, "b1": p["fuse_b1"][None, :],
        "w2_t": p["fuse_w2"].T, "b2": p["fuse_b2"][None, :],
        "w_hr": w_hr, "w_x": w_x, "b_pre": b_pre, "w_alpha_pad": w_alpha_pad,
        "wt_hr": trans_t[:D], "wt_rh": trans_t[D:], "b_t": p["trans_b"][None, :],
        "w_h_t": p["w_h"].T,
    }
    return jax.tree_util.tree_map(jnp.asarray, prepped)


# ---------------------------------------------------------------------------
# Pure-JAX reference mirroring the PyTorch forward exactly
# ---------------------------------------------------------------------------
def timeline_gnn_layer7_ref(p, q_sub, q_rel, hidden, edges, n_node, time_stamp,
                            act=lambda x: x):
    del q_sub
    D = hidden.shape[1]
    sub, obj, r_idx = edges[:, 4], edges[:, 5], edges[:, 0]
    pairs = jnp.stack([edges[:, 2], edges[:, 6]], axis=1)
    uniq, rev = jnp.unique(pairs, axis=0, return_inverse=True)
    rev = rev.reshape(-1)
    rel_emb = p["rela_embed"][uniq[:, 0]]
    t_rel = p["time_rel_pe"][uniq[:, 1]]
    t_abs = p["time_abs_pe"][time_stamp - uniq[:, 1]]
    raw = jnp.concatenate([rel_emb, t_rel, t_abs], axis=1)
    h = jax.nn.leaky_relu(raw @ p["fuse_w1"].T + p["fuse_b1"], 0.01)
    h = jax.nn.leaky_relu(h @ p["fuse_w2"].T + p["fuse_b2"], 0.01)
    temp_comp = h + rel_emb
    hr = temp_comp[rev]
    hs = hidden[sub]
    h_qr = p["rela_embed"][q_rel][r_idx]
    # GateUnit
    factors = jnp.concatenate([hr, h_qr, hs], axis=1)
    gate = jax.nn.sigmoid(factors @ p["gate_w"].T + p["gate_b"])
    update, reset = gate[:, :D], gate[:, D:]
    cand = jnp.tanh(jnp.concatenate([hr, reset * hs], axis=1) @ p["trans_w"].T
                    + p["trans_b"])
    message = (1.0 - update) * hs + update * cand
    attn = jax.nn.leaky_relu(hs @ p["ws_attn"].T + hr @ p["wr_attn"].T
                             + h_qr @ p["wqr_attn"].T + p["wqr_b"], 0.01)
    alpha = attn @ p["w_alpha"].T
    up = jax.nn.sigmoid(alpha) * message
    agg = jax.ops.segment_sum(up, obj, num_segments=n_node)
    return act(agg @ p["w_h"].T)


if __name__ == "__main__":
    IN_DIM, OUT_DIM, ATTN_DIM = 32, 32, 16
    N_REL = 5
    N_NODE = 40
    N_EDGE = 300
    N_QUERY = 4
    TIME_STAMP = 20
    MAX_HIST = 64

    key = jax.random.PRNGKey(0)
    kp, ke, kh, kq = jax.random.split(key, 4)
    params = init_params(kp, IN_DIM, OUT_DIM, ATTN_DIM, N_REL, MAX_HIST)
    prepped = prepare_params(params)          # one-time weight prep, not per call

    ek = jax.random.split(ke, 5)
    r_idx = jax.random.randint(ek[0], (N_EDGE,), 0, N_QUERY)
    rel = jax.random.randint(ek[1], (N_EDGE,), 0, 2 * N_REL + 1)
    sub = jax.random.randint(ek[2], (N_EDGE,), 0, N_NODE)
    obj = jax.random.randint(ek[3], (N_EDGE,), 0, N_NODE)
    ts = jax.random.randint(ek[4], (N_EDGE,), 0, TIME_STAMP + 1)
    zeros = jnp.zeros((N_EDGE,), jnp.int32)
    edges = jnp.stack([r_idx, zeros, rel, zeros, sub, obj, ts], axis=1)

    hidden = jax.random.normal(kh, (N_NODE, IN_DIM), jnp.float32)
    q_rel = jax.random.randint(kq, (N_QUERY,), 0, 2 * N_REL + 1)
    q_sub = jnp.zeros((N_QUERY,), jnp.int32)   # unused in forward (matches PyTorch)

    # Whole forward jit-compiles now (no eager jnp.unique); n_node is static.
    fwd = jax.jit(timeline_gnn_layer7_forward, static_argnums=(5,))
    out = jax.block_until_ready(fwd(prepped, q_sub, q_rel, hidden, edges,
                                    N_NODE, TIME_STAMP))

    ref = timeline_gnn_layer7_ref(params, q_sub, q_rel, hidden, edges,
                                  N_NODE, TIME_STAMP)
    assert out.shape == (N_NODE, OUT_DIM)
    err = float(jnp.max(jnp.abs(out - ref)))
    assert jnp.allclose(out, ref, atol=1e-4, rtol=1e-4), f"mismatch vs ref, max err {err}"

    print("KERNEL_OK")
</pallas_src>

<mosaic_0001>
module attributes {stable_mosaic.version = 11 : i64} {
  func.func @edge_message_kernel(%arg0: i32, %arg1: memref<152x128xf32, #tpu.memory_space<vmem>>, %arg2: memref<128x32xf32, #tpu.memory_space<vmem>>, %arg3: memref<1x32xf32, #tpu.memory_space<vmem>>, %arg4: memref<32x32xf32, #tpu.memory_space<vmem>>, %arg5: memref<1x32xf32, #tpu.memory_space<vmem>>, %arg6: memref<32x128xf32, #tpu.memory_space<vmem>>, %arg7: memref<128x128xf32, #tpu.memory_space<vmem>>, %arg8: memref<1x128xf32, #tpu.memory_space<vmem>>, %arg9: memref<1x128xf32, #tpu.memory_space<vmem>>, %arg10: memref<32x32xf32, #tpu.memory_space<vmem>>, %arg11: memref<32x32xf32, #tpu.memory_space<vmem>>, %arg12: memref<1x32xf32, #tpu.memory_space<vmem>>, %arg13: memref<152x32xf32, #tpu.memory_space<vmem>>) attributes {dimension_semantics = [#tpu.dimension_semantics<parallel>], iteration_bounds = array<i64: 2>, scalar_prefetch = 0 : i64, scratch_operands = 0 : i64, tpu.core_type = #tpu.core_type<tc>, window_params = [{transform_indices = @transform_0, window_bounds = array<i64: 152, 128>}, {pipeline_mode = #tpu.pipeline_mode<synchronous>, transform_indices = @transform_1, window_bounds = array<i64: 128, 32>}, {pipeline_mode = #tpu.pipeline_mode<synchronous>, transform_indices = @transform_2, window_bounds = array<i64: 1, 32>}, {pipeline_mode = #tpu.pipeline_mode<synchronous>, transform_indices = @transform_3, window_bounds = array<i64: 32, 32>}, {pipeline_mode = #tpu.pipeline_mode<synchronous>, transform_indices = @transform_4, window_bounds = array<i64: 1, 32>}, {pipeline_mode = #tpu.pipeline_mode<synchronous>, transform_indices = @transform_5, window_bounds = array<i64: 32, 128>}, {pipeline_mode = #tpu.pipeline_mode<synchronous>, transform_indices = @transform_6, window_bounds = array<i64: 128, 128>}, {pipeline_mode = #tpu.pipeline_mode<synchronous>, transform_indices = @transform_7, window_bounds = array<i64: 1, 128>}, {pipeline_mode = #tpu.pipeline_mode<synchronous>, transform_indices = @transform_8, window_bounds = array<i64: 1, 128>}, {pipeline_mode = #tpu.pipeline_mode<synchronous>, transform_indices = @transform_9, window_bounds = array<i64: 32, 32>}, {pipeline_mode = #tpu.pipeline_mode<synchronous>, transform_indices = @transform_10, window_bounds = array<i64: 32, 32>}, {pipeline_mode = #tpu.pipeline_mode<synchronous>, transform_indices = @transform_11, window_bounds = array<i64: 1, 32>}, {transform_indices = @transform_12, window_bounds = array<i64: 152, 32>}]} {
    %c0 = arith.constant 0 : index
    %c0_0 = arith.constant 0 : index
    %0 = vector.load %arg1[%c0, %c0_0] : memref<152x128xf32, #tpu.memory_space<vmem>>, vector<152x128xf32>
    %1 = vector.extract_strided_slice %0 {offsets = [0, 0], sizes = [152, 32], strides = [1, 1]} : vector<152x128xf32> to vector<152x32xf32>
    %2 = vector.extract_strided_slice %0 {offsets = [0, 96], sizes = [152, 32], strides = [1, 1]} : vector<152x128xf32> to vector<152x32xf32>
    %c0_1 = arith.constant 0 : index
    %c0_2 = arith.constant 0 : index
    %3 = vector.load %arg2[%c0_1, %c0_2] : memref<128x32xf32, #tpu.memory_space<vmem>>, vector<128x32xf32>
    %cst = arith.constant dense<0.000000e+00> : vector<152x32xf32>
    %4 = tpu.matmul %0, %3, %cst {dimension_numbers = #tpu.dot_dimension_numbers<[1], [0], [0], [1], [0, 0, 1, 1], [], []>, precision = #tpu.contract_precision<fp32>} : vector<152x128xf32>, vector<128x32xf32>, vector<152x32xf32> -> vector<152x32xf32>
    %c0_3 = arith.constant 0 : index
    %c0_4 = arith.constant 0 : index
    %5 = vector.load %arg3[%c0_3, %c0_4] : memref<1x32xf32, #tpu.memory_space<vmem>>, vector<1x32xf32>
    %6 = vector.broadcast %5 : vector<1x32xf32> to vector<152x32xf32>
    %7 = arith.addf %4, %6 : vector<152x32xf32>
    %cst_5 = arith.constant 0.00999999977 : f32
    %cst_6 = arith.constant 0.000000e+00 : f32
    %8 = vector.broadcast %cst_6 : f32 to vector<152x32xf32>
    %9 = arith.cmpf oge, %7, %8 : vector<152x32xf32>
    %10 = vector.broadcast %cst_5 : f32 to vector<152x32xf32>
    %11 = arith.mulf %10, %7 : vector<152x32xf32>
    %12 = arith.select %9, %7, %11 : vector<152x32xi1>, vector<152x32xf32>
    %c0_7 = arith.constant 0 : index
    %c0_8 = arith.constant 0 : index
    %13 = vector.load %arg4[%c0_7, %c0_8] : memref<32x32xf32, #tpu.memory_space<vmem>>, vector<32x32xf32>
    %cst_9 = arith.constant dense<0.000000e+00> : vector<152x32xf32>
    %14 = tpu.matmul %12, %13, %cst_9 {dimension_numbers = #tpu.dot_dimension_numbers<[1], [0], [0], [1], [0, 0, 1, 1], [], []>, precision = #tpu.contract_precision<fp32>} : vector<152x32xf32>, vector<32x32xf32>, vector<152x32xf32> -> vector<152x32xf32>
    %c0_10 = arith.constant 0 : index
    %c0_11 = arith.constant 0 : index
    %15 = vector.load %arg5[%c0_10, %c0_11] : memref<1x32xf32, #tpu.memory_space<vmem>>, vector<1x32xf32>
    %16 = vector.broadcast %15 : vector<1x32xf32> to vector<152x32xf32>
    %17 = arith.addf %14, %16 : vector<152x32xf32>
    %cst_12 = arith.constant 0.00999999977 : f32
    %cst_13 = arith.constant 0.000000e+00 : f32
    %18 = vector.broadcast %cst_13 : f32 to vector<152x32xf32>
    %19 = arith.cmpf oge, %17, %18 : vector<152x32xf32>
    %20 = vector.broadcast %cst_12 : f32 to vector<152x32xf32>
    %21 = arith.mulf %20, %17 : vector<152x32xf32>
    %22 = arith.select %19, %17, %21 : vector<152x32xi1>, vector<152x32xf32>
    %23 = arith.addf %22, %1 : vector<152x32xf32>
    %c0_14 = arith.constant 0 : index
    %c0_15 = arith.constant 0 : index
    %24 = vector.load %arg6[%c0_14, %c0_15] : memref<32x128xf32, #tpu.memory_space<vmem>>, vector<32x128xf32>
    %cst_16 = arith.constant dense<0.000000e+00> : vector<152x128xf32>
    %25 = tpu.matmul %23, %24, %cst_16 {dimension_numbers = #tpu.dot_dimension_numbers<[1], [0], [0], [1], [0, 0, 1, 1], [], []>, precision = #tpu.contract_precision<fp32>} : vector<152x32xf32>, vector<32x128xf32>, vector<152x128xf32> -> vector<152x128xf32>
    %c0_17 = arith.constant 0 : index
    %c0_18 = arith.constant 0 : index
    %26 = vector.load %arg7[%c0_17, %c0_18] : memref<128x128xf32, #tpu.memory_space<vmem>>, vector<128x128xf32>
    %cst_19 = arith.constant dense<0.000000e+00> : vector<152x128xf32>
    %27 = tpu.matmul %0, %26, %cst_19 {dimension_numbers = #tpu.dot_dimension_numbers<[1], [0], [0], [1], [0, 0, 1, 1], [], []>, precision = #tpu.contract_precision<fp32>} : vector<152x128xf32>, vector<128x128xf32>, vector<152x128xf32> -> vector<152x128xf32>
    %28 = arith.addf %25, %27 : vector<152x128xf32>
    %c0_20 = arith.constant 0 : index
    %c0_21 = arith.constant 0 : index
    %29 = vector.load %arg8[%c0_20, %c0_21] : memref<1x128xf32, #tpu.memory_space<vmem>>, vector<1x128xf32>
    %30 = vector.broadcast %29 : vector<1x128xf32> to vector<152x128xf32>
    %31 = arith.addf %28, %30 : vector<152x128xf32>
    %32 = arith.negf %31 : vector<152x128xf32>
    %33 = math.exp %32 : vector<152x128xf32>
    %cst_22 = arith.constant 1.000000e+00 : f32
    %34 = vector.broadcast %cst_22 : f32 to vector<152x128xf32>
    %35 = arith.addf %34, %33 : vector<152x128xf32>
    %36 = arith.divf %34, %35 : vector<152x128xf32>
    %37 = vector.extract_strided_slice %36 {offsets = [0, 0], sizes = [152, 32], strides = [1, 1]} : vector<152x128xf32> to vector<152x32xf32>
    %38 = vector.extract_strided_slice %36 {offsets = [0, 32], sizes = [152, 32], strides = [1, 1]} : vector<152x128xf32> to vector<152x32xf32>
    %cst_23 = arith.constant 0.00999999977 : f32
    %cst_24 = arith.constant 0.000000e+00 : f32
    %39 = vector.broadcast %cst_24 : f32 to vector<152x128xf32>
    %40 = arith.cmpf oge, %31, %39 : vector<152x128xf32>
    %41 = vector.broadcast %cst_23 : f32 to vector<152x128xf32>
    %42 = arith.mulf %41, %31 : vector<152x128xf32>
    %43 = arith.select %40, %31, %42 : vector<152x128xi1>, vector<152x128xf32>
    %c0_25 = arith.constant 0 : index
    %c0_26 = arith.constant 0 : index
    %44 = vector.load %arg9[%c0_25, %c0_26] : memref<1x128xf32, #tpu.memory_space<vmem>>, vector<1x128xf32>
    %45 = vector.broadcast %44 : vector<1x128xf32> to vector<152x128xf32>
    %46 = arith.mulf %43, %45 : vector<152x128xf32>
    %cst_27 = arith.constant dense<0.000000e+00> : vector<152xf32>
    %47 = vector.multi_reduction <add>, %46, %cst_27 [1] : vector<152x128xf32> to vector<152xf32>
    %48 = vector.shape_cast %47 : vector<152xf32> to vector<152x1xf32>
    %c0_28 = arith.constant 0 : index
    %c0_29 = arith.constant 0 : index
    %49 = vector.load %arg10[%c0_28, %c0_29] : memref<32x32xf32, #tpu.memory_space<vmem>>, vector<32x32xf32>
    %cst_30 = arith.constant dense<0.000000e+00> : vector<152x32xf32>
    %50 = tpu.matmul %23, %49, %cst_30 {dimension_numbers = #tpu.dot_dimension_numbers<[1], [0], [0], [1], [0, 0, 1, 1], [], []>, precision = #tpu.contract_precision<fp32>} : vector<152x32xf32>, vector<32x32xf32>, vector<152x32xf32> -> vector<152x32xf32>
    %51 = arith.mulf %38, %2 : vector<152x32xf32>
    %c0_31 = arith.constant 0 : index
    %c0_32 = arith.constant 0 : index
    %52 = vector.load %arg11[%c0_31, %c0_32] : memref<32x32xf32, #tpu.memory_space<vmem>>, vector<32x32xf32>
    %cst_33 = arith.constant dense<0.000000e+00> : vector<152x32xf32>
    %53 = tpu.matmul %51, %52, %cst_33 {dimension_numbers = #tpu.dot_dimension_numbers<[1], [0], [0], [1], [0, 0, 1, 1], [], []>, precision = #tpu.contract_precision<fp32>} : vector<152x32xf32>, vector<32x32xf32>, vector<152x32xf32> -> vector<152x32xf32>
    %54 = arith.addf %50, %53 : vector<152x32xf32>
    %c0_34 = arith.constant 0 : index
    %c0_35 = arith.constant 0 : index
    %55 = vector.load %arg12[%c0_34, %c0_35] : memref<1x32xf32, #tpu.memory_space<vmem>>, vector<1x32xf32>
    %56 = vector.broadcast %55 : vector<1x32xf32> to vector<152x32xf32>
    %57 = arith.addf %54, %56 : vector<152x32xf32>
    %58 = math.tanh %57 : vector<152x32xf32>
    %cst_36 = arith.constant 1.000000e+00 : f32
    %59 = vector.broadcast %cst_36 : f32 to vector<152x32xf32>
    %60 = arith.subf %59, %37 : vector<152x32xf32>
    %61 = arith.mulf %60, %2 : vector<152x32xf32>
    %62 = arith.mulf %37, %58 : vector<152x32xf32>
    %63 = arith.addf %61, %62 : vector<152x32xf32>
    %64 = arith.negf %48 : vector<152x1xf32>
    %65 = math.exp %64 : vector<152x1xf32>
    %cst_37 = arith.constant 1.000000e+00 : f32
    %66 = vector.broadcast %cst_37 : f32 to vector<152x1xf32>
    %67 = arith.addf %66, %65 : vector<152x1xf32>
    %68 = arith.divf %66, %67 : vector<152x1xf32>
    %69 = vector.broadcast %68 : vector<152x1xf32> to vector<152x32xf32>
    %70 = arith.mulf %69, %63 : vector<152x32xf32>
    %c0_38 = arith.constant 0 : index
    %c0_39 = arith.constant 0 : index
    %71 = vector.load %arg13[%c0_38, %c0_39] : memref<152x32xf32, #tpu.memory_space<vmem>>, vector<152x32xf32>
    tpu.vector_store %arg13[%c0_38, %c0_39], %70 {strides = array<i32>} : memref<152x32xf32, #tpu.memory_space<vmem>>, vector<152x32xf32>,
    return
  }
  func.func @transform_0(%arg0: i32) -> (i32, i32) {
    %c0_i32 = arith.constant 0 : i32
    %c0_i32_0 = arith.constant 0 : i32
    return %arg0, %c0_i32 : i32, i32
  }
  func.func @transform_1(%arg0: i32) -> (i32, i32) {
    %c0_i32 = arith.constant 0 : i32
    %c0_i32_0 = arith.constant 0 : i32
    %c0_i32_1 = arith.constant 0 : i32
    return %c0_i32, %c0_i32_0 : i32, i32
  }
  func.func @transform_2(%arg0: i32) -> (i32, i32) {
    %c0_i32 = arith.constant 0 : i32
    %c0_i32_0 = arith.constant 0 : i32
    %c0_i32_1 = arith.constant 0 : i32
    return %c0_i32, %c0_i32_0 : i32, i32
  }
  func.func @transform_3(%arg0: i32) -> (i32, i32) {
    %c0_i32 = arith.constant 0 : i32
    %c0_i32_0 = arith.constant 0 : i32
    %c0_i32_1 = arith.constant 0 : i32
    return %c0_i32, %c0_i32_0 : i32, i32
  }
  func.func @transform_4(%arg0: i32) -> (i32, i32) {
    %c0_i32 = arith.constant 0 : i32
    %c0_i32_0 = arith.constant 0 : i32
    %c0_i32_1 = arith.constant 0 : i32
    return %c0_i32, %c0_i32_0 : i32, i32
  }
  func.func @transform_5(%arg0: i32) -> (i32, i32) {
    %c0_i32 = arith.constant 0 : i32
    %c0_i32_0 = arith.constant 0 : i32
    %c0_i32_1 = arith.constant 0 : i32
    return %c0_i32, %c0_i32_0 : i32, i32
  }
  func.func @transform_6(%arg0: i32) -> (i32, i32) {
    %c0_i32 = arith.constant 0 : i32
    %c0_i32_0 = arith.constant 0 : i32
    %c0_i32_1 = arith.constant 0 : i32
    return %c0_i32, %c0_i32_0 : i32, i32
  }
  func.func @transform_7(%arg0: i32) -> (i32, i32) {
    %c0_i32 = arith.constant 0 : i32
    %c0_i32_0 = arith.constant 0 : i32
    %c0_i32_1 = arith.constant 0 : i32
    return %c0_i32, %c0_i32_0 : i32, i32
  }
  func.func @transform_8(%arg0: i32) -> (i32, i32) {
    %c0_i32 = arith.constant 0 : i32
    %c0_i32_0 = arith.constant 0 : i32
    %c0_i32_1 = arith.constant 0 : i32
    return %c0_i32, %c0_i32_0 : i32, i32
  }
  func.func @transform_9(%arg0: i32) -> (i32, i32) {
    %c0_i32 = arith.constant 0 : i32
    %c0_i32_0 = arith.constant 0 : i32
    %c0_i32_1 = arith.constant 0 : i32
    return %c0_i32, %c0_i32_0 : i32, i32
  }
  func.func @transform_10(%arg0: i32) -> (i32, i32) {
    %c0_i32 = arith.constant 0 : i32
    %c0_i32_0 = arith.constant 0 : i32
    %c0_i32_1 = arith.constant 0 : i32
    return %c0_i32, %c0_i32_0 : i32, i32
  }
  func.func @transform_11(%arg0: i32) -> (i32, i32) {
    %c0_i32 = arith.constant 0 : i32
    %c0_i32_0 = arith.constant 0 : i32
    %c0_i32_1 = arith.constant 0 : i32
    return %c0_i32, %c0_i32_0 : i32, i32
  }
  func.func @transform_12(%arg0: i32) -> (i32, i32) {
    %c0_i32 = arith.constant 0 : i32
    %c0_i32_0 = arith.constant 0 : i32
    return %arg0, %c0_i32 : i32, i32
  }
}

</mosaic_0001>

<llo_original>
// kernel: timeline_gnn_layer7_forward.1
$region0: #{timeline_gnn_layer7_forward.1}
  #allocation0 [shape = 'u32[]', space=smem, size = 0x4, offset = 0x4, fixed_abs, tag = 'smem constant byte address 0x4 - core index']
  #allocation1 [shape = 'u32[144,128]{1,0:T(1,128)}', space=vmem, size = 0x12000, scoped, tag = 'internal scratch']
  %s0 = inlined_call_operand.vmem [shape: f32[304,128], index: 0, kind: input, shape index: {}]
  %s1 = inlined_call_operand.vmem [shape: f32[128,32], index: 1, kind: input, shape index: {}]
  %s2 = inlined_call_operand.vmem [shape: f32[1,32], index: 2, kind: input, shape index: {}]
  %s3 = inlined_call_operand.vmem [shape: f32[32,32], index: 3, kind: input, shape index: {}]
  %s4 = inlined_call_operand.vmem [shape: f32[1,32], index: 4, kind: input, shape index: {}]
  %s5 = inlined_call_operand.vmem [shape: f32[32,128], index: 5, kind: input, shape index: {}]
  %s6 = inlined_call_operand.vmem [shape: f32[128,128], index: 6, kind: input, shape index: {}]
  %s7 = inlined_call_operand.vmem [shape: f32[1,128], index: 7, kind: input, shape index: {}]
  %s8 = inlined_call_operand.vmem [shape: f32[1,128], index: 8, kind: input, shape index: {}]
  %s9 = inlined_call_operand.vmem [shape: f32[32,32], index: 9, kind: input, shape index: {}]
  %s10 = inlined_call_operand.vmem [shape: f32[32,32], index: 10, kind: input, shape index: {}]
  %s11 = inlined_call_operand.vmem [shape: f32[1,32], index: 11, kind: input, shape index: {}]
  %s12 = inlined_call_operand.vmem [shape: f32[304,32], index: 12, kind: output, shape index: {}]
  %s13 = sld [smem:[#allocation0]]
  $region81: #{timeline_gnn_layer7_forward.1} parent=0
    _
  %s15 = ssub.s32 1, %s13
  %s16 = scalar_select 0, %s15, %s13
  loop: start=0, step=1, limit=4
  $region2: #{timeline_gnn_layer7_forward.1} parent=0 // loop_pre_header
    _
  $region3: #{timeline_gnn_layer7_forward.1} parent=0 // loop_header
    %s18 = sphi 0, %s22
    %p19 = scmp.ge.s32.totalorder %s18, 4
    %s28 = sphi 0, %s30
    %s31 = sphi 0, %s28
    %s32 = sphi 0, %s31
    %s48 = sphi 0, %s32
    %s52 = sphi 0, %s52
    %s54 = sphi 0, %s52
    %s55 = sphi 0, %s54
    %s69 = sphi 0, %s55
    %s73 = sphi 0, %s73
    %s75 = sphi 0, %s73
    %s76 = sphi 0, %s75
    %s90 = sphi 0, %s76
    %s94 = sphi 0, %s94
    %s96 = sphi 0, %s94
    %s97 = sphi 0, %s96
    %s111 = sphi 0, %s97
    %s115 = sphi 0, %s115
    %s117 = sphi 0, %s115
    %s118 = sphi 0, %s117
    %s132 = sphi 0, %s118
    %s136 = sphi 0, %s136
    %s138 = sphi 0, %s136
    %s139 = sphi 0, %s138
    %s153 = sphi 0, %s139
    %s157 = sphi 0, %s157
    %s159 = sphi 0, %s157
    %s160 = sphi 0, %s159
    %s174 = sphi 0, %s160
    %s178 = sphi 0, %s178
    %s180 = sphi 0, %s178
    %s181 = sphi 0, %s180
    %s195 = sphi 0, %s181
    %s199 = sphi 0, %s199
    %s201 = sphi 0, %s199
    %s202 = sphi 0, %s201
    %s216 = sphi 0, %s202
    %s220 = sphi 0, %s220
    %s222 = sphi 0, %s220
    %s223 = sphi 0, %s222
    %s237 = sphi 0, %s223
    %s241 = sphi 0, %s241
    %s243 = sphi 0, %s241
    %s244 = sphi 0, %s243
    %s258 = sphi 0, %s244
    %s262 = sphi 0, %s262
    %s264 = sphi 0, %s262
    %s265 = sphi 0, %s264
    %s279 = sphi 0, %s265
    %s285 = sphi 0, %s287
    %s288 = sphi 0, %s285
    %s289 = sphi 0, %s288
    %s305 = sphi 0, %s289
  $region4: #{timeline_gnn_layer7_forward.1} parent=0 // loop_header_branch
    %21 = sbr.rel (%p19) target = $region8
  $region5: #{timeline_gnn_layer7_forward.1} parent=0 // loop_body
    %s23 = ssub.s32 %s18, 1
    %s24 = ssub.s32 %s18, 2
    %s25 = sadd.s32 %s18, 1
    %s26 = ssub.s32 %s18, %s25
    %p27 = scmp.eq.s32.totalorder %s26, 0
    %s29 = sadd.s32 %s28, 1
    %s30 = scalar_select %p27, %s28, %s29
    %p33 = pneg %p27
    %p34 = scmp.eq.s32.totalorder %s18, 1
    %p35 = por %p33, %p34
    %p36 = scmp.ne.s32.totalorder %s28, %s31
    %p37 = scmp.eq.s32.totalorder %s18, 0
    %p38 = por %p36, %p37
    %p39 = scmp.ne.s32.totalorder %s28, %s31
    %p40 = scmp.eq.s32.totalorder %s23, 1
    %p41 = por %p39, %p40
    %p42 = scmp.ne.s32.totalorder %s31, %s32
    %p43 = scmp.eq.s32.totalorder %s23, 0
    %p44 = por %p42, %p43
    %p45 = scmp.ne.s32.totalorder %s31, %s32
    %p46 = scmp.eq.s32.totalorder %s24, 1
    %p47 = por %p45, %p46
    %p49 = scmp.ne.s32.totalorder %s32, %s48
    %p50 = scmp.eq.s32.totalorder %s24, 0
    %p51 = por %p49, %p50
    %s53 = sadd.s32 %s52, 1
    %p56 = scmp.eq.s32.totalorder %s18, 1
    %p57 = scmp.ne.s32.totalorder %s52, %s54
    %p58 = scmp.eq.s32.totalorder %s18, 0
    %p59 = por %p57, %p58
    %p60 = scmp.ne.s32.totalorder %s52, %s54
    %p61 = scmp.eq.s32.totalorder %s23, 1
    %p62 = por %p60, %p61
    %p63 = scmp.ne.s32.totalorder %s54, %s55
    %p64 = scmp.eq.s32.totalorder %s23, 0
    %p65 = por %p63, %p64
    %p66 = scmp.ne.s32.totalorder %s54, %s55
    %p67 = scmp.eq.s32.totalorder %s24, 1
    %p68 = por %p66, %p67
    %p70 = scmp.ne.s32.totalorder %s55, %s69
    %p71 = scmp.eq.s32.totalorder %s24, 0
    %p72 = por %p70, %p71
    %s74 = sadd.s32 %s73, 1
    %p77 = scmp.eq.s32.totalorder %s18, 1
    %p78 = scmp.ne.s32.totalorder %s73, %s75
    %p79 = scmp.eq.s32.totalorder %s18, 0
    %p80 = por %p78, %p79
    %p81 = scmp.ne.s32.totalorder %s73, %s75
    %p82 = scmp.eq.s32.totalorder %s23, 1
    %p83 = por %p81, %p82
    %p84 = scmp.ne.s32.totalorder %s75, %s76
    %p85 = scmp.eq.s32.totalorder %s23, 0
    %p86 = por %p84, %p85
    %p87 = scmp.ne.s32.totalorder %s75, %s76
    %p88 = scmp.eq.s32.totalorder %s24, 1
    %p89 = por %p87, %p88
    %p91 = scmp.ne.s32.totalorder %s76, %s90
    %p92 = scmp.eq.s32.totalorder %s24, 0
    %p93 = por %p91, %p92
    %s95 = sadd.s32 %s94, 1
    %p98 = scmp.eq.s32.totalorder %s18, 1
    %p99 = scmp.ne.s32.totalorder %s94, %s96
    %p100 = scmp.eq.s32.totalorder %s18, 0
    %p101 = por %p99, %p100
    %p102 = scmp.ne.s32.totalorder %s94, %s96
    %p103 = scmp.eq.s32.totalorder %s23, 1
    %p104 = por %p102, %p103
    %p105 = scmp.ne.s32.totalorder %s96, %s97
    %p106 = scmp.eq.s32.totalorder %s23, 0
    %p107 = por %p105, %p106
    %p108 = scmp.ne.s32.totalorder %s96, %s97
    %p109 = scmp.eq.s32.totalorder %s24, 1
    %p110 = por %p108, %p109
    %p112 = scmp.ne.s32.totalorder %s97, %s111
    %p113 = scmp.eq.s32.totalorder %s24, 0
    %p114 = por %p112, %p113
    %s116 = sadd.s32 %s115, 1
    %p119 = scmp.eq.s32.totalorder %s18, 1
    %p120 = scmp.ne.s32.totalorder %s115, %s117
    %p121 = scmp.eq.s32.totalorder %s18, 0
    %p122 = por %p120, %p121
    %p123 = scmp.ne.s32.totalorder %s115, %s117
    %p124 = scmp.eq.s32.totalorder %s23, 1
    %p125 = por %p123, %p124
    %p126 = scmp.ne.s32.totalorder %s117, %s118
    %p127 = scmp.eq.s32.totalorder %s23, 0
    %p128 = por %p126, %p127
    %p129 = scmp.ne.s32.totalorder %s117, %s118
    %p130 = scmp.eq.s32.totalorder %s24, 1
    %p131 = por %p129, %p130
    %p133 = scmp.ne.s32.totalorder %s118, %s132
    %p134 = scmp.eq.s32.totalorder %s24, 0
    %p135 = por %p133, %p134
    %s137 = sadd.s32 %s136, 1
    %p140 = scmp.eq.s32.totalorder %s18, 1
    %p141 = scmp.ne.s32.totalorder %s136, %s138
    %p142 = scmp.eq.s32.totalorder %s18, 0
    %p143 = por %p141, %p142
    %p144 = scmp.ne.s32.totalorder %s136, %s138
    %p145 = scmp.eq.s32.totalorder %s23, 1
    %p146 = por %p144, %p145
    %p147 = scmp.ne.s32.totalorder %s138, %s139
    %p148 = scmp.eq.s32.totalorder %s23, 0
    %p149 = por %p147, %p148
    %p150 = scmp.ne.s32.totalorder %s138, %s139
    %p151 = scmp.eq.s32.totalorder %s24, 1
    %p152 = por %p150, %p151
    %p154 = scmp.ne.s32.totalorder %s139, %s153
    %p155 = scmp.eq.s32.totalorder %s24, 0
    %p156 = por %p154, %p155
    %s158 = sadd.s32 %s157, 1
    %p161 = scmp.eq.s32.totalorder %s18, 1
    %p162 = scmp.ne.s32.totalorder %s157, %s159
    %p163 = scmp.eq.s32.totalorder %s18, 0
    %p164 = por %p162, %p163
    %p165 = scmp.ne.s32.totalorder %s157, %s159
    %p166 = scmp.eq.s32.totalorder %s23, 1
    %p167 = por %p165, %p166
    %p168 = scmp.ne.s32.totalorder %s159, %s160
    %p169 = scmp.eq.s32.totalorder %s23, 0
    %p170 = por %p168, %p169
    %p171 = scmp.ne.s32.totalorder %s159, %s160
    %p172 = scmp.eq.s32.totalorder %s24, 1
    %p173 = por %p171, %p172
    %p175 = scmp.ne.s32.totalorder %s160, %s174
    %p176 = scmp.eq.s32.totalorder %s24, 0
    %p177 = por %p175, %p176
    %s179 = sadd.s32 %s178, 1
    %p182 = scmp.eq.s32.totalorder %s18, 1
    %p183 = scmp.ne.s32.totalorder %s178, %s180
    %p184 = scmp.eq.s32.totalorder %s18, 0
    %p185 = por %p183, %p184
    %p186 = scmp.ne.s32.totalorder %s178, %s180
    %p187 = scmp.eq.s32.totalorder %s23, 1
    %p188 = por %p186, %p187
    %p189 = scmp.ne.s32.totalorder %s180, %s181
    %p190 = scmp.eq.s32.totalorder %s23, 0
    %p191 = por %p189, %p190
    %p192 = scmp.ne.s32.totalorder %s180, %s181
    %p193 = scmp.eq.s32.totalorder %s24, 1
    %p194 = por %p192, %p193
    %p196 = scmp.ne.s32.totalorder %s181, %s195
    %p197 = scmp.eq.s32.totalorder %s24, 0
    %p198 = por %p196, %p197
    %s200 = sadd.s32 %s199, 1
    %p203 = scmp.eq.s32.totalorder %s18, 1
    %p204 = scmp.ne.s32.totalorder %s199, %s201
    %p205 = scmp.eq.s32.totalorder %s18, 0
    %p206 = por %p204, %p205
    %p207 = scmp.ne.s32.totalorder %s199, %s201
    %p208 = scmp.eq.s32.totalorder %s23, 1
    %p209 = por %p207, %p208
    %p210 = scmp.ne.s32.totalorder %s201, %s202
    %p211 = scmp.eq.s32.totalorder %s23, 0
    %p212 = por %p210, %p211
    %p213 = scmp.ne.s32.totalorder %s201, %s202
    %p214 = scmp.eq.s32.totalorder %s24, 1
    %p215 = por %p213, %p214
    %p217 = scmp.ne.s32.totalorder %s202, %s216
    %p218 = scmp.eq.s32.totalorder %s24, 0
    %p219 = por %p217, %p218
    %s221 = sadd.s32 %s220, 1
    %p224 = scmp.eq.s32.totalorder %s18, 1
    %p225 = scmp.ne.s32.totalorder %s220, %s222
    %p226 = scmp.eq.s32.totalorder %s18, 0
    %p227 = por %p225, %p226
    %p228 = scmp.ne.s32.totalorder %s220, %s222
    %p229 = scmp.eq.s32.totalorder %s23, 1
    %p230 = por %p228, %p229
    %p231 = scmp.ne.s32.totalorder %s222, %s223
    %p232 = scmp.eq.s32.totalorder %s23, 0
    %p233 = por %p231, %p232
    %p234 = scmp.ne.s32.totalorder %s222, %s223
    %p235 = scmp.eq.s32.totalorder %s24, 1
    %p236 = por %p234, %p235
    %p238 = scmp.ne.s32.totalorder %s223, %s237
    %p239 = scmp.eq.s32.totalorder %s24, 0
    %p240 = por %p238, %p239
    %s242 = sadd.s32 %s241, 1
    %p245 = scmp.eq.s32.totalorder %s18, 1
    %p246 = scmp.ne.s32.totalorder %s241, %s243
    %p247 = scmp.eq.s32.totalorder %s18, 0
    %p248 = por %p246, %p247
    %p249 = scmp.ne.s32.totalorder %s241, %s243
    %p250 = scmp.eq.s32.totalorder %s23, 1
    %p251 = por %p249, %p250
    %p252 = scmp.ne.s32.totalorder %s243, %s244
    %p253 = scmp.eq.s32.totalorder %s23, 0
    %p254 = por %p252, %p253
    %p255 = scmp.ne.s32.totalorder %s243, %s244
    %p256 = scmp.eq.s32.totalorder %s24, 1
    %p257 = por %p255, %p256
    %p259 = scmp.ne.s32.totalorder %s244, %s258
    %p260 = scmp.eq.s32.totalorder %s24, 0
    %p261 = por %p259, %p260
    %s263 = sadd.s32 %s262, 1
    %p266 = scmp.eq.s32.totalorder %s18, 1
    %p267 = scmp.ne.s32.totalorder %s262, %s264
    %p268 = scmp.eq.s32.totalorder %s18, 0
    %p269 = por %p267, %p268
    %p270 = scmp.ne.s32.totalorder %s262, %s264
    %p271 = scmp.eq.s32.totalorder %s23, 1
    %p272 = por %p270, %p271
    %p273 = scmp.ne.s32.totalorder %s264, %s265
    %p274 = scmp.eq.s32.totalorder %s23, 0
    %p275 = por %p273, %p274
    %p276 = scmp.ne.s32.totalorder %s264, %s265
    %p277 = scmp.eq.s32.totalorder %s24, 1
    %p278 = por %p276, %p277
    %p280 = scmp.ne.s32.totalorder %s265, %s279
    %p281 = scmp.eq.s32.totalorder %s24, 0
    %p282 = por %p280, %p281
    %s283 = ssub.s32 %s18, %s25
    %p284 = scmp.eq.s32.totalorder %s283, 0
    %s286 = sadd.s32 %s285, 1
    %s287 = scalar_select %p284, %s285, %s286
    %p290 = pneg %p284
    %p291 = scmp.eq.s32.totalorder %s18, 1
    %p292 = por %p290, %p291
    %p293 = scmp.ne.s32.totalorder %s285, %s288
    %p294 = scmp.eq.s32.totalorder %s18, 0
    %p295 = por %p293, %p294
    %p296 = scmp.ne.s32.totalorder %s285, %s288
    %p297 = scmp.eq.s32.totalorder %s23, 1
    %p298 = por %p296, %p297
    %p299 = scmp.ne.s32.totalorder %s288, %s289
    %p300 = scmp.eq.s32.totalorder %s23, 0
    %p301 = por %p299, %p300
    %p302 = scmp.ne.s32.totalorder %s288, %s289
    %p303 = scmp.eq.s32.totalorder %s24, 1
    %p304 = por %p302, %p303
    %p306 = scmp.ne.s32.totalorder %s289, %s305
    %p307 = scmp.eq.s32.totalorder %s24, 0
    %p308 = por %p306, %p307
    %p309 = scmp.le.s32.totalorder 1, %s18
    %p310 = scmp.lt.s32.totalorder %s18, 3
    %p311 = pnand %p309, %p310
    %p312 = pneg %p311
    // Predicated region
    $region9: #{timeline_gnn_layer7_forward.1} parent=5 // pred_check
      _
    $region10: #{timeline_gnn_layer7_forward.1} parent=5 // pred_check_branch
      %314 = sbr.rel (%p311) target = $region12
    $region11: #{timeline_gnn_layer7_forward.1} parent=5 // pred_region
      %s315 = ssub.s32 %s18, 1
      // Predicated region
      $region13: #{timeline_gnn_layer7_forward.1} parent=11 // pred_check
        %p316 = pneg %p65
      $region14: #{timeline_gnn_layer7_forward.1} parent=11 // pred_check_branch
        %318 = sbr.rel (%p316) target = $region16
      $region15: #{timeline_gnn_layer7_forward.1} parent=11 // pred_region
        _
      $region16: #{timeline_gnn_layer7_forward.1} parent=11 // pred_fallthru
        _
      // Predicated region
      $region17: #{timeline_gnn_layer7_forward.1} parent=11 // pred_check
        %p319 = pneg %p86
      $region18: #{timeline_gnn_layer7_forward.1} parent=11 // pred_check_branch
        %321 = sbr.rel (%p319) target = $region20
      $region19: #{timeline_gnn_layer7_forward.1} parent=11 // pred_region
        _
      $region20: #{timeline_gnn_layer7_forward.1} parent=11 // pred_fallthru
        _
      // Predicated region
      $region21: #{timeline_gnn_layer7_forward.1} parent=11 // pred_check
        %p322 = pneg %p107
      $region22: #{timeline_gnn_layer7_forward.1} parent=11 // pred_check_branch
        %324 = sbr.rel (%p322) target = $region24
      $region23: #{timeline_gnn_layer7_forward.1} parent=11 // pred_region
        _
      $region24: #{timeline_gnn_layer7_forward.1} parent=11 // pred_fallthru
        _
      // Predicated region
      $region25: #{timeline_gnn_layer7_forward.1} parent=11 // pred_check
        %p325 = pneg %p128
      $region26: #{timeline_gnn_layer7_forward.1} parent=11 // pred_check_branch
        %327 = sbr.rel (%p325) target = $region28
      $region27: #{timeline_gnn_layer7_forward.1} parent=11 // pred_region
        _
      $region28: #{timeline_gnn_layer7_forward.1} parent=11 // pred_fallthru
        _
      // Predicated region
      $region29: #{timeline_gnn_layer7_forward.1} parent=11 // pred_check
        %p328 = pneg %p149
      $region30: #{timeline_gnn_layer7_forward.1} parent=11 // pred_check_branch
        %330 = sbr.rel (%p328) target = $region32
      $region31: #{timeline_gnn_layer7_forward.1} parent=11 // pred_region
        _
      $region32: #{timeline_gnn_layer7_forward.1} parent=11 // pred_fallthru
        _
      // Predicated region
      $region33: #{timeline_gnn_layer7_forward.1} parent=11 // pred_check
        %p331 = pneg %p170
      $region34: #{timeline_gnn_layer7_forward.1} parent=11 // pred_check_branch
        %333 = sbr.rel (%p331) target = $region36
      $region35: #{timeline_gnn_layer7_forward.1} parent=11 // pred_region
        _
      $region36: #{timeline_gnn_layer7_forward.1} parent=11 // pred_fallthru
        _
      // Predicated region
      $region37: #{timeline_gnn_layer7_forward.1} parent=11 // pred_check
        %p334 = pneg %p191
      $region38: #{timeline_gnn_layer7_forward.1} parent=11 // pred_check_branch
        %336 = sbr.rel (%p334) target = $region40
      $region39: #{timeline_gnn_layer7_forward.1} parent=11 // pred_region
        _
      $region40: #{timeline_gnn_layer7_forward.1} parent=11 // pred_fallthru
        _
      // Predicated region
      $region41: #{timeline_gnn_layer7_forward.1} parent=11 // pred_check
        %p337 = pneg %p212
      $region42: #{timeline_gnn_layer7_forward.1} parent=11 // pred_check_branch
        %339 = sbr.rel (%p337) target = $region44
      $region43: #{timeline_gnn_layer7_forward.1} parent=11 // pred_region
        _
      $region44: #{timeline_gnn_layer7_forward.1} parent=11 // pred_fallthru
        _
      // Predicated region
      $region45: #{timeline_gnn_layer7_forward.1} parent=11 // pred_check
        %p340 = pneg %p233
      $region46: #{timeline_gnn_layer7_forward.1} parent=11 // pred_check_branch
        %342 = sbr.rel (%p340) target = $region48
      $region47: #{timeline_gnn_layer7_forward.1} parent=11 // pred_region
        _
      $region48: #{timeline_gnn_layer7_forward.1} parent=11 // pred_fallthru
        _
      // Predicated region
      $region49: #{timeline_gnn_layer7_forward.1} parent=11 // pred_check
        %p343 = pneg %p254
      $region50: #{timeline_gnn_layer7_forward.1} parent=11 // pred_check_branch
        %345 = sbr.rel (%p343) target = $region52
      $region51: #{timeline_gnn_layer7_forward.1} parent=11 // pred_region
        _
      $region52: #{timeline_gnn_layer7_forward.1} parent=11 // pred_fallthru
        _
      // Predicated region
      $region53: #{timeline_gnn_layer7_forward.1} parent=11 // pred_check
        %p346 = pneg %p275
      $region54: #{timeline_gnn_layer7_forward.1} parent=11 // pred_check_branch
        %348 = sbr.rel (%p346) target = $region56
      $region55: #{timeline_gnn_layer7_forward.1} parent=11 // pred_region
        _
      $region56: #{timeline_gnn_layer7_forward.1} parent=11 // pred_fallthru
        _
    $region12: #{timeline_gnn_layer7_forward.1} parent=5 // pred_fallthru
      _
    %p349 = scmp.lt.s32.totalorder %s18, 2
    // Predicated region
    $region57: #{timeline_gnn_layer7_forward.1} parent=5 // pred_check
      %p350 = pneg %p349
    $region58: #{timeline_gnn_layer7_forward.1} parent=5 // pred_check_branch
      %352 = sbr.rel (%p350) target = $region60
    $region59: #{timeline_gnn_layer7_forward.1} parent=5 // pred_region
      // Predicated region
      $region61: #{timeline_gnn_layer7_forward.1} parent=59 // pred_check
        %p353 = pneg %p38
      $region62: #{timeline_gnn_layer7_forward.1} parent=59 // pred_check_branch
        %355 = sbr.rel (%p353) target = $region64
      $region63: #{timeline_gnn_layer7_forward.1} parent=59 // pred_region
        %s356 = smul.u32 19, %s18
        %p357 = scmp.lt.s32.totalorder %s356, 37
        %s358 = scalar_select %p357, %s356, 37
        %s359 = smul.addr %s358, 8
        %s360 = scalar_lea.vmem %s0, %s359
        %s361 = smul.u32 19, %s18
      $region64: #{timeline_gnn_layer7_forward.1} parent=59 // pred_fallthru
        _
    $region60: #{timeline_gnn_layer7_forward.1} parent=5 // pred_fallthru
      _
    %p362 = scmp.le.s32.totalorder 1, %s18
    %p363 = scmp.lt.s32.totalorder %s18, 3
    %p364 = pnand %p362, %p363
    %p365 = pneg %p364
    // Predicated region
    $region65: #{timeline_gnn_layer7_forward.1} parent=5 // pred_check
      _
    $region66: #{timeline_gnn_layer7_forward.1} parent=5 // pred_check_branch
      %367 = sbr.rel (%p364) target = $region68
    $region67: #{timeline_gnn_layer7_forward.1} parent=5 // pred_region
      %s368 = ssub.s32 %s18, 1
      %s369 = smul.u32 19, %s23
      %p370 = scmp.lt.s32.totalorder %s369, 37
      %s371 = scalar_select %p370, %s369, 37
      %s372 = smul.addr %s371, 8
      %s373 = scalar_lea.vmem %s0, %s372
      %p374 = pneg %p44
      %p375 = pneg %p41
      %p376 = pneg %p65
      %p377 = pneg %p62
      %p378 = pneg %p86
      %p379 = pneg %p83
      %p380 = pneg %p107
      %p381 = pneg %p104
      %p382 = pneg %p128
      %p383 = pneg %p125
      %p384 = pneg %p149
      %p385 = pneg %p146
      %p386 = pneg %p170
      %p387 = pneg %p167
      %p388 = pneg %p191
      %p389 = pneg %p188
      %p390 = pneg %p212
      %p391 = pneg %p209
      %p392 = pneg %p233
      %p393 = pneg %p230
      %p394 = pneg %p254
      %p395 = pneg %p251
      %p396 = pneg %p275
      %p397 = pneg %p272
      %p398 = pneg %p301
      %p399 = pneg %p298
      %s400 = smul.u32 19, %s23
      %p401 = scmp.lt.s32.totalorder %s400, 37
      %s402 = scalar_select %p401, %s400, 37
      %s403 = smul.addr %s402, 8
      %s404 = scalar_lea.vmem %s12, %s403
      %s405 = smul.u32 19, %s23
      %p406 = scmp.lt.s32.totalorder %s405, 37
      %s407 = scalar_select %p406, %s405, 37
      %s408 = smul.addr %s407, 8
      %s409 = scalar_lea.vmem %s0, %s408
      %s410 = smul.u32 19, %s23
      %s411 = smul.u32 19, %s23
      %p412 = scmp.lt.s32.totalorder %s411, 37
      %s413 = scalar_select %p412, %s411, 37
      %s414 = smul.addr %s413, 8
      %s415 = scalar_lea.vmem %s12, %s414
      %s416 = smul.u32 19, %s23
      %v417 = vld [vmem:[%s409] sm:$0xff]
      %v418 = vld [vmem:[%s409 + $0x8] sm:$0xff]
      %v419 = vld [vmem:[%s409 + $0x10] sm:$0xff]
      %v420 = vld [vmem:[%s409 + $0x18] sm:$0xff]
      %v421 = vld [vmem:[%s409 + $0x20] sm:$0xff]
      %v422 = vld [vmem:[%s409 + $0x28] sm:$0xff]
      %v423 = vld [vmem:[%s409 + $0x30] sm:$0xff]
      %v424 = vld [vmem:[%s409 + $0x38] sm:$0xff]
      %v425 = vld [vmem:[%s409 + $0x40] sm:$0xff]
      %v426 = vld [vmem:[%s409 + $0x48] sm:$0xff]
      %v427 = vld [vmem:[%s409 + $0x50] sm:$0xff]
      %v428 = vld [vmem:[%s409 + $0x58] sm:$0xff]
      %v429 = vld [vmem:[%s409 + $0x60] sm:$0xff]
      %v430 = vld [vmem:[%s409 + $0x68] sm:$0xff]
      %v431 = vld [vmem:[%s409 + $0x70] sm:$0xff]
      %v432 = vld [vmem:[%s409 + $0x78] sm:$0xff]
      %v433 = vld [vmem:[%s409 + $0x80] sm:$0xff]
      %v434 = vld [vmem:[%s409 + $0x88] sm:$0xff]
      %v435 = vld [vmem:[%s409 + $0x90] sm:$0xff]
      %v436 = vld [vmem:[%s1] sm:$0xff]
      %v437 = vld [vmem:[%s1 + $0x8] sm:$0xff]
      %v438 = vld [vmem:[%s1 + $0x10] sm:$0xff]
      %v439 = vld [vmem:[%s1 + $0x18] sm:$0xff]
      %v440 = vld [vmem:[%s1 + $0x20] sm:$0xff]
      %v441 = vld [vmem:[%s1 + $0x28] sm:$0xff]
      %v442 = vld [vmem:[%s1 + $0x30] sm:$0xff]
      %v443 = vld [vmem:[%s1 + $0x38] sm:$0xff]
      %v444 = vld [vmem:[%s1 + $0x40] sm:$0xff]
      %v445 = vld [vmem:[%s1 + $0x48] sm:$0xff]
      %v446 = vld [vmem:[%s1 + $0x50] sm:$0xff]
      %v447 = vld [vmem:[%s1 + $0x58] sm:$0xff]
      %v448 = vld [vmem:[%s1 + $0x60] sm:$0xff]
      %v449 = vld [vmem:[%s1 + $0x68] sm:$0xff]
      %v450 = vld [vmem:[%s1 + $0x70] sm:$0xff]
      %v451 = vld [vmem:[%s1 + $0x78] sm:$0xff]
      %v452 = vld [vmem:[%s2] sm:$0x1]
      %v454 = vlaneseq
      %v455 = vshrl.u32 %v454, 7
      %v456 = vsub.s32 0, %v455
      %v457 = vrot.slane %v452, %v456
      %459 = vmatprep.subr.mxu0 0.0
      %v460 = vand.u32 %v436, 4294901760
      %461 = vmatpush1.msra.mxu0 %v460
      %462 = vmatprep.subr.mxu0 0.0
      %v463 = vand.u32 %v437, 4294901760
      %464 = vmatpush1.msra.mxu0 %v463
      %465 = vmatprep.subr.mxu0 0.0
      %v466 = vand.u32 %v438, 4294901760
      %467 = vmatpush1.msra.mxu0 %v466
      %468 = vmatprep.subr.mxu0 0.0
      %v469 = vand.u32 %v439, 4294901760
      %470 = vmatpush1.msra.mxu0 %v469
      %471 = vmatprep.subr.mxu0 0.0
      %v472 = vand.u32 %v440, 4294901760
      %473 = vmatpush1.msra.mxu0 %v472
      %474 = vmatprep.subr.mxu0 0.0
      %v475 = vand.u32 %v441, 4294901760
      %476 = vmatpush1.msra.mxu0 %v475
      %477 = vmatprep.subr.mxu0 0.0
      %v478 = vand.u32 %v442, 4294901760
      %479 = vmatpush1.msra.mxu0 %v478
      %480 = vmatprep.subr.mxu0 0.0
      %v481 = vand.u32 %v443, 4294901760
      %482 = vmatpush1.msra.mxu0 %v481
      %483 = vmatprep.subr.mxu0 0.0
      %v484 = vand.u32 %v444, 4294901760
      %485 = vmatpush1.msra.mxu0 %v484
      %486 = vmatprep.subr.mxu0 0.0
      %v487 = vand.u32 %v445, 4294901760
      %488 = vmatpush1.msra.mxu0 %v487
      %489 = vmatprep.subr.mxu0 0.0
      %v490 = vand.u32 %v446, 4294901760
      %491 = vmatpush1.msra.mxu0 %v490
      %492 = vmatprep.subr.mxu0 0.0
      %v493 = vand.u32 %v447, 4294901760
      %494 = vmatpush1.msra.mxu0 %v493
      %495 = vmatprep.subr.mxu0 0.0
      %v496 = vand.u32 %v448, 4294901760
      %497 = vmatpush1.msra.mxu0 %v496
      %498 = vmatprep.subr.mxu0 0.0
      %v499 = vand.u32 %v449, 4294901760
      %500 = vmatpush1.msra.mxu0 %v499
      %501 = vmatprep.subr.mxu0 0.0
      %v502 = vand.u32 %v450, 4294901760
      %503 = vmatpush1.msra.mxu0 %v502
      %504 = vmatprep.subr.mxu0 0.0
      %v505 = vand.u32 %v451, 4294901760
      %506 = vmatpush1.msra.mxu0 %v505
      %507 = vmatprep.subr.mxu0 0.0
      %508 = vmatpush1.msra.mxu0 0.0
      %509 = vmatprep.subr.mxu0 0.0
      %510 = vmatpush1.msra.mxu0 0.0
      %511 = vmatprep.subr.mxu0 0.0
      %512 = vmatpush1.msra.mxu0 0.0
      %513 = vmatprep.subr.mxu0 0.0
      %514 = vmatpush1.msra.mxu0 0.0
      %515 = vmatprep.subr.mxu0 0.0
      %516 = vmatpush1.msra.mxu0 0.0
      %517 = vmatprep.subr.mxu0 0.0
      %518 = vmatpush1.msra.mxu0 0.0
      %519 = vmatprep.subr.mxu0 0.0
      %520 = vmatpush1.msra.mxu0 0.0
      %521 = vmatprep.subr.mxu0 0.0
      %522 = vmatpush1.msra.mxu0 0.0
      %523 = vmatprep.subr.mxu0 0.0
      %524 = vmatpush1.msra.mxu0 0.0
      %525 = vmatprep.subr.mxu0 0.0
      %526 = vmatpush1.msra.mxu0 0.0
      %527 = vmatprep.subr.mxu0 0.0
      %528 = vmatpush1.msra.mxu0 0.0
      %529 = vmatprep.subr.mxu0 0.0
      %530 = vmatpush1.msra.mxu0 0.0
      %531 = vmatprep.subr.mxu0 0.0
      %532 = vmatpush1.msra.mxu0 0.0
      %533 = vmatprep.subr.mxu0 0.0
      %534 = vmatpush1.msra.mxu0 0.0
      %535 = vmatprep.subr.mxu0 0.0
      %536 = vmatpush1.msra.mxu0 0.0
      %537 = vmatprep.subr.mxu0 0.0
      %538 = vmatpush1.msra.mxu0 0.0
      %539 = vmatprep.mubr.f32.mxu0 0.0
      %v540 = vand.u32 %v417, 4294901760
      %v541 = vsub.f32 %v417, %v540
      %v542 = vand.u32 %v541, 4294901760
      %v543 = vsub.f32 %v541, %v542
      %v544 = vand.u32 %v543, 4294901760
      %545 = vmatmul.mubr.f32.gmra.mrb[0].mxu0 %v544
      %v546 = vpop.f32.mrb[0].mxu0
      %v547 = vadd.f32 %v457, %v546
      %v548 = vpop.f32.mrb[0].mxu0
      %549 = vmatprep.mubr.f32.mxu0 0.0
      %v550 = vand.u32 %v418, 4294901760
      %v551 = vsub.f32 %v418, %v550
      %v552 = vand.u32 %v551, 4294901760
      %v553 = vsub.f32 %v551, %v552
      %v554 = vand.u32 %v553, 4294901760
      %555 = vmatmul.mubr.f32.gmra.mrb[0].mxu0 %v554
      %v556 = vpop.f32.mrb[0].mxu0
      %v557 = vadd.f32 %v457, %v556
      %v558 = vpop.f32.mrb[0].mxu0
      %559 = vmatprep.mubr.f32.mxu0 0.0
      %v560 = vand.u32 %v419, 4294901760
      %v561 = vsub.f32 %v419, %v560
      %v562 = vand.u32 %v561, 4294901760
      %v563 = vsub.f32 %v561, %v562
      %v564 = vand.u32 %v563, 4294901760
      %565 = vmatmul.mubr.f32.gmra.mrb[0].mxu0 %v564
      %v566 = vpop.f32.mrb[0].mxu0
      %v567 = vadd.f32 %v457, %v566
      %v568 = vpop.f32.mrb[0].mxu0
      %569 = vmatprep.mubr.f32.mxu0 0.0
      %v570 = vand.u32 %v420, 4294901760
      %v571 = vsub.f32 %v420, %v570
      %v572 = vand.u32 %v571, 4294901760
      %v573 = vsub.f32 %v571, %v572
      %v574 = vand.u32 %v573, 4294901760
      %575 = vmatmul.mubr.f32.gmra.mrb[0].mxu0 %v574
      %v576 = vpop.f32.mrb[0].mxu0
      %v577 = vadd.f32 %v457, %v576
      %v578 = vpop.f32.mrb[0].mxu0
      %579 = vmatprep.mubr.f32.mxu0 0.0
      %v580 = vand.u32 %v421, 4294901760
      %v581 = vsub.f32 %v421, %v580
      %v582 = vand.u32 %v581, 4294901760
      %v583 = vsub.f32 %v581, %v582
      %v584 = vand.u32 %v583, 4294901760
      %585 = vmatmul.mubr.f32.gmra.mrb[0].mxu0 %v584
      %v586 = vpop.f32.mrb[0].mxu0
      %v587 = vadd.f32 %v457, %v586
      %v588 = vpop.f32.mrb[0].mxu0
      %589 = vmatprep.mubr.f32.mxu0 0.0
      %v590 = vand.u32 %v422, 4294901760
      %v591 = vsub.f32 %v422, %v590
      %v592 = vand.u32 %v591, 4294901760
      %v593 = vsub.f32 %v591, %v592
      %v594 = vand.u32 %v593, 4294901760
      %595 = vmatmul.mubr.f32.gmra.mrb[0].mxu0 %v594
      %v596 = vpop.f32.mrb[0].mxu0
      %v597 = vadd.f32 %v457, %v596
      %v598 = vpop.f32.mrb[0].mxu0
      %599 = vmatprep.mubr.f32.mxu0 0.0
      %v600 = vand.u32 %v423, 4294901760
      %v601 = vsub.f32 %v423, %v600
      %v602 = vand.u32 %v601, 4294901760
      %v603 = vsub.f32 %v601, %v602
      %v604 = vand.u32 %v603, 4294901760
      %605 = vmatmul.mubr.f32.gmra.mrb[0].mxu0 %v604
      %v606 = vpop.f32.mrb[0].mxu0
      %v607 = vadd.f32 %v457, %v606
      %v608 = vpop.f32.mrb[0].mxu0
      %609 = vmatprep.mubr.f32.mxu0 0.0
      %v610 = vand.u32 %v424, 4294901760
      %v611 = vsub.f32 %v424, %v610
      %v612 = vand.u32 %v611, 4294901760
      %v613 = vsub.f32 %v611, %v612
      %v614 = vand.u32 %v613, 4294901760
      %615 = vmatmul.mubr.f32.gmra.mrb[0].mxu0 %v614
      %v616 = vpop.f32.mrb[0].mxu0
      %v617 = vadd.f32 %v457, %v616
      %v618 = vpop.f32.mrb[0].mxu0
      %619 = vmatprep.mubr.f32.mxu0 0.0
      %v620 = vand.u32 %v425, 4294901760
      %v621 = vsub.f32 %v425, %v620
      %v622 = vand.u32 %v621, 4294901760
      %v623 = vsub.f32 %v621, %v622
      %v624 = vand.u32 %v623, 4294901760
      %625 = vmatmul.mubr.f32.gmra.mrb[0].mxu0 %v624
      %v626 = vpop.f32.mrb[0].mxu0
      %v627 = vadd.f32 %v457, %v626
      %v628 = vpop.f32.mrb[0].mxu0
      %629 = vmatprep.mubr.f32.mxu0 0.0
      %v630 = vand.u32 %v426, 4294901760
      %v631 = vsub.f32 %v426, %v630
      %v632 = vand.u32 %v631, 4294901760
      %v633 = vsub.f32 %v631, %v632
      %v634 = vand.u32 %v633, 4294901760
      %635 = vmatmul.mubr.f32.gmra.mrb[0].mxu0 %v634
      %v636 = vpop.f32.mrb[0].mxu0
      %v637 = vadd.f32 %v457, %v636
      %v638 = vpop.f32.mrb[0].mxu0
      %639 = vmatprep.mubr.f32.mxu0 0.0
      %v640 = vand.u32 %v427, 4294901760
      %v641 = vsub.f32 %v427, %v640
      %v642 = vand.u32 %v641, 4294901760
      %v643 = vsub.f32 %v641, %v642
      %v644 = vand.u32 %v643, 4294901760
      %645 = vmatmul.mubr.f32.gmra.mrb[0].mxu0 %v644
      %v646 = vpop.f32.mrb[0].mxu0
      %v647 = vadd.f32 %v457, %v646
      %v648 = vpop.f32.mrb[0].mxu0
      %649 = vmatprep.mubr.f32.mxu0 0.0
      %v650 = vand.u32 %v428, 4294901760
      %v651 = vsub.f32 %v428, %v650
      %v652 = vand.u32 %v651, 4294901760
      %v653 = vsub.f32 %v651, %v652
      %v654 = vand.u32 %v653, 4294901760
      %655 = vmatmul.mubr.f32.gmra.mrb[0].mxu0 %v654
      %v656 = vpop.f32.mrb[0].mxu0
      %v657 = vadd.f32 %v457, %v656
      %v658 = vpop.f32.mrb[0].mxu0
      %659 = vmatprep.mubr.f32.mxu0 0.0
      %v660 = vand.u32 %v429, 4294901760
      %v661 = vsub.f32 %v429, %v660
      %v662 = vand.u32 %v661, 4294901760
      %v663 = vsub.f32 %v661, %v662
      %v664 = vand.u32 %v663, 4294901760
      %665 = vmatmul.mubr.f32.gmra.mrb[0].mxu0 %v664
      %v666 = vpop.f32.mrb[0].mxu0
      %v667 = vadd.f32 %v457, %v666
      %v668 = vpop.f32.mrb[0].mxu0
      %669 = vmatprep.mubr.f32.mxu0 0.0
      %v670 = vand.u32 %v430, 4294901760
      %v671 = vsub.f32 %v430, %v670
      %v672 = vand.u32 %v671, 4294901760
      %v673 = vsub.f32 %v671, %v672
      %v674 = vand.u32 %v673, 4294901760
      %675 = vmatmul.mubr.f32.gmra.mrb[0].mxu0 %v674
      %v676 = vpop.f32.mrb[0].mxu0
      %v677 = vadd.f32 %v457, %v676
      %v678 = vpop.f32.mrb[0].mxu0
      %679 = vmatprep.mubr.f32.mxu0 0.0
      %v680 = vand.u32 %v431, 4294901760
      %v681 = vsub.f32 %v431, %v680
      %v682 = vand.u32 %v681, 4294901760
      %v683 = vsub.f32 %v681, %v682
      %v684 = vand.u32 %v683, 4294901760
      %685 = vmatmul.mubr.f32.gmra.mrb[0].mxu0 %v684
      %v686 = vpop.f32.mrb[0].mxu0
      %v687 = vadd.f32 %v457, %v686
      %v688 = vpop.f32.mrb[0].mxu0
      %689 = vmatprep.mubr.f32.mxu0 0.0
      %v690 = vand.u32 %v432, 4294901760
      %v691 = vsub.f32 %v432, %v690
      %v692 = vand.u32 %v691, 4294901760
      %v693 = vsub.f32 %v691, %v692
      %v694 = vand.u32 %v693, 4294901760
      %695 = vmatmul.mubr.f32.gmra.mrb[0].mxu0 %v694
      %v696 = vpop.f32.mrb[0].mxu0
      %v697 = vadd.f32 %v457, %v696
      %v698 = vpop.f32.mrb[0].mxu0
      %699 = vmatprep.mubr.f32.mxu0 0.0
      %v700 = vand.u32 %v433, 4294901760
      %v701 = vsub.f32 %v433, %v700
      %v702 = vand.u32 %v701, 4294901760
      %v703 = vsub.f32 %v701, %v702
      %v704 = vand.u32 %v703, 4294901760
      %705 = vmatmul.mubr.f32.gmra.mrb[0].mxu0 %v704
      %v706 = vpop.f32.mrb[0].mxu0
      %v707 = vadd.f32 %v457, %v706
      %v708 = vpop.f32.mrb[0].mxu0
      %709 = vmatprep.mubr.f32.mxu0 0.0
      %v710 = vand.u32 %v434, 4294901760
      %v711 = vsub.f32 %v434, %v710
      %v712 = vand.u32 %v711, 4294901760
      %v713 = vsub.f32 %v711, %v712
      %v714 = vand.u32 %v713, 4294901760
      %715 = vmatmul.mubr.f32.gmra.mrb[0].mxu0 %v714
      %v716 = vpop.f32.mrb[0].mxu0
      %v717 = vadd.f32 %v457, %v716
      %v718 = vpop.f32.mrb[0].mxu0
      %719 = vmatprep.mubr.f32.mxu0 0.0
      %v720 = vand.u32 %v435, 4294901760
      %v721 = vsub.f32 %v435, %v720
      %v722 = vand.u32 %v721, 4294901760
      %v723 = vsub.f32 %v721, %v722
      %v724 = vand.u32 %v723, 4294901760
      %725 = vmatmul.mubr.f32.gmra.mrb[0].mxu0 %v724
      %v726 = vpop.f32.mrb[0].mxu0
      %v727 = vadd.f32 %v457, %v726
      %v728 = vpop.f32.mrb[0].mxu0
      %729 = vdwg.mxu0
      %730 = vmatprep.subr.mxu0 0.0
      %v731 = vand.u32 %v436, 4294901760
      %v732 = vsub.f32 %v436, %v731
      %v733 = vand.u32 %v732, 4294901760
      %v734 = vsub.f32 %v732, %v733
      %v735 = vand.u32 %v734, 4294901760
      %736 = vmatpush1.msra.mxu0 %v735
      %737 = vmatprep.subr.mxu0 0.0
      %v738 = vand.u32 %v437, 4294901760
      %v739 = vsub.f32 %v437, %v738
      %v740 = vand.u32 %v739, 4294901760
      %v741 = vsub.f32 %v739, %v740
      %v742 = vand.u32 %v741, 4294901760
      %743 = vmatpush1.msra.mxu0 %v742
      %744 = vmatprep.subr.mxu0 0.0
      %v745 = vand.u32 %v438, 4294901760
      %v746 = vsub.f32 %v438, %v745
      %v747 = vand.u32 %v746, 4294901760
      %v748 = vsub.f32 %v746, %v747
      %v749 = vand.u32 %v748, 4294901760
      %750 = vmatpush1.msra.mxu0 %v749
      %751 = vmatprep.subr.mxu0 0.0
      %v752 = vand.u32 %v439, 4294901760
      %v753 = vsub.f32 %v439, %v752
      %v754 = vand.u32 %v753, 4294901760
      %v755 = vsub.f32 %v753, %v754
      %v756 = vand.u32 %v755, 4294901760
      %757 = vmatpush1.msra.mxu0 %v756
      %758 = vmatprep.subr.mxu0 0.0
      %v759 = vand.u32 %v440, 4294901760
      %v760 = vsub.f32 %v440, %v759
      %v761 = vand.u32 %v760, 4294901760
      %v762 = vsub.f32 %v760, %v761
      %v763 = vand.u32 %v762, 4294901760
      %764 = vmatpush1.msra.mxu0 %v763
      %765 = vmatprep.subr.mxu0 0.0
      %v766 = vand.u32 %v441, 4294901760
      %v767 = vsub.f32 %v441, %v766
      %v768 = vand.u32 %v767, 4294901760
      %v769 = vsub.f32 %v767, %v768
      %v770 = vand.u32 %v769, 4294901760
      %771 = vmatpush1.msra.mxu0 %v770
      %772 = vmatprep.subr.mxu0 0.0
      %v773 = vand.u32 %v442, 4294901760
      %v774 = vsub.f32 %v442, %v773
      %v775 = vand.u32 %v774, 4294901760
      %v776 = vsub.f32 %v774, %v775
      %v777 = vand.u32 %v776, 4294901760
      %778 = vmatpush1.msra.mxu0 %v777
      %779 = vmatprep.subr.mxu0 0.0
      %v780 = vand.u32 %v443, 4294901760
      %v781 = vsub.f32 %v443, %v780
      %v782 = vand.u32 %v781, 4294901760
      %v783 = vsub.f32 %v781, %v782
      %v784 = vand.u32 %v783, 4294901760
      %785 = vmatpush1.msra.mxu0 %v784
      %786 = vmatprep.subr.mxu0 0.0
      %v787 = vand.u32 %v444, 4294901760
      %v788 = vsub.f32 %v444, %v787
      %v789 = vand.u32 %v788, 4294901760
      %v790 = vsub.f32 %v788, %v789
      %v791 = vand.u32 %v790, 4294901760
      %792 = vmatpush1.msra.mxu0 %v791
      %793 = vmatprep.subr.mxu0 0.0
      %v794 = vand.u32 %v445, 4294901760
      %v795 = vsub.f32 %v445, %v794
      %v796 = vand.u32 %v795, 4294901760
      %v797 = vsub.f32 %v795, %v796
      %v798 = vand.u32 %v797, 4294901760
      %799 = vmatpush1.msra.mxu0 %v798
      %800 = vmatprep.subr.mxu0 0.0
      %v801 = vand.u32 %v446, 4294901760
      %v802 = vsub.f32 %v446, %v801
      %v803 = vand.u32 %v802, 4294901760
      %v804 = vsub.f32 %v802, %v803
      %v805 = vand.u32 %v804, 4294901760
      %806 = vmatpush1.msra.mxu0 %v805
      %807 = vmatprep.subr.mxu0 0.0
      %v808 = vand.u32 %v447, 4294901760
      %v809 = vsub.f32 %v447, %v808
      %v810 = vand.u32 %v809, 4294901760
      %v811 = vsub.f32 %v809, %v810
      %v812 = vand.u32 %v811, 4294901760
      %813 = vmatpush1.msra.mxu0 %v812
      %814 = vmatprep.subr.mxu0 0.0
      %v815 = vand.u32 %v448, 4294901760
      %v816 = vsub.f32 %v448, %v815
      %v817 = vand.u32 %v816, 4294901760
      %v818 = vsub.f32 %v816, %v817
      %v819 = vand.u32 %v818, 4294901760
      %820 = vmatpush1.msra.mxu0 %v819
      %821 = vmatprep.subr.mxu0 0.0
      %v822 = vand.u32 %v449, 4294901760
      %v823 = vsub.f32 %v449, %v822
      %v824 = vand.u32 %v823, 4294901760
      %v825 = vsub.f32 %v823, %v824
      %v826 = vand.u32 %v825, 4294901760
      %827 = vmatpush1.msra.mxu0 %v826
      %828 = vmatprep.subr.mxu0 0.0
      %v829 = vand.u32 %v450, 4294901760
      %v830 = vsub.f32 %v450, %v829
      %v831 = vand.u32 %v830, 4294901760
      %v832 = vsub.f32 %v830, %v831
      %v833 = vand.u32 %v832, 4294901760
      %834 = vmatpush1.msra.mxu0 %v833
      %835 = vmatprep.subr.mxu0 0.0
      %v836 = vand.u32 %v451, 4294901760
      %v837 = vsub.f32 %v451, %v836
      %v838 = vand.u32 %v837, 4294901760
      %v839 = vsub.f32 %v837, %v838
      %v840 = vand.u32 %v839, 4294901760
      %841 = vmatpush1.msra.mxu0 %v840
      %842 = vmatprep.subr.mxu0 0.0
      %843 = vmatpush1.msra.mxu0 0.0
      %844 = vmatprep.subr.mxu0 0.0
      %845 = vmatpush1.msra.mxu0 0.0
      %846 = vmatprep.subr.mxu0 0.0
      %847 = vmatpush1.msra.mxu0 0.0
      %848 = vmatprep.subr.mxu0 0.0
      %849 = vmatpush1.msra.mxu0 0.0
      %850 = vmatprep.subr.mxu0 0.0
      %851 = vmatpush1.msra.mxu0 0.0
      %852 = vmatprep.subr.mxu0 0.0
      %853 = vmatpush1.msra.mxu0 0.0
      %854 = vmatprep.subr.mxu0 0.0
      %855 = vmatpush1.msra.mxu0 0.0
      %856 = vmatprep.subr.mxu0 0.0
      %857 = vmatpush1.msra.mxu0 0.0
      %858 = vmatprep.subr.mxu0 0.0
      %859 = vmatpush1.msra.mxu0 0.0
      %860 = vmatprep.subr.mxu0 0.0
      %861 = vmatpush1.msra.mxu0 0.0
      %862 = vmatprep.subr.mxu0 0.0
      %863 = vmatpush1.msra.mxu0 0.0
      %864 = vmatprep.subr.mxu0 0.0
      %865 = vmatpush1.msra.mxu0 0.0
      %866 = vmatprep.subr.mxu0 0.0
      %867 = vmatpush1.msra.mxu0 0.0
      %868 = vmatprep.subr.mxu0 0.0
      %869 = vmatpush1.msra.mxu0 0.0
      %870 = vmatprep.subr.mxu0 0.0
      %871 = vmatpush1.msra.mxu0 0.0
      %872 = vmatprep.subr.mxu0 0.0
      %873 = vmatpush1.msra.mxu0 0.0
      %874 = vmatprep.mubr.f32.mxu0 0.0
      %v875 = vand.u32 %v417, 4294901760
      %876 = vmatmul.mubr.f32.gmra.mrb[0].mxu0 %v875
      %v877 = vpop.f32.mrb[0].mxu0
      %v878 = vadd.f32 %v547, %v877
      %v879 = vpop.f32.mrb[0].mxu0
      %880 = vmatprep.mubr.f32.mxu0 0.0
      %v881 = vand.u32 %v418, 4294901760
      %882 = vmatmul.mubr.f32.gmra.mrb[0].mxu0 %v881
      %v883 = vpop.f32.mrb[0].mxu0
      %v884 = vadd.f32 %v557, %v883
      %v885 = vpop.f32.mrb[0].mxu0
      %886 = vmatprep.mubr.f32.mxu0 0.0
      %v887 = vand.u32 %v419, 4294901760
      %888 = vmatmul.mubr.f32.gmra.mrb[0].mxu0 %v887
      %v889 = vpop.f32.mrb[0].mxu0
      %v890 = vadd.f32 %v567, %v889
      %v891 = vpop.f32.mrb[0].mxu0
      %892 = vmatprep.mubr.f32.mxu0 0.0
      %v893 = vand.u32 %v420, 4294901760
      %894 = vmatmul.mubr.f32.gmra.mrb[0].mxu0 %v893
      %v895 = vpop.f32.mrb[0].mxu0
      %v896 = vadd.f32 %v577, %v895
      %v897 = vpop.f32.mrb[0].mxu0
      %898 = vmatprep.mubr.f32.mxu0 0.0
      %v899 = vand.u32 %v421, 4294901760
      %900 = vmatmul.mubr.f32.gmra.mrb[0].mxu0 %v899
      %v901 = vpop.f32.mrb[0].mxu0
      %v902 = vadd.f32 %v587, %v901
      %v903 = vpop.f32.mrb[0].mxu0
      %904 = vmatprep.mubr.f32.mxu0 0.0
      %v905 = vand.u32 %v422, 4294901760
      %906 = vmatmul.mubr.f32.gmra.mrb[0].mxu0 %v905
      %v907 = vpop.f32.mrb[0].mxu0
      %v908 = vadd.f32 %v597, %v907
      %v909 = vpop.f32.mrb[0].mxu0
      %910 = vmatprep.mubr.f32.mxu0 0.0
      %v911 = vand.u32 %v423, 4294901760
      %912 = vmatmul.mubr.f32.gmra.mrb[0].mxu0 %v911
      %v913 = vpop.f32.mrb[0].mxu0
      %v914 = vadd.f32 %v607, %v913
      %v915 = vpop.f32.mrb[0].mxu0
      %916 = vmatprep.mubr.f32.mxu0 0.0
      %v917 = vand.u32 %v424, 4294901760
      %918 = vmatmul.mubr.f32.gmra.mrb[0].mxu0 %v917
      %v919 = vpop.f32.mrb[0].mxu0
      %v920 = vadd.f32 %v617, %v919
      %v921 = vpop.f32.mrb[0].mxu0
      %922 = vmatprep.mubr.f32.mxu0 0.0
      %v923 = vand.u32 %v425, 4294901760
      %924 = vmatmul.mubr.f32.gmra.mrb[0].mxu0 %v923
      %v925 = vpop.f32.mrb[0].mxu0
      %v926 = vadd.f32 %v627, %v925
      %v927 = vpop.f32.mrb[0].mxu0
      %928 = vmatprep.mubr.f32.mxu0 0.0
      %v929 = vand.u32 %v426, 4294901760
      %930 = vmatmul.mubr.f32.gmra.mrb[0].mxu0 %v929
      %v931 = vpop.f32.mrb[0].mxu0
      %v932 = vadd.f32 %v637, %v931
      %v933 = vpop.f32.mrb[0].mxu0
      %934 = vmatprep.mubr.f32.mxu0 0.0
      %v935 = vand.u32 %v427, 4294901760
      %936 = vmatmul.mubr.f32.gmra.mrb[0].mxu0 %v935
      %v937 = vpop.f32.mrb[0].mxu0
      %v938 = vadd.f32 %v647, %v937
      %v939 = vpop.f32.mrb[0].mxu0
      %940 = vmatprep.mubr.f32.mxu0 0.0
      %v941 = vand.u32 %v428, 4294901760
      %942 = vmatmul.mubr.f32.gmra.mrb[0].mxu0 %v941
      %v943 = vpop.f32.mrb[0].mxu0
      %v944 = vadd.f32 %v657, %v943
      %v945 = vpop.f32.mrb[0].mxu0
      %946 = vmatprep.mubr.f32.mxu0 0.0
      %v947 = vand.u32 %v429, 4294901760
      %948 = vmatmul.mubr.f32.gmra.mrb[0].mxu0 %v947
      %v949 = vpop.f32.mrb[0].mxu0
      %v950 = vadd.f32 %v667, %v949
      %v951 = vpop.f32.mrb[0].mxu0
      %952 = vmatprep.mubr.f32.mxu0 0.0
      %v953 = vand.u32 %v430, 4294901760
      %954 = vmatmul.mubr.f32.gmra.mrb[0].mxu0 %v953
      %v955 = vpop.f32.mrb[0].mxu0
      %v956 = vadd.f32 %v677, %v955
      %v957 = vpop.f32.mrb[0].mxu0
      %958 = vmatprep.mubr.f32.mxu0 0.0
      %v959 = vand.u32 %v431, 4294901760
      %960 = vmatmul.mubr.f32.gmra.mrb[0].mxu0 %v959
      %v961 = vpop.f32.mrb[0].mxu0
      %v962 = vadd.f32 %v687, %v961
      %v963 = vpop.f32.mrb[0].mxu0
      %964 = vmatprep.mubr.f32.mxu0 0.0
      %v965 = vand.u32 %v432, 4294901760
      %966 = vmatmul.mubr.f32.gmra.mrb[0].mxu0 %v965
      %v967 = vpop.f32.mrb[0].mxu0
      %v968 = vadd.f32 %v697, %v967
      %v969 = vpop.f32.mrb[0].mxu0
      %970 = vmatprep.mubr.f32.mxu0 0.0
      %v971 = vand.u32 %v433, 4294901760
      %972 = vmatmul.mubr.f32.gmra.mrb[0].mxu0 %v971
      %v973 = vpop.f32.mrb[0].mxu0
      %v974 = vadd.f32 %v707, %v973
      %v975 = vpop.f32.mrb[0].mxu0
      %976 = vmatprep.mubr.f32.mxu0 0.0
      %v977 = vand.u32 %v434, 4294901760
      %978 = vmatmul.mubr.f32.gmra.mrb[0].mxu0 %v977
      %v979 = vpop.f32.mrb[0].mxu0
      %v980 = vadd.f32 %v717, %v979
      %v981 = vpop.f32.mrb[0].mxu0
      %982 = vmatprep.mubr.f32.mxu0 0.0
      %v983 = vand.u32 %v435, 4294901760
      %984 = vmatmul.mubr.f32.gmra.mrb[0].mxu0 %v983
      %v985 = vpop.f32.mrb[0].mxu0
      %v986 = vadd.f32 %v727, %v985
      %v987 = vpop.f32.mrb[0].mxu0
      %988 = vdwg.mxu0
      %989 = vmatprep.subr.mxu0 0.0
      %v990 = vand.u32 %v436, 4294901760
      %v991 = vsub.f32 %v436, %v990
      %992 = vmatpush1.msra.mxu0 %v991
      %993 = vmatprep.subr.mxu0 0.0
      %v994 = vand.u32 %v437, 4294901760
      %v995 = vsub.f32 %v437, %v994
      %996 = vmatpush1.msra.mxu0 %v995
      %997 = vmatprep.subr.mxu0 0.0
      %v998 = vand.u32 %v438, 4294901760
      %v999 = vsub.f32 %v438, %v998
      %1000 = vmatpush1.msra.mxu0 %v999
      %1001 = vmatprep.subr.mxu0 0.0
      %v1002 = vand.u32 %v439, 4294901760
      %v1003 = vsub.f32 %v439, %v1002
      %1004 = vmatpush1.msra.mxu0 %v1003
      %1005 = vmatprep.subr.mxu0 0.0
      %v1006 = vand.u32 %v440, 4294901760
      %v1007 = vsub.f32 %v440, %v1006
      %1008 = vmatpush1.msra.mxu0 %v1007
      %1009 = vmatprep.subr.mxu0 0.0
      %v1010 = vand.u32 %v441, 4294901760
      %v1011 = vsub.f32 %v441, %v1010
      %1012 = vmatpush1.msra.mxu0 %v1011
      %1013 = vmatprep.subr.mxu0 0.0
      %v1014 = vand.u32 %v442, 4294901760
      %v1015 = vsub.f32 %v442, %v1014
      %1016 = vmatpush1.msra.mxu0 %v1015
      %1017 = vmatprep.subr.mxu0 0.0
      %v1018 = vand.u32 %v443, 4294901760
      %v1019 = vsub.f32 %v443, %v1018
      %1020 = vmatpush1.msra.mxu0 %v1019
      %1021 = vmatprep.subr.mxu0 0.0
      %v1022 = vand.u32 %v444, 4294901760
      %v1023 = vsub.f32 %v444, %v1022
      %1024 = vmatpush1.msra.mxu0 %v1023
      %1025 = vmatprep.subr.mxu0 0.0
      %v1026 = vand.u32 %v445, 4294901760
      %v1027 = vsub.f32 %v445, %v1026
      %1028 = vmatpush1.msra.mxu0 %v1027
      %1029 = vmatprep.subr.mxu0 0.0
      %v1030 = vand.u32 %v446, 4294901760
      %v1031 = vsub.f32 %v446, %v1030
      %1032 = vmatpush1.msra.mxu0 %v1031
      %1033 = vmatprep.subr.mxu0 0.0
      %v1034 = vand.u32 %v447, 4294901760
      %v1035 = vsub.f32 %v447, %v1034
      %1036 = vmatpush1.msra.mxu0 %v1035
      %1037 = vmatprep.subr.mxu0 0.0
      %v1038 = vand.u32 %v448, 4294901760
      %v1039 = vsub.f32 %v448, %v1038
      %1040 = vmatpush1.msra.mxu0 %v1039
      %1041 = vmatprep.subr.mxu0 0.0
      %v1042 = vand.u32 %v449, 4294901760
      %v1043 = vsub.f32 %v449, %v1042
      %1044 = vmatpush1.msra.mxu0 %v1043
      %1045 = vmatprep.subr.mxu0 0.0
      %v1046 = vand.u32 %v450, 4294901760
      %v1047 = vsub.f32 %v450, %v1046
      %1048 = vmatpush1.msra.mxu0 %v1047
      %1049 = vmatprep.subr.mxu0 0.0
      %v1050 = vand.u32 %v451, 4294901760
      %v1051 = vsub.f32 %v451, %v1050
      %1052 = vmatpush1.msra.mxu0 %v1051
      %1053 = vmatprep.subr.mxu0 0.0
      %1054 = vmatpush1.msra.mxu0 0.0
      %1055 = vmatprep.subr.mxu0 0.0
      %1056 = vmatpush1.msra.mxu0 0.0
      %1057 = vmatprep.subr.mxu0 0.0
      %1058 = vmatpush1.msra.mxu0 0.0
      %1059 = vmatprep.subr.mxu0 0.0
      %1060 = vmatpush1.msra.mxu0 0.0
      %1061 = vmatprep.subr.mxu0 0.0
      %1062 = vmatpush1.msra.mxu0 0.0
      %1063 = vmatprep.subr.mxu0 0.0
      %1064 = vmatpush1.msra.mxu0 0.0
      %1065 = vmatprep.subr.mxu0 0.0
      %1066 = vmatpush1.msra.mxu0 0.0
      %1067 = vmatprep.subr.mxu0 0.0
      %1068 = vmatpush1.msra.mxu0 0.0
      %1069 = vmatprep.subr.mxu0 0.0
      %1070 = vmatpush1.msra.mxu0 0.0
      %1071 = vmatprep.subr.mxu0 0.0
      %1072 = vmatpush1.msra.mxu0 0.0
      %1073 = vmatprep.subr.mxu0 0.0
      %1074 = vmatpush1.msra.mxu0 0.0
      %1075 = vmatprep.subr.mxu0 0.0
      %1076 = vmatpush1.msra.mxu0 0.0
      %1077 = vmatprep.subr.mxu0 0.0
      %1078 = vmatpush1.msra.mxu0 0.0
      %1079 = vmatprep.subr.mxu0 0.0
      %1080 = vmatpush1.msra.mxu0 0.0
      %1081 = vmatprep.subr.mxu0 0.0
      %1082 = vmatpush1.msra.mxu0 0.0
      %1083 = vmatprep.subr.mxu0 0.0
      %1084 = vmatpush1.msra.mxu0 0.0
      %1085 = vmatprep.mubr.f32.mxu0 0.0
      %v1086 = vand.u32 %v417, 4294901760
      %v1087 = vsub.f32 %v417, %v1086
      %1088 = vmatmul.mubr.f32.gmra.mrb[0].mxu0 %v1087
      %v1089 = vpop.f32.mrb[0].mxu0
      %v1090 = vadd.f32 %v878, %v1089
      %v1091 = vpop.f32.mrb[0].mxu0
      %1092 = vmatprep.mubr.f32.mxu0 0.0
      %v1093 = vand.u32 %v418, 4294901760
      %v1094 = vsub.f32 %v418, %v1093
      %1095 = vmatmul.mubr.f32.gmra.mrb[0].mxu0 %v1094
      %v1096 = vpop.f32.mrb[0].mxu0
      %v1097 = vadd.f32 %v884, %v1096
      %v1098 = vpop.f32.mrb[0].mxu0
      %1099 = vmatprep.mubr.f32.mxu0 0.0
      %v1100 = vand.u32 %v419, 4294901760
      %v1101 = vsub.f32 %v419, %v1100
      %1102 = vmatmul.mubr.f32.gmra.mrb[0].mxu0 %v1101
      %v1103 = vpop.f32.mrb[0].mxu0
      %v1104 = vadd.f32 %v890, %v1103
      %v1105 = vpop.f32.mrb[0].mxu0
      %1106 = vmatprep.mubr.f32.mxu0 0.0
      %v1107 = vand.u32 %v420, 4294901760
      %v1108 = vsub.f32 %v420, %v1107
      %1109 = vmatmul.mubr.f32.gmra.mrb[0].mxu0 %v1108
      %v1110 = vpop.f32.mrb[0].mxu0
      %v1111 = vadd.f32 %v896, %v1110
      %v1112 = vpop.f32.mrb[0].mxu0
      %1113 = vmatprep.mubr.f32.mxu0 0.0
      %v1114 = vand.u32 %v421, 4294901760
      %v1115 = vsub.f32 %v421, %v1114
      %1116 = vmatmul.mubr.f32.gmra.mrb[0].mxu0 %v1115
      %v1117 = vpop.f32.mrb[0].mxu0
      %v1118 = vadd.f32 %v902, %v1117
      %v1119 = vpop.f32.mrb[0].mxu0
      %1120 = vmatprep.mubr.f32.mxu0 0.0
      %v1121 = vand.u32 %v422, 4294901760
      %v1122 = vsub.f32 %v422, %v1121
      %1123 = vmatmul.mubr.f32.gmra.mrb[0].mxu0 %v1122
      %v1124 = vpop.f32.mrb[0].mxu0
      %v1125 = vadd.f32 %v908, %v1124
      %v1126 = vpop.f32.mrb[0].mxu0
      %1127 = vmatprep.mubr.f32.mxu0 0.0
      %v1128 = vand.u32 %v423, 4294901760
      %v1129 = vsub.f32 %v423, %v1128
      %1130 = vmatmul.mubr.f32.gmra.mrb[0].mxu0 %v1129
      %v1131 = vpop.f32.mrb[0].mxu0
      %v1132 = vadd.f32 %v914, %v1131
      %v1133 = vpop.f32.mrb[0].mxu0
      %1134 = vmatprep.mubr.f32.mxu0 0.0
      %v1135 = vand.u32 %v424, 4294901760
      %v1136 = vsub.f32 %v424, %v1135
      %1137 = vmatmul.mubr.f32.gmra.mrb[0].mxu0 %v1136
      %v1138 = vpop.f32.mrb[0].mxu0
      %v1139 = vadd.f32 %v920, %v1138
      %v1140 = vpop.f32.mrb[0].mxu0
      %1141 = vmatprep.mubr.f32.mxu0 0.0
      %v1142 = vand.u32 %v425, 4294901760
      %v1143 = vsub.f32 %v425, %v1142
      %1144 = vmatmul.mubr.f32.gmra.mrb[0].mxu0 %v1143
      %v1145 = vpop.f32.mrb[0].mxu0
      %v1146 = vadd.f32 %v926, %v1145
      %v1147 = vpop.f32.mrb[0].mxu0
      %1148 = vmatprep.mubr.f32.mxu0 0.0
      %v1149 = vand.u32 %v426, 4294901760
      %v1150 = vsub.f32 %v426, %v1149
      %1151 = vmatmul.mubr.f32.gmra.mrb[0].mxu0 %v1150
      %v1152 = vpop.f32.mrb[0].mxu0
      %v1153 = vadd.f32 %v932, %v1152
      %v1154 = vpop.f32.mrb[0].mxu0
      %1155 = vmatprep.mubr.f32.mxu0 0.0
      %v1156 = vand.u32 %v427, 4294901760
      %v1157 = vsub.f32 %v427, %v1156
      %1158 = vmatmul.mubr.f32.gmra.mrb[0].mxu0 %v1157
      %v1159 = vpop.f32.mrb[0].mxu0
      %v1160 = vadd.f32 %v938, %v1159
      %v1161 = vpop.f32.mrb[0].mxu0
      %1162 = vmatprep.mubr.f32.mxu0 0.0
      %v1163 = vand.u32 %v428, 4294901760
      %v1164 = vsub.f32 %v428, %v1163
      %1165 = vmatmul.mubr.f32.gmra.mrb[0].mxu0 %v1164
      %v1166 = vpop.f32.mrb[0].mxu0
      %v1167 = vadd.f32 %v944, %v1166
      %v1168 = vpop.f32.mrb[0].mxu0
      %1169 = vmatprep.mubr.f32.mxu0 0.0
      %v1170 = vand.u32 %v429, 4294901760
      %v1171 = vsub.f32 %v429, %v1170
      %1172 = vmatmul.mubr.f32.gmra.mrb[0].mxu0 %v1171
      %v1173 = vpop.f32.mrb[0].mxu0
      %v1174 = vadd.f32 %v950, %v1173
      %v1175 = vpop.f32.mrb[0].mxu0
      %1176 = vmatprep.mubr.f32.mxu0 0.0
      %v1177 = vand.u32 %v430, 4294901760
      %v1178 = vsub.f32 %v430, %v1177
      %1179 = vmatmul.mubr.f32.gmra.mrb[0].mxu0 %v1178
      %v1180 = vpop.f32.mrb[0].mxu0
      %v1181 = vadd.f32 %v956, %v1180
      %v1182 = vpop.f32.mrb[0].mxu0
      %1183 = vmatprep.mubr.f32.mxu0 0.0
      %v1184 = vand.u32 %v431, 4294901760
      %v1185 = vsub.f32 %v431, %v1184
      %1186 = vmatmul.mubr.f32.gmra.mrb[0].mxu0 %v1185
      %v1187 = vpop.f32.mrb[0].mxu0
      %v1188 = vadd.f32 %v962, %v1187
      %v1189 = vpop.f32.mrb[0].mxu0
      %1190 = vmatprep.mubr.f32.mxu0 0.0
      %v1191 = vand.u32 %v432, 4294901760
      %v1192 = vsub.f32 %v432, %v1191
      %1193 = vmatmul.mubr.f32.gmra.mrb[0].mxu0 %v1192
      %v1194 = vpop.f32.mrb[0].mxu0
      %v1195 = vadd.f32 %v968, %v1194
      %v1196 = vpop.f32.mrb[0].mxu0
      %1197 = vmatprep.mubr.f32.mxu0 0.0
      %v1198 = vand.u32 %v433, 4294901760
      %v1199 = vsub.f32 %v433, %v1198
      %1200 = vmatmul.mubr.f32.gmra.mrb[0].mxu0 %v1199
      %v1201 = vpop.f32.mrb[0].mxu0
      %v1202 = vadd.f32 %v974, %v1201
      %v1203 = vpop.f32.mrb[0].mxu0
      %1204 = vmatprep.mubr.f32.mxu0 0.0
      %v1205 = vand.u32 %v434, 4294901760
      %v1206 = vsub.f32 %v434, %v1205
      %1207 = vmatmul.mubr.f32.gmra.mrb[0].mxu0 %v1206
      %v1208 = vpop.f32.mrb[0].mxu0
      %v1209 = vadd.f32 %v980, %v1208
      %v1210 = vpop.f32.mrb[0].mxu0
      %1211 = vmatprep.mubr.f32.mxu0 0.0
      %v1212 = vand.u32 %v435, 4294901760
      %v1213 = vsub.f32 %v435, %v1212
      %1214 = vmatmul.mubr.f32.gmra.mrb[0].mxu0 %v1213
      %v1215 = vpop.f32.mrb[0].mxu0
      %v1216 = vadd.f32 %v986, %v1215
      %v1217 = vpop.f32.mrb[0].mxu0
      %1218 = vdwg.mxu0
      %1219 = vmatprep.subr.mxu0 0.0
      %v1220 = vand.u32 %v436, 4294901760
      %1221 = vmatpush1.msra.mxu0 %v1220
      %1222 = vmatprep.subr.mxu0 0.0
      %v1223 = vand.u32 %v437, 4294901760
      %1224 = vmatpush1.msra.mxu0 %v1223
      %1225 = vmatprep.subr.mxu0 0.0
      %v1226 = vand.u32 %v438, 4294901760
      %1227 = vmatpush1.msra.mxu0 %v1226
      %1228 = vmatprep.subr.mxu0 0.0
      %v1229 = vand.u32 %v439, 4294901760
      %1230 = vmatpush1.msra.mxu0 %v1229
      %1231 = vmatprep.subr.mxu0 0.0
      %v1232 = vand.u32 %v440, 4294901760
      %1233 = vmatpush1.msra.mxu0 %v1232
      %1234 = vmatprep.subr.mxu0 0.0
      %v1235 = vand.u32 %v441, 4294901760
      %1236 = vmatpush1.msra.mxu0 %v1235
      %1237 = vmatprep.subr.mxu0 0.0
      %v1238 = vand.u32 %v442, 4294901760
      %1239 = vmatpush1.msra.mxu0 %v1238
      %1240 = vmatprep.subr.mxu0 0.0
      %v1241 = vand.u32 %v443, 4294901760
      %1242 = vmatpush1.msra.mxu0 %v1241
      %1243 = vmatprep.subr.mxu0 0.0
      %v1244 = vand.u32 %v444, 4294901760
      %1245 = vmatpush1.msra.mxu0 %v1244
      %1246 = vmatprep.subr.mxu0 0.0
      %v1247 = vand.u32 %v445, 4294901760
      %1248 = vmatpush1.msra.mxu0 %v1247
      %1249 = vmatprep.subr.mxu0 0.0
      %v1250 = vand.u32 %v446, 4294901760
      %1251 = vmatpush1.msra.mxu0 %v1250
      %1252 = vmatprep.subr.mxu0 0.0
      %v1253 = vand.u32 %v447, 4294901760
      %1254 = vmatpush1.msra.mxu0 %v1253
      %1255 = vmatprep.subr.mxu0 0.0
      %v1256 = vand.u32 %v448, 4294901760
      %1257 = vmatpush1.msra.mxu0 %v1256
      %1258 = vmatprep.subr.mxu0 0.0
      %v1259 = vand.u32 %v449, 4294901760
      %1260 = vmatpush1.msra.mxu0 %v1259
      %1261 = vmatprep.subr.mxu0 0.0
      %v1262 = vand.u32 %v450, 4294901760
      %1263 = vmatpush1.msra.mxu0 %v1262
      %1264 = vmatprep.subr.mxu0 0.0
      %v1265 = vand.u32 %v451, 4294901760
      %1266 = vmatpush1.msra.mxu0 %v1265
      %1267 = vmatprep.subr.mxu0 0.0
      %1268 = vmatpush1.msra.mxu0 0.0
      %1269 = vmatprep.subr.mxu0 0.0
      %1270 = vmatpush1.msra.mxu0 0.0
      %1271 = vmatprep.subr.mxu0 0.0
      %1272 = vmatpush1.msra.mxu0 0.0
      %1273 = vmatprep.subr.mxu0 0.0
      %1274 = vmatpush1.msra.mxu0 0.0
      %1275 = vmatprep.subr.mxu0 0.0
      %1276 = vmatpush1.msra.mxu0 0.0
      %1277 = vmatprep.subr.mxu0 0.0
      %1278 = vmatpush1.msra.mxu0 0.0
      %1279 = vmatprep.subr.mxu0 0.0
      %1280 = vmatpush1.msra.mxu0 0.0
      %1281 = vmatprep.subr.mxu0 0.0
      %1282 = vmatpush1.msra.mxu0 0.0
      %1283 = vmatprep.subr.mxu0 0.0
      %1284 = vmatpush1.msra.mxu0 0.0
      %1285 = vmatprep.subr.mxu0 0.0
      %1286 = vmatpush1.msra.mxu0 0.0
      %1287 = vmatprep.subr.mxu0 0.0
      %1288 = vmatpush1.msra.mxu0 0.0
      %1289 = vmatprep.subr.mxu0 0.0
      %1290 = vmatpush1.msra.mxu0 0.0
      %1291 = vmatprep.subr.mxu0 0.0
      %1292 = vmatpush1.msra.mxu0 0.0
      %1293 = vmatprep.subr.mxu0 0.0
      %1294 = vmatpush1.msra.mxu0 0.0
      %1295 = vmatprep.subr.mxu0 0.0
      %1296 = vmatpush1.msra.mxu0 0.0
      %1297 = vmatprep.subr.mxu0 0.0
      %1298 = vmatpush1.msra.mxu0 0.0
      %1299 = vmatprep.mubr.f32.mxu0 0.0
      %v1300 = vand.u32 %v417, 4294901760
      %v1301 = vsub.f32 %v417, %v1300
      %v1302 = vand.u32 %v1301, 4294901760
      %1303 = vmatmul.mubr.f32.gmra.mrb[0].mxu0 %v1302
      %v1304 = vpop.f32.mrb[0].mxu0
      %v1305 = vadd.f32 %v1090, %v1304
      %v1306 = vpop.f32.mrb[0].mxu0
      %1307 = vmatprep.mubr.f32.mxu0 0.0
      %v1308 = vand.u32 %v418, 4294901760
      %v1309 = vsub.f32 %v418, %v1308
      %v1310 = vand.u32 %v1309, 4294901760
      %1311 = vmatmul.mubr.f32.gmra.mrb[0].mxu0 %v1310
      %v1312 = vpop.f32.mrb[0].mxu0
      %v1313 = vadd.f32 %v1097, %v1312
      %v1314 = vpop.f32.mrb[0].mxu0
      %1315 = vmatprep.mubr.f32.mxu0 0.0
      %v1316 = vand.u32 %v419, 4294901760
      %v1317 = vsub.f32 %v419, %v1316
      %v1318 = vand.u32 %v1317, 4294901760
      %1319 = vmatmul.mubr.f32.gmra.mrb[0].mxu0 %v1318
      %v1320 = vpop.f32.mrb[0].mxu0
      %v1321 = vadd.f32 %v1104, %v1320
      %v1322 = vpop.f32.mrb[0].mxu0
      %1323 = vmatprep.mubr.f32.mxu0 0.0
      %v1324 = vand.u32 %v420, 4294901760
      %v1325 = vsub.f32 %v420, %v1324
      %v1326 = vand.u32 %v1325, 4294901760
      %1327 = vmatmul.mubr.f32.gmra.mrb[0].mxu0 %v1326
      %v1328 = vpop.f32.mrb[0].mxu0
      %v1329 = vadd.f32 %v1111, %v1328
      %v1330 = vpop.f32.mrb[0].mxu0
      %1331 = vmatprep.mubr.f32.mxu0 0.0
      %v1332 = vand.u32 %v421, 4294901760
      %v1333 = vsub.f32 %v421, %v1332
      %v1334 = vand.u32 %v1333, 4294901760
      %1335 = vmatmul.mubr.f32.gmra.mrb[0].mxu0 %v1334
      %v1336 = vpop.f32.mrb[0].mxu0
      %v1337 = vadd.f32 %v1118, %v1336
      %v1338 = vpop.f32.mrb[0].mxu0
      %1339 = vmatprep.mubr.f32.mxu0 0.0
      %v1340 = vand.u32 %v422, 4294901760
      %v1341 = vsub.f32 %v422, %v1340
      %v1342 = vand.u32 %v1341, 4294901760
      %1343 = vmatmul.mubr.f32.gmra.mrb[0].mxu0 %v1342
      %v1344 = vpop.f32.mrb[0].mxu0
      %v1345 = vadd.f32 %v1125, %v1344
      %v1346 = vpop.f32.mrb[0].mxu0
      %1347 = vmatprep.mubr.f32.mxu0 0.0
      %v1348 = vand.u32 %v423, 4294901760
      %v1349 = vsub.f32 %v423, %v1348
      %v1350 = vand.u32 %v1349, 4294901760
      %1351 = vmatmul.mubr.f32.gmra.mrb[0].mxu0 %v1350
      %v1352 = vpop.f32.mrb[0].mxu0
      %v1353 = vadd.f32 %v1132, %v1352
      %v1354 = vpop.f32.mrb[0].mxu0
      %1355 = vmatprep.mubr.f32.mxu0 0.0
      %v1356 = vand.u32 %v424, 4294901760
      %v1357 = vsub.f32 %v424, %v1356
      %v1358 = vand.u32 %v1357, 4294901760
      %1359 = vmatmul.mubr.f32.gmra.mrb[0].mxu0 %v1358
      %v1360 = vpop.f32.mrb[0].mxu0
      %v1361 = vadd.f32 %v1139, %v1360
      %v1362 = vpop.f32.mrb[0].mxu0
      %1363 = vmatprep.mubr.f32.mxu0 0.0
      %v1364 = vand.u32 %v425, 4294901760
      %v1365 = vsub.f32 %v425, %v1364
      %v1366 = vand.u32 %v1365, 4294901760
      %1367 = vmatmul.mubr.f32.gmra.mrb[0].mxu0 %v1366
      %v1368 = vpop.f32.mrb[0].mxu0
      %v1369 = vadd.f32 %v1146, %v1368
      %v1370 = vpop.f32.mrb[0].mxu0
      %1371 = vmatprep.mubr.f32.mxu0 0.0
      %v1372 = vand.u32 %v426, 4294901760
      %v1373 = vsub.f32 %v426, %v1372
      %v1374 = vand.u32 %v1373, 4294901760
      %1375 = vmatmul.mubr.f32.gmra.mrb[0].mxu0 %v1374
      %v1376 = vpop.f32.mrb[0].mxu0
      %v1377 = vadd.f32 %v1153, %v1376
      %v1378 = vpop.f32.mrb[0].mxu0
      %1379 = vmatprep.mubr.f32.mxu0 0.0
      %v1380 = vand.u32 %v427, 4294901760
      %v1381 = vsub.f32 %v427, %v1380
      %v1382 = vand.u32 %v1381, 4294901760
      %1383 = vmatmul.mubr.f32.gmra.mrb[0].mxu0 %v1382
      %v1384 = vpop.f32.mrb[0].mxu0
      %v1385 = vadd.f32 %v1160, %v1384
      %v1386 = vpop.f32.mrb[0].mxu0
      %1387 = vmatprep.mubr.f32.mxu0 0.0
      %v1388 = vand.u32 %v428, 4294901760
      %v1389 = vsub.f32 %v428, %v1388
      %v1390 = vand.u32 %v1389, 4294901760
      %1391 = vmatmul.mubr.f32.gmra.mrb[0].mxu0 %v1390
      %v1392 = vpop.f32.mrb[0].mxu0
      %v1393 = vadd.f32 %v1167, %v1392
      %v1394 = vpop.f32.mrb[0].mxu0
      %1395 = vmatprep.mubr.f32.mxu0 0.0
      %v1396 = vand.u32 %v429, 4294901760
      %v1397 = vsub.f32 %v429, %v1396
      %v1398 = vand.u32 %v1397, 4294901760
      %1399 = vmatmul.mubr.f32.gmra.mrb[0].mxu0 %v1398
      %v1400 = vpop.f32.mrb[0].mxu0
      %v1401 = vadd.f32 %v1174, %v1400
      %v1402 = vpop.f32.mrb[0].mxu0
      %1403 = vmatprep.mubr.f32.mxu0 0.0
      %v1404 = vand.u32 %v430, 4294901760
      %v1405 = vsub.f32 %v430, %v1404
      %v1406 = vand.u32 %v1405, 4294901760
      %1407 = vmatmul.mubr.f32.gmra.mrb[0].mxu0 %v1406
      %v1408 = vpop.f32.mrb[0].mxu0
      %v1409 = vadd.f32 %v1181, %v1408
      %v1410 = vpop.f32.mrb[0].mxu0
      %1411 = vmatprep.mubr.f32.mxu0 0.0
      %v1412 = vand.u32 %v431, 4294901760
      %v1413 = vsub.f32 %v431, %v1412
      %v1414 = vand.u32 %v1413, 4294901760
      %1415 = vmatmul.mubr.f32.gmra.mrb[0].mxu0 %v1414
      %v1416 = vpop.f32.mrb[0].mxu0
      %v1417 = vadd.f32 %v1188, %v1416
      %v1418 = vpop.f32.mrb[0].mxu0
      %1419 = vmatprep.mubr.f32.mxu0 0.0
      %v1420 = vand.u32 %v432, 4294901760
      %v1421 = vsub.f32 %v432, %v1420
      %v1422 = vand.u32 %v1421, 4294901760
      %1423 = vmatmul.mubr.f32.gmra.mrb[0].mxu0 %v1422
      %v1424 = vpop.f32.mrb[0].mxu0
      %v1425 = vadd.f32 %v1195, %v1424
      %v1426 = vpop.f32.mrb[0].mxu0
      %1427 = vmatprep.mubr.f32.mxu0 0.0
      %v1428 = vand.u32 %v433, 4294901760
      %v1429 = vsub.f32 %v433, %v1428
      %v1430 = vand.u32 %v1429, 4294901760
      %1431 = vmatmul.mubr.f32.gmra.mrb[0].mxu0 %v1430
      %v1432 = vpop.f32.mrb[0].mxu0
      %v1433 = vadd.f32 %v1202, %v1432
      %v1434 = vpop.f32.mrb[0].mxu0
      %1435 = vmatprep.mubr.f32.mxu0 0.0
      %v1436 = vand.u32 %v434, 4294901760
      %v1437 = vsub.f32 %v434, %v1436
      %v1438 = vand.u32 %v1437, 4294901760
      %1439 = vmatmul.mubr.f32.gmra.mrb[0].mxu0 %v1438
      %v1440 = vpop.f32.mrb[0].mxu0
      %v1441 = vadd.f32 %v1209, %v1440
      %v1442 = vpop.f32.mrb[0].mxu0
      %1443 = vmatprep.mubr.f32.mxu0 0.0
      %v1444 = vand.u32 %v435, 4294901760
      %v1445 = vsub.f32 %v435, %v1444
      %v1446 = vand.u32 %v1445, 4294901760
      %1447 = vmatmul.mubr.f32.gmra.mrb[0].mxu0 %v1446
      %v1448 = vpop.f32.mrb[0].mxu0
      %v1449 = vadd.f32 %v1216, %v1448
      %v1450 = vpop.f32.mrb[0].mxu0
      %1451 = vdwg.mxu0
      %1452 = vmatprep.subr.mxu0 0.0
      %v1453 = vand.u32 %v436, 4294901760
      %v1454 = vsub.f32 %v436, %v1453
      %v1455 = vand.u32 %v1454, 4294901760
      %1456 = vmatpush1.msra.mxu0 %v1455
      %1457 = vmatprep.subr.mxu0 0.0
      %v1458 = vand.u32 %v437, 4294901760
      %v1459 = vsub.f32 %v437, %v1458
      %v1460 = vand.u32 %v1459, 4294901760
      %1461 = vmatpush1.msra.mxu0 %v1460
      %1462 = vmatprep.subr.mxu0 0.0
      %v1463 = vand.u32 %v438, 4294901760
      %v1464 = vsub.f32 %v438, %v1463
      %v1465 = vand.u32 %v1464, 4294901760
      %1466 = vmatpush1.msra.mxu0 %v1465
      %1467 = vmatprep.subr.mxu0 0.0
      %v1468 = vand.u32 %v439, 4294901760
      %v1469 = vsub.f32 %v439, %v1468
      %v1470 = vand.u32 %v1469, 4294901760
      %1471 = vmatpush1.msra.mxu0 %v1470
      %1472 = vmatprep.subr.mxu0 0.0
      %v1473 = vand.u32 %v440, 4294901760
      %v1474 = vsub.f32 %v440, %v1473
      %v1475 = vand.u32 %v1474, 4294901760
      %1476 = vmatpush1.msra.mxu0 %v1475
      %1477 = vmatprep.subr.mxu0 0.0
      %v1478 = vand.u32 %v441, 4294901760
      %v1479 = vsub.f32 %v441, %v1478
      %v1480 = vand.u32 %v1479, 4294901760
      %1481 = vmatpush1.msra.mxu0 %v1480
      %1482 = vmatprep.subr.mxu0 0.0
      %v1483 = vand.u32 %v442, 4294901760
      %v1484 = vsub.f32 %v442, %v1483
      %v1485 = vand.u32 %v1484, 4294901760
      %1486 = vmatpush1.msra.mxu0 %v1485
      %1487 = vmatprep.subr.mxu0 0.0
      %v1488 = vand.u32 %v443, 4294901760
      %v1489 = vsub.f32 %v443, %v1488
      %v1490 = vand.u32 %v1489, 4294901760
      %1491 = vmatpush1.msra.mxu0 %v1490
      %1492 = vmatprep.subr.mxu0 0.0
      %v1493 = vand.u32 %v444, 4294901760
      %v1494 = vsub.f32 %v444, %v1493
      %v1495 = vand.u32 %v1494, 4294901760
      %1496 = vmatpush1.msra.mxu0 %v1495
      %1497 = vmatprep.subr.mxu0 0.0
      %v1498 = vand.u32 %v445, 4294901760
      %v1499 = vsub.f32 %v445, %v1498
      %v1500 = vand.u32 %v1499, 4294901760
      %1501 = vmatpush1.msra.mxu0 %v1500
      %1502 = vmatprep.subr.mxu0 0.0
      %v1503 = vand.u32 %v446, 4294901760
      %v1504 = vsub.f32 %v446, %v1503
      %v1505 = vand.u32 %v1504, 4294901760
      %1506 = vmatpush1.msra.mxu0 %v1505
      %1507 = vmatprep.subr.mxu0 0.0
      %v1508 = vand.u32 %v447, 4294901760
      %v1509 = vsub.f32 %v447, %v1508
      %v1510 = vand.u32 %v1509, 4294901760
      %1511 = vmatpush1.msra.mxu0 %v1510
      %1512 = vmatprep.subr.mxu0 0.0
      %v1513 = vand.u32 %v448, 4294901760
      %v1514 = vsub.f32 %v448, %v1513
      %v1515 = vand.u32 %v1514, 4294901760
      %1516 = vmatpush1.msra.mxu0 %v1515
      %1517 = vmatprep.subr.mxu0 0.0
      %v1518 = vand.u32 %v449, 4294901760
      %v1519 = vsub.f32 %v449, %v1518
      %v1520 = vand.u32 %v1519, 4294901760
      %1521 = vmatpush1.msra.mxu0 %v1520
      %1522 = vmatprep.subr.mxu0 0.0
      %v1523 = vand.u32 %v450, 4294901760
      %v1524 = vsub.f32 %v450, %v1523
      %v1525 = vand.u32 %v1524, 4294901760
      %1526 = vmatpush1.msra.mxu0 %v1525
      %1527 = vmatprep.subr.mxu0 0.0
      %v1528 = vand.u32 %v451, 4294901760
      %v1529 = vsub.f32 %v451, %v1528
      %v1530 = vand.u32 %v1529, 4294901760
      %1531 = vmatpush1.msra.mxu0 %v1530
      %1532 = vmatprep.subr.mxu0 0.0
      %1533 = vmatpush1.msra.mxu0 0.0
      %1534 = vmatprep.subr.mxu0 0.0
      %1535 = vmatpush1.msra.mxu0 0.0
      %1536 = vmatprep.subr.mxu0 0.0
      %1537 = vmatpush1.msra.mxu0 0.0
      %1538 = vmatprep.subr.mxu0 0.0
      %1539 = vmatpush1.msra.mxu0 0.0
      %1540 = vmatprep.subr.mxu0 0.0
      %1541 = vmatpush1.msra.mxu0 0.0
      %1542 = vmatprep.subr.mxu0 0.0
      %1543 = vmatpush1.msra.mxu0 0.0
      %1544 = vmatprep.subr.mxu0 0.0
      %1545 = vmatpush1.msra.mxu0 0.0
      %1546 = vmatprep.subr.mxu0 0.0
      %1547 = vmatpush1.msra.mxu0 0.0
      %1548 = vmatprep.subr.mxu0 0.0
      %1549 = vmatpush1.msra.mxu0 0.0
      %1550 = vmatprep.subr.mxu0 0.0
      %1551 = vmatpush1.msra.mxu0 0.0
      %1552 = vmatprep.subr.mxu0 0.0
      %1553 = vmatpush1.msra.mxu0 0.0
      %1554 = vmatprep.subr.mxu0 0.0
      %1555 = vmatpush1.msra.mxu0 0.0
      %1556 = vmatprep.subr.mxu0 0.0
      %1557 = vmatpush1.msra.mxu0 0.0
      %1558 = vmatprep.subr.mxu0 0.0
      %1559 = vmatpush1.msra.mxu0 0.0
      %1560 = vmatprep.subr.mxu0 0.0
      %1561 = vmatpush1.msra.mxu0 0.0
      %1562 = vmatprep.subr.mxu0 0.0
      %1563 = vmatpush1.msra.mxu0 0.0
      %1564 = vmatprep.mubr.f32.mxu0 0.0
      %v1565 = vand.u32 %v417, 4294901760
      %1566 = vmatmul.mubr.f32.gmra.mrb[0].mxu0 %v1565
      %v1567 = vpop.f32.mrb[0].mxu0
      %v1568 = vadd.f32 %v1305, %v1567
      %v1569 = vpop.f32.mrb[0].mxu0
      %1570 = vmatprep.mubr.f32.mxu0 0.0
      %v1571 = vand.u32 %v418, 4294901760
      %1572 = vmatmul.mubr.f32.gmra.mrb[0].mxu0 %v1571
      %v1573 = vpop.f32.mrb[0].mxu0
      %v1574 = vadd.f32 %v1313, %v1573
      %v1575 = vpop.f32.mrb[0].mxu0
      %1576 = vmatprep.mubr.f32.mxu0 0.0
      %v1577 = vand.u32 %v419, 4294901760
      %1578 = vmatmul.mubr.f32.gmra.mrb[0].mxu0 %v1577
      %v1579 = vpop.f32.mrb[0].mxu0
      %v1580 = vadd.f32 %v1321, %v1579
      %v1581 = vpop.f32.mrb[0].mxu0
      %1582 = vmatprep.mubr.f32.mxu0 0.0
      %v1583 = vand.u32 %v420, 4294901760
      %1584 = vmatmul.mubr.f32.gmra.mrb[0].mxu0 %v1583
      %v1585 = vpop.f32.mrb[0].mxu0
      %v1586 = vadd.f32 %v1329, %v1585
      %v1587 = vpop.f32.mrb[0].mxu0
      %1588 = vmatprep.mubr.f32.mxu0 0.0
      %v1589 = vand.u32 %v421, 4294901760
      %1590 = vmatmul.mubr.f32.gmra.mrb[0].mxu0 %v1589
      %v1591 = vpop.f32.mrb[0].mxu0
      %v1592 = vadd.f32 %v1337, %v1591
      %v1593 = vpop.f32.mrb[0].mxu0
      %1594 = vmatprep.mubr.f32.mxu0 0.0
      %v1595 = vand.u32 %v422, 4294901760
      %1596 = vmatmul.mubr.f32.gmra.mrb[0].mxu0 %v1595
      %v1597 = vpop.f32.mrb[0].mxu0
      %v1598 = vadd.f32 %v1345, %v1597
      %v1599 = vpop.f32.mrb[0].mxu0
      %1600 = vmatprep.mubr.f32.mxu0 0.0
      %v1601 = vand.u32 %v423, 4294901760
      %1602 = vmatmul.mubr.f32.gmra.mrb[0].mxu0 %v1601
      %v1603 = vpop.f32.mrb[0].mxu0
      %v1604 = vadd.f32 %v1353, %v1603
      %v1605 = vpop.f32.mrb[0].mxu0
      %1606 = vmatprep.mubr.f32.mxu0 0.0
      %v1607 = vand.u32 %v424, 4294901760
      %1608 = vmatmul.mubr.f32.gmra.mrb[0].mxu0 %v1607
      %v1609 = vpop.f32.mrb[0].mxu0
      %v1610 = vadd.f32 %v1361, %v1609
      %v1611 = vpop.f32.mrb[0].mxu0
      %1612 = vmatprep.mubr.f32.mxu0 0.0
      %v1613 = vand.u32 %v425, 4294901760
      %1614 = vmatmul.mubr.f32.gmra.mrb[0].mxu0 %v1613
      %v1615 = vpop.f32.mrb[0].mxu0
      %v1616 = vadd.f32 %v1369, %v1615
      %v1617 = vpop.f32.mrb[0].mxu0
      %1618 = vmatprep.mubr.f32.mxu0 0.0
      %v1619 = vand.u32 %v426, 4294901760
      %1620 = vmatmul.mubr.f32.gmra.mrb[0].mxu0 %v1619
      %v1621 = vpop.f32.mrb[0].mxu0
      %v1622 = vadd.f32 %v1377, %v1621
      %v1623 = vpop.f32.mrb[0].mxu0
      %1624 = vmatprep.mubr.f32.mxu0 0.0
      %v1625 = vand.u32 %v427, 4294901760
      %1626 = vmatmul.mubr.f32.gmra.mrb[0].mxu0 %v1625
      %v1627 = vpop.f32.mrb[0].mxu0
      %v1628 = vadd.f32 %v1385, %v1627
      %v1629 = vpop.f32.mrb[0].mxu0
      %1630 = vmatprep.mubr.f32.mxu0 0.0
      %v1631 = vand.u32 %v428, 4294901760
      %1632 = vmatmul.mubr.f32.gmra.mrb[0].mxu0 %v1631
      %v1633 = vpop.f32.mrb[0].mxu0
      %v1634 = vadd.f32 %v1393, %v1633
      %v1635 = vpop.f32.mrb[0].mxu0
      %1636 = vmatprep.mubr.f32.mxu0 0.0
      %v1637 = vand.u32 %v429, 4294901760
      %1638 = vmatmul.mubr.f32.gmra.mrb[0].mxu0 %v1637
      %v1639 = vpop.f32.mrb[0].mxu0
      %v1640 = vadd.f32 %v1401, %v1639
      %v1641 = vpop.f32.mrb[0].mxu0
      %1642 = vmatprep.mubr.f32.mxu0 0.0
      %v1643 = vand.u32 %v430, 4294901760
      %1644 = vmatmul.mubr.f32.gmra.mrb[0].mxu0 %v1643
      %v1645 = vpop.f32.mrb[0].mxu0
      %v1646 = vadd.f32 %v1409, %v1645
      %v1647 = vpop.f32.mrb[0].mxu0
      %1648 = vmatprep.mubr.f32.mxu0 0.0
      %v1649 = vand.u32 %v431, 4294901760
      %1650 = vmatmul.mubr.f32.gmra.mrb[0].mxu0 %v1649
      %v1651 = vpop.f32.mrb[0].mxu0
      %v1652 = vadd.f32 %v1417, %v1651
      %v1653 = vpop.f32.mrb[0].mxu0
      %1654 = vmatprep.mubr.f32.mxu0 0.0
      %v1655 = vand.u32 %v432, 4294901760
      %1656 = vmatmul.mubr.f32.gmra.mrb[0].mxu0 %v1655
      %v1657 = vpop.f32.mrb[0].mxu0
      %v1658 = vadd.f32 %v1425, %v1657
      %v1659 = vpop.f32.mrb[0].mxu0
      %1660 = vmatprep.mubr.f32.mxu0 0.0
      %v1661 = vand.u32 %v433, 4294901760
      %1662 = vmatmul.mubr.f32.gmra.mrb[0].mxu0 %v1661
      %v1663 = vpop.f32.mrb[0].mxu0
      %v1664 = vadd.f32 %v1433, %v1663
      %v1665 = vpop.f32.mrb[0].mxu0
      %1666 = vmatprep.mubr.f32.mxu0 0.0
      %v1667 = vand.u32 %v434, 4294901760
      %1668 = vmatmul.mubr.f32.gmra.mrb[0].mxu0 %v1667
      %v1669 = vpop.f32.mrb[0].mxu0
      %v1670 = vadd.f32 %v1441, %v1669
      %v1671 = vpop.f32.mrb[0].mxu0
      %1672 = vmatprep.mubr.f32.mxu0 0.0
      %v1673 = vand.u32 %v435, 4294901760
      %1674 = vmatmul.mubr.f32.gmra.mrb[0].mxu0 %v1673
      %v1675 = vpop.f32.mrb[0].mxu0
      %v1676 = vadd.f32 %v1449, %v1675
      %v1677 = vpop.f32.mrb[0].mxu0
      %1678 = vdwg.mxu0
      %1679 = vmatprep.subr.mxu0 0.0
      %v1680 = vand.u32 %v436, 4294901760
      %1681 = vmatpush1.msra.mxu0 %v1680
      %1682 = vmatprep.subr.mxu0 0.0
      %v1683 = vand.u32 %v437, 4294901760
      %1684 = vmatpush1.msra.mxu0 %v1683
      %1685 = vmatprep.subr.mxu0 0.0
      %v1686 = vand.u32 %v438, 4294901760
      %1687 = vmatpush1.msra.mxu0 %v1686
      %1688 = vmatprep.subr.mxu0 0.0
      %v1689 = vand.u32 %v439, 4294901760
      %1690 = vmatpush1.msra.mxu0 %v1689
      %1691 = vmatprep.subr.mxu0 0.0
      %v1692 = vand.u32 %v440, 4294901760
      %1693 = vmatpush1.msra.mxu0 %v1692
      %1694 = vmatprep.subr.mxu0 0.0
      %v1695 = vand.u32 %v441, 4294901760
      %1696 = vmatpush1.msra.mxu0 %v1695
      %1697 = vmatprep.subr.mxu0 0.0
      %v1698 = vand.u32 %v442, 4294901760
      %1699 = vmatpush1.msra.mxu0 %v1698
      %1700 = vmatprep.subr.mxu0 0.0
      %v1701 = vand.u32 %v443, 4294901760
      %1702 = vmatpush1.msra.mxu0 %v1701
      %1703 = vmatprep.subr.mxu0 0.0
      %v1704 = vand.u32 %v444, 4294901760
      %1705 = vmatpush1.msra.mxu0 %v1704
      %1706 = vmatprep.subr.mxu0 0.0
      %v1707 = vand.u32 %v445, 4294901760
      %1708 = vmatpush1.msra.mxu0 %v1707
      %1709 = vmatprep.subr.mxu0 0.0
      %v1710 = vand.u32 %v446, 4294901760
      %1711 = vmatpush1.msra.mxu0 %v1710
      %1712 = vmatprep.subr.mxu0 0.0
      %v1713 = vand.u32 %v447, 4294901760
      %1714 = vmatpush1.msra.mxu0 %v1713
      %1715 = vmatprep.subr.mxu0 0.0
      %v1716 = vand.u32 %v448, 4294901760
      %1717 = vmatpush1.msra.mxu0 %v1716
      %1718 = vmatprep.subr.mxu0 0.0
      %v1719 = vand.u32 %v449, 4294901760
      %1720 = vmatpush1.msra.mxu0 %v1719
      %1721 = vmatprep.subr.mxu0 0.0
      %v1722 = vand.u32 %v450, 4294901760
      %1723 = vmatpush1.msra.mxu0 %v1722
      %1724 = vmatprep.subr.mxu0 0.0
      %v1725 = vand.u32 %v451, 4294901760
      %1726 = vmatpush1.msra.mxu0 %v1725
      %1727 = vmatprep.subr.mxu0 0.0
      %1728 = vmatpush1.msra.mxu0 0.0
      %1729 = vmatprep.subr.mxu0 0.0
      %1730 = vmatpush1.msra.mxu0 0.0
      %1731 = vmatprep.subr.mxu0 0.0
      %1732 = vmatpush1.msra.mxu0 0.0
      %1733 = vmatprep.subr.mxu0 0.0
      %1734 = vmatpush1.msra.mxu0 0.0
      %1735 = vmatprep.subr.mxu0 0.0
      %1736 = vmatpush1.msra.mxu0 0.0
      %1737 = vmatprep.subr.mxu0 0.0
      %1738 = vmatpush1.msra.mxu0 0.0
      %1739 = vmatprep.subr.mxu0 0.0
      %1740 = vmatpush1.msra.mxu0 0.0
      %1741 = vmatprep.subr.mxu0 0.0
      %1742 = vmatpush1.msra.mxu0 0.0
      %1743 = vmatprep.subr.mxu0 0.0
      %1744 = vmatpush1.msra.mxu0 0.0
      %1745 = vmatprep.subr.mxu0 0.0
      %1746 = vmatpush1.msra.mxu0 0.0
      %1747 = vmatprep.subr.mxu0 0.0
      %1748 = vmatpush1.msra.mxu0 0.0
      %1749 = vmatprep.subr.mxu0 0.0
      %1750 = vmatpush1.msra.mxu0 0.0
      %1751 = vmatprep.subr.mxu0 0.0
      %1752 = vmatpush1.msra.mxu0 0.0
      %1753 = vmatprep.subr.mxu0 0.0
      %1754 = vmatpush1.msra.mxu0 0.0
      %1755 = vmatprep.subr.mxu0 0.0
      %1756 = vmatpush1.msra.mxu0 0.0
      %1757 = vmatprep.subr.mxu0 0.0
      %1758 = vmatpush1.msra.mxu0 0.0
      %1759 = vmatprep.mubr.f32.mxu0 0.0
      %v1760 = vand.u32 %v417, 4294901760
      %1761 = vmatmul.mubr.f32.gmra.mrb[0].mxu0 %v1760
      %v1762 = vpop.f32.mrb[0].mxu0
      %v1763 = vadd.f32 %v1568, %v1762
      %v1764 = vpop.f32.mrb[0].mxu0
      %1765 = vmatprep.mubr.f32.mxu0 0.0
      %v1766 = vand.u32 %v418, 4294901760
      %1767 = vmatmul.mubr.f32.gmra.mrb[0].mxu0 %v1766
      %v1768 = vpop.f32.mrb[0].mxu0
      %v1769 = vadd.f32 %v1574, %v1768
      %v1770 = vpop.f32.mrb[0].mxu0
      %1771 = vmatprep.mubr.f32.mxu0 0.0
      %v1772 = vand.u32 %v419, 4294901760
      %1773 = vmatmul.mubr.f32.gmra.mrb[0].mxu0 %v1772
      %v1774 = vpop.f32.mrb[0].mxu0
      %v1775 = vadd.f32 %v1580, %v1774
      %v1776 = vpop.f32.mrb[0].mxu0
      %1777 = vmatprep.mubr.f32.mxu0 0.0
      %v1778 = vand.u32 %v420, 4294901760
      %1779 = vmatmul.mubr.f32.gmra.mrb[0].mxu0 %v1778
      %v1780 = vpop.f32.mrb[0].mxu0
      %v1781 = vadd.f32 %v1586, %v1780
      %v1782 = vpop.f32.mrb[0].mxu0
      %1783 = vmatprep.mubr.f32.mxu0 0.0
      %v1784 = vand.u32 %v421, 4294901760
      %1785 = vmatmul.mubr.f32.gmra.mrb[0].mxu0 %v1784
      %v1786 = vpop.f32.mrb[0].mxu0
      %v1787 = vadd.f32 %v1592, %v1786
      %v1788 = vpop.f32.mrb[0].mxu0
      %1789 = vmatprep.mubr.f32.mxu0 0.0
      %v1790 = vand.u32 %v422, 4294901760
      %1791 = vmatmul.mubr.f32.gmra.mrb[0].mxu0 %v1790
      %v1792 = vpop.f32.mrb[0].mxu0
      %v1793 = vadd.f32 %v1598, %v1792
      %v1794 = vpop.f32.mrb[0].mxu0
      %1795 = vmatprep.mubr.f32.mxu0 0.0
      %v1796 = vand.u32 %v423, 4294901760
      %1797 = vmatmul.mubr.f32.gmra.mrb[0].mxu0 %v1796
      %v1798 = vpop.f32.mrb[0].mxu0
      %v1799 = vadd.f32 %v1604, %v1798
      %v1800 = vpop.f32.mrb[0].mxu0
      %1801 = vmatprep.mubr.f32.mxu0 0.0
      %v1802 = vand.u32 %v424, 4294901760
      %1803 = vmatmul.mubr.f32.gmra.mrb[0].mxu0 %v1802
      %v1804 = vpop.f32.mrb[0].mxu0
      %v1805 = vadd.f32 %v1610, %v1804
      %v1806 = vpop.f32.mrb[0].mxu0
      %1807 = vmatprep.mubr.f32.mxu0 0.0
      %v1808 = vand.u32 %v425, 4294901760
      %1809 = vmatmul.mubr.f32.gmra.mrb[0].mxu0 %v1808
      %v1810 = vpop.f32.mrb[0].mxu0
      %v1811 = vadd.f32 %v1616, %v1810
      %v1812 = vpop.f32.mrb[0].mxu0
      %1813 = vmatprep.mubr.f32.mxu0 0.0
      %v1814 = vand.u32 %v426, 4294901760
      %1815 = vmatmul.mubr.f32.gmra.mrb[0].mxu0 %v1814
      %v1816 = vpop.f32.mrb[0].mxu0
      %v1817 = vadd.f32 %v1622, %v1816
      %v1818 = vpop.f32.mrb[0].mxu0
      %1819 = vmatprep.mubr.f32.mxu0 0.0
      %v1820 = vand.u32 %v427, 4294901760
      %1821 = vmatmul.mubr.f32.gmra.mrb[0].mxu0 %v1820
      %v1822 = vpop.f32.mrb[0].mxu0
      %v1823 = vadd.f32 %v1628, %v1822
      %v1824 = vpop.f32.mrb[0].mxu0
      %1825 = vmatprep.mubr.f32.mxu0 0.0
      %v1826 = vand.u32 %v428, 4294901760
      %1827 = vmatmul.mubr.f32.gmra.mrb[0].mxu0 %v1826
      %v1828 = vpop.f32.mrb[0].mxu0
      %v1829 = vadd.f32 %v1634, %v1828
      %v1830 = vpop.f32.mrb[0].mxu0
      %1831 = vmatprep.mubr.f32.mxu0 0.0
      %v1832 = vand.u32 %v429, 4294901760
      %1833 = vmatmul.mubr.f32.gmra.mrb[0].mxu0 %v1832
      %v1834 = vpop.f32.mrb[0].mxu0
      %v1835 = vadd.f32 %v1640, %v1834
      %v1836 = vpop.f32.mrb[0].mxu0
      %1837 = vmatprep.mubr.f32.mxu0 0.0
      %v1838 = vand.u32 %v430, 4294901760
      %1839 = vmatmul.mubr.f32.gmra.mrb[0].mxu0 %v1838
      %v1840 = vpop.f32.mrb[0].mxu0
      %v1841 = vadd.f32 %v1646, %v1840
      %v1842 = vpop.f32.mrb[0].mxu0
      %1843 = vmatprep.mubr.f32.mxu0 0.0
      %v1844 = vand.u32 %v431, 4294901760
      %1845 = vmatmul.mubr.f32.gmra.mrb[0].mxu0 %v1844
      %v1846 = vpop.f32.mrb[0].mxu0
      %v1847 = vadd.f32 %v1652, %v1846
      %v1848 = vpop.f32.mrb[0].mxu0
      %1849 = vmatprep.mubr.f32.mxu0 0.0
      %v1850 = vand.u32 %v432, 4294901760
      %1851 = vmatmul.mubr.f32.gmra.mrb[0].mxu0 %v1850
      %v1852 = vpop.f32.mrb[0].mxu0
      %v1853 = vadd.f32 %v1658, %v1852
      %v1854 = vpop.f32.mrb[0].mxu0
      %1855 = vmatprep.mubr.f32.mxu0 0.0
      %v1856 = vand.u32 %v433, 4294901760
      %1857 = vmatmul.mubr.f32.gmra.mrb[0].mxu0 %v1856
      %v1858 = vpop.f32.mrb[0].mxu0
      %v1859 = vadd.f32 %v1664, %v1858
      %v1860 = vpop.f32.mrb[0].mxu0
      %1861 = vmatprep.mubr.f32.mxu0 0.0
      %v1862 = vand.u32 %v434, 4294901760
      %1863 = vmatmul.mubr.f32.gmra.mrb[0].mxu0 %v1862
      %v1864 = vpop.f32.mrb[0].mxu0
      %v1865 = vadd.f32 %v1670, %v1864
      %v1866 = vpop.f32.mrb[0].mxu0
      %1867 = vmatprep.mubr.f32.mxu0 0.0
      %v1868 = vand.u32 %v435, 4294901760
      %1869 = vmatmul.mubr.f32.gmra.mrb[0].mxu0 %v1868
      %v1870 = vpop.f32.mrb[0].mxu0
      %v1871 = vadd.f32 %v1676, %v1870
      %v1872 = vpop.f32.mrb[0].mxu0
      %1873 = vdwg.mxu0
      %vm1874 = vcmp.ge.f32.partialorder %v1763, 0.0
      %vm1875 = vcmp.ge.f32.partialorder %v1769, 0.0
      %vm1876 = vcmp.ge.f32.partialorder %v1775, 0.0
      %vm1877 = vcmp.ge.f32.partialorder %v1781, 0.0
      %vm1878 = vcmp.ge.f32.partialorder %v1787, 0.0
      %vm1879 = vcmp.ge.f32.partialorder %v1793, 0.0
      %vm1880 = vcmp.ge.f32.partialorder %v1799, 0.0
      %vm1881 = vcmp.ge.f32.partialorder %v1805, 0.0
      %vm1882 = vcmp.ge.f32.partialorder %v1811, 0.0
      %vm1883 = vcmp.ge.f32.partialorder %v1817, 0.0
      %vm1884 = vcmp.ge.f32.partialorder %v1823, 0.0
      %vm1885 = vcmp.ge.f32.partialorder %v1829, 0.0
      %vm1886 = vcmp.ge.f32.partialorder %v1835, 0.0
      %vm1887 = vcmp.ge.f32.partialorder %v1841, 0.0
      %vm1888 = vcmp.ge.f32.partialorder %v1847, 0.0
      %vm1889 = vcmp.ge.f32.partialorder %v1853, 0.0
      %vm1890 = vcmp.ge.f32.partialorder %v1859, 0.0
      %vm1891 = vcmp.ge.f32.partialorder %v1865, 0.0
      %vm1892 = vcmp.ge.f32.partialorder %v1871, 0.0
      %v1893 = vmul.f32 %v1763, 0.01
      %v1894 = vmul.f32 %v1769, 0.01
      %v1895 = vmul.f32 %v1775, 0.01
      %v1896 = vmul.f32 %v1781, 0.01
      %v1897 = vmul.f32 %v1787, 0.01
      %v1898 = vmul.f32 %v1793, 0.01
      %v1899 = vmul.f32 %v1799, 0.01
      %v1900 = vmul.f32 %v1805, 0.01
      %v1901 = vmul.f32 %v1811, 0.01
      %v1902 = vmul.f32 %v1817, 0.01
      %v1903 = vmul.f32 %v1823, 0.01
      %v1904 = vmul.f32 %v1829, 0.01
      %v1905 = vmul.f32 %v1835, 0.01
      %v1906 = vmul.f32 %v1841, 0.01
      %v1907 = vmul.f32 %v1847, 0.01
      %v1908 = vmul.f32 %v1853, 0.01
      %v1909 = vmul.f32 %v1859, 0.01
      %v1910 = vmul.f32 %v1865, 0.01
      %v1911 = vmul.f32 %v1871, 0.01
      %v1912 = vsel %vm1874, %v1763, %v1893
      %v1913 = vsel %vm1875, %v1769, %v1894
      %v1914 = vsel %vm1876, %v1775, %v1895
      %v1915 = vsel %vm1877, %v1781, %v1896
      %v1916 = vsel %vm1878, %v1787, %v1897
      %v1917 = vsel %vm1879, %v1793, %v1898
      %v1918 = vsel %vm1880, %v1799, %v1899
      %v1919 = vsel %vm1881, %v1805, %v1900
      %v1920 = vsel %vm1882, %v1811, %v1901
      %v1921 = vsel %vm1883, %v1817, %v1902
      %v1922 = vsel %vm1884, %v1823, %v1903
      %v1923 = vsel %vm1885, %v1829, %v1904
      %v1924 = vsel %vm1886, %v1835, %v1905
      %v1925 = vsel %vm1887, %v1841, %v1906
      %v1926 = vsel %vm1888, %v1847, %v1907
      %v1927 = vsel %vm1889, %v1853, %v1908
      %v1928 = vsel %vm1890, %v1859, %v1909
      %v1929 = vsel %vm1891, %v1865, %v1910
      %v1930 = vsel %vm1892, %v1871, %v1911
      %v1931 = vld [vmem:[%s3] sm:$0xff]
      %v1932 = vld [vmem:[%s3 + $0x8] sm:$0xff]
      %v1933 = vld [vmem:[%s3 + $0x10] sm:$0xff]
      %v1934 = vld [vmem:[%s3 + $0x18] sm:$0xff]
      %v1935 = vld [vmem:[%s4] sm:$0x1]
      %v1937 = vlaneseq
      %v1938 = vshrl.u32 %v1937, 7
      %v1939 = vsub.s32 0, %v1938
      %v1940 = vrot.slane %v1935, %v1939
      %vm1942 = vcmask 261120
      %v1944 = vsel %vm1942, %v1912, 0
      %v1947 = vsel %vm1942, %v1913, 0
      %v1950 = vsel %vm1942, %v1914, 0
      %v1953 = vsel %vm1942, %v1915, 0
      %v1956 = vsel %vm1942, %v1916, 0
      %v1959 = vsel %vm1942, %v1917, 0
      %v1962 = vsel %vm1942, %v1918, 0
      %v1965 = vsel %vm1942, %v1919, 0
      %v1968 = vsel %vm1942, %v1920, 0
      %v1971 = vsel %vm1942, %v1921, 0
      %v1974 = vsel %vm1942, %v1922, 0
      %v1977 = vsel %vm1942, %v1923, 0
      %v1980 = vsel %vm1942, %v1924, 0
      %v1983 = vsel %vm1942, %v1925, 0
      %v1986 = vsel %vm1942, %v1926, 0
      %v1989 = vsel %vm1942, %v1927, 0
      %v1992 = vsel %vm1942, %v1928, 0
      %v1995 = vsel %vm1942, %v1929, 0
      %v1998 = vsel %vm1942, %v1930, 0
      %2000 = vmatprep.subr.mxu0 0.0
      %v2001 = vand.u32 %v1931, 4294901760
      %2002 = vmatpush1.msra.mxu0 %v2001
      %2003 = vmatprep.subr.mxu0 0.0
      %v2004 = vand.u32 %v1932, 4294901760
      %2005 = vmatpush1.msra.mxu0 %v2004
      %2006 = vmatprep.subr.mxu0 0.0
      %v2007 = vand.u32 %v1933, 4294901760
      %2008 = vmatpush1.msra.mxu0 %v2007
      %2009 = vmatprep.subr.mxu0 0.0
      %v2010 = vand.u32 %v1934, 4294901760
      %2011 = vmatpush1.msra.mxu0 %v2010
      %2012 = vmatprep.subr.mxu0 0.0
      %2013 = vmatpush1.msra.mxu0 0.0
      %2014 = vmatprep.subr.mxu0 0.0
      %2015 = vmatpush1.msra.mxu0 0.0
      %2016 = vmatprep.subr.mxu0 0.0
      %2017 = vmatpush1.msra.mxu0 0.0
      %2018 = vmatprep.subr.mxu0 0.0
      %2019 = vmatpush1.msra.mxu0 0.0
      %2020 = vmatprep.subr.mxu0 0.0
      %2021 = vmatpush1.msra.mxu0 0.0
      %2022 = vmatprep.subr.mxu0 0.0
      %2023 = vmatpush1.msra.mxu0 0.0
      %2024 = vmatprep.subr.mxu0 0.0
      %2025 = vmatpush1.msra.mxu0 0.0
      %2026 = vmatprep.subr.mxu0 0.0
      %2027 = vmatpush1.msra.mxu0 0.0
      %2028 = vmatprep.subr.mxu0 0.0
      %2029 = vmatpush1.msra.mxu0 0.0
      %2030 = vmatprep.subr.mxu0 0.0
      %2031 = vmatpush1.msra.mxu0 0.0
      %2032 = vmatprep.subr.mxu0 0.0
      %2033 = vmatpush1.msra.mxu0 0.0
      %2034 = vmatprep.subr.mxu0 0.0
      %2035 = vmatpush1.msra.mxu0 0.0
      %2036 = vmatprep.subr.mxu0 0.0
      %2037 = vmatpush1.msra.mxu0 0.0
      %2038 = vmatprep.subr.mxu0 0.0
      %2039 = vmatpush1.msra.mxu0 0.0
      %2040 = vmatprep.subr.mxu0 0.0
      %2041 = vmatpush1.msra.mxu0 0.0
      %2042 = vmatprep.subr.mxu0 0.0
      %2043 = vmatpush1.msra.mxu0 0.0
      %2044 = vmatprep.subr.mxu0 0.0
      %2045 = vmatpush1.msra.mxu0 0.0
      %2046 = vmatprep.subr.mxu0 0.0
      %2047 = vmatpush1.msra.mxu0 0.0
      %2048 = vmatprep.subr.mxu0 0.0
      %2049 = vmatpush1.msra.mxu0 0.0
      %2050 = vmatprep.subr.mxu0 0.0
      %2051 = vmatpush1.msra.mxu0 0.0
      %2052 = vmatprep.subr.mxu0 0.0
      %2053 = vmatpush1.msra.mxu0 0.0
      %2054 = vmatprep.subr.mxu0 0.0
      %2055 = vmatpush1.msra.mxu0 0.0
      %2056 = vmatprep.subr.mxu0 0.0
      %2057 = vmatpush1.msra.mxu0 0.0
      %2058 = vmatprep.subr.mxu0 0.0
      %2059 = vmatpush1.msra.mxu0 0.0
      %2060 = vmatprep.subr.mxu0 0.0
      %2061 = vmatpush1.msra.mxu0 0.0
      %2062 = vmatprep.subr.mxu0 0.0
      %2063 = vmatpush1.msra.mxu0 0.0
      %2064 = vmatprep.subr.mxu0 0.0
      %2065 = vmatpush1.msra.mxu0 0.0
      %2066 = vmatprep.subr.mxu0 0.0
      %2067 = vmatpush1.msra.mxu0 0.0
      %2068 = vmatprep.mubr.f32.mxu0 0.0
      %v2069 = vand.u32 %v1944, 4294901760
      %v2070 = vsub.f32 %v1944, %v2069
      %v2071 = vand.u32 %v2070, 4294901760
      %v2072 = vsub.f32 %v2070, %v2071
      %v2073 = vand.u32 %v2072, 4294901760
      %2074 = vmatmul.mubr.f32.gmra.mrb[0].mxu0 %v2073
      %v2075 = vpop.f32.mrb[0].mxu0
      %v2076 = vadd.f32 %v1940, %v2075
      %v2077 = vpop.f32.mrb[0].mxu0
      %2078 = vmatprep.mubr.f32.mxu0 0.0
      %v2079 = vand.u32 %v1947, 4294901760
      %v2080 = vsub.f32 %v1947, %v2079
      %v2081 = vand.u32 %v2080, 4294901760
      %v2082 = vsub.f32 %v2080, %v2081
      %v2083 = vand.u32 %v2082, 4294901760
      %2084 = vmatmul.mubr.f32.gmra.mrb[0].mxu0 %v2083
      %v2085 = vpop.f32.mrb[0].mxu0
      %v2086 = vadd.f32 %v1940, %v2085
      %v2087 = vpop.f32.mrb[0].mxu0
      %2088 = vmatprep.mubr.f32.mxu0 0.0
      %v2089 = vand.u32 %v1950, 4294901760
      %v2090 = vsub.f32 %v1950, %v2089
      %v2091 = vand.u32 %v2090, 4294901760
      %v2092 = vsub.f32 %v2090, %v2091
      %v2093 = vand.u32 %v2092, 4294901760
      %2094 = vmatmul.mubr.f32.gmra.mrb[0].mxu0 %v2093
      %v2095 = vpop.f32.mrb[0].mxu0
      %v2096 = vadd.f32 %v1940, %v2095
      %v2097 = vpop.f32.mrb[0].mxu0
      %2098 = vmatprep.mubr.f32.mxu0 0.0
      %v2099 = vand.u32 %v1953, 4294901760
      %v2100 = vsub.f32 %v1953, %v2099
      %v2101 = vand.u32 %v2100, 4294901760
      %v2102 = vsub.f32 %v2100, %v2101
      %v2103 = vand.u32 %v2102, 4294901760
      %2104 = vmatmul.mubr.f32.gmra.mrb[0].mxu0 %v2103
      %v2105 = vpop.f32.mrb[0].mxu0
      %v2106 = vadd.f32 %v1940, %v2105
      %v2107 = vpop.f32.mrb[0].mxu0
      %2108 = vmatprep.mubr.f32.mxu0 0.0
      %v2109 = vand.u32 %v1956, 4294901760
      %v2110 = vsub.f32 %v1956, %v2109
      %v2111 = vand.u32 %v2110, 4294901760
      %v2112 = vsub.f32 %v2110, %v2111
      %v2113 = vand.u32 %v2112, 4294901760
      %2114 = vmatmul.mubr.f32.gmra.mrb[0].mxu0 %v2113
      %v2115 = vpop.f32.mrb[0].mxu0
      %v2116 = vadd.f32 %v1940, %v2115
      %v2117 = vpop.f32.mrb[0].mxu0
      %2118 = vmatprep.mubr.f32.mxu0 0.0
      %v2119 = vand.u32 %v1959, 4294901760
      %v2120 = vsub.f32 %v1959, %v2119
      %v2121 = vand.u32 %v2120, 4294901760
      %v2122 = vsub.f32 %v2120, %v2121
      %v2123 = vand.u32 %v2122, 4294901760
      %2124 = vmatmul.mubr.f32.gmra.mrb[0].mxu0 %v2123
      %v2125 = vpop.f32.mrb[0].mxu0
      %v2126 = vadd.f32 %v1940, %v2125
      %v2127 = vpop.f32.mrb[0].mxu0
      %2128 = vmatprep.mubr.f32.mxu0 0.0
      %v2129 = vand.u32 %v1962, 4294901760
      %v2130 = vsub.f32 %v1962, %v2129
      %v2131 = vand.u32 %v2130, 4294901760
      %v2132 = vsub.f32 %v2130, %v2131
      %v2133 = vand.u32 %v2132, 4294901760
      %2134 = vmatmul.mubr.f32.gmra.mrb[0].mxu0 %v2133
      %v2135 = vpop.f32.mrb[0].mxu0
      %v2136 = vadd.f32 %v1940, %v2135
      %v2137 = vpop.f32.mrb[0].mxu0
      %2138 = vmatprep.mubr.f32.mxu0 0.0
      %v2139 = vand.u32 %v1965, 4294901760
      %v2140 = vsub.f32 %v1965, %v2139
      %v2141 = vand.u32 %v2140, 4294901760
      %v2142 = vsub.f32 %v2140, %v2141
      %v2143 = vand.u32 %v2142, 4294901760
      %2144 = vmatmul.mubr.f32.gmra.mrb[0].mxu0 %v2143
      %v2145 = vpop.f32.mrb[0].mxu0
      %v2146 = vadd.f32 %v1940, %v2145
      %v2147 = vpop.f32.mrb[0].mxu0
      %2148 = vmatprep.mubr.f32.mxu0 0.0
      %v2149 = vand.u32 %v1968, 4294901760
      %v2150 = vsub.f32 %v1968, %v2149
      %v2151 = vand.u32 %v2150, 4294901760
      %v2152 = vsub.f32 %v2150, %v2151
      %v2153 = vand.u32 %v2152, 4294901760
      %2154 = vmatmul.mubr.f32.gmra.mrb[0].mxu0 %v2153
      %v2155 = vpop.f32.mrb[0].mxu0
      %v2156 = vadd.f32 %v1940, %v2155
      %v2157 = vpop.f32.mrb[0].mxu0
      %2158 = vmatprep.mubr.f32.mxu0 0.0
      %v2159 = vand.u32 %v1971, 4294901760
      %v2160 = vsub.f32 %v1971, %v2159
      %v2161 = vand.u32 %v2160, 4294901760
      %v2162 = vsub.f32 %v2160, %v2161
      %v2163 = vand.u32 %v2162, 4294901760
      %2164 = vmatmul.mubr.f32.gmra.mrb[0].mxu0 %v2163
      %v2165 = vpop.f32.mrb[0].mxu0
      %v2166 = vadd.f32 %v1940, %v2165
      %v2167 = vpop.f32.mrb[0].mxu0
      %2168 = vmatprep.mubr.f32.mxu0 0.0
      %v2169 = vand.u32 %v1974, 4294901760
      %v2170 = vsub.f32 %v1974, %v2169
      %v2171 = vand.u32 %v2170, 4294901760
      %v2172 = vsub.f32 %v2170, %v2171
      %v2173 = vand.u32 %v2172, 4294901760
      %2174 = vmatmul.mubr.f32.gmra.mrb[0].mxu0 %v2173
      %v2175 = vpop.f32.mrb[0].mxu0
      %v2176 = vadd.f32 %v1940, %v2175
      %v2177 = vpop.f32.mrb[0].mxu0
      %2178 = vmatprep.mubr.f32.mxu0 0.0
      %v2179 = vand.u32 %v1977, 4294901760
      %v2180 = vsub.f32 %v1977, %v2179
      %v2181 = vand.u32 %v2180, 4294901760
      %v2182 = vsub.f32 %v2180, %v2181
      %v2183 = vand.u32 %v2182, 4294901760
      %2184 = vmatmul.mubr.f32.gmra.mrb[0].mxu0 %v2183
      %v2185 = vpop.f32.mrb[0].mxu0
      %v2186 = vadd.f32 %v1940, %v2185
      %v2187 = vpop.f32.mrb[0].mxu0
      %2188 = vmatprep.mubr.f32.mxu0 0.0
      %v2189 = vand.u32 %v1980, 4294901760
      %v2190 = vsub.f32 %v1980, %v2189
      %v2191 = vand.u32 %v2190, 4294901760
      %v2192 = vsub.f32 %v2190, %v2191
      %v2193 = vand.u32 %v2192, 4294901760
      %2194 = vmatmul.mubr.f32.gmra.mrb[0].mxu0 %v2193
      %v2195 = vpop.f32.mrb[0].mxu0
      %v2196 = vadd.f32 %v1940, %v2195
      %v2197 = vpop.f32.mrb[0].mxu0
      %2198 = vmatprep.mubr.f32.mxu0 0.0
      %v2199 = vand.u32 %v1983, 4294901760
      %v2200 = vsub.f32 %v1983, %v2199
      %v2201 = vand.u32 %v2200, 4294901760
      %v2202 = vsub.f32 %v2200, %v2201
      %v2203 = vand.u32 %v2202, 4294901760
      %2204 = vmatmul.mubr.f32.gmra.mrb[0].mxu0 %v2203
      %v2205 = vpop.f32.mrb[0].mxu0
      %v2206 = vadd.f32 %v1940, %v2205
      %v2207 = vpop.f32.mrb[0].mxu0
      %2208 = vmatprep.mubr.f32.mxu0 0.0
      %v2209 = vand.u32 %v1986, 4294901760
      %v2210 = vsub.f32 %v1986, %v2209
      %v2211 = vand.u32 %v2210, 4294901760
      %v2212 = vsub.f32 %v2210, %v2211
      %v2213 = vand.u32 %v2212, 4294901760
      %2214 = vmatmul.mubr.f32.gmra.mrb[0].mxu0 %v2213
      %v2215 = vpop.f32.mrb[0].mxu0
      %v2216 = vadd.f32 %v1940, %v2215
      %v2217 = vpop.f32.mrb[0].mxu0
      %2218 = vmatprep.mubr.f32.mxu0 0.0
      %v2219 = vand.u32 %v1989, 4294901760
      %v2220 = vsub.f32 %v1989, %v2219
      %v2221 = vand.u32 %v2220, 4294901760
      %v2222 = vsub.f32 %v2220, %v2221
      %v2223 = vand.u32 %v2222, 4294901760
      %2224 = vmatmul.mubr.f32.gmra.mrb[0].mxu0 %v2223
      %v2225 = vpop.f32.mrb[0].mxu0
      %v2226 = vadd.f32 %v1940, %v2225
      %v2227 = vpop.f32.mrb[0].mxu0
      %2228 = vmatprep.mubr.f32.mxu0 0.0
      %v2229 = vand.u32 %v1992, 4294901760
      %v2230 = vsub.f32 %v1992, %v2229
      %v2231 = vand.u32 %v2230, 4294901760
      %v2232 = vsub.f32 %v2230, %v2231
      %v2233 = vand.u32 %v2232, 4294901760
      %2234 = vmatmul.mubr.f32.gmra.mrb[0].mxu0 %v2233
      %v2235 = vpop.f32.mrb[0].mxu0
      %v2236 = vadd.f32 %v1940, %v2235
      %v2237 = vpop.f32.mrb[0].mxu0
      %2238 = vmatprep.mubr.f32.mxu0 0.0
      %v2239 = vand.u32 %v1995, 4294901760
      %v2240 = vsub.f32 %v1995, %v2239
      %v2241 = vand.u32 %v2240, 4294901760
      %v2242 = vsub.f32 %v2240, %v2241
      %v2243 = vand.u32 %v2242, 4294901760
      %2244 = vmatmul.mubr.f32.gmra.mrb[0].mxu0 %v2243
      %v2245 = vpop.f32.mrb[0].mxu0
      %v2246 = vadd.f32 %v1940, %v2245
      %v2247 = vpop.f32.mrb[0].mxu0
      %2248 = vmatprep.mubr.f32.mxu0 0.0
      %v2249 = vand.u32 %v1998, 4294901760
      %v2250 = vsub.f32 %v1998, %v2249
      %v2251 = vand.u32 %v2250, 4294901760
      %v2252 = vsub.f32 %v2250, %v2251
      %v2253 = vand.u32 %v2252, 4294901760
      %2254 = vmatmul.mubr.f32.gmra.mrb[0].mxu0 %v2253
      %v2255 = vpop.f32.mrb[0].mxu0
      %v2256 = vadd.f32 %v1940, %v2255
      %v2257 = vpop.f32.mrb[0].mxu0
      %2258 = vdwg.mxu0
      %2259 = vmatprep.subr.mxu0 0.0
      %v2260 = vand.u32 %v1931, 4294901760
      %v2261 = vsub.f32 %v1931, %v2260
      %v2262 = vand.u32 %v2261, 4294901760
      %v2263 = vsub.f32 %v2261, %v2262
      %v2264 = vand.u32 %v2263, 4294901760
      %2265 = vmatpush1.msra.mxu0 %v2264
      %2266 = vmatprep.subr.mxu0 0.0
      %v2267 = vand.u32 %v1932, 4294901760
      %v2268 = vsub.f32 %v1932, %v2267
      %v2269 = vand.u32 %v2268, 4294901760
      %v2270 = vsub.f32 %v2268, %v2269
      %v2271 = vand.u32 %v2270, 4294901760
      %2272 = vmatpush1.msra.mxu0 %v2271
      %2273 = vmatprep.subr.mxu0 0.0
      %v2274 = vand.u32 %v1933, 4294901760
      %v2275 = vsub.f32 %v1933, %v2274
      %v2276 = vand.u32 %v2275, 4294901760
      %v2277 = vsub.f32 %v2275, %v2276
      %v2278 = vand.u32 %v2277, 4294901760
      %2279 = vmatpush1.msra.mxu0 %v2278
      %2280 = vmatprep.subr.mxu0 0.0
      %v2281 = vand.u32 %v1934, 4294901760
      %v2282 = vsub.f32 %v1934, %v2281
      %v2283 = vand.u32 %v2282, 4294901760
      %v2284 = vsub.f32 %v2282, %v2283
      %v2285 = vand.u32 %v2284, 4294901760
      %2286 = vmatpush1.msra.mxu0 %v2285
      %2287 = vmatprep.subr.mxu0 0.0
      %2288 = vmatpush1.msra.mxu0 0.0
      %2289 = vmatprep.subr.mxu0 0.0
      %2290 = vmatpush1.msra.mxu0 0.0
      %2291 = vmatprep.subr.mxu0 0.0
      %2292 = vmatpush1.msra.mxu0 0.0
      %2293 = vmatprep.subr.mxu0 0.0
      %2294 = vmatpush1.msra.mxu0 0.0
      %2295 = vmatprep.subr.mxu0 0.0
      %2296 = vmatpush1.msra.mxu0 0.0
      %2297 = vmatprep.subr.mxu0 0.0
      %2298 = vmatpush1.msra.mxu0 0.0
      %2299 = vmatprep.subr.mxu0 0.0
      %2300 = vmatpush1.msra.mxu0 0.0
      %2301 = vmatprep.subr.mxu0 0.0
      %2302 = vmatpush1.msra.mxu0 0.0
      %2303 = vmatprep.subr.mxu0 0.0
      %2304 = vmatpush1.msra.mxu0 0.0
      %2305 = vmatprep.subr.mxu0 0.0
      %2306 = vmatpush1.msra.mxu0 0.0
      %2307 = vmatprep.subr.mxu0 0.0
      %2308 = vmatpush1.msra.mxu0 0.0
      %2309 = vmatprep.subr.mxu0 0.0
      %2310 = vmatpush1.msra.mxu0 0.0
      %2311 = vmatprep.subr.mxu0 0.0
      %2312 = vmatpush1.msra.mxu0 0.0
      %2313 = vmatprep.subr.mxu0 0.0
      %2314 = vmatpush1.msra.mxu0 0.0
      %2315 = vmatprep.subr.mxu0 0.0
      %2316 = vmatpush1.msra.mxu0 0.0
      %2317 = vmatprep.subr.mxu0 0.0
      %2318 = vmatpush1.msra.mxu0 0.0
      %2319 = vmatprep.subr.mxu0 0.0
      %2320 = vmatpush1.msra.mxu0 0.0
      %2321 = vmatprep.subr.mxu0 0.0
      %2322 = vmatpush1.msra.mxu0 0.0
      %2323 = vmatprep.subr.mxu0 0.0
      %2324 = vmatpush1.msra.mxu0 0.0
      %2325 = vmatprep.subr.mxu0 0.0
      %2326 = vmatpush1.msra.mxu0 0.0
      %2327 = vmatprep.subr.mxu0 0.0
      %2328 = vmatpush1.msra.mxu0 0.0
      %2329 = vmatprep.subr.mxu0 0.0
      %2330 = vmatpush1.msra.mxu0 0.0
      %2331 = vmatprep.subr.mxu0 0.0
      %2332 = vmatpush1.msra.mxu0 0.0
      %2333 = vmatprep.subr.mxu0 0.0
      %2334 = vmatpush1.msra.mxu0 0.0
      %2335 = vmatprep.subr.mxu0 0.0
      %2336 = vmatpush1.msra.mxu0 0.0
      %2337 = vmatprep.subr.mxu0 0.0
      %2338 = vmatpush1.msra.mxu0 0.0
      %2339 = vmatprep.subr.mxu0 0.0
      %2340 = vmatpush1.msra.mxu0 0.0
      %2341 = vmatprep.subr.mxu0 0.0
      %2342 = vmatpush1.msra.mxu0 0.0
      %2343 = vmatprep.mubr.f32.mxu0 0.0
      %v2344 = vand.u32 %v1944, 4294901760
      %2345 = vmatmul.mubr.f32.gmra.mrb[0].mxu0 %v2344
      %v2346 = vpop.f32.mrb[0].mxu0
      %v2347 = vadd.f32 %v2076, %v2346
      %v2348 = vpop.f32.mrb[0].mxu0
      %2349 = vmatprep.mubr.f32.mxu0 0.0
      %v2350 = vand.u32 %v1947, 4294901760
      %2351 = vmatmul.mubr.f32.gmra.mrb[0].mxu0 %v2350
      %v2352 = vpop.f32.mrb[0].mxu0
      %v2353 = vadd.f32 %v2086, %v2352
      %v2354 = vpop.f32.mrb[0].mxu0
      %2355 = vmatprep.mubr.f32.mxu0 0.0
      %v2356 = vand.u32 %v1950, 4294901760
      %2357 = vmatmul.mubr.f32.gmra.mrb[0].mxu0 %v2356
      %v2358 = vpop.f32.mrb[0].mxu0
      %v2359 = vadd.f32 %v2096, %v2358
      %v2360 = vpop.f32.mrb[0].mxu0
      %2361 = vmatprep.mubr.f32.mxu0 0.0
      %v2362 = vand.u32 %v1953, 4294901760
      %2363 = vmatmul.mubr.f32.gmra.mrb[0].mxu0 %v2362
      %v2364 = vpop.f32.mrb[0].mxu0
      %v2365 = vadd.f32 %v2106, %v2364
      %v2366 = vpop.f32.mrb[0].mxu0
      %2367 = vmatprep.mubr.f32.mxu0 0.0
      %v2368 = vand.u32 %v1956, 4294901760
      %2369 = vmatmul.mubr.f32.gmra.mrb[0].mxu0 %v2368
      %v2370 = vpop.f32.mrb[0].mxu0
      %v2371 = vadd.f32 %v2116, %v2370
      %v2372 = vpop.f32.mrb[0].mxu0
      %2373 = vmatprep.mubr.f32.mxu0 0.0
      %v2374 = vand.u32 %v1959, 4294901760
      %2375 = vmatmul.mubr.f32.gmra.mrb[0].mxu0 %v2374
      %v2376 = vpop.f32.mrb[0].mxu0
      %v2377 = vadd.f32 %v2126, %v2376
      %v2378 = vpop.f32.mrb[0].mxu0
      %2379 = vmatprep.mubr.f32.mxu0 0.0
      %v2380 = vand.u32 %v1962, 4294901760
      %2381 = vmatmul.mubr.f32.gmra.mrb[0].mxu0 %v2380
      %v2382 = vpop.f32.mrb[0].mxu0
      %v2383 = vadd.f32 %v2136, %v2382
      %v2384 = vpop.f32.mrb[0].mxu0
      %2385 = vmatprep.mubr.f32.mxu0 0.0
      %v2386 = vand.u32 %v1965, 4294901760
      %2387 = vmatmul.mubr.f32.gmra.mrb[0].mxu0 %v2386
      %v2388 = vpop.f32.mrb[0].mxu0
      %v2389 = vadd.f32 %v2146, %v2388
      %v2390 = vpop.f32.mrb[0].mxu0
      %2391 = vmatprep.mubr.f32.mxu0 0.0
      %v2392 = vand.u32 %v1968, 4294901760
      %2393 = vmatmul.mubr.f32.gmra.mrb[0].mxu0 %v2392
      %v2394 = vpop.f32.mrb[0].mxu0
      %v2395 = vadd.f32 %v2156, %v2394
      %v2396 = vpop.f32.mrb[0].mxu0
      %2397 = vmatprep.mubr.f32.mxu0 0.0
      %v2398 = vand.u32 %v1971, 4294901760
      %2399 = vmatmul.mubr.f32.gmra.mrb[0].mxu0 %v2398
      %v2400 = vpop.f32.mrb[0].mxu0
      %v2401 = vadd.f32 %v2166, %v2400
      %v2402 = vpop.f32.mrb[0].mxu0
      %2403 = vmatprep.mubr.f32.mxu0 0.0
      %v2404 = vand.u32 %v1974, 4294901760
      %2405 = vmatmul.mubr.f32.gmra.mrb[0].mxu0 %v2404
      %v2406 = vpop.f32.mrb[0].mxu0
      %v2407 = vadd.f32 %v2176, %v2406
      %v2408 = vpop.f32.mrb[0].mxu0
      %2409 = vmatprep.mubr.f32.mxu0 0.0
      %v2410 = vand.u32 %v1977, 4294901760
      %2411 = vmatmul.mubr.f32.gmra.mrb[0].mxu0 %v2410
      %v2412 = vpop.f32.mrb[0].mxu0
      %v2413 = vadd.f32 %v2186, %v2412
      %v2414 = vpop.f32.mrb[0].mxu0
      %2415 = vmatprep.mubr.f32.mxu0 0.0
      %v2416 = vand.u32 %v1980, 4294901760
      %2417 = vmatmul.mubr.f32.gmra.mrb[0].mxu0 %v2416
      %v2418 = vpop.f32.mrb[0].mxu0
      %v2419 = vadd.f32 %v2196, %v2418
      %v2420 = vpop.f32.mrb[0].mxu0
      %2421 = vmatprep.mubr.f32.mxu0 0.0
      %v2422 = vand.u32 %v1983, 4294901760
      %2423 = vmatmul.mubr.f32.gmra.mrb[0].mxu0 %v2422
      %v2424 = vpop.f32.mrb[0].mxu0
      %v2425 = vadd.f32 %v2206, %v2424
      %v2426 = vpop.f32.mrb[0].mxu0
      %2427 = vmatprep.mubr.f32.mxu0 0.0
      %v2428 = vand.u32 %v1986, 4294901760
      %2429 = vmatmul.mubr.f32.gmra.mrb[0].mxu0 %v2428
      %v2430 = vpop.f32.mrb[0].mxu0
      %v2431 = vadd.f32 %v2216, %v2430
      %v2432 = vpop.f32.mrb[0].mxu0
      %2433 = vmatprep.mubr.f32.mxu0 0.0
      %v2434 = vand.u32 %v1989, 4294901760
      %2435 = vmatmul.mubr.f32.gmra.mrb[0].mxu0 %v2434
      %v2436 = vpop.f32.mrb[0].mxu0
      %v2437 = vadd.f32 %v2226, %v2436
      %v2438 = vpop.f32.mrb[0].mxu0
      %2439 = vmatprep.mubr.f32.mxu0 0.0
      %v2440 = vand.u32 %v1992, 4294901760
      %2441 = vmatmul.mubr.f32.gmra.mrb[0].mxu0 %v2440
      %v2442 = vpop.f32.mrb[0].mxu0
      %v2443 = vadd.f32 %v2236, %v2442
      %v2444 = vpop.f32.mrb[0].mxu0
      %2445 = vmatprep.mubr.f32.mxu0 0.0
      %v2446 = vand.u32 %v1995, 4294901760
      %2447 = vmatmul.mubr.f32.gmra.mrb[0].mxu0 %v2446
      %v2448 = vpop.f32.mrb[0].mxu0
      %v2449 = vadd.f32 %v2246, %v2448
      %v2450 = vpop.f32.mrb[0].mxu0
      %2451 = vmatprep.mubr.f32.mxu0 0.0
      %v2452 = vand.u32 %v1998, 4294901760
      %2453 = vmatmul.mubr.f32.gmra.mrb[0].mxu0 %v2452
      %v2454 = vpop.f32.mrb[0].mxu0
      %v2455 = vadd.f32 %v2256, %v2454
      %v2456 = vpop.f32.mrb[0].mxu0
      %2457 = vdwg.mxu0
      %2458 = vmatprep.subr.mxu0 0.0
      %v2459 = vand.u32 %v1931, 4294901760
      %v2460 = vsub.f32 %v1931, %v2459
      %2461 = vmatpush1.msra.mxu0 %v2460
      %2462 = vmatprep.subr.mxu0 0.0
      %v2463 = vand.u32 %v1932, 4294901760
      %v2464 = vsub.f32 %v1932, %v2463
      %2465 = vmatpush1.msra.mxu0 %v2464
      %2466 = vmatprep.subr.mxu0 0.0
      %v2467 = vand.u32 %v1933, 4294901760
      %v2468 = vsub.f32 %v1933, %v2467
      %2469 = vmatpush1.msra.mxu0 %v2468
      %2470 = vmatprep.subr.mxu0 0.0
      %v2471 = vand.u32 %v1934, 4294901760
      %v2472 = vsub.f32 %v1934, %v2471
      %2473 = vmatpush1.msra.mxu0 %v2472
      %2474 = vmatprep.subr.mxu0 0.0
      %2475 = vmatpush1.msra.mxu0 0.0
      %2476 = vmatprep.subr.mxu0 0.0
      %2477 = vmatpush1.msra.mxu0 0.0
      %2478 = vmatprep.subr.mxu0 0.0
      %2479 = vmatpush1.msra.mxu0 0.0
      %2480 = vmatprep.subr.mxu0 0.0
      %2481 = vmatpush1.msra.mxu0 0.0
      %2482 = vmatprep.subr.mxu0 0.0
      %2483 = vmatpush1.msra.mxu0 0.0
      %2484 = vmatprep.subr.mxu0 0.0
      %2485 = vmatpush1.msra.mxu0 0.0
      %2486 = vmatprep.subr.mxu0 0.0
      %2487 = vmatpush1.msra.mxu0 0.0
      %2488 = vmatprep.subr.mxu0 0.0
      %2489 = vmatpush1.msra.mxu0 0.0
      %2490 = vmatprep.subr.mxu0 0.0
      %2491 = vmatpush1.msra.mxu0 0.0
      %2492 = vmatprep.subr.mxu0 0.0
      %2493 = vmatpush1.msra.mxu0 0.0
      %2494 = vmatprep.subr.mxu0 0.0
      %2495 = vmatpush1.msra.mxu0 0.0
      %2496 = vmatprep.subr.mxu0 0.0
      %2497 = vmatpush1.msra.mxu0 0.0
      %2498 = vmatprep.subr.mxu0 0.0
      %2499 = vmatpush1.msra.mxu0 0.0
      %2500 = vmatprep.subr.mxu0 0.0
      %2501 = vmatpush1.msra.mxu0 0.0
      %2502 = vmatprep.subr.mxu0 0.0
      %2503 = vmatpush1.msra.mxu0 0.0
      %2504 = vmatprep.subr.mxu0 0.0
      %2505 = vmatpush1.msra.mxu0 0.0
      %2506 = vmatprep.subr.mxu0 0.0
      %2507 = vmatpush1.msra.mxu0 0.0
      %2508 = vmatprep.subr.mxu0 0.0
      %2509 = vmatpush1.msra.mxu0 0.0
      %2510 = vmatprep.subr.mxu0 0.0
      %2511 = vmatpush1.msra.mxu0 0.0
      %2512 = vmatprep.subr.mxu0 0.0
      %2513 = vmatpush1.msra.mxu0 0.0
      %2514 = vmatprep.subr.mxu0 0.0
      %2515 = vmatpush1.msra.mxu0 0.0
      %2516 = vmatprep.subr.mxu0 0.0
      %2517 = vmatpush1.msra.mxu0 0.0
      %2518 = vmatprep.subr.mxu0 0.0
      %2519 = vmatpush1.msra.mxu0 0.0
      %2520 = vmatprep.subr.mxu0 0.0
      %2521 = vmatpush1.msra.mxu0 0.0
      %2522 = vmatprep.subr.mxu0 0.0
      %2523 = vmatpush1.msra.mxu0 0.0
      %2524 = vmatprep.subr.mxu0 0.0
      %2525 = vmatpush1.msra.mxu0 0.0
      %2526 = vmatprep.subr.mxu0 0.0
      %2527 = vmatpush1.msra.mxu0 0.0
      %2528 = vmatprep.subr.mxu0 0.0
      %2529 = vmatpush1.msra.mxu0 0.0
      %2530 = vmatprep.mubr.f32.mxu0 0.0
      %v2531 = vand.u32 %v1944, 4294901760
      %v2532 = vsub.f32 %v1944, %v2531
      %2533 = vmatmul.mubr.f32.gmra.mrb[0].mxu0 %v2532
      %v2534 = vpop.f32.mrb[0].mxu0
      %v2535 = vadd.f32 %v2347, %v2534
      %v2536 = vpop.f32.mrb[0].mxu0
      %2537 = vmatprep.mubr.f32.mxu0 0.0
      %v2538 = vand.u32 %v1947, 4294901760
      %v2539 = vsub.f32 %v1947, %v2538
      %2540 = vmatmul.mubr.f32.gmra.mrb[0].mxu0 %v2539
      %v2541 = vpop.f32.mrb[0].mxu0
      %v2542 = vadd.f32 %v2353, %v2541
      %v2543 = vpop.f32.mrb[0].mxu0
      %2544 = vmatprep.mubr.f32.mxu0 0.0
      %v2545 = vand.u32 %v1950, 4294901760
      %v2546 = vsub.f32 %v1950, %v2545
      %2547 = vmatmul.mubr.f32.gmra.mrb[0].mxu0 %v2546
      %v2548 = vpop.f32.mrb[0].mxu0
      %v2549 = vadd.f32 %v2359, %v2548
      %v2550 = vpop.f32.mrb[0].mxu0
      %2551 = vmatprep.mubr.f32.mxu0 0.0
      %v2552 = vand.u32 %v1953, 4294901760
      %v2553 = vsub.f32 %v1953, %v2552
      %2554 = vmatmul.mubr.f32.gmra.mrb[0].mxu0 %v2553
      %v2555 = vpop.f32.mrb[0].mxu0
      %v2556 = vadd.f32 %v2365, %v2555
      %v2557 = vpop.f32.mrb[0].mxu0
      %2558 = vmatprep.mubr.f32.mxu0 0.0
      %v2559 = vand.u32 %v1956, 4294901760
      %v2560 = vsub.f32 %v1956, %v2559
      %2561 = vmatmul.mubr.f32.gmra.mrb[0].mxu0 %v2560
      %v2562 = vpop.f32.mrb[0].mxu0
      %v2563 = vadd.f32 %v2371, %v2562
      %v2564 = vpop.f32.mrb[0].mxu0
      %2565 = vmatprep.mubr.f32.mxu0 0.0
      %v2566 = vand.u32 %v1959, 4294901760
      %v2567 = vsub.f32 %v1959, %v2566
      %2568 = vmatmul.mubr.f32.gmra.mrb[0].mxu0 %v2567
      %v2569 = vpop.f32.mrb[0].mxu0
      %v2570 = vadd.f32 %v2377, %v2569
      %v2571 = vpop.f32.mrb[0].mxu0
      %2572 = vmatprep.mubr.f32.mxu0 0.0
      %v2573 = vand.u32 %v1962, 4294901760
      %v2574 = vsub.f32 %v1962, %v2573
      %2575 = vmatmul.mubr.f32.gmra.mrb[0].mxu0 %v2574
      %v2576 = vpop.f32.mrb[0].mxu0
      %v2577 = vadd.f32 %v2383, %v2576
      %v2578 = vpop.f32.mrb[0].mxu0
      %2579 = vmatprep.mubr.f32.mxu0 0.0
      %v2580 = vand.u32 %v1965, 4294901760
      %v2581 = vsub.f32 %v1965, %v2580
      %2582 = vmatmul.mubr.f32.gmra.mrb[0].mxu0 %v2581
      %v2583 = vpop.f32.mrb[0].mxu0
      %v2584 = vadd.f32 %v2389, %v2583
      %v2585 = vpop.f32.mrb[0].mxu0
      %2586 = vmatprep.mubr.f32.mxu0 0.0
      %v2587 = vand.u32 %v1968, 4294901760
      %v2588 = vsub.f32 %v1968, %v2587
      %2589 = vmatmul.mubr.f32.gmra.mrb[0].mxu0 %v2588
      %v2590 = vpop.f32.mrb[0].mxu0
      %v2591 = vadd.f32 %v2395, %v2590
      %v2592 = vpop.f32.mrb[0].mxu0
      %2593 = vmatprep.mubr.f32.mxu0 0.0
      %v2594 = vand.u32 %v1971, 4294901760
      %v2595 = vsub.f32 %v1971, %v2594
      %2596 = vmatmul.mubr.f32.gmra.mrb[0].mxu0 %v2595
      %v2597 = vpop.f32.mrb[0].mxu0
      %v2598 = vadd.f32 %v2401, %v2597
      %v2599 = vpop.f32.mrb[0].mxu0
      %2600 = vmatprep.mubr.f32.mxu0 0.0
      %v2601 = vand.u32 %v1974, 4294901760
      %v2602 = vsub.f32 %v1974, %v2601
      %2603 = vmatmul.mubr.f32.gmra.mrb[0].mxu0 %v2602
      %v2604 = vpop.f32.mrb[0].mxu0
      %v2605 = vadd.f32 %v2407, %v2604
      %v2606 = vpop.f32.mrb[0].mxu0
      %2607 = vmatprep.mubr.f32.mxu0 0.0
      %v2608 = vand.u32 %v1977, 4294901760
      %v2609 = vsub.f32 %v1977, %v2608
      %2610 = vmatmul.mubr.f32.gmra.mrb[0].mxu0 %v2609
      %v2611 = vpop.f32.mrb[0].mxu0
      %v2612 = vadd.f32 %v2413, %v2611
      %v2613 = vpop.f32.mrb[0].mxu0
      %2614 = vmatprep.mubr.f32.mxu0 0.0
      %v2615 = vand.u32 %v1980, 4294901760
      %v2616 = vsub.f32 %v1980, %v2615
      %2617 = vmatmul.mubr.f32.gmra.mrb[0].mxu0 %v2616
      %v2618 = vpop.f32.mrb[0].mxu0
      %v2619 = vadd.f32 %v2419, %v2618
      %v2620 = vpop.f32.mrb[0].mxu0
      %2621 = vmatprep.mubr.f32.mxu0 0.0
      %v2622 = vand.u32 %v1983, 4294901760
      %v2623 = vsub.f32 %v1983, %v2622
      %2624 = vmatmul.mubr.f32.gmra.mrb[0].mxu0 %v2623
      %v2625 = vpop.f32.mrb[0].mxu0
      %v2626 = vadd.f32 %v2425, %v2625
      %v2627 = vpop.f32.mrb[0].mxu0
      %2628 = vmatprep.mubr.f32.mxu0 0.0
      %v2629 = vand.u32 %v1986, 4294901760
      %v2630 = vsub.f32 %v1986, %v2629
      %2631 = vmatmul.mubr.f32.gmra.mrb[0].mxu0 %v2630
      %v2632 = vpop.f32.mrb[0].mxu0
      %v2633 = vadd.f32 %v2431, %v2632
      %v2634 = vpop.f32.mrb[0].mxu0
      %2635 = vmatprep.mubr.f32.mxu0 0.0
      %v2636 = vand.u32 %v1989, 4294901760
      %v2637 = vsub.f32 %v1989, %v2636
      %2638 = vmatmul.mubr.f32.gmra.mrb[0].mxu0 %v2637
      %v2639 = vpop.f32.mrb[0].mxu0
      %v2640 = vadd.f32 %v2437, %v2639
      %v2641 = vpop.f32.mrb[0].mxu0
      %2642 = vmatprep.mubr.f32.mxu0 0.0
      %v2643 = vand.u32 %v1992, 4294901760
      %v2644 = vsub.f32 %v1992, %v2643
      %2645 = vmatmul.mubr.f32.gmra.mrb[0].mxu0 %v2644
      %v2646 = vpop.f32.mrb[0].mxu0
      %v2647 = vadd.f32 %v2443, %v2646
      %v2648 = vpop.f32.mrb[0].mxu0
      %2649 = vmatprep.mubr.f32.mxu0 0.0
      %v2650 = vand.u32 %v1995, 4294901760
      %v2651 = vsub.f32 %v1995, %v2650
      %2652 = vmatmul.mubr.f32.gmra.mrb[0].mxu0 %v2651
      %v2653 = vpop.f32.mrb[0].mxu0
      %v2654 = vadd.f32 %v2449, %v2653
      %v2655 = vpop.f32.mrb[0].mxu0
      %2656 = vmatprep.mubr.f32.mxu0 0.0
      %v2657 = vand.u32 %v1998, 4294901760
      %v2658 = vsub.f32 %v1998, %v2657
      %2659 = vmatmul.mubr.f32.gmra.mrb[0].mxu0 %v2658
      %v2660 = vpop.f32.mrb[0].mxu0
      %v2661 = vadd.f32 %v2455, %v2660
      %v2662 = vpop.f32.mrb[0].mxu0
      %2663 = vdwg.mxu0
      %2664 = vmatprep.subr.mxu0 0.0
      %v2665 = vand.u32 %v1931, 4294901760
      %2666 = vmatpush1.msra.mxu0 %v2665
      %2667 = vmatprep.subr.mxu0 0.0
      %v2668 = vand.u32 %v1932, 4294901760
      %2669 = vmatpush1.msra.mxu0 %v2668
      %2670 = vmatprep.subr.mxu0 0.0
      %v2671 = vand.u32 %v1933, 4294901760
      %2672 = vmatpush1.msra.mxu0 %v2671
      %2673 = vmatprep.subr.mxu0 0.0
      %v2674 = vand.u32 %v1934, 4294901760
      %2675 = vmatpush1.msra.mxu0 %v2674
      %2676 = vmatprep.subr.mxu0 0.0
      %2677 = vmatpush1.msra.mxu0 0.0
      %2678 = vmatprep.subr.mxu0 0.0
      %2679 = vmatpush1.msra.mxu0 0.0
      %2680 = vmatprep.subr.mxu0 0.0
      %2681 = vmatpush1.msra.mxu0 0.0
      %2682 = vmatprep.subr.mxu0 0.0
      %2683 = vmatpush1.msra.mxu0 0.0
      %2684 = vmatprep.subr.mxu0 0.0
      %2685 = vmatpush1.msra.mxu0 0.0
      %2686 = vmatprep.subr.mxu0 0.0
      %2687 = vmatpush1.msra.mxu0 0.0
      %2688 = vmatprep.subr.mxu0 0.0
      %2689 = vmatpush1.msra.mxu0 0.0
      %2690 = vmatprep.subr.mxu0 0.0
      %2691 = vmatpush1.msra.mxu0 0.0
      %2692 = vmatprep.subr.mxu0 0.0
      %2693 = vmatpush1.msra.mxu0 0.0
      %2694 = vmatprep.subr.mxu0 0.0
      %2695 = vmatpush1.msra.mxu0 0.0
      %2696 = vmatprep.subr.mxu0 0.0
      %2697 = vmatpush1.msra.mxu0 0.0
      %2698 = vmatprep.subr.mxu0 0.0
      %2699 = vmatpush1.msra.mxu0 0.0
      %2700 = vmatprep.subr.mxu0 0.0
      %2701 = vmatpush1.msra.mxu0 0.0
      %2702 = vmatprep.subr.mxu0 0.0
      %2703 = vmatpush1.msra.mxu0 0.0
      %2704 = vmatprep.subr.mxu0 0.0
      %2705 = vmatpush1.msra.mxu0 0.0
      %2706 = vmatprep.subr.mxu0 0.0
      %2707 = vmatpush1.msra.mxu0 0.0
      %2708 = vmatprep.subr.mxu0 0.0
      %2709 = vmatpush1.msra.mxu0 0.0
      %2710 = vmatprep.subr.mxu0 0.0
      %2711 = vmatpush1.msra.mxu0 0.0
      %2712 = vmatprep.subr.mxu0 0.0
      %2713 = vmatpush1.msra.mxu0 0.0
      %2714 = vmatprep.subr.mxu0 0.0
      %2715 = vmatpush1.msra.mxu0 0.0
      %2716 = vmatprep.subr.mxu0 0.0
      %2717 = vmatpush1.msra.mxu0 0.0
      %2718 = vmatprep.subr.mxu0 0.0
      %2719 = vmatpush1.msra.mxu0 0.0
      %2720 = vmatprep.subr.mxu0 0.0
      %2721 = vmatpush1.msra.mxu0 0.0
      %2722 = vmatprep.subr.mxu0 0.0
      %2723 = vmatpush1.msra.mxu0 0.0
      %2724 = vmatprep.subr.mxu0 0.0
      %2725 = vmatpush1.msra.mxu0 0.0
      %2726 = vmatprep.subr.mxu0 0.0
      %2727 = vmatpush1.msra.mxu0 0.0
      %2728 = vmatprep.subr.mxu0 0.0
      %2729 = vmatpush1.msra.mxu0 0.0
      %2730 = vmatprep.subr.mxu0 0.0
      %2731 = vmatpush1.msra.mxu0 0.0
      %2732 = vmatprep.mubr.f32.mxu0 0.0
      %v2733 = vand.u32 %v1944, 4294901760
      %v2734 = vsub.f32 %v1944, %v2733
      %v2735 = vand.u32 %v2734, 4294901760
      %2736 = vmatmul.mubr.f32.gmra.mrb[0].mxu0 %v2735
      %v2737 = vpop.f32.mrb[0].mxu0
      %v2738 = vadd.f32 %v2535, %v2737
      %v2739 = vpop.f32.mrb[0].mxu0
      %2740 = vmatprep.mubr.f32.mxu0 0.0
      %v2741 = vand.u32 %v1947, 4294901760
      %v2742 = vsub.f32 %v1947, %v2741
      %v2743 = vand.u32 %v2742, 4294901760
      %2744 = vmatmul.mubr.f32.gmra.mrb[0].mxu0 %v2743
      %v2745 = vpop.f32.mrb[0].mxu0
      %v2746 = vadd.f32 %v2542, %v2745
      %v2747 = vpop.f32.mrb[0].mxu0
      %2748 = vmatprep.mubr.f32.mxu0 0.0
      %v2749 = vand.u32 %v1950, 4294901760
      %v2750 = vsub.f32 %v1950, %v2749
      %v2751 = vand.u32 %v2750, 4294901760
      %2752 = vmatmul.mubr.f32.gmra.mrb[0].mxu0 %v2751
      %v2753 = vpop.f32.mrb[0].mxu0
      %v2754 = vadd.f32 %v2549, %v2753
      %v2755 = vpop.f32.mrb[0].mxu0
      %2756 = vmatprep.mubr.f32.mxu0 0.0
      %v2757 = vand.u32 %v1953, 4294901760
      %v2758 = vsub.f32 %v1953, %v2757
      %v2759 = vand.u32 %v2758, 4294901760
      %2760 = vmatmul.mubr.f32.gmra.mrb[0].mxu0 %v2759
      %v2761 = vpop.f32.mrb[0].mxu0
      %v2762 = vadd.f32 %v2556, %v2761
      %v2763 = vpop.f32.mrb[0].mxu0
      %2764 = vmatprep.mubr.f32.mxu0 0.0
      %v2765 = vand.u32 %v1956, 4294901760
      %v2766 = vsub.f32 %v1956, %v2765
      %v2767 = vand.u32 %v2766, 4294901760
      %2768 = vmatmul.mubr.f32.gmra.mrb[0].mxu0 %v2767
      %v2769 = vpop.f32.mrb[0].mxu0
      %v2770 = vadd.f32 %v2563, %v2769
      %v2771 = vpop.f32.mrb[0].mxu0
      %2772 = vmatprep.mubr.f32.mxu0 0.0
      %v2773 = vand.u32 %v1959, 4294901760
      %v2774 = vsub.f32 %v1959, %v2773
      %v2775 = vand.u32 %v2774, 4294901760
      %2776 = vmatmul.mubr.f32.gmra.mrb[0].mxu0 %v2775
      %v2777 = vpop.f32.mrb[0].mxu0
      %v2778 = vadd.f32 %v2570, %v2777
      %v2779 = vpop.f32.mrb[0].mxu0
      %2780 = vmatprep.mubr.f32.mxu0 0.0
      %v2781 = vand.u32 %v1962, 4294901760
      %v2782 = vsub.f32 %v1962, %v2781
      %v2783 = vand.u32 %v2782, 4294901760
      %2784 = vmatmul.mubr.f32.gmra.mrb[0].mxu0 %v2783
      %v2785 = vpop.f32.mrb[0].mxu0
      %v2786 = vadd.f32 %v2577, %v2785
      %v2787 = vpop.f32.mrb[0].mxu0
      %2788 = vmatprep.mubr.f32.mxu0 0.0
      %v2789 = vand.u32 %v1965, 4294901760
      %v2790 = vsub.f32 %v1965, %v2789
      %v2791 = vand.u32 %v2790, 4294901760
      %2792 = vmatmul.mubr.f32.gmra.mrb[0].mxu0 %v2791
      %v2793 = vpop.f32.mrb[0].mxu0
      %v2794 = vadd.f32 %v2584, %v2793
      %v2795 = vpop.f32.mrb[0].mxu0
      %2796 = vmatprep.mubr.f32.mxu0 0.0
      %v2797 = vand.u32 %v1968, 4294901760
      %v2798 = vsub.f32 %v1968, %v2797
      %v2799 = vand.u32 %v2798, 4294901760
      %2800 = vmatmul.mubr.f32.gmra.mrb[0].mxu0 %v2799
      %v2801 = vpop.f32.mrb[0].mxu0
      %v2802 = vadd.f32 %v2591, %v2801
      %v2803 = vpop.f32.mrb[0].mxu0
      %2804 = vmatprep.mubr.f32.mxu0 0.0
      %v2805 = vand.u32 %v1971, 4294901760
      %v2806 = vsub.f32 %v1971, %v2805
      %v2807 = vand.u32 %v2806, 4294901760
      %2808 = vmatmul.mubr.f32.gmra.mrb[0].mxu0 %v2807
      %v2809 = vpop.f32.mrb[0].mxu0
      %v2810 = vadd.f32 %v2598, %v2809
      %v2811 = vpop.f32.mrb[0].mxu0
      %2812 = vmatprep.mubr.f32.mxu0 0.0
      %v2813 = vand.u32 %v1974, 4294901760
      %v2814 = vsub.f32 %v1974, %v2813
      %v2815 = vand.u32 %v2814, 4294901760
      %2816 = vmatmul.mubr.f32.gmra.mrb[0].mxu0 %v2815
      %v2817 = vpop.f32.mrb[0].mxu0
      %v2818 = vadd.f32 %v2605, %v2817
      %v2819 = vpop.f32.mrb[0].mxu0
      %2820 = vmatprep.mubr.f32.mxu0 0.0
      %v2821 = vand.u32 %v1977, 4294901760
      %v2822 = vsub.f32 %v1977, %v2821
      %v2823 = vand.u32 %v2822, 4294901760
      %2824 = vmatmul.mubr.f32.gmra.mrb[0].mxu0 %v2823
      %v2825 = vpop.f32.mrb[0].mxu0
      %v2826 = vadd.f32 %v2612, %v2825
      %v2827 = vpop.f32.mrb[0].mxu0
      %2828 = vmatprep.mubr.f32.mxu0 0.0
      %v2829 = vand.u32 %v1980, 4294901760
      %v2830 = vsub.f32 %v1980, %v2829
      %v2831 = vand.u32 %v2830, 4294901760
      %2832 = vmatmul.mubr.f32.gmra.mrb[0].mxu0 %v2831
      %v2833 = vpop.f32.mrb[0].mxu0
      %v2834 = vadd.f32 %v2619, %v2833
      %v2835 = vpop.f32.mrb[0].mxu0
      %2836 = vmatprep.mubr.f32.mxu0 0.0
      %v2837 = vand.u32 %v1983, 4294901760
      %v2838 = vsub.f32 %v1983, %v2837
      %v2839 = vand.u32 %v2838, 4294901760
      %2840 = vmatmul.mubr.f32.gmra.mrb[0].mxu0 %v2839
      %v2841 = vpop.f32.mrb[0].mxu0
      %v2842 = vadd.f32 %v2626, %v2841
      %v2843 = vpop.f32.mrb[0].mxu0
      %2844 = vmatprep.mubr.f32.mxu0 0.0
      %v2845 = vand.u32 %v1986, 4294901760
      %v2846 = vsub.f32 %v1986, %v2845
      %v2847 = vand.u32 %v2846, 4294901760
      %2848 = vmatmul.mubr.f32.gmra.mrb[0].mxu0 %v2847
      %v2849 = vpop.f32.mrb[0].mxu0
      %v2850 = vadd.f32 %v2633, %v2849
      %v2851 = vpop.f32.mrb[0].mxu0
      %2852 = vmatprep.mubr.f32.mxu0 0.0
      %v2853 = vand.u32 %v1989, 4294901760
      %v2854 = vsub.f32 %v1989, %v2853
      %v2855 = vand.u32 %v2854, 4294901760
      %2856 = vmatmul.mubr.f32.gmra.mrb[0].mxu0 %v2855
      %v2857 = vpop.f32.mrb[0].mxu0
      %v2858 = vadd.f32 %v2640, %v2857
      %v2859 = vpop.f32.mrb[0].mxu0
      %2860 = vmatprep.mubr.f32.mxu0 0.0
      %v2861 = vand.u32 %v1992, 4294901760
      %v2862 = vsub.f32 %v1992, %v2861
      %v2863 = vand.u32 %v2862, 4294901760
      %2864 = vmatmul.mubr.f32.gmra.mrb[0].mxu0 %v2863
      %v2865 = vpop.f32.mrb[0].mxu0
      %v2866 = vadd.f32 %v2647, %v2865
      %v2867 = vpop.f32.mrb[0].mxu0
      %2868 = vmatprep.mubr.f32.mxu0 0.0
      %v2869 = vand.u32 %v1995, 4294901760
      %v2870 = vsub.f32 %v1995, %v2869
      %v2871 = vand.u32 %v2870, 4294901760
      %2872 = vmatmul.mubr.f32.gmra.mrb[0].mxu0 %v2871
      %v2873 = vpop.f32.mrb[0].mxu0
      %v2874 = vadd.f32 %v2654, %v2873
      %v2875 = vpop.f32.mrb[0].mxu0
      %2876 = vmatprep.mubr.f32.mxu0 0.0
      %v2877 = vand.u32 %v1998, 4294901760
      %v2878 = vsub.f32 %v1998, %v2877
      %v2879 = vand.u32 %v2878, 4294901760
      %2880 = vmatmul.mubr.f32.gmra.mrb[0].mxu0 %v2879
      %v2881 = vpop.f32.mrb[0].mxu0
      %v2882 = vadd.f32 %v2661, %v2881
      %v2883 = vpop.f32.mrb[0].mxu0
      %2884 = vdwg.mxu0
      %2885 = vmatprep.subr.mxu0 0.0
      %v2886 = vand.u32 %v1931, 4294901760
      %v2887 = vsub.f32 %v1931, %v2886
      %v2888 = vand.u32 %v2887, 4294901760
      %2889 = vmatpush1.msra.mxu0 %v2888
      %2890 = vmatprep.subr.mxu0 0.0
      %v2891 = vand.u32 %v1932, 4294901760
      %v2892 = vsub.f32 %v1932, %v2891
      %v2893 = vand.u32 %v2892, 4294901760
      %2894 = vmatpush1.msra.mxu0 %v2893
      %2895 = vmatprep.subr.mxu0 0.0
      %v2896 = vand.u32 %v1933, 4294901760
      %v2897 = vsub.f32 %v1933, %v2896
      %v2898 = vand.u32 %v2897, 4294901760
      %2899 = vmatpush1.msra.mxu0 %v2898
      %2900 = vmatprep.subr.mxu0 0.0
      %v2901 = vand.u32 %v1934, 4294901760
      %v2902 = vsub.f32 %v1934, %v2901
      %v2903 = vand.u32 %v2902, 4294901760
      %2904 = vmatpush1.msra.mxu0 %v2903
      %2905 = vmatprep.subr.mxu0 0.0
      %2906 = vmatpush1.msra.mxu0 0.0
      %2907 = vmatprep.subr.mxu0 0.0
      %2908 = vmatpush1.msra.mxu0 0.0
      %2909 = vmatprep.subr.mxu0 0.0
      %2910 = vmatpush1.msra.mxu0 0.0
      %2911 = vmatprep.subr.mxu0 0.0
      %2912 = vmatpush1.msra.mxu0 0.0
      %2913 = vmatprep.subr.mxu0 0.0
      %2914 = vmatpush1.msra.mxu0 0.0
      %2915 = vmatprep.subr.mxu0 0.0
      %2916 = vmatpush1.msra.mxu0 0.0
      %2917 = vmatprep.subr.mxu0 0.0
      %2918 = vmatpush1.msra.mxu0 0.0
      %2919 = vmatprep.subr.mxu0 0.0
      %2920 = vmatpush1.msra.mxu0 0.0
      %2921 = vmatprep.subr.mxu0 0.0
      %2922 = vmatpush1.msra.mxu0 0.0
      %2923 = vmatprep.subr.mxu0 0.0
      %2924 = vmatpush1.msra.mxu0 0.0
      %2925 = vmatprep.subr.mxu0 0.0
      %2926 = vmatpush1.msra.mxu0 0.0
      %2927 = vmatprep.subr.mxu0 0.0
      %2928 = vmatpush1.msra.mxu0 0.0
      %2929 = vmatprep.subr.mxu0 0.0
      %2930 = vmatpush1.msra.mxu0 0.0
      %2931 = vmatprep.subr.mxu0 0.0
      %2932 = vmatpush1.msra.mxu0 0.0
      %2933 = vmatprep.subr.mxu0 0.0
      %2934 = vmatpush1.msra.mxu0 0.0
      %2935 = vmatprep.subr.mxu0 0.0
      %2936 = vmatpush1.msra.mxu0 0.0
      %2937 = vmatprep.subr.mxu0 0.0
      %2938 = vmatpush1.msra.mxu0 0.0
      %2939 = vmatprep.subr.mxu0 0.0
      %2940 = vmatpush1.msra.mxu0 0.0
      %2941 = vmatprep.subr.mxu0 0.0
      %2942 = vmatpush1.msra.mxu0 0.0
      %2943 = vmatprep.subr.mxu0 0.0
      %2944 = vmatpush1.msra.mxu0 0.0
      %2945 = vmatprep.subr.mxu0 0.0
      %2946 = vmatpush1.msra.mxu0 0.0
      %2947 = vmatprep.subr.mxu0 0.0
      %2948 = vmatpush1.msra.mxu0 0.0
      %2949 = vmatprep.subr.mxu0 0.0
      %2950 = vmatpush1.msra.mxu0 0.0
      %2951 = vmatprep.subr.mxu0 0.0
      %2952 = vmatpush1.msra.mxu0 0.0
      %2953 = vmatprep.subr.mxu0 0.0
      %2954 = vmatpush1.msra.mxu0 0.0
      %2955 = vmatprep.subr.mxu0 0.0
      %2956 = vmatpush1.msra.mxu0 0.0
      %2957 = vmatprep.subr.mxu0 0.0
      %2958 = vmatpush1.msra.mxu0 0.0
      %2959 = vmatprep.subr.mxu0 0.0
      %2960 = vmatpush1.msra.mxu0 0.0
      %2961 = vmatprep.mubr.f32.mxu0 0.0
      %v2962 = vand.u32 %v1944, 4294901760
      %2963 = vmatmul.mubr.f32.gmra.mrb[0].mxu0 %v2962
      %v2964 = vpop.f32.mrb[0].mxu0
      %v2965 = vadd.f32 %v2738, %v2964
      %v2966 = vpop.f32.mrb[0].mxu0
      %2967 = vmatprep.mubr.f32.mxu0 0.0
      %v2968 = vand.u32 %v1947, 4294901760
      %2969 = vmatmul.mubr.f32.gmra.mrb[0].mxu0 %v2968
      %v2970 = vpop.f32.mrb[0].mxu0
      %v2971 = vadd.f32 %v2746, %v2970
      %v2972 = vpop.f32.mrb[0].mxu0
      %2973 = vmatprep.mubr.f32.mxu0 0.0
      %v2974 = vand.u32 %v1950, 4294901760
      %2975 = vmatmul.mubr.f32.gmra.mrb[0].mxu0 %v2974
      %v2976 = vpop.f32.mrb[0].mxu0
      %v2977 = vadd.f32 %v2754, %v2976
      %v2978 = vpop.f32.mrb[0].mxu0
      %2979 = vmatprep.mubr.f32.mxu0 0.0
      %v2980 = vand.u32 %v1953, 4294901760
      %2981 = vmatmul.mubr.f32.gmra.mrb[0].mxu0 %v2980
      %v2982 = vpop.f32.mrb[0].mxu0
      %v2983 = vadd.f32 %v2762, %v2982
      %v2984 = vpop.f32.mrb[0].mxu0
      %2985 = vmatprep.mubr.f32.mxu0 0.0
      %v2986 = vand.u32 %v1956, 4294901760
      %2987 = vmatmul.mubr.f32.gmra.mrb[0].mxu0 %v2986
      %v2988 = vpop.f32.mrb[0].mxu0
      %v2989 = vadd.f32 %v2770, %v2988
      %v2990 = vpop.f32.mrb[0].mxu0
      %2991 = vmatprep.mubr.f32.mxu0 0.0
      %v2992 = vand.u32 %v1959, 4294901760
      %2993 = vmatmul.mubr.f32.gmra.mrb[0].mxu0 %v2992
      %v2994 = vpop.f32.mrb[0].mxu0
      %v2995 = vadd.f32 %v2778, %v2994
      %v2996 = vpop.f32.mrb[0].mxu0
      %2997 = vmatprep.mubr.f32.mxu0 0.0
      %v2998 = vand.u32 %v1962, 4294901760
      %2999 = vmatmul.mubr.f32.gmra.mrb[0].mxu0 %v2998
      %v3000 = vpop.f32.mrb[0].mxu0
      %v3001 = vadd.f32 %v2786, %v3000
      %v3002 = vpop.f32.mrb[0].mxu0
      %3003 = vmatprep.mubr.f32.mxu0 0.0
      %v3004 = vand.u32 %v1965, 4294901760
      %3005 = vmatmul.mubr.f32.gmra.mrb[0].mxu0 %v3004
      %v3006 = vpop.f32.mrb[0].mxu0
      %v3007 = vadd.f32 %v2794, %v3006
      %v3008 = vpop.f32.mrb[0].mxu0
      %3009 = vmatprep.mubr.f32.mxu0 0.0
      %v3010 = vand.u32 %v1968, 4294901760
      %3011 = vmatmul.mubr.f32.gmra.mrb[0].mxu0 %v3010
      %v3012 = vpop.f32.mrb[0].mxu0
      %v3013 = vadd.f32 %v2802, %v3012
      %v3014 = vpop.f32.mrb[0].mxu0
      %3015 = vmatprep.mubr.f32.mxu0 0.0
      %v3016 = vand.u32 %v1971, 4294901760
      %3017 = vmatmul.mubr.f32.gmra.mrb[0].mxu0 %v3016
      %v3018 = vpop.f32.mrb[0].mxu0
      %v3019 = vadd.f32 %v2810, %v3018
      %v3020 = vpop.f32.mrb[0].mxu0
      %3021 = vmatprep.mubr.f32.mxu0 0.0
      %v3022 = vand.u32 %v1974, 4294901760
      %3023 = vmatmul.mubr.f32.gmra.mrb[0].mxu0 %v3022
      %v3024 = vpop.f32.mrb[0].mxu0
      %v3025 = vadd.f32 %v2818, %v3024
      %v3026 = vpop.f32.mrb[0].mxu0
      %3027 = vmatprep.mubr.f32.mxu0 0.0
      %v3028 = vand.u32 %v1977, 4294901760
      %3029 = vmatmul.mubr.f32.gmra.mrb[0].mxu0 %v3028
      %v3030 = vpop.f32.mrb[0].mxu0
      %v3031 = vadd.f32 %v2826, %v3030
      %v3032 = vpop.f32.mrb[0].mxu0
      %3033 = vmatprep.mubr.f32.mxu0 0.0
      %v3034 = vand.u32 %v1980, 4294901760
      %3035 = vmatmul.mubr.f32.gmra.mrb[0].mxu0 %v3034
      %v3036 = vpop.f32.mrb[0].mxu0
      %v3037 = vadd.f32 %v2834, %v3036
      %v3038 = vpop.f32.mrb[0].mxu0
      %3039 = vmatprep.mubr.f32.mxu0 0.0
      %v3040 = vand.u32 %v1983, 4294901760
      %3041 = vmatmul.mubr.f32.gmra.mrb[0].mxu0 %v3040
      %v3042 = vpop.f32.mrb[0].mxu0
      %v3043 = vadd.f32 %v2842, %v3042
      %v3044 = vpop.f32.mrb[0].mxu0
      %3045 = vmatprep.mubr.f32.mxu0 0.0
      %v3046 = vand.u32 %v1986, 4294901760
      %3047 = vmatmul.mubr.f32.gmra.mrb[0].mxu0 %v3046
      %v3048 = vpop.f32.mrb[0].mxu0
      %v3049 = vadd.f32 %v2850, %v3048
      %v3050 = vpop.f32.mrb[0].mxu0
      %3051 = vmatprep.mubr.f32.mxu0 0.0
      %v3052 = vand.u32 %v1989, 4294901760
      %3053 = vmatmul.mubr.f32.gmra.mrb[0].mxu0 %v3052
      %v3054 = vpop.f32.mrb[0].mxu0
      %v3055 = vadd.f32 %v2858, %v3054
      %v3056 = vpop.f32.mrb[0].mxu0
      %3057 = vmatprep.mubr.f32.mxu0 0.0
      %v3058 = vand.u32 %v1992, 4294901760
      %3059 = vmatmul.mubr.f32.gmra.mrb[0].mxu0 %v3058
      %v3060 = vpop.f32.mrb[0].mxu0
      %v3061 = vadd.f32 %v2866, %v3060
      %v3062 = vpop.f32.mrb[0].mxu0
      %3063 = vmatprep.mubr.f32.mxu0 0.0
      %v3064 = vand.u32 %v1995, 4294901760
      %3065 = vmatmul.mubr.f32.gmra.mrb[0].mxu0 %v3064
      %v3066 = vpop.f32.mrb[0].mxu0
      %v3067 = vadd.f32 %v2874, %v3066
      %v3068 = vpop.f32.mrb[0].mxu0
      %3069 = vmatprep.mubr.f32.mxu0 0.0
      %v3070 = vand.u32 %v1998, 4294901760
      %3071 = vmatmul.mubr.f32.gmra.mrb[0].mxu0 %v3070
      %v3072 = vpop.f32.mrb[0].mxu0
      %v3073 = vadd.f32 %v2882, %v3072
      %v3074 = vpop.f32.mrb[0].mxu0
      %3075 = vdwg.mxu0
      %3076 = vmatprep.subr.mxu0 0.0
      %v3077 = vand.u32 %v1931, 4294901760
      %3078 = vmatpush1.msra.mxu0 %v3077
      %3079 = vmatprep.subr.mxu0 0.0
      %v3080 = vand.u32 %v1932, 4294901760
      %3081 = vmatpush1.msra.mxu0 %v3080
      %3082 = vmatprep.subr.mxu0 0.0
      %v3083 = vand.u32 %v1933, 4294901760
      %3084 = vmatpush1.msra.mxu0 %v3083
      %3085 = vmatprep.subr.mxu0 0.0
      %v3086 = vand.u32 %v1934, 4294901760
      %3087 = vmatpush1.msra.mxu0 %v3086
      %3088 = vmatprep.subr.mxu0 0.0
      %3089 = vmatpush1.msra.mxu0 0.0
      %3090 = vmatprep.subr.mxu0 0.0
      %3091 = vmatpush1.msra.mxu0 0.0
      %3092 = vmatprep.subr.mxu0 0.0
      %3093 = vmatpush1.msra.mxu0 0.0
      %3094 = vmatprep.subr.mxu0 0.0
      %3095 = vmatpush1.msra.mxu0 0.0
      %3096 = vmatprep.subr.mxu0 0.0
      %3097 = vmatpush1.msra.mxu0 0.0
      %3098 = vmatprep.subr.mxu0 0.0
      %3099 = vmatpush1.msra.mxu0 0.0
      %3100 = vmatprep.subr.mxu0 0.0
      %3101 = vmatpush1.msra.mxu0 0.0
      %3102 = vmatprep.subr.mxu0 0.0
      %3103 = vmatpush1.msra.mxu0 0.0
      %3104 = vmatprep.subr.mxu0 0.0
      %3105 = vmatpush1.msra.mxu0 0.0
      %3106 = vmatprep.subr.mxu0 0.0
      %3107 = vmatpush1.msra.mxu0 0.0
      %3108 = vmatprep.subr.mxu0 0.0
      %3109 = vmatpush1.msra.mxu0 0.0
      %3110 = vmatprep.subr.mxu0 0.0
      %3111 = vmatpush1.msra.mxu0 0.0
      %3112 = vmatprep.subr.mxu0 0.0
      %3113 = vmatpush1.msra.mxu0 0.0
      %3114 = vmatprep.subr.mxu0 0.0
      %3115 = vmatpush1.msra.mxu0 0.0
      %3116 = vmatprep.subr.mxu0 0.0
      %3117 = vmatpush1.msra.mxu0 0.0
      %3118 = vmatprep.subr.mxu0 0.0
      %3119 = vmatpush1.msra.mxu0 0.0
      %3120 = vmatprep.subr.mxu0 0.0
      %3121 = vmatpush1.msra.mxu0 0.0
      %3122 = vmatprep.subr.mxu0 0.0
      %3123 = vmatpush1.msra.mxu0 0.0
      %3124 = vmatprep.subr.mxu0 0.0
      %3125 = vmatpush1.msra.mxu0 0.0
      %3126 = vmatprep.subr.mxu0 0.0
      %3127 = vmatpush1.msra.mxu0 0.0
      %3128 = vmatprep.subr.mxu0 0.0
      %3129 = vmatpush1.msra.mxu0 0.0
      %3130 = vmatprep.subr.mxu0 0.0
      %3131 = vmatpush1.msra.mxu0 0.0
      %3132 = vmatprep.subr.mxu0 0.0
      %3133 = vmatpush1.msra.mxu0 0.0
      %3134 = vmatprep.subr.mxu0 0.0
      %3135 = vmatpush1.msra.mxu0 0.0
      %3136 = vmatprep.subr.mxu0 0.0
      %3137 = vmatpush1.msra.mxu0 0.0
      %3138 = vmatprep.subr.mxu0 0.0
      %3139 = vmatpush1.msra.mxu0 0.0
      %3140 = vmatprep.subr.mxu0 0.0
      %3141 = vmatpush1.msra.mxu0 0.0
      %3142 = vmatprep.subr.mxu0 0.0
      %3143 = vmatpush1.msra.mxu0 0.0
      %3144 = vmatprep.mubr.f32.mxu0 0.0
      %v3145 = vand.u32 %v1944, 4294901760
      %3146 = vmatmul.mubr.f32.gmra.mrb[0].mxu0 %v3145
      %v3147 = vpop.f32.mrb[0].mxu0
      %v3148 = vadd.f32 %v2965, %v3147
      %v3149 = vpop.f32.mrb[0].mxu0
      %3150 = vmatprep.mubr.f32.mxu0 0.0
      %v3151 = vand.u32 %v1947, 4294901760
      %3152 = vmatmul.mubr.f32.gmra.mrb[0].mxu0 %v3151
      %v3153 = vpop.f32.mrb[0].mxu0
      %v3154 = vadd.f32 %v2971, %v3153
      %v3155 = vpop.f32.mrb[0].mxu0
      %3156 = vmatprep.mubr.f32.mxu0 0.0
      %v3157 = vand.u32 %v1950, 4294901760
      %3158 = vmatmul.mubr.f32.gmra.mrb[0].mxu0 %v3157
      %v3159 = vpop.f32.mrb[0].mxu0
      %v3160 = vadd.f32 %v2977, %v3159
      %v3161 = vpop.f32.mrb[0].mxu0
      %3162 = vmatprep.mubr.f32.mxu0 0.0
      %v3163 = vand.u32 %v1953, 4294901760
      %3164 = vmatmul.mubr.f32.gmra.mrb[0].mxu0 %v3163
      %v3165 = vpop.f32.mrb[0].mxu0
      %v3166 = vadd.f32 %v2983, %v3165
      %v3167 = vpop.f32.mrb[0].mxu0
      %3168 = vmatprep.mubr.f32.mxu0 0.0
      %v3169 = vand.u32 %v1956, 4294901760
      %3170 = vmatmul.mubr.f32.gmra.mrb[0].mxu0 %v3169
      %v3171 = vpop.f32.mrb[0].mxu0
      %v3172 = vadd.f32 %v2989, %v3171
      %v3173 = vpop.f32.mrb[0].mxu0
      %3174 = vmatprep.mubr.f32.mxu0 0.0
      %v3175 = vand.u32 %v1959, 4294901760
      %3176 = vmatmul.mubr.f32.gmra.mrb[0].mxu0 %v3175
      %v3177 = vpop.f32.mrb[0].mxu0
      %v3178 = vadd.f32 %v2995, %v3177
      %v3179 = vpop.f32.mrb[0].mxu0
      %3180 = vmatprep.mubr.f32.mxu0 0.0
      %v3181 = vand.u32 %v1962, 4294901760
      %3182 = vmatmul.mubr.f32.gmra.mrb[0].mxu0 %v3181
      %v3183 = vpop.f32.mrb[0].mxu0
      %v3184 = vadd.f32 %v3001, %v3183
      %v3185 = vpop.f32.mrb[0].mxu0
      %3186 = vmatprep.mubr.f32.mxu0 0.0
      %v3187 = vand.u32 %v1965, 4294901760
      %3188 = vmatmul.mubr.f32.gmra.mrb[0].mxu0 %v3187
      %v3189 = vpop.f32.mrb[0].mxu0
      %v3190 = vadd.f32 %v3007, %v3189
      %v3191 = vpop.f32.mrb[0].mxu0
      %3192 = vmatprep.mubr.f32.mxu0 0.0
      %v3193 = vand.u32 %v1968, 4294901760
      %3194 = vmatmul.mubr.f32.gmra.mrb[0].mxu0 %v3193
      %v3195 = vpop.f32.mrb[0].mxu0
      %v3196 = vadd.f32 %v3013, %v3195
      %v3197 = vpop.f32.mrb[0].mxu0
      %3198 = vmatprep.mubr.f32.mxu0 0.0
      %v3199 = vand.u32 %v1971, 4294901760
      %3200 = vmatmul.mubr.f32.gmra.mrb[0].mxu0 %v3199
      %v3201 = vpop.f32.mrb[0].mxu0
      %v3202 = vadd.f32 %v3019, %v3201
      %v3203 = vpop.f32.mrb[0].mxu0
      %3204 = vmatprep.mubr.f32.mxu0 0.0
      %v3205 = vand.u32 %v1974, 4294901760
      %3206 = vmatmul.mubr.f32.gmra.mrb[0].mxu0 %v3205
      %v3207 = vpop.f32.mrb[0].mxu0
      %v3208 = vadd.f32 %v3025, %v3207
      %v3209 = vpop.f32.mrb[0].mxu0
      %3210 = vmatprep.mubr.f32.mxu0 0.0
      %v3211 = vand.u32 %v1977, 4294901760
      %3212 = vmatmul.mubr.f32.gmra.mrb[0].mxu0 %v3211
      %v3213 = vpop.f32.mrb[0].mxu0
      %v3214 = vadd.f32 %v3031, %v3213
      %v3215 = vpop.f32.mrb[0].mxu0
      %3216 = vmatprep.mubr.f32.mxu0 0.0
      %v3217 = vand.u32 %v1980, 4294901760
      %3218 = vmatmul.mubr.f32.gmra.mrb[0].mxu0 %v3217
      %v3219 = vpop.f32.mrb[0].mxu0
      %v3220 = vadd.f32 %v3037, %v3219
      %v3221 = vpop.f32.mrb[0].mxu0
      %3222 = vmatprep.mubr.f32.mxu0 0.0
      %v3223 = vand.u32 %v1983, 4294901760
      %3224 = vmatmul.mubr.f32.gmra.mrb[0].mxu0 %v3223
      %v3225 = vpop.f32.mrb[0].mxu0
      %v3226 = vadd.f32 %v3043, %v3225
      %v3227 = vpop.f32.mrb[0].mxu0
      %3228 = vmatprep.mubr.f32.mxu0 0.0
      %v3229 = vand.u32 %v1986, 4294901760
      %3230 = vmatmul.mubr.f32.gmra.mrb[0].mxu0 %v3229
      %v3231 = vpop.f32.mrb[0].mxu0
      %v3232 = vadd.f32 %v3049, %v3231
      %v3233 = vpop.f32.mrb[0].mxu0
      %3234 = vmatprep.mubr.f32.mxu0 0.0
      %v3235 = vand.u32 %v1989, 4294901760
      %3236 = vmatmul.mubr.f32.gmra.mrb[0].mxu0 %v3235
      %v3237 = vpop.f32.mrb[0].mxu0
      %v3238 = vadd.f32 %v3055, %v3237
      %v3239 = vpop.f32.mrb[0].mxu0
      %3240 = vmatprep.mubr.f32.mxu0 0.0
      %v3241 = vand.u32 %v1992, 4294901760
      %3242 = vmatmul.mubr.f32.gmra.mrb[0].mxu0 %v3241
      %v3243 = vpop.f32.mrb[0].mxu0
      %v3244 = vadd.f32 %v3061, %v3243
      %v3245 = vpop.f32.mrb[0].mxu0
      %3246 = vmatprep.mubr.f32.mxu0 0.0
      %v3247 = vand.u32 %v1995, 4294901760
      %3248 = vmatmul.mubr.f32.gmra.mrb[0].mxu0 %v3247
      %v3249 = vpop.f32.mrb[0].mxu0
      %v3250 = vadd.f32 %v3067, %v3249
      %v3251 = vpop.f32.mrb[0].mxu0
      %3252 = vmatprep.mubr.f32.mxu0 0.0
      %v3253 = vand.u32 %v1998, 4294901760
      %3254 = vmatmul.mubr.f32.gmra.mrb[0].mxu0 %v3253
      %v3255 = vpop.f32.mrb[0].mxu0
      %v3256 = vadd.f32 %v3073, %v3255
      %v3257 = vpop.f32.mrb[0].mxu0
      %3258 = vdwg.mxu0
      %vm3259 = vcmp.ge.f32.partialorder %v3148, 0.0
      %vm3260 = vcmp.ge.f32.partialorder %v3154, 0.0
      %vm3261 = vcmp.ge.f32.partialorder %v3160, 0.0
      %vm3262 = vcmp.ge.f32.partialorder %v3166, 0.0
      %vm3263 = vcmp.ge.f32.partialorder %v3172, 0.0
      %vm3264 = vcmp.ge.f32.partialorder %v3178, 0.0
      %vm3265 = vcmp.ge.f32.partialorder %v3184, 0.0
      %vm3266 = vcmp.ge.f32.partialorder %v3190, 0.0
      %vm3267 = vcmp.ge.f32.partialorder %v3196, 0.0
      %vm3268 = vcmp.ge.f32.partialorder %v3202, 0.0
      %vm3269 = vcmp.ge.f32.partialorder %v3208, 0.0
      %vm3270 = vcmp.ge.f32.partialorder %v3214, 0.0
      %vm3271 = vcmp.ge.f32.partialorder %v3220, 0.0
      %vm3272 = vcmp.ge.f32.partialorder %v3226, 0.0
      %vm3273 = vcmp.ge.f32.partialorder %v3232, 0.0
      %vm3274 = vcmp.ge.f32.partialorder %v3238, 0.0
      %vm3275 = vcmp.ge.f32.partialorder %v3244, 0.0
      %vm3276 = vcmp.ge.f32.partialorder %v3250, 0.0
      %vm3277 = vcmp.ge.f32.partialorder %v3256, 0.0
      %v3278 = vmul.f32 %v3148, 0.01
      %v3279 = vmul.f32 %v3154, 0.01
      %v3280 = vmul.f32 %v3160, 0.01
      %v3281 = vmul.f32 %v3166, 0.01
      %v3282 = vmul.f32 %v3172, 0.01
      %v3283 = vmul.f32 %v3178, 0.01
      %v3284 = vmul.f32 %v3184, 0.01
      %v3285 = vmul.f32 %v3190, 0.01
      %v3286 = vmul.f32 %v3196, 0.01
      %v3287 = vmul.f32 %v3202, 0.01
      %v3288 = vmul.f32 %v3208, 0.01
      %v3289 = vmul.f32 %v3214, 0.01
      %v3290 = vmul.f32 %v3220, 0.01
      %v3291 = vmul.f32 %v3226, 0.01
      %v3292 = vmul.f32 %v3232, 0.01
      %v3293 = vmul.f32 %v3238, 0.01
      %v3294 = vmul.f32 %v3244, 0.01
      %v3295 = vmul.f32 %v3250, 0.01
      %v3296 = vmul.f32 %v3256, 0.01
      %v3297 = vsel %vm3259, %v3148, %v3278
      %v3298 = vsel %vm3260, %v3154, %v3279
      %v3299 = vsel %vm3261, %v3160, %v3280
      %v3300 = vsel %vm3262, %v3166, %v3281
      %v3301 = vsel %vm3263, %v3172, %v3282
      %v3302 = vsel %vm3264, %v3178, %v3283
      %v3303 = vsel %vm3265, %v3184, %v3284
      %v3304 = vsel %vm3266, %v3190, %v3285
      %v3305 = vsel %vm3267, %v3196, %v3286
      %v3306 = vsel %vm3268, %v3202, %v3287
      %v3307 = vsel %vm3269, %v3208, %v3288
      %v3308 = vsel %vm3270, %v3214, %v3289
      %v3309 = vsel %vm3271, %v3220, %v3290
      %v3310 = vsel %vm3272, %v3226, %v3291
      %v3311 = vsel %vm3273, %v3232, %v3292
      %v3312 = vsel %vm3274, %v3238, %v3293
      %v3313 = vsel %vm3275, %v3244, %v3294
      %v3314 = vsel %vm3276, %v3250, %v3295
      %v3315 = vsel %vm3277, %v3256, %v3296
      %v3316 = vadd.f32 %v3297, %v417
      %v3317 = vadd.f32 %v3298, %v418
      %v3318 = vadd.f32 %v3299, %v419
      %v3319 = vadd.f32 %v3300, %v420
      %v3320 = vadd.f32 %v3301, %v421
      %v3321 = vadd.f32 %v3302, %v422
      %v3322 = vadd.f32 %v3303, %v423
      %v3323 = vadd.f32 %v3304, %v424
      %v3324 = vadd.f32 %v3305, %v425
      %v3325 = vadd.f32 %v3306, %v426
      %v3326 = vadd.f32 %v3307, %v427
      %v3327 = vadd.f32 %v3308, %v428
      %v3328 = vadd.f32 %v3309, %v429
      %v3329 = vadd.f32 %v3310, %v430
      %v3330 = vadd.f32 %v3311, %v431
      %v3331 = vadd.f32 %v3312, %v432
      %v3332 = vadd.f32 %v3313, %v433
      %v3333 = vadd.f32 %v3314, %v434
      %v3334 = vadd.f32 %v3315, %v435
      %v3335 = vld [vmem:[%s5] sm:$0xff]
      %v3336 = vld [vmem:[%s5 + $0x8] sm:$0xff]
      %v3337 = vld [vmem:[%s5 + $0x10] sm:$0xff]
      %v3338 = vld [vmem:[%s5 + $0x18] sm:$0xff]
      %v3339 = vld [vmem:[%s6] sm:$0xff]
      %v3340 = vld [vmem:[%s6 + $0x8] sm:$0xff]
      %v3341 = vld [vmem:[%s6 + $0x10] sm:$0xff]
      %v3342 = vld [vmem:[%s6 + $0x18] sm:$0xff]
      %v3343 = vld [vmem:[%s6 + $0x20] sm:$0xff]
      %v3344 = vld [vmem:[%s6 + $0x28] sm:$0xff]
      %v3345 = vld [vmem:[%s6 + $0x30] sm:$0xff]
      %v3346 = vld [vmem:[%s6 + $0x38] sm:$0xff]
      %v3347 = vld [vmem:[%s6 + $0x40] sm:$0xff]
      %v3348 = vld [vmem:[%s6 + $0x48] sm:$0xff]
      %v3349 = vld [vmem:[%s6 + $0x50] sm:$0xff]
      %v3350 = vld [vmem:[%s6 + $0x58] sm:$0xff]
      %v3351 = vld [vmem:[%s6 + $0x60] sm:$0xff]
      %v3352 = vld [vmem:[%s6 + $0x68] sm:$0xff]
      %v3353 = vld [vmem:[%s6 + $0x70] sm:$0xff]
      %v3354 = vld [vmem:[%s6 + $0x78] sm:$0xff]
      %3355 = vmatprep.subr.mxu0 0.0
      %v3356 = vand.u32 %v3339, 4294901760
      %3357 = vmatpush1.msra.mxu0 %v3356
      %3358 = vmatprep.subr.mxu0 0.0
      %v3359 = vand.u32 %v3340, 4294901760
      %3360 = vmatpush1.msra.mxu0 %v3359
      %3361 = vmatprep.subr.mxu0 0.0
      %v3362 = vand.u32 %v3341, 4294901760
      %3363 = vmatpush1.msra.mxu0 %v3362
      %3364 = vmatprep.subr.mxu0 0.0
      %v3365 = vand.u32 %v3342, 4294901760
      %3366 = vmatpush1.msra.mxu0 %v3365
      %3367 = vmatprep.subr.mxu0 0.0
      %v3368 = vand.u32 %v3343, 4294901760
      %3369 = vmatpush1.msra.mxu0 %v3368
      %3370 = vmatprep.subr.mxu0 0.0
      %v3371 = vand.u32 %v3344, 4294901760
      %3372 = vmatpush1.msra.mxu0 %v3371
      %3373 = vmatprep.subr.mxu0 0.0
      %v3374 = vand.u32 %v3345, 4294901760
      %3375 = vmatpush1.msra.mxu0 %v3374
      %3376 = vmatprep.subr.mxu0 0.0
      %v3377 = vand.u32 %v3346, 4294901760
      %3378 = vmatpush1.msra.mxu0 %v3377
      %3379 = vmatprep.subr.mxu0 0.0
      %v3380 = vand.u32 %v3347, 4294901760
      %3381 = vmatpush1.msra.mxu0 %v3380
      %3382 = vmatprep.subr.mxu0 0.0
      %v3383 = vand.u32 %v3348, 4294901760
      %3384 = vmatpush1.msra.mxu0 %v3383
      %3385 = vmatprep.subr.mxu0 0.0
      %v3386 = vand.u32 %v3349, 4294901760
      %3387 = vmatpush1.msra.mxu0 %v3386
      %3388 = vmatprep.subr.mxu0 0.0
      %v3389 = vand.u32 %v3350, 4294901760
      %3390 = vmatpush1.msra.mxu0 %v3389
      %3391 = vmatprep.subr.mxu0 0.0
      %v3392 = vand.u32 %v3351, 4294901760
      %3393 = vmatpush1.msra.mxu0 %v3392
      %3394 = vmatprep.subr.mxu0 0.0
      %v3395 = vand.u32 %v3352, 4294901760
      %3396 = vmatpush1.msra.mxu0 %v3395
      %3397 = vmatprep.subr.mxu0 0.0
      %v3398 = vand.u32 %v3353, 4294901760
      %3399 = vmatpush1.msra.mxu0 %v3398
      %3400 = vmatprep.subr.mxu0 0.0
      %v3401 = vand.u32 %v3354, 4294901760
      %3402 = vmatpush1.msra.mxu0 %v3401
      %3403 = vmatprep.subr.mxu0 0.0
      %3404 = vmatpush1.msra.mxu0 0.0
      %3405 = vmatprep.subr.mxu0 0.0
      %3406 = vmatpush1.msra.mxu0 0.0
      %3407 = vmatprep.subr.mxu0 0.0
      %3408 = vmatpush1.msra.mxu0 0.0
      %3409 = vmatprep.subr.mxu0 0.0
      %3410 = vmatpush1.msra.mxu0 0.0
      %3411 = vmatprep.subr.mxu0 0.0
      %3412 = vmatpush1.msra.mxu0 0.0
      %3413 = vmatprep.subr.mxu0 0.0
      %3414 = vmatpush1.msra.mxu0 0.0
      %3415 = vmatprep.subr.mxu0 0.0
      %3416 = vmatpush1.msra.mxu0 0.0
      %3417 = vmatprep.subr.mxu0 0.0
      %3418 = vmatpush1.msra.mxu0 0.0
      %3419 = vmatprep.subr.mxu0 0.0
      %3420 = vmatpush1.msra.mxu0 0.0
      %3421 = vmatprep.subr.mxu0 0.0
      %3422 = vmatpush1.msra.mxu0 0.0
      %3423 = vmatprep.subr.mxu0 0.0
      %3424 = vmatpush1.msra.mxu0 0.0
      %3425 = vmatprep.subr.mxu0 0.0
      %3426 = vmatpush1.msra.mxu0 0.0
      %3427 = vmatprep.subr.mxu0 0.0
      %3428 = vmatpush1.msra.mxu0 0.0
      %3429 = vmatprep.subr.mxu0 0.0
      %3430 = vmatpush1.msra.mxu0 0.0
      %3431 = vmatprep.subr.mxu0 0.0
      %3432 = vmatpush1.msra.mxu0 0.0
      %3433 = vmatprep.subr.mxu0 0.0
      %3434 = vmatpush1.msra.mxu0 0.0
      %3435 = vmatprep.mubr.f32.mxu0 0.0
      %v3436 = vand.u32 %v417, 4294901760
      %v3437 = vsub.f32 %v417, %v3436
      %v3438 = vand.u32 %v3437, 4294901760
      %v3439 = vsub.f32 %v3437, %v3438
      %v3440 = vand.u32 %v3439, 4294901760
      %3441 = vmatmul.mubr.f32.gmra.mrb[0].mxu0 %v3440
      %v3442 = vpop.f32.mrb[0].mxu0
      %v3443 = vadd.f32 0.0, %v3442
      %v3444 = vpop.f32.mrb[0].mxu0
      %3445 = vmatprep.mubr.f32.mxu0 0.0
      %v3446 = vand.u32 %v418, 4294901760
      %v3447 = vsub.f32 %v418, %v3446
      %v3448 = vand.u32 %v3447, 4294901760
      %v3449 = vsub.f32 %v3447, %v3448
      %v3450 = vand.u32 %v3449, 4294901760
      %3451 = vmatmul.mubr.f32.gmra.mrb[0].mxu0 %v3450
      %v3452 = vpop.f32.mrb[0].mxu0
      %v3453 = vadd.f32 0.0, %v3452
      %v3454 = vpop.f32.mrb[0].mxu0
      %3455 = vmatprep.mubr.f32.mxu0 0.0
      %v3456 = vand.u32 %v419, 4294901760
      %v3457 = vsub.f32 %v419, %v3456
      %v3458 = vand.u32 %v3457, 4294901760
      %v3459 = vsub.f32 %v3457, %v3458
      %v3460 = vand.u32 %v3459, 4294901760
      %3461 = vmatmul.mubr.f32.gmra.mrb[0].mxu0 %v3460
      %v3462 = vpop.f32.mrb[0].mxu0
      %v3463 = vadd.f32 0.0, %v3462
      %v3464 = vpop.f32.mrb[0].mxu0
      %3465 = vmatprep.mubr.f32.mxu0 0.0
      %v3466 = vand.u32 %v420, 4294901760
      %v3467 = vsub.f32 %v420, %v3466
      %v3468 = vand.u32 %v3467, 4294901760
      %v3469 = vsub.f32 %v3467, %v3468
      %v3470 = vand.u32 %v3469, 4294901760
      %3471 = vmatmul.mubr.f32.gmra.mrb[0].mxu0 %v3470
      %v3472 = vpop.f32.mrb[0].mxu0
      %v3473 = vadd.f32 0.0, %v3472
      %v3474 = vpop.f32.mrb[0].mxu0
      %3475 = vmatprep.mubr.f32.mxu0 0.0
      %v3476 = vand.u32 %v421, 4294901760
      %v3477 = vsub.f32 %v421, %v3476
      %v3478 = vand.u32 %v3477, 4294901760
      %v3479 = vsub.f32 %v3477, %v3478
      %v3480 = vand.u32 %v3479, 4294901760
      %3481 = vmatmul.mubr.f32.gmra.mrb[0].mxu0 %v3480
      %v3482 = vpop.f32.mrb[0].mxu0
      %v3483 = vadd.f32 0.0, %v3482
      %v3484 = vpop.f32.mrb[0].mxu0
      %3485 = vmatprep.mubr.f32.mxu0 0.0
      %v3486 = vand.u32 %v422, 4294901760
      %v3487 = vsub.f32 %v422, %v3486
      %v3488 = vand.u32 %v3487, 4294901760
      %v3489 = vsub.f32 %v3487, %v3488
      %v3490 = vand.u32 %v3489, 4294901760
      %3491 = vmatmul.mubr.f32.gmra.mrb[0].mxu0 %v3490
      %v3492 = vpop.f32.mrb[0].mxu0
      %v3493 = vadd.f32 0.0, %v3492
      %v3494 = vpop.f32.mrb[0].mxu0
      %3495 = vmatprep.mubr.f32.mxu0 0.0
      %v3496 = vand.u32 %v423, 4294901760
      %v3497 = vsub.f32 %v423, %v3496
      %v3498 = vand.u32 %v3497, 4294901760
      %v3499 = vsub.f32 %v3497, %v3498
      %v3500 = vand.u32 %v3499, 4294901760
      %3501 = vmatmul.mubr.f32.gmra.mrb[0].mxu0 %v3500
      %v3502 = vpop.f32.mrb[0].mxu0
      %v3503 = vadd.f32 0.0, %v3502
      %v3504 = vpop.f32.mrb[0].mxu0
      %3505 = vmatprep.mubr.f32.mxu0 0.0
      %v3506 = vand.u32 %v424, 4294901760
      %v3507 = vsub.f32 %v424, %v3506
      %v3508 = vand.u32 %v3507, 4294901760
      %v3509 = vsub.f32 %v3507, %v3508
      %v3510 = vand.u32 %v3509, 4294901760
      %3511 = vmatmul.mubr.f32.gmra.mrb[0].mxu0 %v3510
      %v3512 = vpop.f32.mrb[0].mxu0
      %v3513 = vadd.f32 0.0, %v3512
      %v3514 = vpop.f32.mrb[0].mxu0
      %3515 = vmatprep.mubr.f32.mxu0 0.0
      %v3516 = vand.u32 %v425, 4294901760
      %v3517 = vsub.f32 %v425, %v3516
      %v3518 = vand.u32 %v3517, 4294901760
      %v3519 = vsub.f32 %v3517, %v3518
      %v3520 = vand.u32 %v3519, 4294901760
      %3521 = vmatmul.mubr.f32.gmra.mrb[0].mxu0 %v3520
      %v3522 = vpop.f32.mrb[0].mxu0
      %v3523 = vadd.f32 0.0, %v3522
      %v3524 = vpop.f32.mrb[0].mxu0
      %3525 = vmatprep.mubr.f32.mxu0 0.0
      %v3526 = vand.u32 %v426, 4294901760
      %v3527 = vsub.f32 %v426, %v3526
      %v3528 = vand.u32 %v3527, 4294901760
      %v3529 = vsub.f32 %v3527, %v3528
      %v3530 = vand.u32 %v3529, 4294901760
      %3531 = vmatmul.mubr.f32.gmra.mrb[0].mxu0 %v3530
      %v3532 = vpop.f32.mrb[0].mxu0
      %v3533 = vadd.f32 0.0, %v3532
      %v3534 = vpop.f32.mrb[0].mxu0
      %3535 = vmatprep.mubr.f32.mxu0 0.0
      %v3536 = vand.u32 %v427, 4294901760
      %v3537 = vsub.f32 %v427, %v3536
      %v3538 = vand.u32 %v3537, 4294901760
      %v3539 = vsub.f32 %v3537, %v3538
      %v3540 = vand.u32 %v3539, 4294901760
      %3541 = vmatmul.mubr.f32.gmra.mrb[0].mxu0 %v3540
      %v3542 = vpop.f32.mrb[0].mxu0
      %v3543 = vadd.f32 0.0, %v3542
      %v3544 = vpop.f32.mrb[0].mxu0
      %3545 = vmatprep.mubr.f32.mxu0 0.0
      %v3546 = vand.u32 %v428, 4294901760
      %v3547 = vsub.f32 %v428, %v3546
      %v3548 = vand.u32 %v3547, 4294901760
      %v3549 = vsub.f32 %v3547, %v3548
      %v3550 = vand.u32 %v3549, 4294901760
      %3551 = vmatmul.mubr.f32.gmra.mrb[0].mxu0 %v3550
      %v3552 = vpop.f32.mrb[0].mxu0
      %v3553 = vadd.f32 0.0, %v3552
      %v3554 = vpop.f32.mrb[0].mxu0
      %3555 = vmatprep.mubr.f32.mxu0 0.0
      %v3556 = vand.u32 %v429, 4294901760
      %v3557 = vsub.f32 %v429, %v3556
      %v3558 = vand.u32 %v3557, 4294901760
      %v3559 = vsub.f32 %v3557, %v3558
      %v3560 = vand.u32 %v3559, 4294901760
      %3561 = vmatmul.mubr.f32.gmra.mrb[0].mxu0 %v3560
      %v3562 = vpop.f32.mrb[0].mxu0
      %v3563 = vadd.f32 0.0, %v3562
      %v3564 = vpop.f32.mrb[0].mxu0
      %3565 = vmatprep.mubr.f32.mxu0 0.0
      %v3566 = vand.u32 %v430, 4294901760
      %v3567 = vsub.f32 %v430, %v3566
      %v3568 = vand.u32 %v3567, 4294901760
      %v3569 = vsub.f32 %v3567, %v3568
      %v3570 = vand.u32 %v3569, 4294901760
      %3571 = vmatmul.mubr.f32.gmra.mrb[0].mxu0 %v3570
      %v3572 = vpop.f32.mrb[0].mxu0
      %v3573 = vadd.f32 0.0, %v3572
      %v3574 = vpop.f32.mrb[0].mxu0
      %3575 = vmatprep.mubr.f32.mxu0 0.0
      %v3576 = vand.u32 %v431, 4294901760
      %v3577 = vsub.f32 %v431, %v3576
      %v3578 = vand.u32 %v3577, 4294901760
      %v3579 = vsub.f32 %v3577, %v3578
      %v3580 = vand.u32 %v3579, 4294901760
      %3581 = vmatmul.mubr.f32.gmra.mrb[0].mxu0 %v3580
      %v3582 = vpop.f32.mrb[0].mxu0
      %v3583 = vadd.f32 0.0, %v3582
      %v3584 = vpop.f32.mrb[0].mxu0
      %3585 = vmatprep.mubr.f32.mxu0 0.0
      %v3586 = vand.u32 %v432, 4294901760
      %v3587 = vsub.f32 %v432, %v3586
      %v3588 = vand.u32 %v3587, 4294901760
      %v3589 = vsub.f32 %v3587, %v3588
      %v3590 = vand.u32 %v3589, 4294901760
      %3591 = vmatmul.mubr.f32.gmra.mrb[0].mxu0 %v3590
      %v3592 = vpop.f32.mrb[0].mxu0
      %v3593 = vadd.f32 0.0, %v3592
      %v3594 = vpop.f32.mrb[0].mxu0
      %3595 = vmatprep.mubr.f32.mxu0 0.0
      %v3596 = vand.u32 %v433, 4294901760
      %v3597 = vsub.f32 %v433, %v3596
      %v3598 = vand.u32 %v3597, 4294901760
      %v3599 = vsub.f32 %v3597, %v3598
      %v3600 = vand.u32 %v3599, 4294901760
      %3601 = vmatmul.mubr.f32.gmra.mrb[0].mxu0 %v3600
      %v3602 = vpop.f32.mrb[0].mxu0
      %v3603 = vadd.f32 0.0, %v3602
      %v3604 = vpop.f32.mrb[0].mxu0
      %3605 = vmatprep.mubr.f32.mxu0 0.0
      %v3606 = vand.u32 %v434, 4294901760
      %v3607 = vsub.f32 %v434, %v3606
      %v3608 = vand.u32 %v3607, 4294901760
      %v3609 = vsub.f32 %v3607, %v3608
      %v3610 = vand.u32 %v3609, 4294901760
      %3611 = vmatmul.mubr.f32.gmra.mrb[0].mxu0 %v3610
      %v3612 = vpop.f32.mrb[0].mxu0
      %v3613 = vadd.f32 0.0, %v3612
      %v3614 = vpop.f32.mrb[0].mxu0
      %3615 = vmatprep.mubr.f32.mxu0 0.0
      %v3616 = vand.u32 %v435, 4294901760
      %v3617 = vsub.f32 %v435, %v3616
      %v3618 = vand.u32 %v3617, 4294901760
      %v3619 = vsub.f32 %v3617, %v3618
      %v3620 = vand.u32 %v3619, 4294901760
      %3621 = vmatmul.mubr.f32.gmra.mrb[0].mxu0 %v3620
      %v3622 = vpop.f32.mrb[0].mxu0
      %v3623 = vadd.f32 0.0, %v3622
      %v3624 = vpop.f32.mrb[0].mxu0
      %3625 = vdwg.mxu0
      %3626 = vmatprep.subr.mxu0 0.0
      %v3627 = vand.u32 %v3339, 4294901760
      %v3628 = vsub.f32 %v3339, %v3627
      %v3629 = vand.u32 %v3628, 4294901760
      %v3630 = vsub.f32 %v3628, %v3629
      %v3631 = vand.u32 %v3630, 4294901760
      %3632 = vmatpush1.msra.mxu0 %v3631
      %3633 = vmatprep.subr.mxu0 0.0
      %v3634 = vand.u32 %v3340, 4294901760
      %v3635 = vsub.f32 %v3340, %v3634
      %v3636 = vand.u32 %v3635, 4294901760
      %v3637 = vsub.f32 %v3635, %v3636
      %v3638 = vand.u32 %v3637, 4294901760
      %3639 = vmatpush1.msra.mxu0 %v3638
      %3640 = vmatprep.subr.mxu0 0.0
      %v3641 = vand.u32 %v3341, 4294901760
      %v3642 = vsub.f32 %v3341, %v3641
      %v3643 = vand.u32 %v3642, 4294901760
      %v3644 = vsub.f32 %v3642, %v3643
      %v3645 = vand.u32 %v3644, 4294901760
      %3646 = vmatpush1.msra.mxu0 %v3645
      %3647 = vmatprep.subr.mxu0 0.0
      %v3648 = vand.u32 %v3342, 4294901760
      %v3649 = vsub.f32 %v3342, %v3648
      %v3650 = vand.u32 %v3649, 4294901760
      %v3651 = vsub.f32 %v3649, %v3650
      %v3652 = vand.u32 %v3651, 4294901760
      %3653 = vmatpush1.msra.mxu0 %v3652
      %3654 = vmatprep.subr.mxu0 0.0
      %v3655 = vand.u32 %v3343, 4294901760
      %v3656 = vsub.f32 %v3343, %v3655
      %v3657 = vand.u32 %v3656, 4294901760
      %v3658 = vsub.f32 %v3656, %v3657
      %v3659 = vand.u32 %v3658, 4294901760
      %3660 = vmatpush1.msra.mxu0 %v3659
      %3661 = vmatprep.subr.mxu0 0.0
      %v3662 = vand.u32 %v3344, 4294901760
      %v3663 = vsub.f32 %v3344, %v3662
      %v3664 = vand.u32 %v3663, 4294901760
      %v3665 = vsub.f32 %v3663, %v3664
      %v3666 = vand.u32 %v3665, 4294901760
      %3667 = vmatpush1.msra.mxu0 %v3666
      %3668 = vmatprep.subr.mxu0 0.0
      %v3669 = vand.u32 %v3345, 4294901760
      %v3670 = vsub.f32 %v3345, %v3669
      %v3671 = vand.u32 %v3670, 4294901760
      %v3672 = vsub.f32 %v3670, %v3671
      %v3673 = vand.u32 %v3672, 4294901760
      %3674 = vmatpush1.msra.mxu0 %v3673
      %3675 = vmatprep.subr.mxu0 0.0
      %v3676 = vand.u32 %v3346, 4294901760
      %v3677 = vsub.f32 %v3346, %v3676
      %v3678 = vand.u32 %v3677, 4294901760
      %v3679 = vsub.f32 %v3677, %v3678
      %v3680 = vand.u32 %v3679, 4294901760
      %3681 = vmatpush1.msra.mxu0 %v3680
      %3682 = vmatprep.subr.mxu0 0.0
      %v3683 = vand.u32 %v3347, 4294901760
      %v3684 = vsub.f32 %v3347, %v3683
      %v3685 = vand.u32 %v3684, 4294901760
      %v3686 = vsub.f32 %v3684, %v3685
      %v3687 = vand.u32 %v3686, 4294901760
      %3688 = vmatpush1.msra.mxu0 %v3687
      %3689 = vmatprep.subr.mxu0 0.0
      %v3690 = vand.u32 %v3348, 4294901760
      %v3691 = vsub.f32 %v3348, %v3690
      %v3692 = vand.u32 %v3691, 4294901760
      %v3693 = vsub.f32 %v3691, %v3692
      %v3694 = vand.u32 %v3693, 4294901760
      %3695 = vmatpush1.msra.mxu0 %v3694
      %3696 = vmatprep.subr.mxu0 0.0
      %v3697 = vand.u32 %v3349, 4294901760
      %v3698 = vsub.f32 %v3349, %v3697
      %v3699 = vand.u32 %v3698, 4294901760
      %v3700 = vsub.f32 %v3698, %v3699
      %v3701 = vand.u32 %v3700, 4294901760
      %3702 = vmatpush1.msra.mxu0 %v3701
      %3703 = vmatprep.subr.mxu0 0.0
      %v3704 = vand.u32 %v3350, 4294901760
      %v3705 = vsub.f32 %v3350, %v3704
      %v3706 = vand.u32 %v3705, 4294901760
      %v3707 = vsub.f32 %v3705, %v3706
      %v3708 = vand.u32 %v3707, 4294901760
      %3709 = vmatpush1.msra.mxu0 %v3708
      %3710 = vmatprep.subr.mxu0 0.0
      %v3711 = vand.u32 %v3351, 4294901760
      %v3712 = vsub.f32 %v3351, %v3711
      %v3713 = vand.u32 %v3712, 4294901760
      %v3714 = vsub.f32 %v3712, %v3713
      %v3715 = vand.u32 %v3714, 4294901760
      %3716 = vmatpush1.msra.mxu0 %v3715
      %3717 = vmatprep.subr.mxu0 0.0
      %v3718 = vand.u32 %v3352, 4294901760
      %v3719 = vsub.f32 %v3352, %v3718
      %v3720 = vand.u32 %v3719, 4294901760
      %v3721 = vsub.f32 %v3719, %v3720
      %v3722 = vand.u32 %v3721, 4294901760
      %3723 = vmatpush1.msra.mxu0 %v3722
      %3724 = vmatprep.subr.mxu0 0.0
      %v3725 = vand.u32 %v3353, 4294901760
      %v3726 = vsub.f32 %v3353, %v3725
      %v3727 = vand.u32 %v3726, 4294901760
      %v3728 = vsub.f32 %v3726, %v3727
      %v3729 = vand.u32 %v3728, 4294901760
      %3730 = vmatpush1.msra.mxu0 %v3729
      %3731 = vmatprep.subr.mxu0 0.0
      %v3732 = vand.u32 %v3354, 4294901760
      %v3733 = vsub.f32 %v3354, %v3732
      %v3734 = vand.u32 %v3733, 4294901760
      %v3735 = vsub.f32 %v3733, %v3734
      %v3736 = vand.u32 %v3735, 4294901760
      %3737 = vmatpush1.msra.mxu0 %v3736
      %3738 = vmatprep.subr.mxu0 0.0
      %3739 = vmatpush1.msra.mxu0 0.0
      %3740 = vmatprep.subr.mxu0 0.0
      %3741 = vmatpush1.msra.mxu0 0.0
      %3742 = vmatprep.subr.mxu0 0.0
      %3743 = vmatpush1.msra.mxu0 0.0
      %3744 = vmatprep.subr.mxu0 0.0
      %3745 = vmatpush1.msra.mxu0 0.0
      %3746 = vmatprep.subr.mxu0 0.0
      %3747 = vmatpush1.msra.mxu0 0.0
      %3748 = vmatprep.subr.mxu0 0.0
      %3749 = vmatpush1.msra.mxu0 0.0
      %3750 = vmatprep.subr.mxu0 0.0
      %3751 = vmatpush1.msra.mxu0 0.0
      %3752 = vmatprep.subr.mxu0 0.0
      %3753 = vmatpush1.msra.mxu0 0.0
      %3754 = vmatprep.subr.mxu0 0.0
      %3755 = vmatpush1.msra.mxu0 0.0
      %3756 = vmatprep.subr.mxu0 0.0
      %3757 = vmatpush1.msra.mxu0 0.0
      %3758 = vmatprep.subr.mxu0 0.0
      %3759 = vmatpush1.msra.mxu0 0.0
      %3760 = vmatprep.subr.mxu0 0.0
      %3761 = vmatpush1.msra.mxu0 0.0
      %3762 = vmatprep.subr.mxu0 0.0
      %3763 = vmatpush1.msra.mxu0 0.0
      %3764 = vmatprep.subr.mxu0 0.0
      %3765 = vmatpush1.msra.mxu0 0.0
      %3766 = vmatprep.subr.mxu0 0.0
      %3767 = vmatpush1.msra.mxu0 0.0
      %3768 = vmatprep.subr.mxu0 0.0
      %3769 = vmatpush1.msra.mxu0 0.0
      %3770 = vmatprep.mubr.f32.mxu0 0.0
      %v3771 = vand.u32 %v417, 4294901760
      %3772 = vmatmul.mubr.f32.gmra.mrb[0].mxu0 %v3771
      %v3773 = vpop.f32.mrb[0].mxu0
      %v3774 = vadd.f32 %v3443, %v3773
      %v3775 = vpop.f32.mrb[0].mxu0
      %3776 = vmatprep.mubr.f32.mxu0 0.0
      %v3777 = vand.u32 %v418, 4294901760
      %3778 = vmatmul.mubr.f32.gmra.mrb[0].mxu0 %v3777
      %v3779 = vpop.f32.mrb[0].mxu0
      %v3780 = vadd.f32 %v3453, %v3779
      %v3781 = vpop.f32.mrb[0].mxu0
      %3782 = vmatprep.mubr.f32.mxu0 0.0
      %v3783 = vand.u32 %v419, 4294901760
      %3784 = vmatmul.mubr.f32.gmra.mrb[0].mxu0 %v3783
      %v3785 = vpop.f32.mrb[0].mxu0
      %v3786 = vadd.f32 %v3463, %v3785
      %v3787 = vpop.f32.mrb[0].mxu0
      %3788 = vmatprep.mubr.f32.mxu0 0.0
      %v3789 = vand.u32 %v420, 4294901760
      %3790 = vmatmul.mubr.f32.gmra.mrb[0].mxu0 %v3789
      %v3791 = vpop.f32.mrb[0].mxu0
      %v3792 = vadd.f32 %v3473, %v3791
      %v3793 = vpop.f32.mrb[0].mxu0
      %3794 = vmatprep.mubr.f32.mxu0 0.0
      %v3795 = vand.u32 %v421, 4294901760
      %3796 = vmatmul.mubr.f32.gmra.mrb[0].mxu0 %v3795
      %v3797 = vpop.f32.mrb[0].mxu0
      %v3798 = vadd.f32 %v3483, %v3797
      %v3799 = vpop.f32.mrb[0].mxu0
      %3800 = vmatprep.mubr.f32.mxu0 0.0
      %v3801 = vand.u32 %v422, 4294901760
      %3802 = vmatmul.mubr.f32.gmra.mrb[0].mxu0 %v3801
      %v3803 = vpop.f32.mrb[0].mxu0
      %v3804 = vadd.f32 %v3493, %v3803
      %v3805 = vpop.f32.mrb[0].mxu0
      %3806 = vmatprep.mubr.f32.mxu0 0.0
      %v3807 = vand.u32 %v423, 4294901760
      %3808 = vmatmul.mubr.f32.gmra.mrb[0].mxu0 %v3807
      %v3809 = vpop.f32.mrb[0].mxu0
      %v3810 = vadd.f32 %v3503, %v3809
      %v3811 = vpop.f32.mrb[0].mxu0
      %3812 = vmatprep.mubr.f32.mxu0 0.0
      %v3813 = vand.u32 %v424, 4294901760
      %3814 = vmatmul.mubr.f32.gmra.mrb[0].mxu0 %v3813
      %v3815 = vpop.f32.mrb[0].mxu0
      %v3816 = vadd.f32 %v3513, %v3815
      %v3817 = vpop.f32.mrb[0].mxu0
      %3818 = vmatprep.mubr.f32.mxu0 0.0
      %v3819 = vand.u32 %v425, 4294901760
      %3820 = vmatmul.mubr.f32.gmra.mrb[0].mxu0 %v3819
      %v3821 = vpop.f32.mrb[0].mxu0
      %v3822 = vadd.f32 %v3523, %v3821
      %v3823 = vpop.f32.mrb[0].mxu0
      %3824 = vmatprep.mubr.f32.mxu0 0.0
      %v3825 = vand.u32 %v426, 4294901760
      %3826 = vmatmul.mubr.f32.gmra.mrb[0].mxu0 %v3825
      %v3827 = vpop.f32.mrb[0].mxu0
      %v3828 = vadd.f32 %v3533, %v3827
      %v3829 = vpop.f32.mrb[0].mxu0
      %3830 = vmatprep.mubr.f32.mxu0 0.0
      %v3831 = vand.u32 %v427, 4294901760
      %3832 = vmatmul.mubr.f32.gmra.mrb[0].mxu0 %v3831
      %v3833 = vpop.f32.mrb[0].mxu0
      %v3834 = vadd.f32 %v3543, %v3833
      %v3835 = vpop.f32.mrb[0].mxu0
      %3836 = vmatprep.mubr.f32.mxu0 0.0
      %v3837 = vand.u32 %v428, 4294901760
      %3838 = vmatmul.mubr.f32.gmra.mrb[0].mxu0 %v3837
      %v3839 = vpop.f32.mrb[0].mxu0
      %v3840 = vadd.f32 %v3553, %v3839
      %v3841 = vpop.f32.mrb[0].mxu0
      %3842 = vmatprep.mubr.f32.mxu0 0.0
      %v3843 = vand.u32 %v429, 4294901760
      %3844 = vmatmul.mubr.f32.gmra.mrb[0].mxu0 %v3843
      %v3845 = vpop.f32.mrb[0].mxu0
      %v3846 = vadd.f32 %v3563, %v3845
      %v3847 = vpop.f32.mrb[0].mxu0
      %3848 = vmatprep.mubr.f32.mxu0 0.0
      %v3849 = vand.u32 %v430, 4294901760
      %3850 = vmatmul.mubr.f32.gmra.mrb[0].mxu0 %v3849
      %v3851 = vpop.f32.mrb[0].mxu0
      %v3852 = vadd.f32 %v3573, %v3851
      %v3853 = vpop.f32.mrb[0].mxu0
      %3854 = vmatprep.mubr.f32.mxu0 0.0
      %v3855 = vand.u32 %v431, 4294901760
      %3856 = vmatmul.mubr.f32.gmra.mrb[0].mxu0 %v3855
      %v3857 = vpop.f32.mrb[0].mxu0
      %v3858 = vadd.f32 %v3583, %v3857
      %v3859 = vpop.f32.mrb[0].mxu0
      %3860 = vmatprep.mubr.f32.mxu0 0.0
      %v3861 = vand.u32 %v432, 4294901760
      %3862 = vmatmul.mubr.f32.gmra.mrb[0].mxu0 %v3861
      %v3863 = vpop.f32.mrb[0].mxu0
      %v3864 = vadd.f32 %v3593, %v3863
      %v3865 = vpop.f32.mrb[0].mxu0
      %3866 = vmatprep.mubr.f32.mxu0 0.0
      %v3867 = vand.u32 %v433, 4294901760
      %3868 = vmatmul.mubr.f32.gmra.mrb[0].mxu0 %v3867
      %v3869 = vpop.f32.mrb[0].mxu0
      %v3870 = vadd.f32 %v3603, %v3869
      %v3871 = vpop.f32.mrb[0].mxu0
      %3872 = vmatprep.mubr.f32.mxu0 0.0
      %v3873 = vand.u32 %v434, 4294901760
      %3874 = vmatmul.mubr.f32.gmra.mrb[0].mxu0 %v3873
      %v3875 = vpop.f32.mrb[0].mxu0
      %v3876 = vadd.f32 %v3613, %v3875
      %v3877 = vpop.f32.mrb[0].mxu0
      %3878 = vmatprep.mubr.f32.mxu0 0.0
      %v3879 = vand.u32 %v435, 4294901760
      %3880 = vmatmul.mubr.f32.gmra.mrb[0].mxu0 %v3879
      %v3881 = vpop.f32.mrb[0].mxu0
      %v3882 = vadd.f32 %v3623, %v3881
      %v3883 = vpop.f32.mrb[0].mxu0
      %3884 = vdwg.mxu0
      %3885 = vmatprep.subr.mxu0 0.0
      %v3886 = vand.u32 %v3339, 4294901760
      %v3887 = vsub.f32 %v3339, %v3886
      %3888 = vmatpush1.msra.mxu0 %v3887
      %3889 = vmatprep.subr.mxu0 0.0
      %v3890 = vand.u32 %v3340, 4294901760
      %v3891 = vsub.f32 %v3340, %v3890
      %3892 = vmatpush1.msra.mxu0 %v3891
      %3893 = vmatprep.subr.mxu0 0.0
      %v3894 = vand.u32 %v3341, 4294901760
      %v3895 = vsub.f32 %v3341, %v3894
      %3896 = vmatpush1.msra.mxu0 %v3895
      %3897 = vmatprep.subr.mxu0 0.0
      %v3898 = vand.u32 %v3342, 4294901760
      %v3899 = vsub.f32 %v3342, %v3898
      %3900 = vmatpush1.msra.mxu0 %v3899
      %3901 = vmatprep.subr.mxu0 0.0
      %v3902 = vand.u32 %v3343, 4294901760
      %v3903 = vsub.f32 %v3343, %v3902
      %3904 = vmatpush1.msra.mxu0 %v3903
      %3905 = vmatprep.subr.mxu0 0.0
      %v3906 = vand.u32 %v3344, 4294901760
      %v3907 = vsub.f32 %v3344, %v3906
      %3908 = vmatpush1.msra.mxu0 %v3907
      %3909 = vmatprep.subr.mxu0 0.0
      %v3910 = vand.u32 %v3345, 4294901760
      %v3911 = vsub.f32 %v3345, %v3910
      %3912 = vmatpush1.msra.mxu0 %v3911
      %3913 = vmatprep.subr.mxu0 0.0
      %v3914 = vand.u32 %v3346, 4294901760
      %v3915 = vsub.f32 %v3346, %v3914
      %3916 = vmatpush1.msra.mxu0 %v3915
      %3917 = vmatprep.subr.mxu0 0.0
      %v3918 = vand.u32 %v3347, 4294901760
      %v3919 = vsub.f32 %v3347, %v3918
      %3920 = vmatpush1.msra.mxu0 %v3919
      %3921 = vmatprep.subr.mxu0 0.0
      %v3922 = vand.u32 %v3348, 4294901760
      %v3923 = vsub.f32 %v3348, %v3922
      %3924 = vmatpush1.msra.mxu0 %v3923
      %3925 = vmatprep.subr.mxu0 0.0
      %v3926 = vand.u32 %v3349, 4294901760
      %v3927 = vsub.f32 %v3349, %v3926
      %3928 = vmatpush1.msra.mxu0 %v3927
      %3929 = vmatprep.subr.mxu0 0.0
      %v3930 = vand.u32 %v3350, 4294901760
      %v3931 = vsub.f32 %v3350, %v3930
      %3932 = vmatpush1.msra.mxu0 %v3931
      %3933 = vmatprep.subr.mxu0 0.0
      %v3934 = vand.u32 %v3351, 4294901760
      %v3935 = vsub.f32 %v3351, %v3934
      %3936 = vmatpush1.msra.mxu0 %v3935
      %3937 = vmatprep.subr.mxu0 0.0
      %v3938 = vand.u32 %v3352, 4294901760
      %v3939 = vsub.f32 %v3352, %v3938
      %3940 = vmatpush1.msra.mxu0 %v3939
      %3941 = vmatprep.subr.mxu0 0.0
      %v3942 = vand.u32 %v3353, 4294901760
      %v3943 = vsub.f32 %v3353, %v3942
      %3944 = vmatpush1.msra.mxu0 %v3943
      %3945 = vmatprep.subr.mxu0 0.0
      %v3946 = vand.u32 %v3354, 4294901760
      %v3947 = vsub.f32 %v3354, %v3946
      %3948 = vmatpush1.msra.mxu0 %v3947
      %3949 = vmatprep.subr.mxu0 0.0
      %3950 = vmatpush1.msra.mxu0 0.0
      %3951 = vmatprep.subr.mxu0 0.0
      %3952 = vmatpush1.msra.mxu0 0.0
      %3953 = vmatprep.subr.mxu0 0.0
      %3954 = vmatpush1.msra.mxu0 0.0
      %3955 = vmatprep.subr.mxu0 0.0
      %3956 = vmatpush1.msra.mxu0 0.0
      %3957 = vmatprep.subr.mxu0 0.0
      %3958 = vmatpush1.msra.mxu0 0.0
      %3959 = vmatprep.subr.mxu0 0.0
      %3960 = vmatpush1.msra.mxu0 0.0
      %3961 = vmatprep.subr.mxu0 0.0
      %3962 = vmatpush1.msra.mxu0 0.0
      %3963 = vmatprep.subr.mxu0 0.0
      %3964 = vmatpush1.msra.mxu0 0.0
      %3965 = vmatprep.subr.mxu0 0.0
      %3966 = vmatpush1.msra.mxu0 0.0
      %3967 = vmatprep.subr.mxu0 0.0
      %3968 = vmatpush1.msra.mxu0 0.0
      %3969 = vmatprep.subr.mxu0 0.0
      %3970 = vmatpush1.msra.mxu0 0.0
      %3971 = vmatprep.subr.mxu0 0.0
      %3972 = vmatpush1.msra.mxu0 0.0
      %3973 = vmatprep.subr.mxu0 0.0
      %3974 = vmatpush1.msra.mxu0 0.0
      %3975 = vmatprep.subr.mxu0 0.0
      %3976 = vmatpush1.msra.mxu0 0.0
      %3977 = vmatprep.subr.mxu0 0.0
      %3978 = vmatpush1.msra.mxu0 0.0
      %3979 = vmatprep.subr.mxu0 0.0
      %3980 = vmatpush1.msra.mxu0 0.0
      %3981 = vmatprep.mubr.f32.mxu0 0.0
      %v3982 = vand.u32 %v417, 4294901760
      %v3983 = vsub.f32 %v417, %v3982
      %3984 = vmatmul.mubr.f32.gmra.mrb[0].mxu0 %v3983
      %v3985 = vpop.f32.mrb[0].mxu0
      %v3986 = vadd.f32 %v3774, %v3985
      %v3987 = vpop.f32.mrb[0].mxu0
      %3988 = vmatprep.mubr.f32.mxu0 0.0
      %v3989 = vand.u32 %v418, 4294901760
      %v3990 = vsub.f32 %v418, %v3989
      %3991 = vmatmul.mubr.f32.gmra.mrb[0].mxu0 %v3990
      %v3992 = vpop.f32.mrb[0].mxu0
      %v3993 = vadd.f32 %v3780, %v3992
      %v3994 = vpop.f32.mrb[0].mxu0
      %3995 = vmatprep.mubr.f32.mxu0 0.0
      %v3996 = vand.u32 %v419, 4294901760
      %v3997 = vsub.f32 %v419, %v3996
      %3998 = vmatmul.mubr.f32.gmra.mrb[0].mxu0 %v3997
      %v3999 = vpop.f32.mrb[0].mxu0
      %v4000 = vadd.f32 %v3786, %v3999
      %v4001 = vpop.f32.mrb[0].mxu0
      %4002 = vmatprep.mubr.f32.mxu0 0.0
      %v4003 = vand.u32 %v420, 4294901760
      %v4004 = vsub.f32 %v420, %v4003
      %4005 = vmatmul.mubr.f32.gmra.mrb[0].mxu0 %v4004
      %v4006 = vpop.f32.mrb[0].mxu0
      %v4007 = vadd.f32 %v3792, %v4006
      %v4008 = vpop.f32.mrb[0].mxu0
      %4009 = vmatprep.mubr.f32.mxu0 0.0
      %v4010 = vand.u32 %v421, 4294901760
      %v4011 = vsub.f32 %v421, %v4010
      %4012 = vmatmul.mubr.f32.gmra.mrb[0].mxu0 %v4011
      %v4013 = vpop.f32.mrb[0].mxu0
      %v4014 = vadd.f32 %v3798, %v4013
      %v4015 = vpop.f32.mrb[0].mxu0
      %4016 = vmatprep.mubr.f32.mxu0 0.0
      %v4017 = vand.u32 %v422, 4294901760
      %v4018 = vsub.f32 %v422, %v4017
      %4019 = vmatmul.mubr.f32.gmra.mrb[0].mxu0 %v4018
      %v4020 = vpop.f32.mrb[0].mxu0
      %v4021 = vadd.f32 %v3804, %v4020
      %v4022 = vpop.f32.mrb[0].mxu0
      %4023 = vmatprep.mubr.f32.mxu0 0.0
      %v4024 = vand.u32 %v423, 4294901760
      %v4025 = vsub.f32 %v423, %v4024
      %4026 = vmatmul.mubr.f32.gmra.mrb[0].mxu0 %v4025
      %v4027 = vpop.f32.mrb[0].mxu0
      %v4028 = vadd.f32 %v3810, %v4027
      %v4029 = vpop.f32.mrb[0].mxu0
      %4030 = vmatprep.mubr.f32.mxu0 0.0
      %v4031 = vand.u32 %v424, 4294901760
      %v4032 = vsub.f32 %v424, %v4031
      %4033 = vmatmul.mubr.f32.gmra.mrb[0].mxu0 %v4032
      %v4034 = vpop.f32.mrb[0].mxu0
      %v4035 = vadd.f32 %v3816, %v4034
      %v4036 = vpop.f32.mrb[0].mxu0
      %4037 = vmatprep.mubr.f32.mxu0 0.0
      %v4038 = vand.u32 %v425, 4294901760
      %v4039 = vsub.f32 %v425, %v4038
      %4040 = vmatmul.mubr.f32.gmra.mrb[0].mxu0 %v4039
      %v4041 = vpop.f32.mrb[0].mxu0
      %v4042 = vadd.f32 %v3822, %v4041
      %v4043 = vpop.f32.mrb[0].mxu0
      %4044 = vmatprep.mubr.f32.mxu0 0.0
      %v4045 = vand.u32 %v426, 4294901760
      %v4046 = vsub.f32 %v426, %v4045
      %4047 = vmatmul.mubr.f32.gmra.mrb[0].mxu0 %v4046
      %v4048 = vpop.f32.mrb[0].mxu0
      %v4049 = vadd.f32 %v3828, %v4048
      %v4050 = vpop.f32.mrb[0].mxu0
      %4051 = vmatprep.mubr.f32.mxu0 0.0
      %v4052 = vand.u32 %v427, 4294901760
      %v4053 = vsub.f32 %v427, %v4052
      %4054 = vmatmul.mubr.f32.gmra.mrb[0].mxu0 %v4053
      %v4055 = vpop.f32.mrb[0].mxu0
      %v4056 = vadd.f32 %v3834, %v4055
      %v4057 = vpop.f32.mrb[0].mxu0
      %4058 = vmatprep.mubr.f32.mxu0 0.0
      %v4059 = vand.u32 %v428, 4294901760
      %v4060 = vsub.f32 %v428, %v4059
      %4061 = vmatmul.mubr.f32.gmra.mrb[0].mxu0 %v4060
      %v4062 = vpop.f32.mrb[0].mxu0
      %v4063 = vadd.f32 %v3840, %v4062
      %v4064 = vpop.f32.mrb[0].mxu0
      %4065 = vmatprep.mubr.f32.mxu0 0.0
      %v4066 = vand.u32 %v429, 4294901760
      %v4067 = vsub.f32 %v429, %v4066
      %4068 = vmatmul.mubr.f32.gmra.mrb[0].mxu0 %v4067
      %v4069 = vpop.f32.mrb[0].mxu0
      %v4070 = vadd.f32 %v3846, %v4069
      %v4071 = vpop.f32.mrb[0].mxu0
      %4072 = vmatprep.mubr.f32.mxu0 0.0
      %v4073 = vand.u32 %v430, 4294901760
      %v4074 = vsub.f32 %v430, %v4073
      %4075 = vmatmul.mubr.f32.gmra.mrb[0].mxu0 %v4074
      %v4076 = vpop.f32.mrb[0].mxu0
      %v4077 = vadd.f32 %v3852, %v4076
      %v4078 = vpop.f32.mrb[0].mxu0
      %4079 = vmatprep.mubr.f32.mxu0 0.0
      %v4080 = vand.u32 %v431, 4294901760
      %v4081 = vsub.f32 %v431, %v4080
      %4082 = vmatmul.mubr.f32.gmra.mrb[0].mxu0 %v4081
      %v4083 = vpop.f32.mrb[0].mxu0
      %v4084 = vadd.f32 %v3858, %v4083
      %v4085 = vpop.f32.mrb[0].mxu0
      %4086 = vmatprep.mubr.f32.mxu0 0.0
      %v4087 = vand.u32 %v432, 4294901760
      %v4088 = vsub.f32 %v432, %v4087
      %4089 = vmatmul.mubr.f32.gmra.mrb[0].mxu0 %v4088
      %v4090 = vpop.f32.mrb[0].mxu0
      %v4091 = vadd.f32 %v3864, %v4090
      %v4092 = vpop.f32.mrb[0].mxu0
      %4093 = vmatprep.mubr.f32.mxu0 0.0
      %v4094 = vand.u32 %v433, 4294901760
      %v4095 = vsub.f32 %v433, %v4094
      %4096 = vmatmul.mubr.f32.gmra.mrb[0].mxu0 %v4095
      %v4097 = vpop.f32.mrb[0].mxu0
      %v4098 = vadd.f32 %v3870, %v4097
      %v4099 = vpop.f32.mrb[0].mxu0
      %4100 = vmatprep.mubr.f32.mxu0 0.0
      %v4101 = vand.u32 %v434, 4294901760
      %v4102 = vsub.f32 %v434, %v4101
      %4103 = vmatmul.mubr.f32.gmra.mrb[0].mxu0 %v4102
      %v4104 = vpop.f32.mrb[0].mxu0
      %v4105 = vadd.f32 %v3876, %v4104
      %v4106 = vpop.f32.mrb[0].mxu0
      %4107 = vmatprep.mubr.f32.mxu0 0.0
      %v4108 = vand.u32 %v435, 4294901760
      %v4109 = vsub.f32 %v435, %v4108
      %4110 = vmatmul.mubr.f32.gmra.mrb[0].mxu0 %v4109
      %v4111 = vpop.f32.mrb[0].mxu0
      %v4112 = vadd.f32 %v3882, %v4111
      %v4113 = vpop.f32.mrb[0].mxu0
      %4114 = vdwg.mxu0
      %4115 = vmatprep.subr.mxu0 0.0
      %v4116 = vand.u32 %v3339, 4294901760
      %4117 = vmatpush1.msra.mxu0 %v4116
      %4118 = vmatprep.subr.mxu0 0.0
      %v4119 = vand.u32 %v3340, 4294901760
      %4120 = vmatpush1.msra.mxu0 %v4119
      %4121 = vmatprep.subr.mxu0 0.0
      %v4122 = vand.u32 %v3341, 4294901760
      %4123 = vmatpush1.msra.mxu0 %v4122
      %4124 = vmatprep.subr.mxu0 0.0
      %v4125 = vand.u32 %v3342, 4294901760
      %4126 = vmatpush1.msra.mxu0 %v4125
      %4127 = vmatprep.subr.mxu0 0.0
      %v4128 = vand.u32 %v3343, 4294901760
      %4129 = vmatpush1.msra.mxu0 %v4128
      %4130 = vmatprep.subr.mxu0 0.0
      %v4131 = vand.u32 %v3344, 4294901760
      %4132 = vmatpush1.msra.mxu0 %v4131
      %4133 = vmatprep.subr.mxu0 0.0
      %v4134 = vand.u32 %v3345, 4294901760
      %4135 = vmatpush1.msra.mxu0 %v4134
      %4136 = vmatprep.subr.mxu0 0.0
      %v4137 = vand.u32 %v3346, 4294901760
      %4138 = vmatpush1.msra.mxu0 %v4137
      %4139 = vmatprep.subr.mxu0 0.0
      %v4140 = vand.u32 %v3347, 4294901760
      %4141 = vmatpush1.msra.mxu0 %v4140
      %4142 = vmatprep.subr.mxu0 0.0
      %v4143 = vand.u32 %v3348, 4294901760
      %4144 = vmatpush1.msra.mxu0 %v4143
      %4145 = vmatprep.subr.mxu0 0.0
      %v4146 = vand.u32 %v3349, 4294901760
      %4147 = vmatpush1.msra.mxu0 %v4146
      %4148 = vmatprep.subr.mxu0 0.0
      %v4149 = vand.u32 %v3350, 4294901760
      %4150 = vmatpush1.msra.mxu0 %v4149
      %4151 = vmatprep.subr.mxu0 0.0
      %v4152 = vand.u32 %v3351, 4294901760
      %4153 = vmatpush1.msra.mxu0 %v4152
      %4154 = vmatprep.subr.mxu0 0.0
      %v4155 = vand.u32 %v3352, 4294901760
      %4156 = vmatpush1.msra.mxu0 %v4155
      %4157 = vmatprep.subr.mxu0 0.0
      %v4158 = vand.u32 %v3353, 4294901760
      %4159 = vmatpush1.msra.mxu0 %v4158
      %4160 = vmatprep.subr.mxu0 0.0
      %v4161 = vand.u32 %v3354, 4294901760
      %4162 = vmatpush1.msra.mxu0 %v4161
      %4163 = vmatprep.subr.mxu0 0.0
      %4164 = vmatpush1.msra.mxu0 0.0
      %4165 = vmatprep.subr.mxu0 0.0
      %4166 = vmatpush1.msra.mxu0 0.0
      %4167 = vmatprep.subr.mxu0 0.0
      %4168 = vmatpush1.msra.mxu0 0.0
      %4169 = vmatprep.subr.mxu0 0.0
      %4170 = vmatpush1.msra.mxu0 0.0
      %4171 = vmatprep.subr.mxu0 0.0
      %4172 = vmatpush1.msra.mxu0 0.0
      %4173 = vmatprep.subr.mxu0 0.0
      %4174 = vmatpush1.msra.mxu0 0.0
      %4175 = vmatprep.subr.mxu0 0.0
      %4176 = vmatpush1.msra.mxu0 0.0
      %4177 = vmatprep.subr.mxu0 0.0
      %4178 = vmatpush1.msra.mxu0 0.0
      %4179 = vmatprep.subr.mxu0 0.0
      %4180 = vmatpush1.msra.mxu0 0.0
      %4181 = vmatprep.subr.mxu0 0.0
      %4182 = vmatpush1.msra.mxu0 0.0
      %4183 = vmatprep.subr.mxu0 0.0
      %4184 = vmatpush1.msra.mxu0 0.0
      %4185 = vmatprep.subr.mxu0 0.0
      %4186 = vmatpush1.msra.mxu0 0.0
      %4187 = vmatprep.subr.mxu0 0.0
      %4188 = vmatpush1.msra.mxu0 0.0
      %4189 = vmatprep.subr.mxu0 0.0
      %4190 = vmatpush1.msra.mxu0 0.0
      %4191 = vmatprep.subr.mxu0 0.0
      %4192 = vmatpush1.msra.mxu0 0.0
      %4193 = vmatprep.subr.mxu0 0.0
      %4194 = vmatpush1.msra.mxu0 0.0
      %4195 = vmatprep.mubr.f32.mxu0 0.0
      %v4196 = vand.u32 %v417, 4294901760
      %v4197 = vsub.f32 %v417, %v4196
      %v4198 = vand.u32 %v4197, 4294901760
      %4199 = vmatmul.mubr.f32.gmra.mrb[0].mxu0 %v4198
      %v4200 = vpop.f32.mrb[0].mxu0
      %v4201 = vadd.f32 %v3986, %v4200
      %v4202 = vpop.f32.mrb[0].mxu0
      %4203 = vmatprep.mubr.f32.mxu0 0.0
      %v4204 = vand.u32 %v418, 4294901760
      %v4205 = vsub.f32 %v418, %v4204
      %v4206 = vand.u32 %v4205, 4294901760
      %4207 = vmatmul.mubr.f32.gmra.mrb[0].mxu0 %v4206
      %v4208 = vpop.f32.mrb[0].mxu0
      %v4209 = vadd.f32 %v3993, %v4208
      %v4210 = vpop.f32.mrb[0].mxu0
      %4211 = vmatprep.mubr.f32.mxu0 0.0
      %v4212 = vand.u32 %v419, 4294901760
      %v4213 = vsub.f32 %v419, %v4212
      %v4214 = vand.u32 %v4213, 4294901760
      %4215 = vmatmul.mubr.f32.gmra.mrb[0].mxu0 %v4214
      %v4216 = vpop.f32.mrb[0].mxu0
      %v4217 = vadd.f32 %v4000, %v4216
      %v4218 = vpop.f32.mrb[0].mxu0
      %4219 = vmatprep.mubr.f32.mxu0 0.0
      %v4220 = vand.u32 %v420, 4294901760
      %v4221 = vsub.f32 %v420, %v4220
      %v4222 = vand.u32 %v4221, 4294901760
      %4223 = vmatmul.mubr.f32.gmra.mrb[0].mxu0 %v4222
      %v4224 = vpop.f32.mrb[0].mxu0
      %v4225 = vadd.f32 %v4007, %v4224
      %v4226 = vpop.f32.mrb[0].mxu0
      %4227 = vmatprep.mubr.f32.mxu0 0.0
      %v4228 = vand.u32 %v421, 4294901760
      %v4229 = vsub.f32 %v421, %v4228
      %v4230 = vand.u32 %v4229, 4294901760
      %4231 = vmatmul.mubr.f32.gmra.mrb[0].mxu0 %v4230
      %v4232 = vpop.f32.mrb[0].mxu0
      %v4233 = vadd.f32 %v4014, %v4232
      %v4234 = vpop.f32.mrb[0].mxu0
      %4235 = vmatprep.mubr.f32.mxu0 0.0
      %v4236 = vand.u32 %v422, 4294901760
      %v4237 = vsub.f32 %v422, %v4236
      %v4238 = vand.u32 %v4237, 4294901760
      %4239 = vmatmul.mubr.f32.gmra.mrb[0].mxu0 %v4238
      %v4240 = vpop.f32.mrb[0].mxu0
      %v4241 = vadd.f32 %v4021, %v4240
      %v4242 = vpop.f32.mrb[0].mxu0
      %4243 = vmatprep.mubr.f32.mxu0 0.0
      %v4244 = vand.u32 %v423, 4294901760
      %v4245 = vsub.f32 %v423, %v4244
      %v4246 = vand.u32 %v4245, 4294901760
      %4247 = vmatmul.mubr.f32.gmra.mrb[0].mxu0 %v4246
      %v4248 = vpop.f32.mrb[0].mxu0
      %v4249 = vadd.f32 %v4028, %v4248
      %v4250 = vpop.f32.mrb[0].mxu0
      %4251 = vmatprep.mubr.f32.mxu0 0.0
      %v4252 = vand.u32 %v424, 4294901760
      %v4253 = vsub.f32 %v424, %v4252
      %v4254 = vand.u32 %v4253, 4294901760
      %4255 = vmatmul.mubr.f32.gmra.mrb[0].mxu0 %v4254
      %v4256 = vpop.f32.mrb[0].mxu0
      %v4257 = vadd.f32 %v4035, %v4256
      %v4258 = vpop.f32.mrb[0].mxu0
      %4259 = vmatprep.mubr.f32.mxu0 0.0
      %v4260 = vand.u32 %v425, 4294901760
      %v4261 = vsub.f32 %v425, %v4260
      %v4262 = vand.u32 %v4261, 4294901760
      %4263 = vmatmul.mubr.f32.gmra.mrb[0].mxu0 %v4262
      %v4264 = vpop.f32.mrb[0].mxu0
      %v4265 = vadd.f32 %v4042, %v4264
      %v4266 = vpop.f32.mrb[0].mxu0
      %4267 = vmatprep.mubr.f32.mxu0 0.0
      %v4268 = vand.u32 %v426, 4294901760
      %v4269 = vsub.f32 %v426, %v4268
      %v4270 = vand.u32 %v4269, 4294901760
      %4271 = vmatmul.mubr.f32.gmra.mrb[0].mxu0 %v4270
      %v4272 = vpop.f32.mrb[0].mxu0
      %v4273 = vadd.f32 %v4049, %v4272
      %v4274 = vpop.f32.mrb[0].mxu0
      %4275 = vmatprep.mubr.f32.mxu0 0.0
      %v4276 = vand.u32 %v427, 4294901760
      %v4277 = vsub.f32 %v427, %v4276
      %v4278 = vand.u32 %v4277, 4294901760
      %4279 = vmatmul.mubr.f32.gmra.mrb[0].mxu0 %v4278
      %v4280 = vpop.f32.mrb[0].mxu0
      %v4281 = vadd.f32 %v4056, %v4280
      %v4282 = vpop.f32.mrb[0].mxu0
      %4283 = vmatprep.mubr.f32.mxu0 0.0
      %v4284 = vand.u32 %v428, 4294901760
      %v4285 = vsub.f32 %v428, %v4284
      %v4286 = vand.u32 %v4285, 4294901760
      %4287 = vmatmul.mubr.f32.gmra.mrb[0].mxu0 %v4286
      %v4288 = vpop.f32.mrb[0].mxu0
      %v4289 = vadd.f32 %v4063, %v4288
      %v4290 = vpop.f32.mrb[0].mxu0
      %4291 = vmatprep.mubr.f32.mxu0 0.0
      %v4292 = vand.u32 %v429, 4294901760
      %v4293 = vsub.f32 %v429, %v4292
      %v4294 = vand.u32 %v4293, 4294901760
      %4295 = vmatmul.mubr.f32.gmra.mrb[0].mxu0 %v4294
      %v4296 = vpop.f32.mrb[0].mxu0
      %v4297 = vadd.f32 %v4070, %v4296
      %v4298 = vpop.f32.mrb[0].mxu0
      %4299 = vmatprep.mubr.f32.mxu0 0.0
      %v4300 = vand.u32 %v430, 4294901760
      %v4301 = vsub.f32 %v430, %v4300
      %v4302 = vand.u32 %v4301, 4294901760
      %4303 = vmatmul.mubr.f32.gmra.mrb[0].mxu0 %v4302
      %v4304 = vpop.f32.mrb[0].mxu0
      %v4305 = vadd.f32 %v4077, %v4304
      %v4306 = vpop.f32.mrb[0].mxu0
      %4307 = vmatprep.mubr.f32.mxu0 0.0
      %v4308 = vand.u32 %v431, 4294901760
      %v4309 = vsub.f32 %v431, %v4308
      %v4310 = vand.u32 %v4309, 4294901760
      %4311 = vmatmul.mubr.f32.gmra.mrb[0].mxu0 %v4310
      %v4312 = vpop.f32.mrb[0].mxu0
      %v4313 = vadd.f32 %v4084, %v4312
      %v4314 = vpop.f32.mrb[0].mxu0
      %4315 = vmatprep.mubr.f32.mxu0 0.0
      %v4316 = vand.u32 %v432, 4294901760
      %v4317 = vsub.f32 %v432, %v4316
      %v4318 = vand.u32 %v4317, 4294901760
      %4319 = vmatmul.mubr.f32.gmra.mrb[0].mxu0 %v4318
      %v4320 = vpop.f32.mrb[0].mxu0
      %v4321 = vadd.f32 %v4091, %v4320
      %v4322 = vpop.f32.mrb[0].mxu0
      %4323 = vmatprep.mubr.f32.mxu0 0.0
      %v4324 = vand.u32 %v433, 4294901760
      %v4325 = vsub.f32 %v433, %v4324
      %v4326 = vand.u32 %v4325, 4294901760
      %4327 = vmatmul.mubr.f32.gmra.mrb[0].mxu0 %v4326
      %v4328 = vpop.f32.mrb[0].mxu0
      %v4329 = vadd.f32 %v4098, %v4328
      %v4330 = vpop.f32.mrb[0].mxu0
      %4331 = vmatprep.mubr.f32.mxu0 0.0
      %v4332 = vand.u32 %v434, 4294901760
      %v4333 = vsub.f32 %v434, %v4332
      %v4334 = vand.u32 %v4333, 4294901760
      %4335 = vmatmul.mubr.f32.gmra.mrb[0].mxu0 %v4334
      %v4336 = vpop.f32.mrb[0].mxu0
      %v4337 = vadd.f32 %v4105, %v4336
      %v4338 = vpop.f32.mrb[0].mxu0
      %4339 = vmatprep.mubr.f32.mxu0 0.0
      %v4340 = vand.u32 %v435, 4294901760
      %v4341 = vsub.f32 %v435, %v4340
      %v4342 = vand.u32 %v4341, 4294901760
      %4343 = vmatmul.mubr.f32.gmra.mrb[0].mxu0 %v4342
      %v4344 = vpop.f32.mrb[0].mxu0
      %v4345 = vadd.f32 %v4112, %v4344
      %v4346 = vpop.f32.mrb[0].mxu0
      %4347 = vdwg.mxu0
      %4348 = vmatprep.subr.mxu0 0.0
      %v4349 = vand.u32 %v3339, 4294901760
      %v4350 = vsub.f32 %v3339, %v4349
      %v4351 = vand.u32 %v4350, 4294901760
      %4352 = vmatpush1.msra.mxu0 %v4351
      %4353 = vmatprep.subr.mxu0 0.0
      %v4354 = vand.u32 %v3340, 4294901760
      %v4355 = vsub.f32 %v3340, %v4354
      %v4356 = vand.u32 %v4355, 4294901760
      %4357 = vmatpush1.msra.mxu0 %v4356
      %4358 = vmatprep.subr.mxu0 0.0
      %v4359 = vand.u32 %v3341, 4294901760
      %v4360 = vsub.f32 %v3341, %v4359
      %v4361 = vand.u32 %v4360, 4294901760
      %4362 = vmatpush1.msra.mxu0 %v4361
      %4363 = vmatprep.subr.mxu0 0.0
      %v4364 = vand.u32 %v3342, 4294901760
      %v4365 = vsub.f32 %v3342, %v4364
      %v4366 = vand.u32 %v4365, 4294901760
      %4367 = vmatpush1.msra.mxu0 %v4366
      %4368 = vmatprep.subr.mxu0 0.0
      %v4369 = vand.u32 %v3343, 4294901760
      %v4370 = vsub.f32 %v3343, %v4369
      %v4371 = vand.u32 %v4370, 4294901760
      %4372 = vmatpush1.msra.mxu0 %v4371
      %4373 = vmatprep.subr.mxu0 0.0
      %v4374 = vand.u32 %v3344, 4294901760
      %v4375 = vsub.f32 %v3344, %v4374
      %v4376 = vand.u32 %v4375, 4294901760
      %4377 = vmatpush1.msra.mxu0 %v4376
      %4378 = vmatprep.subr.mxu0 0.0
      %v4379 = vand.u32 %v3345, 4294901760
      %v4380 = vsub.f32 %v3345, %v4379
      %v4381 = vand.u32 %v4380, 4294901760
      %4382 = vmatpush1.msra.mxu0 %v4381
      %4383 = vmatprep.subr.mxu0 0.0
      %v4384 = vand.u32 %v3346, 4294901760
      %v4385 = vsub.f32 %v3346, %v4384
      %v4386 = vand.u32 %v4385, 4294901760
      %4387 = vmatpush1.msra.mxu0 %v4386
      %4388 = vmatprep.subr.mxu0 0.0
      %v4389 = vand.u32 %v3347, 4294901760
      %v4390 = vsub.f32 %v3347, %v4389
      %v4391 = vand.u32 %v4390, 4294901760
      %4392 = vmatpush1.msra.mxu0 %v4391
      %4393 = vmatprep.subr.mxu0 0.0
      %v4394 = vand.u32 %v3348, 4294901760
      %v4395 = vsub.f32 %v3348, %v4394
      %v4396 = vand.u32 %v4395, 4294901760
      %4397 = vmatpush1.msra.mxu0 %v4396
      %4398 = vmatprep.subr.mxu0 0.0
      %v4399 = vand.u32 %v3349, 4294901760
      %v4400 = vsub.f32 %v3349, %v4399
      %v4401 = vand.u32 %v4400, 4294901760
      %4402 = vmatpush1.msra.mxu0 %v4401
      %4403 = vmatprep.subr.mxu0 0.0
      %v4404 = vand.u32 %v3350, 4294901760
      %v4405 = vsub.f32 %v3350, %v4404
      %v4406 = vand.u32 %v4405, 4294901760
      %4407 = vmatpush1.msra.mxu0 %v4406
      %4408 = vmatprep.subr.mxu0 0.0
      %v4409 = vand.u32 %v3351, 4294901760
      %v4410 = vsub.f32 %v3351, %v4409
      %v4411 = vand.u32 %v4410, 4294901760
      %4412 = vmatpush1.msra.mxu0 %v4411
      %4413 = vmatprep.subr.mxu0 0.0
      %v4414 = vand.u32 %v3352, 4294901760
      %v4415 = vsub.f32 %v3352, %v4414
      %v4416 = vand.u32 %v4415, 4294901760
      %4417 = vmatpush1.msra.mxu0 %v4416
      %4418 = vmatprep.subr.mxu0 0.0
      %v4419 = vand.u32 %v3353, 4294901760
      %v4420 = vsub.f32 %v3353, %v4419
      %v4421 = vand.u32 %v4420, 4294901760
      %4422 = vmatpush1.msra.mxu0 %v4421
      %4423 = vmatprep.subr.mxu0 0.0
      %v4424 = vand.u32 %v3354, 4294901760
      %v4425 = vsub.f32 %v3354, %v4424
      %v4426 = vand.u32 %v4425, 4294901760
      %4427 = vmatpush1.msra.mxu0 %v4426
      %4428 = vmatprep.subr.mxu0 0.0
      %4429 = vmatpush1.msra.mxu0 0.0
      %4430 = vmatprep.subr.mxu0 0.0
      %4431 = vmatpush1.msra.mxu0 0.0
      %4432 = vmatprep.subr.mxu0 0.0
      %4433 = vmatpush1.msra.mxu0 0.0
      %4434 = vmatprep.subr.mxu0 0.0
      %4435 = vmatpush1.msra.mxu0 0.0
      %4436 = vmatprep.subr.mxu0 0.0
      %4437 = vmatpush1.msra.mxu0 0.0
      %4438 = vmatprep.subr.mxu0 0.0
      %4439 = vmatpush1.msra.mxu0 0.0
      %4440 = vmatprep.subr.mxu0 0.0
      %4441 = vmatpush1.msra.mxu0 0.0
      %4442 = vmatprep.subr.mxu0 0.0
      %4443 = vmatpush1.msra.mxu0 0.0
      %4444 = vmatprep.subr.mxu0 0.0
      %4445 = vmatpush1.msra.mxu0 0.0
      %4446 = vmatprep.subr.mxu0 0.0
      %4447 = vmatpush1.msra.mxu0 0.0
      %4448 = vmatprep.subr.mxu0 0.0
      %4449 = vmatpush1.msra.mxu0 0.0
      %4450 = vmatprep.subr.mxu0 0.0
      %4451 = vmatpush1.msra.mxu0 0.0
      %4452 = vmatprep.subr.mxu0 0.0
      %4453 = vmatpush1.msra.mxu0 0.0
      %4454 = vmatprep.subr.mxu0 0.0
      %4455 = vmatpush1.msra.mxu0 0.0
      %4456 = vmatprep.subr.mxu0 0.0
      %4457 = vmatpush1.msra.mxu0 0.0
      %4458 = vmatprep.subr.mxu0 0.0
      %4459 = vmatpush1.msra.mxu0 0.0
      %4460 = vmatprep.mubr.f32.mxu0 0.0
      %v4461 = vand.u32 %v417, 4294901760
      %4462 = vmatmul.mubr.f32.gmra.mrb[0].mxu0 %v4461
      %v4463 = vpop.f32.mrb[0].mxu0
      %v4464 = vadd.f32 %v4201, %v4463
      %v4465 = vpop.f32.mrb[0].mxu0
      %4466 = vmatprep.mubr.f32.mxu0 0.0
      %v4467 = vand.u32 %v418, 4294901760
      %4468 = vmatmul.mubr.f32.gmra.mrb[0].mxu0 %v4467
      %v4469 = vpop.f32.mrb[0].mxu0
      %v4470 = vadd.f32 %v4209, %v4469
      %v4471 = vpop.f32.mrb[0].mxu0
      %4472 = vmatprep.mubr.f32.mxu0 0.0
      %v4473 = vand.u32 %v419, 4294901760
      %4474 = vmatmul.mubr.f32.gmra.mrb[0].mxu0 %v4473
      %v4475 = vpop.f32.mrb[0].mxu0
      %v4476 = vadd.f32 %v4217, %v4475
      %v4477 = vpop.f32.mrb[0].mxu0
      %4478 = vmatprep.mubr.f32.mxu0 0.0
      %v4479 = vand.u32 %v420, 4294901760
      %4480 = vmatmul.mubr.f32.gmra.mrb[0].mxu0 %v4479
      %v4481 = vpop.f32.mrb[0].mxu0
      %v4482 = vadd.f32 %v4225, %v4481
      %v4483 = vpop.f32.mrb[0].mxu0
      %4484 = vmatprep.mubr.f32.mxu0 0.0
      %v4485 = vand.u32 %v421, 4294901760
      %4486 = vmatmul.mubr.f32.gmra.mrb[0].mxu0 %v4485
      %v4487 = vpop.f32.mrb[0].mxu0
      %v4488 = vadd.f32 %v4233, %v4487
      %v4489 = vpop.f32.mrb[0].mxu0
      %4490 = vmatprep.mubr.f32.mxu0 0.0
      %v4491 = vand.u32 %v422, 4294901760
      %4492 = vmatmul.mubr.f32.gmra.mrb[0].mxu0 %v4491
      %v4493 = vpop.f32.mrb[0].mxu0
      %v4494 = vadd.f32 %v4241, %v4493
      %v4495 = vpop.f32.mrb[0].mxu0
      %4496 = vmatprep.mubr.f32.mxu0 0.0
      %v4497 = vand.u32 %v423, 4294901760
      %4498 = vmatmul.mubr.f32.gmra.mrb[0].mxu0 %v4497
      %v4499 = vpop.f32.mrb[0].mxu0
      %v4500 = vadd.f32 %v4249, %v4499
      %v4501 = vpop.f32.mrb[0].mxu0
      %4502 = vmatprep.mubr.f32.mxu0 0.0
      %v4503 = vand.u32 %v424, 4294901760
      %4504 = vmatmul.mubr.f32.gmra.mrb[0].mxu0 %v4503
      %v4505 = vpop.f32.mrb[0].mxu0
      %v4506 = vadd.f32 %v4257, %v4505
      %v4507 = vpop.f32.mrb[0].mxu0
      %4508 = vmatprep.mubr.f32.mxu0 0.0
      %v4509 = vand.u32 %v425, 4294901760
      %4510 = vmatmul.mubr.f32.gmra.mrb[0].mxu0 %v4509
      %v4511 = vpop.f32.mrb[0].mxu0
      %v4512 = vadd.f32 %v4265, %v4511
      %v4513 = vpop.f32.mrb[0].mxu0
      %4514 = vmatprep.mubr.f32.mxu0 0.0
      %v4515 = vand.u32 %v426, 4294901760
      %4516 = vmatmul.mubr.f32.gmra.mrb[0].mxu0 %v4515
      %v4517 = vpop.f32.mrb[0].mxu0
      %v4518 = vadd.f32 %v4273, %v4517
      %v4519 = vpop.f32.mrb[0].mxu0
      %4520 = vmatprep.mubr.f32.mxu0 0.0
      %v4521 = vand.u32 %v427, 4294901760
      %4522 = vmatmul.mubr.f32.gmra.mrb[0].mxu0 %v4521
      %v4523 = vpop.f32.mrb[0].mxu0
      %v4524 = vadd.f32 %v4281, %v4523
      %v4525 = vpop.f32.mrb[0].mxu0
      %4526 = vmatprep.mubr.f32.mxu0 0.0
      %v4527 = vand.u32 %v428, 4294901760
      %4528 = vmatmul.mubr.f32.gmra.mrb[0].mxu0 %v4527
      %v4529 = vpop.f32.mrb[0].mxu0
      %v4530 = vadd.f32 %v4289, %v4529
      %v4531 = vpop.f32.mrb[0].mxu0
      %4532 = vmatprep.mubr.f32.mxu0 0.0
      %v4533 = vand.u32 %v429, 4294901760
      %4534 = vmatmul.mubr.f32.gmra.mrb[0].mxu0 %v4533
      %v4535 = vpop.f32.mrb[0].mxu0
      %v4536 = vadd.f32 %v4297, %v4535
      %v4537 = vpop.f32.mrb[0].mxu0
      %4538 = vmatprep.mubr.f32.mxu0 0.0
      %v4539 = vand.u32 %v430, 4294901760
      %4540 = vmatmul.mubr.f32.gmra.mrb[0].mxu0 %v4539
      %v4541 = vpop.f32.mrb[0].mxu0
      %v4542 = vadd.f32 %v4305, %v4541
      %v4543 = vpop.f32.mrb[0].mxu0
      %4544 = vmatprep.mubr.f32.mxu0 0.0
      %v4545 = vand.u32 %v431, 4294901760
      %4546 = vmatmul.mubr.f32.gmra.mrb[0].mxu0 %v4545
      %v4547 = vpop.f32.mrb[0].mxu0
      %v4548 = vadd.f32 %v4313, %v4547
      %v4549 = vpop.f32.mrb[0].mxu0
      %4550 = vmatprep.mubr.f32.mxu0 0.0
      %v4551 = vand.u32 %v432, 4294901760
      %4552 = vmatmul.mubr.f32.gmra.mrb[0].mxu0 %v4551
      %v4553 = vpop.f32.mrb[0].mxu0
      %v4554 = vadd.f32 %v4321, %v4553
      %v4555 = vpop.f32.mrb[0].mxu0
      %4556 = vmatprep.mubr.f32.mxu0 0.0
      %v4557 = vand.u32 %v433, 4294901760
      %4558 = vmatmul.mubr.f32.gmra.mrb[0].mxu0 %v4557
      %v4559 = vpop.f32.mrb[0].mxu0
      %v4560 = vadd.f32 %v4329, %v4559
      %v4561 = vpop.f32.mrb[0].mxu0
      %4562 = vmatprep.mubr.f32.mxu0 0.0
      %v4563 = vand.u32 %v434, 4294901760
      %4564 = vmatmul.mubr.f32.gmra.mrb[0].mxu0 %v4563
      %v4565 = vpop.f32.mrb[0].mxu0
      %v4566 = vadd.f32 %v4337, %v4565
      %v4567 = vpop.f32.mrb[0].mxu0
      %4568 = vmatprep.mubr.f32.mxu0 0.0
      %v4569 = vand.u32 %v435, 4294901760
      %4570 = vmatmul.mubr.f32.gmra.mrb[0].mxu0 %v4569
      %v4571 = vpop.f32.mrb[0].mxu0
      %v4572 = vadd.f32 %v4345, %v4571
      %v4573 = vpop.f32.mrb[0].mxu0
      %4574 = vdwg.mxu0
      %4575 = vmatprep.subr.mxu0 0.0
      %v4576 = vand.u32 %v3339, 4294901760
      %4577 = vmatpush1.msra.mxu0 %v4576
      %4578 = vmatprep.subr.mxu0 0.0
      %v4579 = vand.u32 %v3340, 4294901760
      %4580 = vmatpush1.msra.mxu0 %v4579
      %4581 = vmatprep.subr.mxu0 0.0
      %v4582 = vand.u32 %v3341, 4294901760
      %4583 = vmatpush1.msra.mxu0 %v4582
      %4584 = vmatprep.subr.mxu0 0.0
      %v4585 = vand.u32 %v3342, 4294901760
      %4586 = vmatpush1.msra.mxu0 %v4585
      %4587 = vmatprep.subr.mxu0 0.0
      %v4588 = vand.u32 %v3343, 4294901760
      %4589 = vmatpush1.msra.mxu0 %v4588
      %4590 = vmatprep.subr.mxu0 0.0
      %v4591 = vand.u32 %v3344, 4294901760
      %4592 = vmatpush1.msra.mxu0 %v4591
      %4593 = vmatprep.subr.mxu0 0.0
      %v4594 = vand.u32 %v3345, 4294901760
      %4595 = vmatpush1.msra.mxu0 %v4594
      %4596 = vmatprep.subr.mxu0 0.0
      %v4597 = vand.u32 %v3346, 4294901760
      %4598 = vmatpush1.msra.mxu0 %v4597
      %4599 = vmatprep.subr.mxu0 0.0
      %v4600 = vand.u32 %v3347, 4294901760
      %4601 = vmatpush1.msra.mxu0 %v4600
      %4602 = vmatprep.subr.mxu0 0.0
      %v4603 = vand.u32 %v3348, 4294901760
      %4604 = vmatpush1.msra.mxu0 %v4603
      %4605 = vmatprep.subr.mxu0 0.0
      %v4606 = vand.u32 %v3349, 4294901760
      %4607 = vmatpush1.msra.mxu0 %v4606
      %4608 = vmatprep.subr.mxu0 0.0
      %v4609 = vand.u32 %v3350, 4294901760
      %4610 = vmatpush1.msra.mxu0 %v4609
      %4611 = vmatprep.subr.mxu0 0.0
      %v4612 = vand.u32 %v3351, 4294901760
      %4613 = vmatpush1.msra.mxu0 %v4612
      %4614 = vmatprep.subr.mxu0 0.0
      %v4615 = vand.u32 %v3352, 4294901760
      %4616 = vmatpush1.msra.mxu0 %v4615
      %4617 = vmatprep.subr.mxu0 0.0
      %v4618 = vand.u32 %v3353, 4294901760
      %4619 = vmatpush1.msra.mxu0 %v4618
      %4620 = vmatprep.subr.mxu0 0.0
      %v4621 = vand.u32 %v3354, 4294901760
      %4622 = vmatpush1.msra.mxu0 %v4621
      %4623 = vmatprep.subr.mxu0 0.0
      %4624 = vmatpush1.msra.mxu0 0.0
      %4625 = vmatprep.subr.mxu0 0.0
      %4626 = vmatpush1.msra.mxu0 0.0
      %4627 = vmatprep.subr.mxu0 0.0
      %4628 = vmatpush1.msra.mxu0 0.0
      %4629 = vmatprep.subr.mxu0 0.0
      %4630 = vmatpush1.msra.mxu0 0.0
      %4631 = vmatprep.subr.mxu0 0.0
      %4632 = vmatpush1.msra.mxu0 0.0
      %4633 = vmatprep.subr.mxu0 0.0
      %4634 = vmatpush1.msra.mxu0 0.0
      %4635 = vmatprep.subr.mxu0 0.0
      %4636 = vmatpush1.msra.mxu0 0.0
      %4637 = vmatprep.subr.mxu0 0.0
      %4638 = vmatpush1.msra.mxu0 0.0
      %4639 = vmatprep.subr.mxu0 0.0
      %4640 = vmatpush1.msra.mxu0 0.0
      %4641 = vmatprep.subr.mxu0 0.0
      %4642 = vmatpush1.msra.mxu0 0.0
      %4643 = vmatprep.subr.mxu0 0.0
      %4644 = vmatpush1.msra.mxu0 0.0
      %4645 = vmatprep.subr.mxu0 0.0
      %4646 = vmatpush1.msra.mxu0 0.0
      %4647 = vmatprep.subr.mxu0 0.0
      %4648 = vmatpush1.msra.mxu0 0.0
      %4649 = vmatprep.subr.mxu0 0.0
      %4650 = vmatpush1.msra.mxu0 0.0
      %4651 = vmatprep.subr.mxu0 0.0
      %4652 = vmatpush1.msra.mxu0 0.0
      %4653 = vmatprep.subr.mxu0 0.0
      %4654 = vmatpush1.msra.mxu0 0.0
      %4655 = vmatprep.mubr.f32.mxu0 0.0
      %v4656 = vand.u32 %v417, 4294901760
      %4657 = vmatmul.mubr.f32.gmra.mrb[0].mxu0 %v4656
      %v4658 = vpop.f32.mrb[0].mxu0
      %v4659 = vadd.f32 %v4464, %v4658
      %v4660 = vpop.f32.mrb[0].mxu0
      %4661 = vmatprep.mubr.f32.mxu0 0.0
      %v4662 = vand.u32 %v418, 4294901760
      %4663 = vmatmul.mubr.f32.gmra.mrb[0].mxu0 %v4662
      %v4664 = vpop.f32.mrb[0].mxu0
      %v4665 = vadd.f32 %v4470, %v4664
      %v4666 = vpop.f32.mrb[0].mxu0
      %4667 = vmatprep.mubr.f32.mxu0 0.0
      %v4668 = vand.u32 %v419, 4294901760
      %4669 = vmatmul.mubr.f32.gmra.mrb[0].mxu0 %v4668
      %v4670 = vpop.f32.mrb[0].mxu0
      %v4671 = vadd.f32 %v4476, %v4670
      %v4672 = vpop.f32.mrb[0].mxu0
      %4673 = vmatprep.mubr.f32.mxu0 0.0
      %v4674 = vand.u32 %v420, 4294901760
      %4675 = vmatmul.mubr.f32.gmra.mrb[0].mxu0 %v4674
      %v4676 = vpop.f32.mrb[0].mxu0
      %v4677 = vadd.f32 %v4482, %v4676
      %v4678 = vpop.f32.mrb[0].mxu0
      %4679 = vmatprep.mubr.f32.mxu0 0.0
      %v4680 = vand.u32 %v421, 4294901760
      %4681 = vmatmul.mubr.f32.gmra.mrb[0].mxu0 %v4680
      %v4682 = vpop.f32.mrb[0].mxu0
      %v4683 = vadd.f32 %v4488, %v4682
      %v4684 = vpop.f32.mrb[0].mxu0
      %4685 = vmatprep.mubr.f32.mxu0 0.0
      %v4686 = vand.u32 %v422, 4294901760
      %4687 = vmatmul.mubr.f32.gmra.mrb[0].mxu0 %v4686
      %v4688 = vpop.f32.mrb[0].mxu0
      %v4689 = vadd.f32 %v4494, %v4688
      %v4690 = vpop.f32.mrb[0].mxu0
      %4691 = vmatprep.mubr.f32.mxu0 0.0
      %v4692 = vand.u32 %v423, 4294901760
      %4693 = vmatmul.mubr.f32.gmra.mrb[0].mxu0 %v4692
      %v4694 = vpop.f32.mrb[0].mxu0
      %v4695 = vadd.f32 %v4500, %v4694
      %v4696 = vpop.f32.mrb[0].mxu0
      %4697 = vmatprep.mubr.f32.mxu0 0.0
      %v4698 = vand.u32 %v424, 4294901760
      %4699 = vmatmul.mubr.f32.gmra.mrb[0].mxu0 %v4698
      %v4700 = vpop.f32.mrb[0].mxu0
      %v4701 = vadd.f32 %v4506, %v4700
      %v4702 = vpop.f32.mrb[0].mxu0
      %4703 = vmatprep.mubr.f32.mxu0 0.0
      %v4704 = vand.u32 %v425, 4294901760
      %4705 = vmatmul.mubr.f32.gmra.mrb[0].mxu0 %v4704
      %v4706 = vpop.f32.mrb[0].mxu0
      %v4707 = vadd.f32 %v4512, %v4706
      %v4708 = vpop.f32.mrb[0].mxu0
      %4709 = vmatprep.mubr.f32.mxu0 0.0
      %v4710 = vand.u32 %v426, 4294901760
      %4711 = vmatmul.mubr.f32.gmra.mrb[0].mxu0 %v4710
      %v4712 = vpop.f32.mrb[0].mxu0
      %v4713 = vadd.f32 %v4518, %v4712
      %v4714 = vpop.f32.mrb[0].mxu0
      %4715 = vmatprep.mubr.f32.mxu0 0.0
      %v4716 = vand.u32 %v427, 4294901760
      %4717 = vmatmul.mubr.f32.gmra.mrb[0].mxu0 %v4716
      %v4718 = vpop.f32.mrb[0].mxu0
      %v4719 = vadd.f32 %v4524, %v4718
      %v4720 = vpop.f32.mrb[0].mxu0
      %4721 = vmatprep.mubr.f32.mxu0 0.0
      %v4722 = vand.u32 %v428, 4294901760
      %4723 = vmatmul.mubr.f32.gmra.mrb[0].mxu0 %v4722
      %v4724 = vpop.f32.mrb[0].mxu0
      %v4725 = vadd.f32 %v4530, %v4724
      %v4726 = vpop.f32.mrb[0].mxu0
      %4727 = vmatprep.mubr.f32.mxu0 0.0
      %v4728 = vand.u32 %v429, 4294901760
      %4729 = vmatmul.mubr.f32.gmra.mrb[0].mxu0 %v4728
      %v4730 = vpop.f32.mrb[0].mxu0
      %v4731 = vadd.f32 %v4536, %v4730
      %v4732 = vpop.f32.mrb[0].mxu0
      %4733 = vmatprep.mubr.f32.mxu0 0.0
      %v4734 = vand.u32 %v430, 4294901760
      %4735 = vmatmul.mubr.f32.gmra.mrb[0].mxu0 %v4734
      %v4736 = vpop.f32.mrb[0].mxu0
      %v4737 = vadd.f32 %v4542, %v4736
      %v4738 = vpop.f32.mrb[0].mxu0
      %4739 = vmatprep.mubr.f32.mxu0 0.0
      %v4740 = vand.u32 %v431, 4294901760
      %4741 = vmatmul.mubr.f32.gmra.mrb[0].mxu0 %v4740
      %v4742 = vpop.f32.mrb[0].mxu0
      %v4743 = vadd.f32 %v4548, %v4742
      %v4744 = vpop.f32.mrb[0].mxu0
      %4745 = vmatprep.mubr.f32.mxu0 0.0
      %v4746 = vand.u32 %v432, 4294901760
      %4747 = vmatmul.mubr.f32.gmra.mrb[0].mxu0 %v4746
      %v4748 = vpop.f32.mrb[0].mxu0
      %v4749 = vadd.f32 %v4554, %v4748
      %v4750 = vpop.f32.mrb[0].mxu0
      %4751 = vmatprep.mubr.f32.mxu0 0.0
      %v4752 = vand.u32 %v433, 4294901760
      %4753 = vmatmul.mubr.f32.gmra.mrb[0].mxu0 %v4752
      %v4754 = vpop.f32.mrb[0].mxu0
      %v4755 = vadd.f32 %v4560, %v4754
      %v4756 = vpop.f32.mrb[0].mxu0
      %4757 = vmatprep.mubr.f32.mxu0 0.0
      %v4758 = vand.u32 %v434, 4294901760
      %4759 = vmatmul.mubr.f32.gmra.mrb[0].mxu0 %v4758
      %v4760 = vpop.f32.mrb[0].mxu0
      %v4761 = vadd.f32 %v4566, %v4760
      %v4762 = vpop.f32.mrb[0].mxu0
      %4763 = vmatprep.mubr.f32.mxu0 0.0
      %v4764 = vand.u32 %v435, 4294901760
      %4765 = vmatmul.mubr.f32.gmra.mrb[0].mxu0 %v4764
      %v4766 = vpop.f32.mrb[0].mxu0
      %v4767 = vadd.f32 %v4572, %v4766
      %v4768 = vpop.f32.mrb[0].mxu0
      %4769 = vdwg.mxu0
      %v4771 = vsel %vm1942, %v3316, 0
      %v4774 = vsel %vm1942, %v3317, 0
      %v4777 = vsel %vm1942, %v3318, 0
      %v4780 = vsel %vm1942, %v3319, 0
      %v4783 = vsel %vm1942, %v3320, 0
      %v4786 = vsel %vm1942, %v3321, 0
      %v4789 = vsel %vm1942, %v3322, 0
      %v4792 = vsel %vm1942, %v3323, 0
      %v4795 = vsel %vm1942, %v3324, 0
      %v4798 = vsel %vm1942, %v3325, 0
      %v4801 = vsel %vm1942, %v3326, 0
      %v4804 = vsel %vm1942, %v3327, 0
      %v4807 = vsel %vm1942, %v3328, 0
      %v4810 = vsel %vm1942, %v3329, 0
      %v4813 = vsel %vm1942, %v3330, 0
      %v4816 = vsel %vm1942, %v3331, 0
      %v4819 = vsel %vm1942, %v3332, 0
      %v4822 = vsel %vm1942, %v3333, 0
      %v4825 = vsel %vm1942, %v3334, 0
      %4827 = vmatprep.subr.mxu0 0.0
      %v4828 = vand.u32 %v3335, 4294901760
      %4829 = vmatpush1.msra.mxu0 %v4828
      %4830 = vmatprep.subr.mxu0 0.0
      %v4831 = vand.u32 %v3336, 4294901760
      %4832 = vmatpush1.msra.mxu0 %v4831
      %4833 = vmatprep.subr.mxu0 0.0
      %v4834 = vand.u32 %v3337, 4294901760
      %4835 = vmatpush1.msra.mxu0 %v4834
      %4836 = vmatprep.subr.mxu0 0.0
      %v4837 = vand.u32 %v3338, 4294901760
      %4838 = vmatpush1.msra.mxu0 %v4837
      %4839 = vmatprep.subr.mxu0 0.0
      %4840 = vmatpush1.msra.mxu0 0.0
      %4841 = vmatprep.subr.mxu0 0.0
      %4842 = vmatpush1.msra.mxu0 0.0
      %4843 = vmatprep.subr.mxu0 0.0
      %4844 = vmatpush1.msra.mxu0 0.0
      %4845 = vmatprep.subr.mxu0 0.0
      %4846 = vmatpush1.msra.mxu0 0.0
      %4847 = vmatprep.subr.mxu0 0.0
      %4848 = vmatpush1.msra.mxu0 0.0
      %4849 = vmatprep.subr.mxu0 0.0
      %4850 = vmatpush1.msra.mxu0 0.0
      %4851 = vmatprep.subr.mxu0 0.0
      %4852 = vmatpush1.msra.mxu0 0.0
      %4853 = vmatprep.subr.mxu0 0.0
      %4854 = vmatpush1.msra.mxu0 0.0
      %4855 = vmatprep.subr.mxu0 0.0
      %4856 = vmatpush1.msra.mxu0 0.0
      %4857 = vmatprep.subr.mxu0 0.0
      %4858 = vmatpush1.msra.mxu0 0.0
      %4859 = vmatprep.subr.mxu0 0.0
      %4860 = vmatpush1.msra.mxu0 0.0
      %4861 = vmatprep.subr.mxu0 0.0
      %4862 = vmatpush1.msra.mxu0 0.0
      %4863 = vmatprep.subr.mxu0 0.0
      %4864 = vmatpush1.msra.mxu0 0.0
      %4865 = vmatprep.subr.mxu0 0.0
      %4866 = vmatpush1.msra.mxu0 0.0
      %4867 = vmatprep.subr.mxu0 0.0
      %4868 = vmatpush1.msra.mxu0 0.0
      %4869 = vmatprep.subr.mxu0 0.0
      %4870 = vmatpush1.msra.mxu0 0.0
      %4871 = vmatprep.subr.mxu0 0.0
      %4872 = vmatpush1.msra.mxu0 0.0
      %4873 = vmatprep.subr.mxu0 0.0
      %4874 = vmatpush1.msra.mxu0 0.0
      %4875 = vmatprep.subr.mxu0 0.0
      %4876 = vmatpush1.msra.mxu0 0.0
      %4877 = vmatprep.subr.mxu0 0.0
      %4878 = vmatpush1.msra.mxu0 0.0
      %4879 = vmatprep.subr.mxu0 0.0
      %4880 = vmatpush1.msra.mxu0 0.0
      %4881 = vmatprep.subr.mxu0 0.0
      %4882 = vmatpush1.msra.mxu0 0.0
      %4883 = vmatprep.subr.mxu0 0.0
      %4884 = vmatpush1.msra.mxu0 0.0
      %4885 = vmatprep.subr.mxu0 0.0
      %4886 = vmatpush1.msra.mxu0 0.0
      %4887 = vmatprep.subr.mxu0 0.0
      %4888 = vmatpush1.msra.mxu0 0.0
      %4889 = vmatprep.subr.mxu0 0.0
      %4890 = vmatpush1.msra.mxu0 0.0
      %4891 = vmatprep.subr.mxu0 0.0
      %4892 = vmatpush1.msra.mxu0 0.0
      %4893 = vmatprep.subr.mxu0 0.0
      %4894 = vmatpush1.msra.mxu0 0.0
      %4895 = vmatprep.mubr.f32.mxu0 0.0
      %v4896 = vand.u32 %v4771, 4294901760
      %v4897 = vsub.f32 %v4771, %v4896
      %v4898 = vand.u32 %v4897, 4294901760
      %v4899 = vsub.f32 %v4897, %v4898
      %v4900 = vand.u32 %v4899, 4294901760
      %4901 = vmatmul.mubr.f32.gmra.mrb[0].mxu0 %v4900
      %v4902 = vpop.f32.mrb[0].mxu0
      %v4903 = vadd.f32 %v4659, %v4902
      %v4904 = vpop.f32.mrb[0].mxu0
      %4905 = vmatprep.mubr.f32.mxu0 0.0
      %v4906 = vand.u32 %v4774, 4294901760
      %v4907 = vsub.f32 %v4774, %v4906
      %v4908 = vand.u32 %v4907, 4294901760
      %v4909 = vsub.f32 %v4907, %v4908
      %v4910 = vand.u32 %v4909, 4294901760
      %4911 = vmatmul.mubr.f32.gmra.mrb[0].mxu0 %v4910
      %v4912 = vpop.f32.mrb[0].mxu0
      %v4913 = vadd.f32 %v4665, %v4912
      %v4914 = vpop.f32.mrb[0].mxu0
      %4915 = vmatprep.mubr.f32.mxu0 0.0
      %v4916 = vand.u32 %v4777, 4294901760
      %v4917 = vsub.f32 %v4777, %v4916
      %v4918 = vand.u32 %v4917, 4294901760
      %v4919 = vsub.f32 %v4917, %v4918
      %v4920 = vand.u32 %v4919, 4294901760
      %4921 = vmatmul.mubr.f32.gmra.mrb[0].mxu0 %v4920
      %v4922 = vpop.f32.mrb[0].mxu0
      %v4923 = vadd.f32 %v4671, %v4922
      %v4924 = vpop.f32.mrb[0].mxu0
      %4925 = vmatprep.mubr.f32.mxu0 0.0
      %v4926 = vand.u32 %v4780, 4294901760
      %v4927 = vsub.f32 %v4780, %v4926
      %v4928 = vand.u32 %v4927, 4294901760
      %v4929 = vsub.f32 %v4927, %v4928
      %v4930 = vand.u32 %v4929, 4294901760
      %4931 = vmatmul.mubr.f32.gmra.mrb[0].mxu0 %v4930
      %v4932 = vpop.f32.mrb[0].mxu0
      %v4933 = vadd.f32 %v4677, %v4932
      %v4934 = vpop.f32.mrb[0].mxu0
      %4935 = vmatprep.mubr.f32.mxu0 0.0
      %v4936 = vand.u32 %v4783, 4294901760
      %v4937 = vsub.f32 %v4783, %v4936
      %v4938 = vand.u32 %v4937, 4294901760
      %v4939 = vsub.f32 %v4937, %v4938
      %v4940 = vand.u32 %v4939, 4294901760
      %4941 = vmatmul.mubr.f32.gmra.mrb[0].mxu0 %v4940
      %v4942 = vpop.f32.mrb[0].mxu0
      %v4943 = vadd.f32 %v4683, %v4942
      %v4944 = vpop.f32.mrb[0].mxu0
      %4945 = vmatprep.mubr.f32.mxu0 0.0
      %v4946 = vand.u32 %v4786, 4294901760
      %v4947 = vsub.f32 %v4786, %v4946
      %v4948 = vand.u32 %v4947, 4294901760
      %v4949 = vsub.f32 %v4947, %v4948
      %v4950 = vand.u32 %v4949, 4294901760
      %4951 = vmatmul.mubr.f32.gmra.mrb[0].mxu0 %v4950
      %v4952 = vpop.f32.mrb[0].mxu0
      %v4953 = vadd.f32 %v4689, %v4952
      %v4954 = vpop.f32.mrb[0].mxu0
      %4955 = vmatprep.mubr.f32.mxu0 0.0
      %v4956 = vand.u32 %v4789, 4294901760
      %v4957 = vsub.f32 %v4789, %v4956
      %v4958 = vand.u32 %v4957, 4294901760
      %v4959 = vsub.f32 %v4957, %v4958
      %v4960 = vand.u32 %v4959, 4294901760
      %4961 = vmatmul.mubr.f32.gmra.mrb[0].mxu0 %v4960
      %v4962 = vpop.f32.mrb[0].mxu0
      %v4963 = vadd.f32 %v4695, %v4962
      %v4964 = vpop.f32.mrb[0].mxu0
      %4965 = vmatprep.mubr.f32.mxu0 0.0
      %v4966 = vand.u32 %v4792, 4294901760
      %v4967 = vsub.f32 %v4792, %v4966
      %v4968 = vand.u32 %v4967, 4294901760
      %v4969 = vsub.f32 %v4967, %v4968
      %v4970 = vand.u32 %v4969, 4294901760
      %4971 = vmatmul.mubr.f32.gmra.mrb[0].mxu0 %v4970
      %v4972 = vpop.f32.mrb[0].mxu0
      %v4973 = vadd.f32 %v4701, %v4972
      %v4974 = vpop.f32.mrb[0].mxu0
      %4975 = vmatprep.mubr.f32.mxu0 0.0
      %v4976 = vand.u32 %v4795, 4294901760
      %v4977 = vsub.f32 %v4795, %v4976
      %v4978 = vand.u32 %v4977, 4294901760
      %v4979 = vsub.f32 %v4977, %v4978
      %v4980 = vand.u32 %v4979, 4294901760
      %4981 = vmatmul.mubr.f32.gmra.mrb[0].mxu0 %v4980
      %v4982 = vpop.f32.mrb[0].mxu0
      %v4983 = vadd.f32 %v4707, %v4982
      %v4984 = vpop.f32.mrb[0].mxu0
      %4985 = vmatprep.mubr.f32.mxu0 0.0
      %v4986 = vand.u32 %v4798, 4294901760
      %v4987 = vsub.f32 %v4798, %v4986
      %v4988 = vand.u32 %v4987, 4294901760
      %v4989 = vsub.f32 %v4987, %v4988
      %v4990 = vand.u32 %v4989, 4294901760
      %4991 = vmatmul.mubr.f32.gmra.mrb[0].mxu0 %v4990
      %v4992 = vpop.f32.mrb[0].mxu0
      %v4993 = vadd.f32 %v4713, %v4992
      %v4994 = vpop.f32.mrb[0].mxu0
      %4995 = vmatprep.mubr.f32.mxu0 0.0
      %v4996 = vand.u32 %v4801, 4294901760
      %v4997 = vsub.f32 %v4801, %v4996
      %v4998 = vand.u32 %v4997, 4294901760
      %v4999 = vsub.f32 %v4997, %v4998
      %v5000 = vand.u32 %v4999, 4294901760
      %5001 = vmatmul.mubr.f32.gmra.mrb[0].mxu0 %v5000
      %v5002 = vpop.f32.mrb[0].mxu0
      %v5003 = vadd.f32 %v4719, %v5002
      %v5004 = vpop.f32.mrb[0].mxu0
      %5005 = vmatprep.mubr.f32.mxu0 0.0
      %v5006 = vand.u32 %v4804, 4294901760
      %v5007 = vsub.f32 %v4804, %v5006
      %v5008 = vand.u32 %v5007, 4294901760
      %v5009 = vsub.f32 %v5007, %v5008
      %v5010 = vand.u32 %v5009, 4294901760
      %5011 = vmatmul.mubr.f32.gmra.mrb[0].mxu0 %v5010
      %v5012 = vpop.f32.mrb[0].mxu0
      %v5013 = vadd.f32 %v4725, %v5012
      %v5014 = vpop.f32.mrb[0].mxu0
      %5015 = vmatprep.mubr.f32.mxu0 0.0
      %v5016 = vand.u32 %v4807, 4294901760
      %v5017 = vsub.f32 %v4807, %v5016
      %v5018 = vand.u32 %v5017, 4294901760
      %v5019 = vsub.f32 %v5017, %v5018
      %v5020 = vand.u32 %v5019, 4294901760
      %5021 = vmatmul.mubr.f32.gmra.mrb[0].mxu0 %v5020
      %v5022 = vpop.f32.mrb[0].mxu0
      %v5023 = vadd.f32 %v4731, %v5022
      %v5024 = vpop.f32.mrb[0].mxu0
      %5025 = vmatprep.mubr.f32.mxu0 0.0
      %v5026 = vand.u32 %v4810, 4294901760
      %v5027 = vsub.f32 %v4810, %v5026
      %v5028 = vand.u32 %v5027, 4294901760
      %v5029 = vsub.f32 %v5027, %v5028
      %v5030 = vand.u32 %v5029, 4294901760
      %5031 = vmatmul.mubr.f32.gmra.mrb[0].mxu0 %v5030
      %v5032 = vpop.f32.mrb[0].mxu0
      %v5033 = vadd.f32 %v4737, %v5032
      %v5034 = vpop.f32.mrb[0].mxu0
      %5035 = vmatprep.mubr.f32.mxu0 0.0
      %v5036 = vand.u32 %v4813, 4294901760
      %v5037 = vsub.f32 %v4813, %v5036
      %v5038 = vand.u32 %v5037, 4294901760
      %v5039 = vsub.f32 %v5037, %v5038
      %v5040 = vand.u32 %v5039, 4294901760
      %5041 = vmatmul.mubr.f32.gmra.mrb[0].mxu0 %v5040
      %v5042 = vpop.f32.mrb[0].mxu0
      %v5043 = vadd.f32 %v4743, %v5042
      %v5044 = vpop.f32.mrb[0].mxu0
      %5045 = vmatprep.mubr.f32.mxu0 0.0
      %v5046 = vand.u32 %v4816, 4294901760
      %v5047 = vsub.f32 %v4816, %v5046
      %v5048 = vand.u32 %v5047, 4294901760
      %v5049 = vsub.f32 %v5047, %v5048
      %v5050 = vand.u32 %v5049, 4294901760
      %5051 = vmatmul.mubr.f32.gmra.mrb[0].mxu0 %v5050
      %v5052 = vpop.f32.mrb[0].mxu0
      %v5053 = vadd.f32 %v4749, %v5052
      %v5054 = vpop.f32.mrb[0].mxu0
      %5055 = vmatprep.mubr.f32.mxu0 0.0
      %v5056 = vand.u32 %v4819, 4294901760
      %v5057 = vsub.f32 %v4819, %v5056
      %v5058 = vand.u32 %v5057, 4294901760
      %v5059 = vsub.f32 %v5057, %v5058
      %v5060 = vand.u32 %v5059, 4294901760
      %5061 = vmatmul.mubr.f32.gmra.mrb[0].mxu0 %v5060
      %v5062 = vpop.f32.mrb[0].mxu0
      %v5063 = vadd.f32 %v4755, %v5062
      %v5064 = vpop.f32.mrb[0].mxu0
      %5065 = vmatprep.mubr.f32.mxu0 0.0
      %v5066 = vand.u32 %v4822, 4294901760
      %v5067 = vsub.f32 %v4822, %v5066
      %v5068 = vand.u32 %v5067, 4294901760
      %v5069 = vsub.f32 %v5067, %v5068
      %v5070 = vand.u32 %v5069, 4294901760
      %5071 = vmatmul.mubr.f32.gmra.mrb[0].mxu0 %v5070
      %v5072 = vpop.f32.mrb[0].mxu0
      %v5073 = vadd.f32 %v4761, %v5072
      %v5074 = vpop.f32.mrb[0].mxu0
      %5075 = vmatprep.mubr.f32.mxu0 0.0
      %v5076 = vand.u32 %v4825, 4294901760
      %v5077 = vsub.f32 %v4825, %v5076
      %v5078 = vand.u32 %v5077, 4294901760
      %v5079 = vsub.f32 %v5077, %v5078
      %v5080 = vand.u32 %v5079, 4294901760
      %5081 = vmatmul.mubr.f32.gmra.mrb[0].mxu0 %v5080
      %v5082 = vpop.f32.mrb[0].mxu0
      %v5083 = vadd.f32 %v4767, %v5082
      %v5084 = vpop.f32.mrb[0].mxu0
      %5085 = vdwg.mxu0
      %5086 = vmatprep.subr.mxu0 0.0
      %v5087 = vand.u32 %v3335, 4294901760
      %v5088 = vsub.f32 %v3335, %v5087
      %v5089 = vand.u32 %v5088, 4294901760
      %v5090 = vsub.f32 %v5088, %v5089
      %v5091 = vand.u32 %v5090, 4294901760
      %5092 = vmatpush1.msra.mxu0 %v5091
      %5093 = vmatprep.subr.mxu0 0.0
      %v5094 = vand.u32 %v3336, 4294901760
      %v5095 = vsub.f32 %v3336, %v5094
      %v5096 = vand.u32 %v5095, 4294901760
      %v5097 = vsub.f32 %v5095, %v5096
      %v5098 = vand.u32 %v5097, 4294901760
      %5099 = vmatpush1.msra.mxu0 %v5098
      %5100 = vmatprep.subr.mxu0 0.0
      %v5101 = vand.u32 %v3337, 4294901760
      %v5102 = vsub.f32 %v3337, %v5101
      %v5103 = vand.u32 %v5102, 4294901760
      %v5104 = vsub.f32 %v5102, %v5103
      %v5105 = vand.u32 %v5104, 4294901760
      %5106 = vmatpush1.msra.mxu0 %v5105
      %5107 = vmatprep.subr.mxu0 0.0
      %v5108 = vand.u32 %v3338, 4294901760
      %v5109 = vsub.f32 %v3338, %v5108
      %v5110 = vand.u32 %v5109, 4294901760
      %v5111 = vsub.f32 %v5109, %v5110
      %v5112 = vand.u32 %v5111, 4294901760
      %5113 = vmatpush1.msra.mxu0 %v5112
      %5114 = vmatprep.subr.mxu0 0.0
      %5115 = vmatpush1.msra.mxu0 0.0
      %5116 = vmatprep.subr.mxu0 0.0
      %5117 = vmatpush1.msra.mxu0 0.0
      %5118 = vmatprep.subr.mxu0 0.0
      %5119 = vmatpush1.msra.mxu0 0.0
      %5120 = vmatprep.subr.mxu0 0.0
      %5121 = vmatpush1.msra.mxu0 0.0
      %5122 = vmatprep.subr.mxu0 0.0
      %5123 = vmatpush1.msra.mxu0 0.0
      %5124 = vmatprep.subr.mxu0 0.0
      %5125 = vmatpush1.msra.mxu0 0.0
      %5126 = vmatprep.subr.mxu0 0.0
      %5127 = vmatpush1.msra.mxu0 0.0
      %5128 = vmatprep.subr.mxu0 0.0
      %5129 = vmatpush1.msra.mxu0 0.0
      %5130 = vmatprep.subr.mxu0 0.0
      %5131 = vmatpush1.msra.mxu0 0.0
      %5132 = vmatprep.subr.mxu0 0.0
      %5133 = vmatpush1.msra.mxu0 0.0
      %5134 = vmatprep.subr.mxu0 0.0
      %5135 = vmatpush1.msra.mxu0 0.0
      %5136 = vmatprep.subr.mxu0 0.0
      %5137 = vmatpush1.msra.mxu0 0.0
      %5138 = vmatprep.subr.mxu0 0.0
      %5139 = vmatpush1.msra.mxu0 0.0
      %5140 = vmatprep.subr.mxu0 0.0
      %5141 = vmatpush1.msra.mxu0 0.0
      %5142 = vmatprep.subr.mxu0 0.0
      %5143 = vmatpush1.msra.mxu0 0.0
      %5144 = vmatprep.subr.mxu0 0.0
      %5145 = vmatpush1.msra.mxu0 0.0
      %5146 = vmatprep.subr.mxu0 0.0
      %5147 = vmatpush1.msra.mxu0 0.0
      %5148 = vmatprep.subr.mxu0 0.0
      %5149 = vmatpush1.msra.mxu0 0.0
      %5150 = vmatprep.subr.mxu0 0.0
      %5151 = vmatpush1.msra.mxu0 0.0
      %5152 = vmatprep.subr.mxu0 0.0
      %5153 = vmatpush1.msra.mxu0 0.0
      %5154 = vmatprep.subr.mxu0 0.0
      %5155 = vmatpush1.msra.mxu0 0.0
      %5156 = vmatprep.subr.mxu0 0.0
      %5157 = vmatpush1.msra.mxu0 0.0
      %5158 = vmatprep.subr.mxu0 0.0
      %5159 = vmatpush1.msra.mxu0 0.0
      %5160 = vmatprep.subr.mxu0 0.0
      %5161 = vmatpush1.msra.mxu0 0.0
      %5162 = vmatprep.subr.mxu0 0.0
      %5163 = vmatpush1.msra.mxu0 0.0
      %5164 = vmatprep.subr.mxu0 0.0
      %5165 = vmatpush1.msra.mxu0 0.0
      %5166 = vmatprep.subr.mxu0 0.0
      %5167 = vmatpush1.msra.mxu0 0.0
      %5168 = vmatprep.subr.mxu0 0.0
      %5169 = vmatpush1.msra.mxu0 0.0
      %5170 = vmatprep.mubr.f32.mxu0 0.0
      %v5171 = vand.u32 %v4771, 4294901760
      %5172 = vmatmul.mubr.f32.gmra.mrb[0].mxu0 %v5171
      %v5173 = vpop.f32.mrb[0].mxu0
      %v5174 = vadd.f32 %v4903, %v5173
      %v5175 = vpop.f32.mrb[0].mxu0
      %5176 = vmatprep.mubr.f32.mxu0 0.0
      %v5177 = vand.u32 %v4774, 4294901760
      %5178 = vmatmul.mubr.f32.gmra.mrb[0].mxu0 %v5177
      %v5179 = vpop.f32.mrb[0].mxu0
      %v5180 = vadd.f32 %v4913, %v5179
      %v5181 = vpop.f32.mrb[0].mxu0
      %5182 = vmatprep.mubr.f32.mxu0 0.0
      %v5183 = vand.u32 %v4777, 4294901760
      %5184 = vmatmul.mubr.f32.gmra.mrb[0].mxu0 %v5183
      %v5185 = vpop.f32.mrb[0].mxu0
      %v5186 = vadd.f32 %v4923, %v5185
      %v5187 = vpop.f32.mrb[0].mxu0
      %5188 = vmatprep.mubr.f32.mxu0 0.0
      %v5189 = vand.u32 %v4780, 4294901760
      %5190 = vmatmul.mubr.f32.gmra.mrb[0].mxu0 %v5189
      %v5191 = vpop.f32.mrb[0].mxu0
      %v5192 = vadd.f32 %v4933, %v5191
      %v5193 = vpop.f32.mrb[0].mxu0
      %5194 = vmatprep.mubr.f32.mxu0 0.0
      %v5195 = vand.u32 %v4783, 4294901760
      %5196 = vmatmul.mubr.f32.gmra.mrb[0].mxu0 %v5195
      %v5197 = vpop.f32.mrb[0].mxu0
      %v5198 = vadd.f32 %v4943, %v5197
      %v5199 = vpop.f32.mrb[0].mxu0
      %5200 = vmatprep.mubr.f32.mxu0 0.0
      %v5201 = vand.u32 %v4786, 4294901760
      %5202 = vmatmul.mubr.f32.gmra.mrb[0].mxu0 %v5201
      %v5203 = vpop.f32.mrb[0].mxu0
      %v5204 = vadd.f32 %v4953, %v5203
      %v5205 = vpop.f32.mrb[0].mxu0
      %5206 = vmatprep.mubr.f32.mxu0 0.0
      %v5207 = vand.u32 %v4789, 4294901760
      %5208 = vmatmul.mubr.f32.gmra.mrb[0].mxu0 %v5207
      %v5209 = vpop.f32.mrb[0].mxu0
      %v5210 = vadd.f32 %v4963, %v5209
      %v5211 = vpop.f32.mrb[0].mxu0
      %5212 = vmatprep.mubr.f32.mxu0 0.0
      %v5213 = vand.u32 %v4792, 4294901760
      %5214 = vmatmul.mubr.f32.gmra.mrb[0].mxu0 %v5213
      %v5215 = vpop.f32.mrb[0].mxu0
      %v5216 = vadd.f32 %v4973, %v5215
      %v5217 = vpop.f32.mrb[0].mxu0
      %5218 = vmatprep.mubr.f32.mxu0 0.0
      %v5219 = vand.u32 %v4795, 4294901760
      %5220 = vmatmul.mubr.f32.gmra.mrb[0].mxu0 %v5219
      %v5221 = vpop.f32.mrb[0].mxu0
      %v5222 = vadd.f32 %v4983, %v5221
      %v5223 = vpop.f32.mrb[0].mxu0
      %5224 = vmatprep.mubr.f32.mxu0 0.0
      %v5225 = vand.u32 %v4798, 4294901760
      %5226 = vmatmul.mubr.f32.gmra.mrb[0].mxu0 %v5225
      %v5227 = vpop.f32.mrb[0].mxu0
      %v5228 = vadd.f32 %v4993, %v5227
      %v5229 = vpop.f32.mrb[0].mxu0
      %5230 = vmatprep.mubr.f32.mxu0 0.0
      %v5231 = vand.u32 %v4801, 4294901760
      %5232 = vmatmul.mubr.f32.gmra.mrb[0].mxu0 %v5231
      %v5233 = vpop.f32.mrb[0].mxu0
      %v5234 = vadd.f32 %v5003, %v5233
      %v5235 = vpop.f32.mrb[0].mxu0
      %5236 = vmatprep.mubr.f32.mxu0 0.0
      %v5237 = vand.u32 %v4804, 4294901760
      %5238 = vmatmul.mubr.f32.gmra.mrb[0].mxu0 %v5237
      %v5239 = vpop.f32.mrb[0].mxu0
      %v5240 = vadd.f32 %v5013, %v5239
      %v5241 = vpop.f32.mrb[0].mxu0
      %5242 = vmatprep.mubr.f32.mxu0 0.0
      %v5243 = vand.u32 %v4807, 4294901760
      %5244 = vmatmul.mubr.f32.gmra.mrb[0].mxu0 %v5243
      %v5245 = vpop.f32.mrb[0].mxu0
      %v5246 = vadd.f32 %v5023, %v5245
      %v5247 = vpop.f32.mrb[0].mxu0
      %5248 = vmatprep.mubr.f32.mxu0 0.0
      %v5249 = vand.u32 %v4810, 4294901760
      %5250 = vmatmul.mubr.f32.gmra.mrb[0].mxu0 %v5249
      %v5251 = vpop.f32.mrb[0].mxu0
      %v5252 = vadd.f32 %v5033, %v5251
      %v5253 = vpop.f32.mrb[0].mxu0
      %5254 = vmatprep.mubr.f32.mxu0 0.0
      %v5255 = vand.u32 %v4813, 4294901760
      %5256 = vmatmul.mubr.f32.gmra.mrb[0].mxu0 %v5255
      %v5257 = vpop.f32.mrb[0].mxu0
      %v5258 = vadd.f32 %v5043, %v5257
      %v5259 = vpop.f32.mrb[0].mxu0
      %5260 = vmatprep.mubr.f32.mxu0 0.0
      %v5261 = vand.u32 %v4816, 4294901760
      %5262 = vmatmul.mubr.f32.gmra.mrb[0].mxu0 %v5261
      %v5263 = vpop.f32.mrb[0].mxu0
      %v5264 = vadd.f32 %v5053, %v5263
      %v5265 = vpop.f32.mrb[0].mxu0
      %5266 = vmatprep.mubr.f32.mxu0 0.0
      %v5267 = vand.u32 %v4819, 4294901760
      %5268 = vmatmul.mubr.f32.gmra.mrb[0].mxu0 %v5267
      %v5269 = vpop.f32.mrb[0].mxu0
      %v5270 = vadd.f32 %v5063, %v5269
      %v5271 = vpop.f32.mrb[0].mxu0
      %5272 = vmatprep.mubr.f32.mxu0 0.0
      %v5273 = vand.u32 %v4822, 4294901760
      %5274 = vmatmul.mubr.f32.gmra.mrb[0].mxu0 %v5273
      %v5275 = vpop.f32.mrb[0].mxu0
      %v5276 = vadd.f32 %v5073, %v5275
      %v5277 = vpop.f32.mrb[0].mxu0
      %5278 = vmatprep.mubr.f32.mxu0 0.0
      %v5279 = vand.u32 %v4825, 4294901760
      %5280 = vmatmul.mubr.f32.gmra.mrb[0].mxu0 %v5279
      %v5281 = vpop.f32.mrb[0].mxu0
      %v5282 = vadd.f32 %v5083, %v5281
      %v5283 = vpop.f32.mrb[0].mxu0
      %5284 = vdwg.mxu0
      %5285 = vmatprep.subr.mxu0 0.0
      %v5286 = vand.u32 %v3335, 4294901760
      %v5287 = vsub.f32 %v3335, %v5286
      %5288 = vmatpush1.msra.mxu0 %v5287
      %5289 = vmatprep.subr.mxu0 0.0
      %v5290 = vand.u32 %v3336, 4294901760
      %v5291 = vsub.f32 %v3336, %v5290
      %5292 = vmatpush1.msra.mxu0 %v5291
      %5293 = vmatprep.subr.mxu0 0.0
      %v5294 = vand.u32 %v3337, 4294901760
      %v5295 = vsub.f32 %v3337, %v5294
      %5296 = vmatpush1.msra.mxu0 %v5295
      %5297 = vmatprep.subr.mxu0 0.0
      %v5298 = vand.u32 %v3338, 4294901760
      %v5299 = vsub.f32 %v3338, %v5298
      %5300 = vmatpush1.msra.mxu0 %v5299
      %5301 = vmatprep.subr.mxu0 0.0
      %5302 = vmatpush1.msra.mxu0 0.0
      %5303 = vmatprep.subr.mxu0 0.0
      %5304 = vmatpush1.msra.mxu0 0.0
      %5305 = vmatprep.subr.mxu0 0.0
      %5306 = vmatpush1.msra.mxu0 0.0
      %5307 = vmatprep.subr.mxu0 0.0
      %5308 = vmatpush1.msra.mxu0 0.0
      %5309 = vmatprep.subr.mxu0 0.0
      %5310 = vmatpush1.msra.mxu0 0.0
      %5311 = vmatprep.subr.mxu0 0.0
      %5312 = vmatpush1.msra.mxu0 0.0
      %5313 = vmatprep.subr.mxu0 0.0
      %5314 = vmatpush1.msra.mxu0 0.0
      %5315 = vmatprep.subr.mxu0 0.0
      %5316 = vmatpush1.msra.mxu0 0.0
      %5317 = vmatprep.subr.mxu0 0.0
      %5318 = vmatpush1.msra.mxu0 0.0
      %5319 = vmatprep.subr.mxu0 0.0
      %5320 = vmatpush1.msra.mxu0 0.0
      %5321 = vmatprep.subr.mxu0 0.0
      %5322 = vmatpush1.msra.mxu0 0.0
      %5323 = vmatprep.subr.mxu0 0.0
      %5324 = vmatpush1.msra.mxu0 0.0
      %5325 = vmatprep.subr.mxu0 0.0
      %5326 = vmatpush1.msra.mxu0 0.0
      %5327 = vmatprep.subr.mxu0 0.0
      %5328 = vmatpush1.msra.mxu0 0.0
      %5329 = vmatprep.subr.mxu0 0.0
      %5330 = vmatpush1.msra.mxu0 0.0
      %5331 = vmatprep.subr.mxu0 0.0
      %5332 = vmatpush1.msra.mxu0 0.0
      %5333 = vmatprep.subr.mxu0 0.0
      %5334 = vmatpush1.msra.mxu0 0.0
      %5335 = vmatprep.subr.mxu0 0.0
      %5336 = vmatpush1.msra.mxu0 0.0
      %5337 = vmatprep.subr.mxu0 0.0
      %5338 = vmatpush1.msra.mxu0 0.0
      %5339 = vmatprep.subr.mxu0 0.0
      %5340 = vmatpush1.msra.mxu0 0.0
      %5341 = vmatprep.subr.mxu0 0.0
      %5342 = vmatpush1.msra.mxu0 0.0
      %5343 = vmatprep.subr.mxu0 0.0
      %5344 = vmatpush1.msra.mxu0 0.0
      %5345 = vmatprep.subr.mxu0 0.0
      %5346 = vmatpush1.msra.mxu0 0.0
      %5347 = vmatprep.subr.mxu0 0.0
      %5348 = vmatpush1.msra.mxu0 0.0
      %5349 = vmatprep.subr.mxu0 0.0
      %5350 = vmatpush1.msra.mxu0 0.0
      %5351 = vmatprep.subr.mxu0 0.0
      %5352 = vmatpush1.msra.mxu0 0.0
      %5353 = vmatprep.subr.mxu0 0.0
      %5354 = vmatpush1.msra.mxu0 0.0
      %5355 = vmatprep.subr.mxu0 0.0
      %5356 = vmatpush1.msra.mxu0 0.0
      %5357 = vmatprep.mubr.f32.mxu0 0.0
      %v5358 = vand.u32 %v4771, 4294901760
      %v5359 = vsub.f32 %v4771, %v5358
      %5360 = vmatmul.mubr.f32.gmra.mrb[0].mxu0 %v5359
      %v5361 = vpop.f32.mrb[0].mxu0
      %v5362 = vadd.f32 %v5174, %v5361
      %v5363 = vpop.f32.mrb[0].mxu0
      %5364 = vmatprep.mubr.f32.mxu0 0.0
      %v5365 = vand.u32 %v4774, 4294901760
      %v5366 = vsub.f32 %v4774, %v5365
      %5367 = vmatmul.mubr.f32.gmra.mrb[0].mxu0 %v5366
      %v5368 = vpop.f32.mrb[0].mxu0
      %v5369 = vadd.f32 %v5180, %v5368
      %v5370 = vpop.f32.mrb[0].mxu0
      %5371 = vmatprep.mubr.f32.mxu0 0.0
      %v5372 = vand.u32 %v4777, 4294901760
      %v5373 = vsub.f32 %v4777, %v5372
      %5374 = vmatmul.mubr.f32.gmra.mrb[0].mxu0 %v5373
      %v5375 = vpop.f32.mrb[0].mxu0
      %v5376 = vadd.f32 %v5186, %v5375
      %v5377 = vpop.f32.mrb[0].mxu0
      %5378 = vmatprep.mubr.f32.mxu0 0.0
      %v5379 = vand.u32 %v4780, 4294901760
      %v5380 = vsub.f32 %v4780, %v5379
      %5381 = vmatmul.mubr.f32.gmra.mrb[0].mxu0 %v5380
      %v5382 = vpop.f32.mrb[0].mxu0
      %v5383 = vadd.f32 %v5192, %v5382
      %v5384 = vpop.f32.mrb[0].mxu0
      %5385 = vmatprep.mubr.f32.mxu0 0.0
      %v5386 = vand.u32 %v4783, 4294901760
      %v5387 = vsub.f32 %v4783, %v5386
      %5388 = vmatmul.mubr.f32.gmra.mrb[0].mxu0 %v5387
      %v5389 = vpop.f32.mrb[0].mxu0
      %v5390 = vadd.f32 %v5198, %v5389
      %v5391 = vpop.f32.mrb[0].mxu0
      %5392 = vmatprep.mubr.f32.mxu0 0.0
      %v5393 = vand.u32 %v4786, 4294901760
      %v5394 = vsub.f32 %v4786, %v5393
      %5395 = vmatmul.mubr.f32.gmra.mrb[0].mxu0 %v5394
      %v5396 = vpop.f32.mrb[0].mxu0
      %v5397 = vadd.f32 %v5204, %v5396
      %v5398 = vpop.f32.mrb[0].mxu0
      %5399 = vmatprep.mubr.f32.mxu0 0.0
      %v5400 = vand.u32 %v4789, 4294901760
      %v5401 = vsub.f32 %v4789, %v5400
      %5402 = vmatmul.mubr.f32.gmra.mrb[0].mxu0 %v5401
      %v5403 = vpop.f32.mrb[0].mxu0
      %v5404 = vadd.f32 %v5210, %v5403
      %v5405 = vpop.f32.mrb[0].mxu0
      %5406 = vmatprep.mubr.f32.mxu0 0.0
      %v5407 = vand.u32 %v4792, 4294901760
      %v5408 = vsub.f32 %v4792, %v5407
      %5409 = vmatmul.mubr.f32.gmra.mrb[0].mxu0 %v5408
      %v5410 = vpop.f32.mrb[0].mxu0
      %v5411 = vadd.f32 %v5216, %v5410
      %v5412 = vpop.f32.mrb[0].mxu0
      %5413 = vmatprep.mubr.f32.mxu0 0.0
      %v5414 = vand.u32 %v4795, 4294901760
      %v5415 = vsub.f32 %v4795, %v5414
      %5416 = vmatmul.mubr.f32.gmra.mrb[0].mxu0 %v5415
      %v5417 = vpop.f32.mrb[0].mxu0
      %v5418 = vadd.f32 %v5222, %v5417
      %v5419 = vpop.f32.mrb[0].mxu0
      %5420 = vmatprep.mubr.f32.mxu0 0.0
      %v5421 = vand.u32 %v4798, 4294901760
      %v5422 = vsub.f32 %v4798, %v5421
      %5423 = vmatmul.mubr.f32.gmra.mrb[0].mxu0 %v5422
      %v5424 = vpop.f32.mrb[0].mxu0
      %v5425 = vadd.f32 %v5228, %v5424
      %v5426 = vpop.f32.mrb[0].mxu0
      %5427 = vmatprep.mubr.f32.mxu0 0.0
      %v5428 = vand.u32 %v4801, 4294901760
      %v5429 = vsub.f32 %v4801, %v5428
      %5430 = vmatmul.mubr.f32.gmra.mrb[0].mxu0 %v5429
      %v5431 = vpop.f32.mrb[0].mxu0
      %v5432 = vadd.f32 %v5234, %v5431
      %v5433 = vpop.f32.mrb[0].mxu0
      %5434 = vmatprep.mubr.f32.mxu0 0.0
      %v5435 = vand.u32 %v4804, 4294901760
      %v5436 = vsub.f32 %v4804, %v5435
      %5437 = vmatmul.mubr.f32.gmra.mrb[0].mxu0 %v5436
      %v5438 = vpop.f32.mrb[0].mxu0
      %v5439 = vadd.f32 %v5240, %v5438
      %v5440 = vpop.f32.mrb[0].mxu0
      %5441 = vmatprep.mubr.f32.mxu0 0.0
      %v5442 = vand.u32 %v4807, 4294901760
      %v5443 = vsub.f32 %v4807, %v5442
      %5444 = vmatmul.mubr.f32.gmra.mrb[0].mxu0 %v5443
      %v5445 = vpop.f32.mrb[0].mxu0
      %v5446 = vadd.f32 %v5246, %v5445
      %v5447 = vpop.f32.mrb[0].mxu0
      %5448 = vmatprep.mubr.f32.mxu0 0.0
      %v5449 = vand.u32 %v4810, 4294901760
      %v5450 = vsub.f32 %v4810, %v5449
      %5451 = vmatmul.mubr.f32.gmra.mrb[0].mxu0 %v5450
      %v5452 = vpop.f32.mrb[0].mxu0
      %v5453 = vadd.f32 %v5252, %v5452
      %v5454 = vpop.f32.mrb[0].mxu0
      %5455 = vmatprep.mubr.f32.mxu0 0.0
      %v5456 = vand.u32 %v4813, 4294901760
      %v5457 = vsub.f32 %v4813, %v5456
      %5458 = vmatmul.mubr.f32.gmra.mrb[0].mxu0 %v5457
      %v5459 = vpop.f32.mrb[0].mxu0
      %v5460 = vadd.f32 %v5258, %v5459
      %v5461 = vpop.f32.mrb[0].mxu0
      %5462 = vmatprep.mubr.f32.mxu0 0.0
      %v5463 = vand.u32 %v4816, 4294901760
      %v5464 = vsub.f32 %v4816, %v5463
      %5465 = vmatmul.mubr.f32.gmra.mrb[0].mxu0 %v5464
      %v5466 = vpop.f32.mrb[0].mxu0
      %v5467 = vadd.f32 %v5264, %v5466
      %v5468 = vpop.f32.mrb[0].mxu0
      %5469 = vmatprep.mubr.f32.mxu0 0.0
      %v5470 = vand.u32 %v4819, 4294901760
      %v5471 = vsub.f32 %v4819, %v5470
      %5472 = vmatmul.mubr.f32.gmra.mrb[0].mxu0 %v5471
      %v5473 = vpop.f32.mrb[0].mxu0
      %v5474 = vadd.f32 %v5270, %v5473
      %v5475 = vpop.f32.mrb[0].mxu0
      %5476 = vmatprep.mubr.f32.mxu0 0.0
      %v5477 = vand.u32 %v4822, 4294901760
      %v5478 = vsub.f32 %v4822, %v5477
      %5479 = vmatmul.mubr.f32.gmra.mrb[0].mxu0 %v5478
      %v5480 = vpop.f32.mrb[0].mxu0
      %v5481 = vadd.f32 %v5276, %v5480
      %v5482 = vpop.f32.mrb[0].mxu0
      %5483 = vmatprep.mubr.f32.mxu0 0.0
      %v5484 = vand.u32 %v4825, 4294901760
      %v5485 = vsub.f32 %v4825, %v5484
      %5486 = vmatmul.mubr.f32.gmra.mrb[0].mxu0 %v5485
      %v5487 = vpop.f32.mrb[0].mxu0
      %v5488 = vadd.f32 %v5282, %v5487
      %v5489 = vpop.f32.mrb[0].mxu0
      %5490 = vdwg.mxu0
      %5491 = vmatprep.subr.mxu0 0.0
      %v5492 = vand.u32 %v3335, 4294901760
      %5493 = vmatpush1.msra.mxu0 %v5492
      %5494 = vmatprep.subr.mxu0 0.0
      %v5495 = vand.u32 %v3336, 4294901760
      %5496 = vmatpush1.msra.mxu0 %v5495
      %5497 = vmatprep.subr.mxu0 0.0
      %v5498 = vand.u32 %v3337, 4294901760
      %5499 = vmatpush1.msra.mxu0 %v5498
      %5500 = vmatprep.subr.mxu0 0.0
      %v5501 = vand.u32 %v3338, 4294901760
      %5502 = vmatpush1.msra.mxu0 %v5501
      %5503 = vmatprep.subr.mxu0 0.0
      %5504 = vmatpush1.msra.mxu0 0.0
      %5505 = vmatprep.subr.mxu0 0.0
      %5506 = vmatpush1.msra.mxu0 0.0
      %5507 = vmatprep.subr.mxu0 0.0
      %5508 = vmatpush1.msra.mxu0 0.0
      %5509 = vmatprep.subr.mxu0 0.0
      %5510 = vmatpush1.msra.mxu0 0.0
      %5511 = vmatprep.subr.mxu0 0.0
      %5512 = vmatpush1.msra.mxu0 0.0
      %5513 = vmatprep.subr.mxu0 0.0
      %5514 = vmatpush1.msra.mxu0 0.0
      %5515 = vmatprep.subr.mxu0 0.0
      %5516 = vmatpush1.msra.mxu0 0.0
      %5517 = vmatprep.subr.mxu0 0.0
      %5518 = vmatpush1.msra.mxu0 0.0
      %5519 = vmatprep.subr.mxu0 0.0
      %5520 = vmatpush1.msra.mxu0 0.0
      %5521 = vmatprep.subr.mxu0 0.0
      %5522 = vmatpush1.msra.mxu0 0.0
      %5523 = vmatprep.subr.mxu0 0.0
      %5524 = vmatpush1.msra.mxu0 0.0
      %5525 = vmatprep.subr.mxu0 0.0
      %5526 = vmatpush1.msra.mxu0 0.0
      %5527 = vmatprep.subr.mxu0 0.0
      %5528 = vmatpush1.msra.mxu0 0.0
      %5529 = vmatprep.subr.mxu0 0.0
      %5530 = vmatpush1.msra.mxu0 0.0
      %5531 = vmatprep.subr.mxu0 0.0
      %5532 = vmatpush1.msra.mxu0 0.0
      %5533 = vmatprep.subr.mxu0 0.0
      %5534 = vmatpush1.msra.mxu0 0.0
      %5535 = vmatprep.subr.mxu0 0.0
      %5536 = vmatpush1.msra.mxu0 0.0
      %5537 = vmatprep.subr.mxu0 0.0
      %5538 = vmatpush1.msra.mxu0 0.0
      %5539 = vmatprep.subr.mxu0 0.0
      %5540 = vmatpush1.msra.mxu0 0.0
      %5541 = vmatprep.subr.mxu0 0.0
      %5542 = vmatpush1.msra.mxu0 0.0
      %5543 = vmatprep.subr.mxu0 0.0
      %5544 = vmatpush1.msra.mxu0 0.0
      %5545 = vmatprep.subr.mxu0 0.0
      %5546 = vmatpush1.msra.mxu0 0.0
      %5547 = vmatprep.subr.mxu0 0.0
      %5548 = vmatpush1.msra.mxu0 0.0
      %5549 = vmatprep.subr.mxu0 0.0
      %5550 = vmatpush1.msra.mxu0 0.0
      %5551 = vmatprep.subr.mxu0 0.0
      %5552 = vmatpush1.msra.mxu0 0.0
      %5553 = vmatprep.subr.mxu0 0.0
      %5554 = vmatpush1.msra.mxu0 0.0
      %5555 = vmatprep.subr.mxu0 0.0
      %5556 = vmatpush1.msra.mxu0 0.0
      %5557 = vmatprep.subr.mxu0 0.0
      %5558 = vmatpush1.msra.mxu0 0.0
      %5559 = vmatprep.mubr.f32.mxu0 0.0
      %v5560 = vand.u32 %v4771, 4294901760
      %v5561 = vsub.f32 %v4771, %v5560
      %v5562 = vand.u32 %v5561, 4294901760
      %5563 = vmatmul.mubr.f32.gmra.mrb[0].mxu0 %v5562
      %v5564 = vpop.f32.mrb[0].mxu0
      %v5565 = vadd.f32 %v5362, %v5564
      %v5566 = vpop.f32.mrb[0].mxu0
      %5567 = vmatprep.mubr.f32.mxu0 0.0
      %v5568 = vand.u32 %v4774, 4294901760
      %v5569 = vsub.f32 %v4774, %v5568
      %v5570 = vand.u32 %v5569, 4294901760
      %5571 = vmatmul.mubr.f32.gmra.mrb[0].mxu0 %v5570
      %v5572 = vpop.f32.mrb[0].mxu0
      %v5573 = vadd.f32 %v5369, %v5572
      %v5574 = vpop.f32.mrb[0].mxu0
      %5575 = vmatprep.mubr.f32.mxu0 0.0
      %v5576 = vand.u32 %v4777, 4294901760
      %v5577 = vsub.f32 %v4777, %v5576
      %v5578 = vand.u32 %v5577, 4294901760
      %5579 = vmatmul.mubr.f32.gmra.mrb[0].mxu0 %v5578
      %v5580 = vpop.f32.mrb[0].mxu0
      %v5581 = vadd.f32 %v5376, %v5580
      %v5582 = vpop.f32.mrb[0].mxu0
      %5583 = vmatprep.mubr.f32.mxu0 0.0
      %v5584 = vand.u32 %v4780, 4294901760
      %v5585 = vsub.f32 %v4780, %v5584
      %v5586 = vand.u32 %v5585, 4294901760
      %5587 = vmatmul.mubr.f32.gmra.mrb[0].mxu0 %v5586
      %v5588 = vpop.f32.mrb[0].mxu0
      %v5589 = vadd.f32 %v5383, %v5588
      %v5590 = vpop.f32.mrb[0].mxu0
      %5591 = vmatprep.mubr.f32.mxu0 0.0
      %v5592 = vand.u32 %v4783, 4294901760
      %v5593 = vsub.f32 %v4783, %v5592
      %v5594 = vand.u32 %v5593, 4294901760
      %5595 = vmatmul.mubr.f32.gmra.mrb[0].mxu0 %v5594
      %v5596 = vpop.f32.mrb[0].mxu0
      %v5597 = vadd.f32 %v5390, %v5596
      %v5598 = vpop.f32.mrb[0].mxu0
      %5599 = vmatprep.mubr.f32.mxu0 0.0
      %v5600 = vand.u32 %v4786, 4294901760
      %v5601 = vsub.f32 %v4786, %v5600
      %v5602 = vand.u32 %v5601, 4294901760
      %5603 = vmatmul.mubr.f32.gmra.mrb[0].mxu0 %v5602
      %v5604 = vpop.f32.mrb[0].mxu0
      %v5605 = vadd.f32 %v5397, %v5604
      %v5606 = vpop.f32.mrb[0].mxu0
      %5607 = vmatprep.mubr.f32.mxu0 0.0
      %v5608 = vand.u32 %v4789, 4294901760
      %v5609 = vsub.f32 %v4789, %v5608
      %v5610 = vand.u32 %v5609, 4294901760
      %5611 = vmatmul.mubr.f32.gmra.mrb[0].mxu0 %v5610
      %v5612 = vpop.f32.mrb[0].mxu0
      %v5613 = vadd.f32 %v5404, %v5612
      %v5614 = vpop.f32.mrb[0].mxu0
      %5615 = vmatprep.mubr.f32.mxu0 0.0
      %v5616 = vand.u32 %v4792, 4294901760
      %v5617 = vsub.f32 %v4792, %v5616
      %v5618 = vand.u32 %v5617, 4294901760
      %5619 = vmatmul.mubr.f32.gmra.mrb[0].mxu0 %v5618
      %v5620 = vpop.f32.mrb[0].mxu0
      %v5621 = vadd.f32 %v5411, %v5620
      %v5622 = vpop.f32.mrb[0].mxu0
      %5623 = vmatprep.mubr.f32.mxu0 0.0
      %v5624 = vand.u32 %v4795, 4294901760
      %v5625 = vsub.f32 %v4795, %v5624
      %v5626 = vand.u32 %v5625, 4294901760
      %5627 = vmatmul.mubr.f32.gmra.mrb[0].mxu0 %v5626
      %v5628 = vpop.f32.mrb[0].mxu0
      %v5629 = vadd.f32 %v5418, %v5628
      %v5630 = vpop.f32.mrb[0].mxu0
      %5631 = vmatprep.mubr.f32.mxu0 0.0
      %v5632 = vand.u32 %v4798, 4294901760
      %v5633 = vsub.f32 %v4798, %v5632
      %v5634 = vand.u32 %v5633, 4294901760
      %5635 = vmatmul.mubr.f32.gmra.mrb[0].mxu0 %v5634
      %v5636 = vpop.f32.mrb[0].mxu0
      %v5637 = vadd.f32 %v5425, %v5636
      %v5638 = vpop.f32.mrb[0].mxu0
      %5639 = vmatprep.mubr.f32.mxu0 0.0
      %v5640 = vand.u32 %v4801, 4294901760
      %v5641 = vsub.f32 %v4801, %v5640
      %v5642 = vand.u32 %v5641, 4294901760
      %5643 = vmatmul.mubr.f32.gmra.mrb[0].mxu0 %v5642
      %v5644 = vpop.f32.mrb[0].mxu0
      %v5645 = vadd.f32 %v5432, %v5644
      %v5646 = vpop.f32.mrb[0].mxu0
      %5647 = vmatprep.mubr.f32.mxu0 0.0
      %v5648 = vand.u32 %v4804, 4294901760
      %v5649 = vsub.f32 %v4804, %v5648
      %v5650 = vand.u32 %v5649, 4294901760
      %5651 = vmatmul.mubr.f32.gmra.mrb[0].mxu0 %v5650
      %v5652 = vpop.f32.mrb[0].mxu0
      %v5653 = vadd.f32 %v5439, %v5652
      %v5654 = vpop.f32.mrb[0].mxu0
      %5655 = vmatprep.mubr.f32.mxu0 0.0
      %v5656 = vand.u32 %v4807, 4294901760
      %v5657 = vsub.f32 %v4807, %v5656
      %v5658 = vand.u32 %v5657, 4294901760
      %5659 = vmatmul.mubr.f32.gmra.mrb[0].mxu0 %v5658
      %v5660 = vpop.f32.mrb[0].mxu0
      %v5661 = vadd.f32 %v5446, %v5660
      %v5662 = vpop.f32.mrb[0].mxu0
      %5663 = vmatprep.mubr.f32.mxu0 0.0
      %v5664 = vand.u32 %v4810, 4294901760
      %v5665 = vsub.f32 %v4810, %v5664
      %v5666 = vand.u32 %v5665, 4294901760
      %5667 = vmatmul.mubr.f32.gmra.mrb[0].mxu0 %v5666
      %v5668 = vpop.f32.mrb[0].mxu0
      %v5669 = vadd.f32 %v5453, %v5668
      %v5670 = vpop.f32.mrb[0].mxu0
      %5671 = vmatprep.mubr.f32.mxu0 0.0
      %v5672 = vand.u32 %v4813, 4294901760
      %v5673 = vsub.f32 %v4813, %v5672
      %v5674 = vand.u32 %v5673, 4294901760
      %5675 = vmatmul.mubr.f32.gmra.mrb[0].mxu0 %v5674
      %v5676 = vpop.f32.mrb[0].mxu0
      %v5677 = vadd.f32 %v5460, %v5676
      %v5678 = vpop.f32.mrb[0].mxu0
      %5679 = vmatprep.mubr.f32.mxu0 0.0
      %v5680 = vand.u32 %v4816, 4294901760
      %v5681 = vsub.f32 %v4816, %v5680
      %v5682 = vand.u32 %v5681, 4294901760
      %5683 = vmatmul.mubr.f32.gmra.mrb[0].mxu0 %v5682
      %v5684 = vpop.f32.mrb[0].mxu0
      %v5685 = vadd.f32 %v5467, %v5684
      %v5686 = vpop.f32.mrb[0].mxu0
      %5687 = vmatprep.mubr.f32.mxu0 0.0
      %v5688 = vand.u32 %v4819, 4294901760
      %v5689 = vsub.f32 %v4819, %v5688
      %v5690 = vand.u32 %v5689, 4294901760
      %5691 = vmatmul.mubr.f32.gmra.mrb[0].mxu0 %v5690
      %v5692 = vpop.f32.mrb[0].mxu0
      %v5693 = vadd.f32 %v5474, %v5692
      %v5694 = vpop.f32.mrb[0].mxu0
      %5695 = vmatprep.mubr.f32.mxu0 0.0
      %v5696 = vand.u32 %v4822, 4294901760
      %v5697 = vsub.f32 %v4822, %v5696
      %v5698 = vand.u32 %v5697, 4294901760
      %5699 = vmatmul.mubr.f32.gmra.mrb[0].mxu0 %v5698
      %v5700 = vpop.f32.mrb[0].mxu0
      %v5701 = vadd.f32 %v5481, %v5700
      %v5702 = vpop.f32.mrb[0].mxu0
      %5703 = vmatprep.mubr.f32.mxu0 0.0
      %v5704 = vand.u32 %v4825, 4294901760
      %v5705 = vsub.f32 %v4825, %v5704
      %v5706 = vand.u32 %v5705, 4294901760
      %5707 = vmatmul.mubr.f32.gmra.mrb[0].mxu0 %v5706
      %v5708 = vpop.f32.mrb[0].mxu0
      %v5709 = vadd.f32 %v5488, %v5708
      %v5710 = vpop.f32.mrb[0].mxu0
      %5711 = vdwg.mxu0
      %5712 = vmatprep.subr.mxu0 0.0
      %v5713 = vand.u32 %v3335, 4294901760
      %v5714 = vsub.f32 %v3335, %v5713
      %v5715 = vand.u32 %v5714, 4294901760
      %5716 = vmatpush1.msra.mxu0 %v5715
      %5717 = vmatprep.subr.mxu0 0.0
      %v5718 = vand.u32 %v3336, 4294901760
      %v5719 = vsub.f32 %v3336, %v5718
      %v5720 = vand.u32 %v5719, 4294901760
      %5721 = vmatpush1.msra.mxu0 %v5720
      %5722 = vmatprep.subr.mxu0 0.0
      %v5723 = vand.u32 %v3337, 4294901760
      %v5724 = vsub.f32 %v3337, %v5723
      %v5725 = vand.u32 %v5724, 4294901760
      %5726 = vmatpush1.msra.mxu0 %v5725
      %5727 = vmatprep.subr.mxu0 0.0
      %v5728 = vand.u32 %v3338, 4294901760
      %v5729 = vsub.f32 %v3338, %v5728
      %v5730 = vand.u32 %v5729, 4294901760
      %5731 = vmatpush1.msra.mxu0 %v5730
      %5732 = vmatprep.subr.mxu0 0.0
      %5733 = vmatpush1.msra.mxu0 0.0
      %5734 = vmatprep.subr.mxu0 0.0
      %5735 = vmatpush1.msra.mxu0 0.0
      %5736 = vmatprep.subr.mxu0 0.0
      %5737 = vmatpush1.msra.mxu0 0.0
      %5738 = vmatprep.subr.mxu0 0.0
      %5739 = vmatpush1.msra.mxu0 0.0
      %5740 = vmatprep.subr.mxu0 0.0
      %5741 = vmatpush1.msra.mxu0 0.0
      %5742 = vmatprep.subr.mxu0 0.0
      %5743 = vmatpush1.msra.mxu0 0.0
      %5744 = vmatprep.subr.mxu0 0.0
      %5745 = vmatpush1.msra.mxu0 0.0
      %5746 = vmatprep.subr.mxu0 0.0
      %5747 = vmatpush1.msra.mxu0 0.0
      %5748 = vmatprep.subr.mxu0 0.0
      %5749 = vmatpush1.msra.mxu0 0.0
      %5750 = vmatprep.subr.mxu0 0.0
      %5751 = vmatpush1.msra.mxu0 0.0
      %5752 = vmatprep.subr.mxu0 0.0
      %5753 = vmatpush1.msra.mxu0 0.0
      %5754 = vmatprep.subr.mxu0 0.0
      %5755 = vmatpush1.msra.mxu0 0.0
      %5756 = vmatprep.subr.mxu0 0.0
      %5757 = vmatpush1.msra.mxu0 0.0
      %5758 = vmatprep.subr.mxu0 0.0
      %5759 = vmatpush1.msra.mxu0 0.0
      %5760 = vmatprep.subr.mxu0 0.0
      %5761 = vmatpush1.msra.mxu0 0.0
      %5762 = vmatprep.subr.mxu0 0.0
      %5763 = vmatpush1.msra.mxu0 0.0
      %5764 = vmatprep.subr.mxu0 0.0
      %5765 = vmatpush1.msra.mxu0 0.0
      %5766 = vmatprep.subr.mxu0 0.0
      %5767 = vmatpush1.msra.mxu0 0.0
      %5768 = vmatprep.subr.mxu0 0.0
      %5769 = vmatpush1.msra.mxu0 0.0
      %5770 = vmatprep.subr.mxu0 0.0
      %5771 = vmatpush1.msra.mxu0 0.0
      %5772 = vmatprep.subr.mxu0 0.0
      %5773 = vmatpush1.msra.mxu0 0.0
      %5774 = vmatprep.subr.mxu0 0.0
      %5775 = vmatpush1.msra.mxu0 0.0
      %5776 = vmatprep.subr.mxu0 0.0
      %5777 = vmatpush1.msra.mxu0 0.0
      %5778 = vmatprep.subr.mxu0 0.0
      %5779 = vmatpush1.msra.mxu0 0.0
      %5780 = vmatprep.subr.mxu0 0.0
      %5781 = vmatpush1.msra.mxu0 0.0
      %5782 = vmatprep.subr.mxu0 0.0
      %5783 = vmatpush1.msra.mxu0 0.0
      %5784 = vmatprep.subr.mxu0 0.0
      %5785 = vmatpush1.msra.mxu0 0.0
      %5786 = vmatprep.subr.mxu0 0.0
      %5787 = vmatpush1.msra.mxu0 0.0
      %5788 = vmatprep.mubr.f32.mxu0 0.0
      %v5789 = vand.u32 %v4771, 4294901760
      %5790 = vmatmul.mubr.f32.gmra.mrb[0].mxu0 %v5789
      %v5791 = vpop.f32.mrb[0].mxu0
      %v5792 = vadd.f32 %v5565, %v5791
      %v5793 = vpop.f32.mrb[0].mxu0
      %5794 = vmatprep.mubr.f32.mxu0 0.0
      %v5795 = vand.u32 %v4774, 4294901760
      %5796 = vmatmul.mubr.f32.gmra.mrb[0].mxu0 %v5795
      %v5797 = vpop.f32.mrb[0].mxu0
      %v5798 = vadd.f32 %v5573, %v5797
      %v5799 = vpop.f32.mrb[0].mxu0
      %5800 = vmatprep.mubr.f32.mxu0 0.0
      %v5801 = vand.u32 %v4777, 4294901760
      %5802 = vmatmul.mubr.f32.gmra.mrb[0].mxu0 %v5801
      %v5803 = vpop.f32.mrb[0].mxu0
      %v5804 = vadd.f32 %v5581, %v5803
      %v5805 = vpop.f32.mrb[0].mxu0
      %5806 = vmatprep.mubr.f32.mxu0 0.0
      %v5807 = vand.u32 %v4780, 4294901760
      %5808 = vmatmul.mubr.f32.gmra.mrb[0].mxu0 %v5807
      %v5809 = vpop.f32.mrb[0].mxu0
      %v5810 = vadd.f32 %v5589, %v5809
      %v5811 = vpop.f32.mrb[0].mxu0
      %5812 = vmatprep.mubr.f32.mxu0 0.0
      %v5813 = vand.u32 %v4783, 4294901760
      %5814 = vmatmul.mubr.f32.gmra.mrb[0].mxu0 %v5813
      %v5815 = vpop.f32.mrb[0].mxu0
      %v5816 = vadd.f32 %v5597, %v5815
      %v5817 = vpop.f32.mrb[0].mxu0
      %5818 = vmatprep.mubr.f32.mxu0 0.0
      %v5819 = vand.u32 %v4786, 4294901760
      %5820 = vmatmul.mubr.f32.gmra.mrb[0].mxu0 %v5819
      %v5821 = vpop.f32.mrb[0].mxu0
      %v5822 = vadd.f32 %v5605, %v5821
      %v5823 = vpop.f32.mrb[0].mxu0
      %5824 = vmatprep.mubr.f32.mxu0 0.0
      %v5825 = vand.u32 %v4789, 4294901760
      %5826 = vmatmul.mubr.f32.gmra.mrb[0].mxu0 %v5825
      %v5827 = vpop.f32.mrb[0].mxu0
      %v5828 = vadd.f32 %v5613, %v5827
      %v5829 = vpop.f32.mrb[0].mxu0
      %5830 = vmatprep.mubr.f32.mxu0 0.0
      %v5831 = vand.u32 %v4792, 4294901760
      %5832 = vmatmul.mubr.f32.gmra.mrb[0].mxu0 %v5831
      %v5833 = vpop.f32.mrb[0].mxu0
      %v5834 = vadd.f32 %v5621, %v5833
      %v5835 = vpop.f32.mrb[0].mxu0
      %5836 = vmatprep.mubr.f32.mxu0 0.0
      %v5837 = vand.u32 %v4795, 4294901760
      %5838 = vmatmul.mubr.f32.gmra.mrb[0].mxu0 %v5837
      %v5839 = vpop.f32.mrb[0].mxu0
      %v5840 = vadd.f32 %v5629, %v5839
      %v5841 = vpop.f32.mrb[0].mxu0
      %5842 = vmatprep.mubr.f32.mxu0 0.0
      %v5843 = vand.u32 %v4798, 4294901760
      %5844 = vmatmul.mubr.f32.gmra.mrb[0].mxu0 %v5843
      %v5845 = vpop.f32.mrb[0].mxu0
      %v5846 = vadd.f32 %v5637, %v5845
      %v5847 = vpop.f32.mrb[0].mxu0
      %5848 = vmatprep.mubr.f32.mxu0 0.0
      %v5849 = vand.u32 %v4801, 4294901760
      %5850 = vmatmul.mubr.f32.gmra.mrb[0].mxu0 %v5849
      %v5851 = vpop.f32.mrb[0].mxu0
      %v5852 = vadd.f32 %v5645, %v5851
      %v5853 = vpop.f32.mrb[0].mxu0
      %5854 = vmatprep.mubr.f32.mxu0 0.0
      %v5855 = vand.u32 %v4804, 4294901760
      %5856 = vmatmul.mubr.f32.gmra.mrb[0].mxu0 %v5855
      %v5857 = vpop.f32.mrb[0].mxu0
      %v5858 = vadd.f32 %v5653, %v5857
      %v5859 = vpop.f32.mrb[0].mxu0
      %5860 = vmatprep.mubr.f32.mxu0 0.0
      %v5861 = vand.u32 %v4807, 4294901760
      %5862 = vmatmul.mubr.f32.gmra.mrb[0].mxu0 %v5861
      %v5863 = vpop.f32.mrb[0].mxu0
      %v5864 = vadd.f32 %v5661, %v5863
      %v5865 = vpop.f32.mrb[0].mxu0
      %5866 = vmatprep.mubr.f32.mxu0 0.0
      %v5867 = vand.u32 %v4810, 4294901760
      %5868 = vmatmul.mubr.f32.gmra.mrb[0].mxu0 %v5867
      %v5869 = vpop.f32.mrb[0].mxu0
      %v5870 = vadd.f32 %v5669, %v5869
      %v5871 = vpop.f32.mrb[0].mxu0
      %5872 = vmatprep.mubr.f32.mxu0 0.0
      %v5873 = vand.u32 %v4813, 4294901760
      %5874 = vmatmul.mubr.f32.gmra.mrb[0].mxu0 %v5873
      %v5875 = vpop.f32.mrb[0].mxu0
      %v5876 = vadd.f32 %v5677, %v5875
      %v5877 = vpop.f32.mrb[0].mxu0
      %5878 = vmatprep.mubr.f32.mxu0 0.0
      %v5879 = vand.u32 %v4816, 4294901760
      %5880 = vmatmul.mubr.f32.gmra.mrb[0].mxu0 %v5879
      %v5881 = vpop.f32.mrb[0].mxu0
      %v5882 = vadd.f32 %v5685, %v5881
      %v5883 = vpop.f32.mrb[0].mxu0
      %5884 = vmatprep.mubr.f32.mxu0 0.0
      %v5885 = vand.u32 %v4819, 4294901760
      %5886 = vmatmul.mubr.f32.gmra.mrb[0].mxu0 %v5885
      %v5887 = vpop.f32.mrb[0].mxu0
      %v5888 = vadd.f32 %v5693, %v5887
      %v5889 = vpop.f32.mrb[0].mxu0
      %5890 = vmatprep.mubr.f32.mxu0 0.0
      %v5891 = vand.u32 %v4822, 4294901760
      %5892 = vmatmul.mubr.f32.gmra.mrb[0].mxu0 %v5891
      %v5893 = vpop.f32.mrb[0].mxu0
      %v5894 = vadd.f32 %v5701, %v5893
      %v5895 = vpop.f32.mrb[0].mxu0
      %5896 = vmatprep.mubr.f32.mxu0 0.0
      %v5897 = vand.u32 %v4825, 4294901760
      %5898 = vmatmul.mubr.f32.gmra.mrb[0].mxu0 %v5897
      %v5899 = vpop.f32.mrb[0].mxu0
      %v5900 = vadd.f32 %v5709, %v5899
      %v5901 = vpop.f32.mrb[0].mxu0
      %5902 = vdwg.mxu0
      %5903 = vmatprep.subr.mxu0 0.0
      %v5904 = vand.u32 %v3335, 4294901760
      %5905 = vmatpush1.msra.mxu0 %v5904
      %5906 = vmatprep.subr.mxu0 0.0
      %v5907 = vand.u32 %v3336, 4294901760
      %5908 = vmatpush1.msra.mxu0 %v5907
      %5909 = vmatprep.subr.mxu0 0.0
      %v5910 = vand.u32 %v3337, 4294901760
      %5911 = vmatpush1.msra.mxu0 %v5910
      %5912 = vmatprep.subr.mxu0 0.0
      %v5913 = vand.u32 %v3338, 4294901760
      %5914 = vmatpush1.msra.mxu0 %v5913
      %5915 = vmatprep.subr.mxu0 0.0
      %5916 = vmatpush1.msra.mxu0 0.0
      %5917 = vmatprep.subr.mxu0 0.0
      %5918 = vmatpush1.msra.mxu0 0.0
      %5919 = vmatprep.subr.mxu0 0.0
      %5920 = vmatpush1.msra.mxu0 0.0
      %5921 = vmatprep.subr.mxu0 0.0
      %5922 = vmatpush1.msra.mxu0 0.0
      %5923 = vmatprep.subr.mxu0 0.0
      %5924 = vmatpush1.msra.mxu0 0.0
      %5925 = vmatprep.subr.mxu0 0.0
      %5926 = vmatpush1.msra.mxu0 0.0
      %5927 = vmatprep.subr.mxu0 0.0
      %5928 = vmatpush1.msra.mxu0 0.0
      %5929 = vmatprep.subr.mxu0 0.0
      %5930 = vmatpush1.msra.mxu0 0.0
      %5931 = vmatprep.subr.mxu0 0.0
      %5932 = vmatpush1.msra.mxu0 0.0
      %5933 = vmatprep.subr.mxu0 0.0
      %5934 = vmatpush1.msra.mxu0 0.0
      %5935 = vmatprep.subr.mxu0 0.0
      %5936 = vmatpush1.msra.mxu0 0.0
      %5937 = vmatprep.subr.mxu0 0.0
      %5938 = vmatpush1.msra.mxu0 0.0
      %5939 = vmatprep.subr.mxu0 0.0
      %5940 = vmatpush1.msra.mxu0 0.0
      %5941 = vmatprep.subr.mxu0 0.0
      %5942 = vmatpush1.msra.mxu0 0.0
      %5943 = vmatprep.subr.mxu0 0.0
      %5944 = vmatpush1.msra.mxu0 0.0
      %5945 = vmatprep.subr.mxu0 0.0
      %5946 = vmatpush1.msra.mxu0 0.0
      %5947 = vmatprep.subr.mxu0 0.0
      %5948 = vmatpush1.msra.mxu0 0.0
      %5949 = vmatprep.subr.mxu0 0.0
      %5950 = vmatpush1.msra.mxu0 0.0
      %5951 = vmatprep.subr.mxu0 0.0
      %5952 = vmatpush1.msra.mxu0 0.0
      %5953 = vmatprep.subr.mxu0 0.0
      %5954 = vmatpush1.msra.mxu0 0.0
      %5955 = vmatprep.subr.mxu0 0.0
      %5956 = vmatpush1.msra.mxu0 0.0
      %5957 = vmatprep.subr.mxu0 0.0
      %5958 = vmatpush1.msra.mxu0 0.0
      %5959 = vmatprep.subr.mxu0 0.0
      %5960 = vmatpush1.msra.mxu0 0.0
      %5961 = vmatprep.subr.mxu0 0.0
      %5962 = vmatpush1.msra.mxu0 0.0
      %5963 = vmatprep.subr.mxu0 0.0
      %5964 = vmatpush1.msra.mxu0 0.0
      %5965 = vmatprep.subr.mxu0 0.0
      %5966 = vmatpush1.msra.mxu0 0.0
      %5967 = vmatprep.subr.mxu0 0.0
      %5968 = vmatpush1.msra.mxu0 0.0
      %5969 = vmatprep.subr.mxu0 0.0
      %5970 = vmatpush1.msra.mxu0 0.0
      %5971 = vmatprep.mubr.f32.mxu0 0.0
      %v5972 = vand.u32 %v4771, 4294901760
      %5973 = vmatmul.mubr.f32.gmra.mrb[0].mxu0 %v5972
      %v5974 = vpop.f32.mrb[0].mxu0
      %v5975 = vadd.f32 %v5792, %v5974
      %v5976 = vpop.f32.mrb[0].mxu0
      %5977 = vmatprep.mubr.f32.mxu0 0.0
      %v5978 = vand.u32 %v4774, 4294901760
      %5979 = vmatmul.mubr.f32.gmra.mrb[0].mxu0 %v5978
      %v5980 = vpop.f32.mrb[0].mxu0
      %v5981 = vadd.f32 %v5798, %v5980
      %v5982 = vpop.f32.mrb[0].mxu0
      %5983 = vmatprep.mubr.f32.mxu0 0.0
      %v5984 = vand.u32 %v4777, 4294901760
      %5985 = vmatmul.mubr.f32.gmra.mrb[0].mxu0 %v5984
      %v5986 = vpop.f32.mrb[0].mxu0
      %v5987 = vadd.f32 %v5804, %v5986
      %v5988 = vpop.f32.mrb[0].mxu0
      %5989 = vmatprep.mubr.f32.mxu0 0.0
      %v5990 = vand.u32 %v4780, 4294901760
      %5991 = vmatmul.mubr.f32.gmra.mrb[0].mxu0 %v5990
      %v5992 = vpop.f32.mrb[0].mxu0
      %v5993 = vadd.f32 %v5810, %v5992
      %v5994 = vpop.f32.mrb[0].mxu0
      %5995 = vmatprep.mubr.f32.mxu0 0.0
      %v5996 = vand.u32 %v4783, 4294901760
      %5997 = vmatmul.mubr.f32.gmra.mrb[0].mxu0 %v5996
      %v5998 = vpop.f32.mrb[0].mxu0
      %v5999 = vadd.f32 %v5816, %v5998
      %v6000 = vpop.f32.mrb[0].mxu0
      %6001 = vmatprep.mubr.f32.mxu0 0.0
      %v6002 = vand.u32 %v4786, 4294901760
      %6003 = vmatmul.mubr.f32.gmra.mrb[0].mxu0 %v6002
      %v6004 = vpop.f32.mrb[0].mxu0
      %v6005 = vadd.f32 %v5822, %v6004
      %v6006 = vpop.f32.mrb[0].mxu0
      %6007 = vmatprep.mubr.f32.mxu0 0.0
      %v6008 = vand.u32 %v4789, 4294901760
      %6009 = vmatmul.mubr.f32.gmra.mrb[0].mxu0 %v6008
      %v6010 = vpop.f32.mrb[0].mxu0
      %v6011 = vadd.f32 %v5828, %v6010
      %v6012 = vpop.f32.mrb[0].mxu0
      %6013 = vmatprep.mubr.f32.mxu0 0.0
      %v6014 = vand.u32 %v4792, 4294901760
      %6015 = vmatmul.mubr.f32.gmra.mrb[0].mxu0 %v6014
      %v6016 = vpop.f32.mrb[0].mxu0
      %v6017 = vadd.f32 %v5834, %v6016
      %v6018 = vpop.f32.mrb[0].mxu0
      %6019 = vmatprep.mubr.f32.mxu0 0.0
      %v6020 = vand.u32 %v4795, 4294901760
      %6021 = vmatmul.mubr.f32.gmra.mrb[0].mxu0 %v6020
      %v6022 = vpop.f32.mrb[0].mxu0
      %v6023 = vadd.f32 %v5840, %v6022
      %v6024 = vpop.f32.mrb[0].mxu0
      %6025 = vmatprep.mubr.f32.mxu0 0.0
      %v6026 = vand.u32 %v4798, 4294901760
      %6027 = vmatmul.mubr.f32.gmra.mrb[0].mxu0 %v6026
      %v6028 = vpop.f32.mrb[0].mxu0
      %v6029 = vadd.f32 %v5846, %v6028
      %v6030 = vpop.f32.mrb[0].mxu0
      %6031 = vmatprep.mubr.f32.mxu0 0.0
      %v6032 = vand.u32 %v4801, 4294901760
      %6033 = vmatmul.mubr.f32.gmra.mrb[0].mxu0 %v6032
      %v6034 = vpop.f32.mrb[0].mxu0
      %v6035 = vadd.f32 %v5852, %v6034
      %v6036 = vpop.f32.mrb[0].mxu0
      %6037 = vmatprep.mubr.f32.mxu0 0.0
      %v6038 = vand.u32 %v4804, 4294901760
      %6039 = vmatmul.mubr.f32.gmra.mrb[0].mxu0 %v6038
      %v6040 = vpop.f32.mrb[0].mxu0
      %v6041 = vadd.f32 %v5858, %v6040
      %v6042 = vpop.f32.mrb[0].mxu0
      %6043 = vmatprep.mubr.f32.mxu0 0.0
      %v6044 = vand.u32 %v4807, 4294901760
      %6045 = vmatmul.mubr.f32.gmra.mrb[0].mxu0 %v6044
      %v6046 = vpop.f32.mrb[0].mxu0
      %v6047 = vadd.f32 %v5864, %v6046
      %v6048 = vpop.f32.mrb[0].mxu0
      %6049 = vmatprep.mubr.f32.mxu0 0.0
      %v6050 = vand.u32 %v4810, 4294901760
      %6051 = vmatmul.mubr.f32.gmra.mrb[0].mxu0 %v6050
      %v6052 = vpop.f32.mrb[0].mxu0
      %v6053 = vadd.f32 %v5870, %v6052
      %v6054 = vpop.f32.mrb[0].mxu0
      %6055 = vmatprep.mubr.f32.mxu0 0.0
      %v6056 = vand.u32 %v4813, 4294901760
      %6057 = vmatmul.mubr.f32.gmra.mrb[0].mxu0 %v6056
      %v6058 = vpop.f32.mrb[0].mxu0
      %v6059 = vadd.f32 %v5876, %v6058
      %v6060 = vpop.f32.mrb[0].mxu0
      %6061 = vmatprep.mubr.f32.mxu0 0.0
      %v6062 = vand.u32 %v4816, 4294901760
      %6063 = vmatmul.mubr.f32.gmra.mrb[0].mxu0 %v6062
      %v6064 = vpop.f32.mrb[0].mxu0
      %v6065 = vadd.f32 %v5882, %v6064
      %v6066 = vpop.f32.mrb[0].mxu0
      %6067 = vmatprep.mubr.f32.mxu0 0.0
      %v6068 = vand.u32 %v4819, 4294901760
      %6069 = vmatmul.mubr.f32.gmra.mrb[0].mxu0 %v6068
      %v6070 = vpop.f32.mrb[0].mxu0
      %v6071 = vadd.f32 %v5888, %v6070
      %v6072 = vpop.f32.mrb[0].mxu0
      %6073 = vmatprep.mubr.f32.mxu0 0.0
      %v6074 = vand.u32 %v4822, 4294901760
      %6075 = vmatmul.mubr.f32.gmra.mrb[0].mxu0 %v6074
      %v6076 = vpop.f32.mrb[0].mxu0
      %v6077 = vadd.f32 %v5894, %v6076
      %v6078 = vpop.f32.mrb[0].mxu0
      %6079 = vmatprep.mubr.f32.mxu0 0.0
      %v6080 = vand.u32 %v4825, 4294901760
      %6081 = vmatmul.mubr.f32.gmra.mrb[0].mxu0 %v6080
      %v6082 = vpop.f32.mrb[0].mxu0
      %v6083 = vadd.f32 %v5900, %v6082
      %v6084 = vpop.f32.mrb[0].mxu0
      %6085 = vdwg.mxu0
      %v6086 = vld [vmem:[%s7] sm:$0x1]
      %v6088 = vlaneseq
      %v6089 = vshrl.u32 %v6088, 7
      %v6090 = vsub.s32 0, %v6089
      %v6091 = vrot.slane %v6086, %v6090
      %v6093 = vadd.f32 %v5975, %v6091
      %v6094 = vadd.f32 %v5981, %v6091
      %v6095 = vadd.f32 %v5987, %v6091
      %v6096 = vadd.f32 %v5993, %v6091
      %v6097 = vadd.f32 %v5999, %v6091
      %v6098 = vadd.f32 %v6005, %v6091
      %v6099 = vadd.f32 %v6011, %v6091
      %v6100 = vadd.f32 %v6017, %v6091
      %v6101 = vadd.f32 %v6023, %v6091
      %v6102 = vadd.f32 %v6029, %v6091
      %v6103 = vadd.f32 %v6035, %v6091
      %v6104 = vadd.f32 %v6041, %v6091
      %v6105 = vadd.f32 %v6047, %v6091
      %v6106 = vadd.f32 %v6053, %v6091
      %v6107 = vadd.f32 %v6059, %v6091
      %v6108 = vadd.f32 %v6065, %v6091
      %v6109 = vadd.f32 %v6071, %v6091
      %v6110 = vadd.f32 %v6077, %v6091
      %v6111 = vadd.f32 %v6083, %v6091
      %v6112 = vxor.u32 %v6093, 2147483648
      %v6113 = vxor.u32 %v6094, 2147483648
      %v6114 = vxor.u32 %v6095, 2147483648
      %v6115 = vxor.u32 %v6096, 2147483648
      %v6116 = vxor.u32 %v6097, 2147483648
      %v6117 = vxor.u32 %v6098, 2147483648
      %v6118 = vxor.u32 %v6099, 2147483648
      %v6119 = vxor.u32 %v6100, 2147483648
      %v6120 = vxor.u32 %v6101, 2147483648
      %v6121 = vxor.u32 %v6102, 2147483648
      %v6122 = vxor.u32 %v6103, 2147483648
      %v6123 = vxor.u32 %v6104, 2147483648
      %v6124 = vxor.u32 %v6105, 2147483648
      %v6125 = vxor.u32 %v6106, 2147483648
      %v6126 = vxor.u32 %v6107, 2147483648
      %v6127 = vxor.u32 %v6108, 2147483648
      %v6128 = vxor.u32 %v6109, 2147483648
      %v6129 = vxor.u32 %v6110, 2147483648
      %v6130 = vxor.u32 %v6111, 2147483648
      %v6131 = vmul.f32 %v6112, 1.442695
      %v6132 = vpow.pop %v6131
      %v6133 = vmul.f32 %v6113, 1.442695
      %v6134 = vpow.pop %v6133
      %v6135 = vmul.f32 %v6114, 1.442695
      %v6136 = vpow.pop %v6135
      %v6137 = vmul.f32 %v6115, 1.442695
      %v6138 = vpow.pop %v6137
      %v6139 = vmul.f32 %v6116, 1.442695
      %v6140 = vpow.pop %v6139
      %v6141 = vmul.f32 %v6117, 1.442695
      %v6142 = vpow.pop %v6141
      %v6143 = vmul.f32 %v6118, 1.442695
      %v6144 = vpow.pop %v6143
      %v6145 = vmul.f32 %v6119, 1.442695
      %v6146 = vpow.pop %v6145
      %v6147 = vmul.f32 %v6120, 1.442695
      %v6148 = vpow.pop %v6147
      %v6149 = vmul.f32 %v6121, 1.442695
      %v6150 = vpow.pop %v6149
      %v6151 = vmul.f32 %v6122, 1.442695
      %v6152 = vpow.pop %v6151
      %v6153 = vmul.f32 %v6123, 1.442695
      %v6154 = vpow.pop %v6153
      %v6155 = vmul.f32 %v6124, 1.442695
      %v6156 = vpow.pop %v6155
      %v6157 = vmul.f32 %v6125, 1.442695
      %v6158 = vpow.pop %v6157
      %v6159 = vmul.f32 %v6126, 1.442695
      %v6160 = vpow.pop %v6159
      %v6161 = vmul.f32 %v6127, 1.442695
      %v6162 = vpow.pop %v6161
      %v6163 = vmul.f32 %v6128, 1.442695
      %v6164 = vpow.pop %v6163
      %v6165 = vmul.f32 %v6129, 1.442695
      %v6166 = vpow.pop %v6165
      %v6167 = vmul.f32 %v6130, 1.442695
      %v6168 = vpow.pop %v6167
      %v6169 = vadd.f32 %v6132, 1.0
      %v6170 = vadd.f32 %v6134, 1.0
      %v6171 = vadd.f32 %v6136, 1.0
      %v6172 = vadd.f32 %v6138, 1.0
      %v6173 = vadd.f32 %v6140, 1.0
      %v6174 = vadd.f32 %v6142, 1.0
      %v6175 = vadd.f32 %v6144, 1.0
      %v6176 = vadd.f32 %v6146, 1.0
      %v6177 = vadd.f32 %v6148, 1.0
      %v6178 = vadd.f32 %v6150, 1.0
      %v6179 = vadd.f32 %v6152, 1.0
      %v6180 = vadd.f32 %v6154, 1.0
      %v6181 = vadd.f32 %v6156, 1.0
      %v6182 = vadd.f32 %v6158, 1.0
      %v6183 = vadd.f32 %v6160, 1.0
      %v6184 = vadd.f32 %v6162, 1.0
      %v6185 = vadd.f32 %v6164, 1.0
      %v6186 = vadd.f32 %v6166, 1.0
      %v6187 = vadd.f32 %v6168, 1.0
      %v6188 = vrcp.pop %v6169
      %v6189 = vmul.f32 1.0, %v6188
      %v6190 = vrcp.pop %v6170
      %v6191 = vmul.f32 1.0, %v6190
      %v6192 = vrcp.pop %v6171
      %v6193 = vmul.f32 1.0, %v6192
      %v6194 = vrcp.pop %v6172
      %v6195 = vmul.f32 1.0, %v6194
      %v6196 = vrcp.pop %v6173
      %v6197 = vmul.f32 1.0, %v6196
      %v6198 = vrcp.pop %v6174
      %v6199 = vmul.f32 1.0, %v6198
      %v6200 = vrcp.pop %v6175
      %v6201 = vmul.f32 1.0, %v6200
      %v6202 = vrcp.pop %v6176
      %v6203 = vmul.f32 1.0, %v6202
      %v6204 = vrcp.pop %v6177
      %v6205 = vmul.f32 1.0, %v6204
      %v6206 = vrcp.pop %v6178
      %v6207 = vmul.f32 1.0, %v6206
      %v6208 = vrcp.pop %v6179
      %v6209 = vmul.f32 1.0, %v6208
      %v6210 = vrcp.pop %v6180
      %v6211 = vmul.f32 1.0, %v6210
      %v6212 = vrcp.pop %v6181
      %v6213 = vmul.f32 1.0, %v6212
      %v6214 = vrcp.pop %v6182
      %v6215 = vmul.f32 1.0, %v6214
      %v6216 = vrcp.pop %v6183
      %v6217 = vmul.f32 1.0, %v6216
      %v6218 = vrcp.pop %v6184
      %v6219 = vmul.f32 1.0, %v6218
      %v6220 = vrcp.pop %v6185
      %v6221 = vmul.f32 1.0, %v6220
      %v6222 = vrcp.pop %v6186
      %v6223 = vmul.f32 1.0, %v6222
      %v6224 = vrcp.pop %v6187
      %v6225 = vmul.f32 1.0, %v6224
      %vm6226 = vcmp.ge.f32.partialorder %v6093, 0.0
      %vm6227 = vcmp.ge.f32.partialorder %v6094, 0.0
      %vm6228 = vcmp.ge.f32.partialorder %v6095, 0.0
      %vm6229 = vcmp.ge.f32.partialorder %v6096, 0.0
      %vm6230 = vcmp.ge.f32.partialorder %v6097, 0.0
      %vm6231 = vcmp.ge.f32.partialorder %v6098, 0.0
      %vm6232 = vcmp.ge.f32.partialorder %v6099, 0.0
      %vm6233 = vcmp.ge.f32.partialorder %v6100, 0.0
      %vm6234 = vcmp.ge.f32.partialorder %v6101, 0.0
      %vm6235 = vcmp.ge.f32.partialorder %v6102, 0.0
      %vm6236 = vcmp.ge.f32.partialorder %v6103, 0.0
      %vm6237 = vcmp.ge.f32.partialorder %v6104, 0.0
      %vm6238 = vcmp.ge.f32.partialorder %v6105, 0.0
      %vm6239 = vcmp.ge.f32.partialorder %v6106, 0.0
      %vm6240 = vcmp.ge.f32.partialorder %v6107, 0.0
      %vm6241 = vcmp.ge.f32.partialorder %v6108, 0.0
      %vm6242 = vcmp.ge.f32.partialorder %v6109, 0.0
      %vm6243 = vcmp.ge.f32.partialorder %v6110, 0.0
      %vm6244 = vcmp.ge.f32.partialorder %v6111, 0.0
      %v6245 = vmul.f32 %v6093, 0.01
      %v6246 = vmul.f32 %v6094, 0.01
      %v6247 = vmul.f32 %v6095, 0.01
      %v6248 = vmul.f32 %v6096, 0.01
      %v6249 = vmul.f32 %v6097, 0.01
      %v6250 = vmul.f32 %v6098, 0.01
      %v6251 = vmul.f32 %v6099, 0.01
      %v6252 = vmul.f32 %v6100, 0.01
      %v6253 = vmul.f32 %v6101, 0.01
      %v6254 = vmul.f32 %v6102, 0.01
      %v6255 = vmul.f32 %v6103, 0.01
      %v6256 = vmul.f32 %v6104, 0.01
      %v6257 = vmul.f32 %v6105, 0.01
      %v6258 = vmul.f32 %v6106, 0.01
      %v6259 = vmul.f32 %v6107, 0.01
      %v6260 = vmul.f32 %v6108, 0.01
      %v6261 = vmul.f32 %v6109, 0.01
      %v6262 = vmul.f32 %v6110, 0.01
      %v6263 = vmul.f32 %v6111, 0.01
      %v6264 = vsel %vm6226, %v6093, %v6245
      %v6265 = vsel %vm6227, %v6094, %v6246
      %v6266 = vsel %vm6228, %v6095, %v6247
      %v6267 = vsel %vm6229, %v6096, %v6248
      %v6268 = vsel %vm6230, %v6097, %v6249
      %v6269 = vsel %vm6231, %v6098, %v6250
      %v6270 = vsel %vm6232, %v6099, %v6251
      %v6271 = vsel %vm6233, %v6100, %v6252
      %v6272 = vsel %vm6234, %v6101, %v6253
      %v6273 = vsel %vm6235, %v6102, %v6254
      %v6274 = vsel %vm6236, %v6103, %v6255
      %v6275 = vsel %vm6237, %v6104, %v6256
      %v6276 = vsel %vm6238, %v6105, %v6257
      %v6277 = vsel %vm6239, %v6106, %v6258
      %v6278 = vsel %vm6240, %v6107, %v6259
      %v6279 = vsel %vm6241, %v6108, %v6260
      %v6280 = vsel %vm6242, %v6109, %v6261
      %v6281 = vsel %vm6243, %v6110, %v6262
      %v6282 = vsel %vm6244, %v6111, %v6263
      %v6283 = vld [vmem:[%s8] sm:$0x1]
      %v6285 = vlaneseq
      %v6286 = vshrl.u32 %v6285, 7
      %v6287 = vsub.s32 0, %v6286
      %v6288 = vrot.slane %v6283, %v6287
      %v6290 = vmul.f32 %v6264, %v6288
      %v6291 = vmul.f32 %v6265, %v6288
      %v6292 = vmul.f32 %v6266, %v6288
      %v6293 = vmul.f32 %v6267, %v6288
      %v6294 = vmul.f32 %v6268, %v6288
      %v6295 = vmul.f32 %v6269, %v6288
      %v6296 = vmul.f32 %v6270, %v6288
      %v6297 = vmul.f32 %v6271, %v6288
      %v6298 = vmul.f32 %v6272, %v6288
      %v6299 = vmul.f32 %v6273, %v6288
      %v6300 = vmul.f32 %v6274, %v6288
      %v6301 = vmul.f32 %v6275, %v6288
      %v6302 = vmul.f32 %v6276, %v6288
      %v6303 = vmul.f32 %v6277, %v6288
      %v6304 = vmul.f32 %v6278, %v6288
      %v6305 = vmul.f32 %v6279, %v6288
      %v6306 = vmul.f32 %v6280, %v6288
      %v6307 = vmul.f32 %v6281, %v6288
      %v6308 = vmul.f32 %v6282, %v6288
      %6309 = vadd.xlane.f32.xlu0 %v6290
      %v6310 = vpop.xlane.xlu0 %6309
      %6311 = vadd.xlane.f32.xlu0 %v6291
      %v6312 = vpop.xlane.xlu0 %6311
      %6313 = vadd.xlane.f32.xlu0 %v6292
      %v6314 = vpop.xlane.xlu0 %6313
      %6315 = vadd.xlane.f32.xlu0 %v6293
      %v6316 = vpop.xlane.xlu0 %6315
      %6317 = vadd.xlane.f32.xlu0 %v6294
      %v6318 = vpop.xlane.xlu0 %6317
      %6319 = vadd.xlane.f32.xlu0 %v6295
      %v6320 = vpop.xlane.xlu0 %6319
      %6321 = vadd.xlane.f32.xlu0 %v6296
      %v6322 = vpop.xlane.xlu0 %6321
      %6323 = vadd.xlane.f32.xlu0 %v6297
      %v6324 = vpop.xlane.xlu0 %6323
      %6325 = vadd.xlane.f32.xlu0 %v6298
      %v6326 = vpop.xlane.xlu0 %6325
      %6327 = vadd.xlane.f32.xlu0 %v6299
      %v6328 = vpop.xlane.xlu0 %6327
      %6329 = vadd.xlane.f32.xlu0 %v6300
      %v6330 = vpop.xlane.xlu0 %6329
      %6331 = vadd.xlane.f32.xlu0 %v6301
      %v6332 = vpop.xlane.xlu0 %6331
      %6333 = vadd.xlane.f32.xlu0 %v6302
      %v6334 = vpop.xlane.xlu0 %6333
      %6335 = vadd.xlane.f32.xlu0 %v6303
      %v6336 = vpop.xlane.xlu0 %6335
      %6337 = vadd.xlane.f32.xlu0 %v6304
      %v6338 = vpop.xlane.xlu0 %6337
      %6339 = vadd.xlane.f32.xlu0 %v6305
      %v6340 = vpop.xlane.xlu0 %6339
      %6341 = vadd.xlane.f32.xlu0 %v6306
      %v6342 = vpop.xlane.xlu0 %6341
      %6343 = vadd.xlane.f32.xlu0 %v6307
      %v6344 = vpop.xlane.xlu0 %6343
      %6345 = vadd.xlane.f32.xlu0 %v6308
      %v6346 = vpop.xlane.xlu0 %6345
      %v6347 = vld [vmem:[%s9] sm:$0xff]
      %v6348 = vld [vmem:[%s9 + $0x8] sm:$0xff]
      %v6349 = vld [vmem:[%s9 + $0x10] sm:$0xff]
      %v6350 = vld [vmem:[%s9 + $0x18] sm:$0xff]
      %6370 = vrot.lane.b32.xlu0 %v417, 64
      %v6371 = vpop.permute.xlu0 %6370
      %6372 = vrot.lane.b32.xlu0 %v418, 64
      %v6373 = vpop.permute.xlu0 %6372
      %6374 = vrot.lane.b32.xlu0 %v419, 64
      %v6375 = vpop.permute.xlu0 %6374
      %6376 = vrot.lane.b32.xlu0 %v420, 64
      %v6377 = vpop.permute.xlu0 %6376
      %6378 = vrot.lane.b32.xlu0 %v421, 64
      %v6379 = vpop.permute.xlu0 %6378
      %6380 = vrot.lane.b32.xlu0 %v422, 64
      %v6381 = vpop.permute.xlu0 %6380
      %6382 = vrot.lane.b32.xlu0 %v423, 64
      %v6383 = vpop.permute.xlu0 %6382
      %6384 = vrot.lane.b32.xlu0 %v424, 64
      %v6385 = vpop.permute.xlu0 %6384
      %6386 = vrot.lane.b32.xlu0 %v425, 64
      %v6387 = vpop.permute.xlu0 %6386
      %6388 = vrot.lane.b32.xlu0 %v426, 64
      %v6389 = vpop.permute.xlu0 %6388
      %6390 = vrot.lane.b32.xlu0 %v427, 64
      %v6391 = vpop.permute.xlu0 %6390
      %6392 = vrot.lane.b32.xlu0 %v428, 64
      %v6393 = vpop.permute.xlu0 %6392
      %6394 = vrot.lane.b32.xlu0 %v429, 64
      %v6395 = vpop.permute.xlu0 %6394
      %6396 = vrot.lane.b32.xlu0 %v430, 64
      %v6397 = vpop.permute.xlu0 %6396
      %6398 = vrot.lane.b32.xlu0 %v431, 64
      %v6399 = vpop.permute.xlu0 %6398
      %6400 = vrot.lane.b32.xlu0 %v432, 64
      %v6401 = vpop.permute.xlu0 %6400
      %6402 = vrot.lane.b32.xlu0 %v433, 64
      %v6403 = vpop.permute.xlu0 %6402
      %6404 = vrot.lane.b32.xlu0 %v434, 64
      %v6405 = vpop.permute.xlu0 %6404
      %6406 = vrot.lane.b32.xlu0 %v435, 64
      %v6407 = vpop.permute.xlu0 %6406
      %v6427 = vmul.f32 %v6189, %v6371
      %v6428 = vmul.f32 %v6191, %v6373
      %v6429 = vmul.f32 %v6193, %v6375
      %v6430 = vmul.f32 %v6195, %v6377
      %v6431 = vmul.f32 %v6197, %v6379
      %v6432 = vmul.f32 %v6199, %v6381
      %v6433 = vmul.f32 %v6201, %v6383
      %v6434 = vmul.f32 %v6203, %v6385
      %v6435 = vmul.f32 %v6205, %v6387
      %v6436 = vmul.f32 %v6207, %v6389
      %v6437 = vmul.f32 %v6209, %v6391
      %v6438 = vmul.f32 %v6211, %v6393
      %v6439 = vmul.f32 %v6213, %v6395
      %v6440 = vmul.f32 %v6215, %v6397
      %v6441 = vmul.f32 %v6217, %v6399
      %v6442 = vmul.f32 %v6219, %v6401
      %v6443 = vmul.f32 %v6221, %v6403
      %v6444 = vmul.f32 %v6223, %v6405
      %v6445 = vmul.f32 %v6225, %v6407
      %v6446 = vld [vmem:[%s10] sm:$0xff]
      %v6447 = vld [vmem:[%s10 + $0x8] sm:$0xff]
      %v6448 = vld [vmem:[%s10 + $0x10] sm:$0xff]
      %v6449 = vld [vmem:[%s10 + $0x18] sm:$0xff]
      %6469 = vrot.lane.b32.xlu0 %v6427, 96
      %v6470 = vpop.permute.xlu0 %6469
      %6471 = vrot.lane.b32.xlu0 %v6428, 96
      %v6472 = vpop.permute.xlu0 %6471
      %6473 = vrot.lane.b32.xlu0 %v6429, 96
      %v6474 = vpop.permute.xlu0 %6473
      %6475 = vrot.lane.b32.xlu0 %v6430, 96
      %v6476 = vpop.permute.xlu0 %6475
      %6477 = vrot.lane.b32.xlu0 %v6431, 96
      %v6478 = vpop.permute.xlu0 %6477
      %6479 = vrot.lane.b32.xlu0 %v6432, 96
      %v6480 = vpop.permute.xlu0 %6479
      %6481 = vrot.lane.b32.xlu0 %v6433, 96
      %v6482 = vpop.permute.xlu0 %6481
      %6483 = vrot.lane.b32.xlu0 %v6434, 96
      %v6484 = vpop.permute.xlu0 %6483
      %6485 = vrot.lane.b32.xlu0 %v6435, 96
      %v6486 = vpop.permute.xlu0 %6485
      %6487 = vrot.lane.b32.xlu0 %v6436, 96
      %v6488 = vpop.permute.xlu0 %6487
      %6489 = vrot.lane.b32.xlu0 %v6437, 96
      %v6490 = vpop.permute.xlu0 %6489
      %6491 = vrot.lane.b32.xlu0 %v6438, 96
      %v6492 = vpop.permute.xlu0 %6491
      %6493 = vrot.lane.b32.xlu0 %v6439, 96
      %v6494 = vpop.permute.xlu0 %6493
      %6495 = vrot.lane.b32.xlu0 %v6440, 96
      %v6496 = vpop.permute.xlu0 %6495
      %6497 = vrot.lane.b32.xlu0 %v6441, 96
      %v6498 = vpop.permute.xlu0 %6497
      %6499 = vrot.lane.b32.xlu0 %v6442, 96
      %v6500 = vpop.permute.xlu0 %6499
      %6501 = vrot.lane.b32.xlu0 %v6443, 96
      %v6502 = vpop.permute.xlu0 %6501
      %6503 = vrot.lane.b32.xlu0 %v6444, 96
      %v6504 = vpop.permute.xlu0 %6503
      %6505 = vrot.lane.b32.xlu0 %v6445, 96
      %v6506 = vpop.permute.xlu0 %6505
      %v6507 = vsel %vm1942, %v6470, 0
      %v6509 = vsel %vm1942, %v6472, 0
      %v6511 = vsel %vm1942, %v6474, 0
      %v6513 = vsel %vm1942, %v6476, 0
      %v6515 = vsel %vm1942, %v6478, 0
      %v6517 = vsel %vm1942, %v6480, 0
      %v6519 = vsel %vm1942, %v6482, 0
      %v6521 = vsel %vm1942, %v6484, 0
      %v6523 = vsel %vm1942, %v6486, 0
      %v6525 = vsel %vm1942, %v6488, 0
      %v6527 = vsel %vm1942, %v6490, 0
      %v6529 = vsel %vm1942, %v6492, 0
      %v6531 = vsel %vm1942, %v6494, 0
      %v6533 = vsel %vm1942, %v6496, 0
      %v6535 = vsel %vm1942, %v6498, 0
      %v6537 = vsel %vm1942, %v6500, 0
      %v6539 = vsel %vm1942, %v6502, 0
      %v6541 = vsel %vm1942, %v6504, 0
      %v6543 = vsel %vm1942, %v6506, 0
      %6545 = vmatprep.subr.mxu0 0.0
      %v6546 = vand.u32 %v6446, 4294901760
      %6547 = vmatpush1.msra.mxu0 %v6546
      %6548 = vmatprep.subr.mxu0 0.0
      %v6549 = vand.u32 %v6447, 4294901760
      %6550 = vmatpush1.msra.mxu0 %v6549
      %6551 = vmatprep.subr.mxu0 0.0
      %v6552 = vand.u32 %v6448, 4294901760
      %6553 = vmatpush1.msra.mxu0 %v6552
      %6554 = vmatprep.subr.mxu0 0.0
      %v6555 = vand.u32 %v6449, 4294901760
      %6556 = vmatpush1.msra.mxu0 %v6555
      %6557 = vmatprep.subr.mxu0 0.0
      %6558 = vmatpush1.msra.mxu0 0.0
      %6559 = vmatprep.subr.mxu0 0.0
      %6560 = vmatpush1.msra.mxu0 0.0
      %6561 = vmatprep.subr.mxu0 0.0
      %6562 = vmatpush1.msra.mxu0 0.0
      %6563 = vmatprep.subr.mxu0 0.0
      %6564 = vmatpush1.msra.mxu0 0.0
      %6565 = vmatprep.subr.mxu0 0.0
      %6566 = vmatpush1.msra.mxu0 0.0
      %6567 = vmatprep.subr.mxu0 0.0
      %6568 = vmatpush1.msra.mxu0 0.0
      %6569 = vmatprep.subr.mxu0 0.0
      %6570 = vmatpush1.msra.mxu0 0.0
      %6571 = vmatprep.subr.mxu0 0.0
      %6572 = vmatpush1.msra.mxu0 0.0
      %6573 = vmatprep.subr.mxu0 0.0
      %6574 = vmatpush1.msra.mxu0 0.0
      %6575 = vmatprep.subr.mxu0 0.0
      %6576 = vmatpush1.msra.mxu0 0.0
      %6577 = vmatprep.subr.mxu0 0.0
      %6578 = vmatpush1.msra.mxu0 0.0
      %6579 = vmatprep.subr.mxu0 0.0
      %6580 = vmatpush1.msra.mxu0 0.0
      %6581 = vmatprep.subr.mxu0 0.0
      %6582 = vmatpush1.msra.mxu0 0.0
      %6583 = vmatprep.subr.mxu0 0.0
      %6584 = vmatpush1.msra.mxu0 0.0
      %6585 = vmatprep.subr.mxu0 0.0
      %6586 = vmatpush1.msra.mxu0 0.0
      %6587 = vmatprep.subr.mxu0 0.0
      %6588 = vmatpush1.msra.mxu0 0.0
      %6589 = vmatprep.subr.mxu0 0.0
      %6590 = vmatpush1.msra.mxu0 0.0
      %6591 = vmatprep.subr.mxu0 0.0
      %6592 = vmatpush1.msra.mxu0 0.0
      %6593 = vmatprep.subr.mxu0 0.0
      %6594 = vmatpush1.msra.mxu0 0.0
      %6595 = vmatprep.subr.mxu0 0.0
      %6596 = vmatpush1.msra.mxu0 0.0
      %6597 = vmatprep.subr.mxu0 0.0
      %6598 = vmatpush1.msra.mxu0 0.0
      %6599 = vmatprep.subr.mxu0 0.0
      %6600 = vmatpush1.msra.mxu0 0.0
      %6601 = vmatprep.subr.mxu0 0.0
      %6602 = vmatpush1.msra.mxu0 0.0
      %6603 = vmatprep.subr.mxu0 0.0
      %6604 = vmatpush1.msra.mxu0 0.0
      %6605 = vmatprep.subr.mxu0 0.0
      %6606 = vmatpush1.msra.mxu0 0.0
      %6607 = vmatprep.subr.mxu0 0.0
      %6608 = vmatpush1.msra.mxu0 0.0
      %6609 = vmatprep.subr.mxu0 0.0
      %6610 = vmatpush1.msra.mxu0 0.0
      %6611 = vmatprep.subr.mxu0 0.0
      %6612 = vmatpush1.msra.mxu0 0.0
      %6613 = vmatprep.mubr.f32.mxu0 0.0
      %v6614 = vand.u32 %v6507, 4294901760
      %v6615 = vsub.f32 %v6507, %v6614
      %v6616 = vand.u32 %v6615, 4294901760
      %v6617 = vsub.f32 %v6615, %v6616
      %v6618 = vand.u32 %v6617, 4294901760
      %6619 = vmatmul.mubr.f32.gmra.mrb[0].mxu0 %v6618
      %v6620 = vpop.f32.mrb[0].mxu0
      %v6621 = vadd.f32 0.0, %v6620
      %v6622 = vpop.f32.mrb[0].mxu0
      %6623 = vmatprep.mubr.f32.mxu0 0.0
      %v6624 = vand.u32 %v6509, 4294901760
      %v6625 = vsub.f32 %v6509, %v6624
      %v6626 = vand.u32 %v6625, 4294901760
      %v6627 = vsub.f32 %v6625, %v6626
      %v6628 = vand.u32 %v6627, 4294901760
      %6629 = vmatmul.mubr.f32.gmra.mrb[0].mxu0 %v6628
      %v6630 = vpop.f32.mrb[0].mxu0
      %v6631 = vadd.f32 0.0, %v6630
      %v6632 = vpop.f32.mrb[0].mxu0
      %6633 = vmatprep.mubr.f32.mxu0 0.0
      %v6634 = vand.u32 %v6511, 4294901760
      %v6635 = vsub.f32 %v6511, %v6634
      %v6636 = vand.u32 %v6635, 4294901760
      %v6637 = vsub.f32 %v6635, %v6636
      %v6638 = vand.u32 %v6637, 4294901760
      %6639 = vmatmul.mubr.f32.gmra.mrb[0].mxu0 %v6638
      %v6640 = vpop.f32.mrb[0].mxu0
      %v6641 = vadd.f32 0.0, %v6640
      %v6642 = vpop.f32.mrb[0].mxu0
      %6643 = vmatprep.mubr.f32.mxu0 0.0
      %v6644 = vand.u32 %v6513, 4294901760
      %v6645 = vsub.f32 %v6513, %v6644
      %v6646 = vand.u32 %v6645, 4294901760
      %v6647 = vsub.f32 %v6645, %v6646
      %v6648 = vand.u32 %v6647, 4294901760
      %6649 = vmatmul.mubr.f32.gmra.mrb[0].mxu0 %v6648
      %v6650 = vpop.f32.mrb[0].mxu0
      %v6651 = vadd.f32 0.0, %v6650
      %v6652 = vpop.f32.mrb[0].mxu0
      %6653 = vmatprep.mubr.f32.mxu0 0.0
      %v6654 = vand.u32 %v6515, 4294901760
      %v6655 = vsub.f32 %v6515, %v6654
      %v6656 = vand.u32 %v6655, 4294901760
      %v6657 = vsub.f32 %v6655, %v6656
      %v6658 = vand.u32 %v6657, 4294901760
      %6659 = vmatmul.mubr.f32.gmra.mrb[0].mxu0 %v6658
      %v6660 = vpop.f32.mrb[0].mxu0
      %v6661 = vadd.f32 0.0, %v6660
      %v6662 = vpop.f32.mrb[0].mxu0
      %6663 = vmatprep.mubr.f32.mxu0 0.0
      %v6664 = vand.u32 %v6517, 4294901760
      %v6665 = vsub.f32 %v6517, %v6664
      %v6666 = vand.u32 %v6665, 4294901760
      %v6667 = vsub.f32 %v6665, %v6666
      %v6668 = vand.u32 %v6667, 4294901760
      %6669 = vmatmul.mubr.f32.gmra.mrb[0].mxu0 %v6668
      %v6670 = vpop.f32.mrb[0].mxu0
      %v6671 = vadd.f32 0.0, %v6670
      %v6672 = vpop.f32.mrb[0].mxu0
      %6673 = vmatprep.mubr.f32.mxu0 0.0
      %v6674 = vand.u32 %v6519, 4294901760
      %v6675 = vsub.f32 %v6519, %v6674
      %v6676 = vand.u32 %v6675, 4294901760
      %v6677 = vsub.f32 %v6675, %v6676
      %v6678 = vand.u32 %v6677, 4294901760
      %6679 = vmatmul.mubr.f32.gmra.mrb[0].mxu0 %v6678
      %v6680 = vpop.f32.mrb[0].mxu0
      %v6681 = vadd.f32 0.0, %v6680
      %v6682 = vpop.f32.mrb[0].mxu0
      %6683 = vmatprep.mubr.f32.mxu0 0.0
      %v6684 = vand.u32 %v6521, 4294901760
      %v6685 = vsub.f32 %v6521, %v6684
      %v6686 = vand.u32 %v6685, 4294901760
      %v6687 = vsub.f32 %v6685, %v6686
      %v6688 = vand.u32 %v6687, 4294901760
      %6689 = vmatmul.mubr.f32.gmra.mrb[0].mxu0 %v6688
      %v6690 = vpop.f32.mrb[0].mxu0
      %v6691 = vadd.f32 0.0, %v6690
      %v6692 = vpop.f32.mrb[0].mxu0
      %6693 = vmatprep.mubr.f32.mxu0 0.0
      %v6694 = vand.u32 %v6523, 4294901760
      %v6695 = vsub.f32 %v6523, %v6694
      %v6696 = vand.u32 %v6695, 4294901760
      %v6697 = vsub.f32 %v6695, %v6696
      %v6698 = vand.u32 %v6697, 4294901760
      %6699 = vmatmul.mubr.f32.gmra.mrb[0].mxu0 %v6698
      %v6700 = vpop.f32.mrb[0].mxu0
      %v6701 = vadd.f32 0.0, %v6700
      %v6702 = vpop.f32.mrb[0].mxu0
      %6703 = vmatprep.mubr.f32.mxu0 0.0
      %v6704 = vand.u32 %v6525, 4294901760
      %v6705 = vsub.f32 %v6525, %v6704
      %v6706 = vand.u32 %v6705, 4294901760
      %v6707 = vsub.f32 %v6705, %v6706
      %v6708 = vand.u32 %v6707, 4294901760
      %6709 = vmatmul.mubr.f32.gmra.mrb[0].mxu0 %v6708
      %v6710 = vpop.f32.mrb[0].mxu0
      %v6711 = vadd.f32 0.0, %v6710
      %v6712 = vpop.f32.mrb[0].mxu0
      %6713 = vmatprep.mubr.f32.mxu0 0.0
      %v6714 = vand.u32 %v6527, 4294901760
      %v6715 = vsub.f32 %v6527, %v6714
      %v6716 = vand.u32 %v6715, 4294901760
      %v6717 = vsub.f32 %v6715, %v6716
      %v6718 = vand.u32 %v6717, 4294901760
      %6719 = vmatmul.mubr.f32.gmra.mrb[0].mxu0 %v6718
      %v6720 = vpop.f32.mrb[0].mxu0
      %v6721 = vadd.f32 0.0, %v6720
      %v6722 = vpop.f32.mrb[0].mxu0
      %6723 = vmatprep.mubr.f32.mxu0 0.0
      %v6724 = vand.u32 %v6529, 4294901760
      %v6725 = vsub.f32 %v6529, %v6724
      %v6726 = vand.u32 %v6725, 4294901760
      %v6727 = vsub.f32 %v6725, %v6726
      %v6728 = vand.u32 %v6727, 4294901760
      %6729 = vmatmul.mubr.f32.gmra.mrb[0].mxu0 %v6728
      %v6730 = vpop.f32.mrb[0].mxu0
      %v6731 = vadd.f32 0.0, %v6730
      %v6732 = vpop.f32.mrb[0].mxu0
      %6733 = vmatprep.mubr.f32.mxu0 0.0
      %v6734 = vand.u32 %v6531, 4294901760
      %v6735 = vsub.f32 %v6531, %v6734
      %v6736 = vand.u32 %v6735, 4294901760
      %v6737 = vsub.f32 %v6735, %v6736
      %v6738 = vand.u32 %v6737, 4294901760
      %6739 = vmatmul.mubr.f32.gmra.mrb[0].mxu0 %v6738
      %v6740 = vpop.f32.mrb[0].mxu0
      %v6741 = vadd.f32 0.0, %v6740
      %v6742 = vpop.f32.mrb[0].mxu0
      %6743 = vmatprep.mubr.f32.mxu0 0.0
      %v6744 = vand.u32 %v6533, 4294901760
      %v6745 = vsub.f32 %v6533, %v6744
      %v6746 = vand.u32 %v6745, 4294901760
      %v6747 = vsub.f32 %v6745, %v6746
      %v6748 = vand.u32 %v6747, 4294901760
      %6749 = vmatmul.mubr.f32.gmra.mrb[0].mxu0 %v6748
      %v6750 = vpop.f32.mrb[0].mxu0
      %v6751 = vadd.f32 0.0, %v6750
      %v6752 = vpop.f32.mrb[0].mxu0
      %6753 = vmatprep.mubr.f32.mxu0 0.0
      %v6754 = vand.u32 %v6535, 4294901760
      %v6755 = vsub.f32 %v6535, %v6754
      %v6756 = vand.u32 %v6755, 4294901760
      %v6757 = vsub.f32 %v6755, %v6756
      %v6758 = vand.u32 %v6757, 4294901760
      %6759 = vmatmul.mubr.f32.gmra.mrb[0].mxu0 %v6758
      %v6760 = vpop.f32.mrb[0].mxu0
      %v6761 = vadd.f32 0.0, %v6760
      %v6762 = vpop.f32.mrb[0].mxu0
      %6763 = vmatprep.mubr.f32.mxu0 0.0
      %v6764 = vand.u32 %v6537, 4294901760
      %v6765 = vsub.f32 %v6537, %v6764
      %v6766 = vand.u32 %v6765, 4294901760
      %v6767 = vsub.f32 %v6765, %v6766
      %v6768 = vand.u32 %v6767, 4294901760
      %6769 = vmatmul.mubr.f32.gmra.mrb[0].mxu0 %v6768
      %v6770 = vpop.f32.mrb[0].mxu0
      %v6771 = vadd.f32 0.0, %v6770
      %v6772 = vpop.f32.mrb[0].mxu0
      %6773 = vmatprep.mubr.f32.mxu0 0.0
      %v6774 = vand.u32 %v6539, 4294901760
      %v6775 = vsub.f32 %v6539, %v6774
      %v6776 = vand.u32 %v6775, 4294901760
      %v6777 = vsub.f32 %v6775, %v6776
      %v6778 = vand.u32 %v6777, 4294901760
      %6779 = vmatmul.mubr.f32.gmra.mrb[0].mxu0 %v6778
      %v6780 = vpop.f32.mrb[0].mxu0
      %v6781 = vadd.f32 0.0, %v6780
      %v6782 = vpop.f32.mrb[0].mxu0
      %6783 = vmatprep.mubr.f32.mxu0 0.0
      %v6784 = vand.u32 %v6541, 4294901760
      %v6785 = vsub.f32 %v6541, %v6784
      %v6786 = vand.u32 %v6785, 4294901760
      %v6787 = vsub.f32 %v6785, %v6786
      %v6788 = vand.u32 %v6787, 4294901760
      %6789 = vmatmul.mubr.f32.gmra.mrb[0].mxu0 %v6788
      %v6790 = vpop.f32.mrb[0].mxu0
      %v6791 = vadd.f32 0.0, %v6790
      %v6792 = vpop.f32.mrb[0].mxu0
      %6793 = vmatprep.mubr.f32.mxu0 0.0
      %v6794 = vand.u32 %v6543, 4294901760
      %v6795 = vsub.f32 %v6543, %v6794
      %v6796 = vand.u32 %v6795, 4294901760
      %v6797 = vsub.f32 %v6795, %v6796
      %v6798 = vand.u32 %v6797, 4294901760
      %6799 = vmatmul.mubr.f32.gmra.mrb[0].mxu0 %v6798
      %v6800 = vpop.f32.mrb[0].mxu0
      %v6801 = vadd.f32 0.0, %v6800
      %v6802 = vpop.f32.mrb[0].mxu0
      %6803 = vdwg.mxu0
      %6804 = vmatprep.subr.mxu0 0.0
      %v6805 = vand.u32 %v6446, 4294901760
      %v6806 = vsub.f32 %v6446, %v6805
      %v6807 = vand.u32 %v6806, 4294901760
      %v6808 = vsub.f32 %v6806, %v6807
      %v6809 = vand.u32 %v6808, 4294901760
      %6810 = vmatpush1.msra.mxu0 %v6809
      %6811 = vmatprep.subr.mxu0 0.0
      %v6812 = vand.u32 %v6447, 4294901760
      %v6813 = vsub.f32 %v6447, %v6812
      %v6814 = vand.u32 %v6813, 4294901760
      %v6815 = vsub.f32 %v6813, %v6814
      %v6816 = vand.u32 %v6815, 4294901760
      %6817 = vmatpush1.msra.mxu0 %v6816
      %6818 = vmatprep.subr.mxu0 0.0
      %v6819 = vand.u32 %v6448, 4294901760
      %v6820 = vsub.f32 %v6448, %v6819
      %v6821 = vand.u32 %v6820, 4294901760
      %v6822 = vsub.f32 %v6820, %v6821
      %v6823 = vand.u32 %v6822, 4294901760
      %6824 = vmatpush1.msra.mxu0 %v6823
      %6825 = vmatprep.subr.mxu0 0.0
      %v6826 = vand.u32 %v6449, 4294901760
      %v6827 = vsub.f32 %v6449, %v6826
      %v6828 = vand.u32 %v6827, 4294901760
      %v6829 = vsub.f32 %v6827, %v6828
      %v6830 = vand.u32 %v6829, 4294901760
      %6831 = vmatpush1.msra.mxu0 %v6830
      %6832 = vmatprep.subr.mxu0 0.0
      %6833 = vmatpush1.msra.mxu0 0.0
      %6834 = vmatprep.subr.mxu0 0.0
      %6835 = vmatpush1.msra.mxu0 0.0
      %6836 = vmatprep.subr.mxu0 0.0
      %6837 = vmatpush1.msra.mxu0 0.0
      %6838 = vmatprep.subr.mxu0 0.0
      %6839 = vmatpush1.msra.mxu0 0.0
      %6840 = vmatprep.subr.mxu0 0.0
      %6841 = vmatpush1.msra.mxu0 0.0
      %6842 = vmatprep.subr.mxu0 0.0
      %6843 = vmatpush1.msra.mxu0 0.0
      %6844 = vmatprep.subr.mxu0 0.0
      %6845 = vmatpush1.msra.mxu0 0.0
      %6846 = vmatprep.subr.mxu0 0.0
      %6847 = vmatpush1.msra.mxu0 0.0
      %6848 = vmatprep.subr.mxu0 0.0
      %6849 = vmatpush1.msra.mxu0 0.0
      %6850 = vmatprep.subr.mxu0 0.0
      %6851 = vmatpush1.msra.mxu0 0.0
      %6852 = vmatprep.subr.mxu0 0.0
      %6853 = vmatpush1.msra.mxu0 0.0
      %6854 = vmatprep.subr.mxu0 0.0
      %6855 = vmatpush1.msra.mxu0 0.0
      %6856 = vmatprep.subr.mxu0 0.0
      %6857 = vmatpush1.msra.mxu0 0.0
      %6858 = vmatprep.subr.mxu0 0.0
      %6859 = vmatpush1.msra.mxu0 0.0
      %6860 = vmatprep.subr.mxu0 0.0
      %6861 = vmatpush1.msra.mxu0 0.0
      %6862 = vmatprep.subr.mxu0 0.0
      %6863 = vmatpush1.msra.mxu0 0.0
      %6864 = vmatprep.subr.mxu0 0.0
      %6865 = vmatpush1.msra.mxu0 0.0
      %6866 = vmatprep.subr.mxu0 0.0
      %6867 = vmatpush1.msra.mxu0 0.0
      %6868 = vmatprep.subr.mxu0 0.0
      %6869 = vmatpush1.msra.mxu0 0.0
      %6870 = vmatprep.subr.mxu0 0.0
      %6871 = vmatpush1.msra.mxu0 0.0
      %6872 = vmatprep.subr.mxu0 0.0
      %6873 = vmatpush1.msra.mxu0 0.0
      %6874 = vmatprep.subr.mxu0 0.0
      %6875 = vmatpush1.msra.mxu0 0.0
      %6876 = vmatprep.subr.mxu0 0.0
      %6877 = vmatpush1.msra.mxu0 0.0
      %6878 = vmatprep.subr.mxu0 0.0
      %6879 = vmatpush1.msra.mxu0 0.0
      %6880 = vmatprep.subr.mxu0 0.0
      %6881 = vmatpush1.msra.mxu0 0.0
      %6882 = vmatprep.subr.mxu0 0.0
      %6883 = vmatpush1.msra.mxu0 0.0
      %6884 = vmatprep.subr.mxu0 0.0
      %6885 = vmatpush1.msra.mxu0 0.0
      %6886 = vmatprep.subr.mxu0 0.0
      %6887 = vmatpush1.msra.mxu0 0.0
      %6888 = vmatprep.mubr.f32.mxu0 0.0
      %v6889 = vand.u32 %v6507, 4294901760
      %6890 = vmatmul.mubr.f32.gmra.mrb[0].mxu0 %v6889
      %v6891 = vpop.f32.mrb[0].mxu0
      %v6892 = vadd.f32 %v6621, %v6891
      %v6893 = vpop.f32.mrb[0].mxu0
      %6894 = vmatprep.mubr.f32.mxu0 0.0
      %v6895 = vand.u32 %v6509, 4294901760
      %6896 = vmatmul.mubr.f32.gmra.mrb[0].mxu0 %v6895
      %v6897 = vpop.f32.mrb[0].mxu0
      %v6898 = vadd.f32 %v6631, %v6897
      %v6899 = vpop.f32.mrb[0].mxu0
      %6900 = vmatprep.mubr.f32.mxu0 0.0
      %v6901 = vand.u32 %v6511, 4294901760
      %6902 = vmatmul.mubr.f32.gmra.mrb[0].mxu0 %v6901
      %v6903 = vpop.f32.mrb[0].mxu0
      %v6904 = vadd.f32 %v6641, %v6903
      %v6905 = vpop.f32.mrb[0].mxu0
      %6906 = vmatprep.mubr.f32.mxu0 0.0
      %v6907 = vand.u32 %v6513, 4294901760
      %6908 = vmatmul.mubr.f32.gmra.mrb[0].mxu0 %v6907
      %v6909 = vpop.f32.mrb[0].mxu0
      %v6910 = vadd.f32 %v6651, %v6909
      %v6911 = vpop.f32.mrb[0].mxu0
      %6912 = vmatprep.mubr.f32.mxu0 0.0
      %v6913 = vand.u32 %v6515, 4294901760
      %6914 = vmatmul.mubr.f32.gmra.mrb[0].mxu0 %v6913
      %v6915 = vpop.f32.mrb[0].mxu0
      %v6916 = vadd.f32 %v6661, %v6915
      %v6917 = vpop.f32.mrb[0].mxu0
      %6918 = vmatprep.mubr.f32.mxu0 0.0
      %v6919 = vand.u32 %v6517, 4294901760
      %6920 = vmatmul.mubr.f32.gmra.mrb[0].mxu0 %v6919
      %v6921 = vpop.f32.mrb[0].mxu0
      %v6922 = vadd.f32 %v6671, %v6921
      %v6923 = vpop.f32.mrb[0].mxu0
      %6924 = vmatprep.mubr.f32.mxu0 0.0
      %v6925 = vand.u32 %v6519, 4294901760
      %6926 = vmatmul.mubr.f32.gmra.mrb[0].mxu0 %v6925
      %v6927 = vpop.f32.mrb[0].mxu0
      %v6928 = vadd.f32 %v6681, %v6927
      %v6929 = vpop.f32.mrb[0].mxu0
      %6930 = vmatprep.mubr.f32.mxu0 0.0
      %v6931 = vand.u32 %v6521, 4294901760
      %6932 = vmatmul.mubr.f32.gmra.mrb[0].mxu0 %v6931
      %v6933 = vpop.f32.mrb[0].mxu0
      %v6934 = vadd.f32 %v6691, %v6933
      %v6935 = vpop.f32.mrb[0].mxu0
      %6936 = vmatprep.mubr.f32.mxu0 0.0
      %v6937 = vand.u32 %v6523, 4294901760
      %6938 = vmatmul.mubr.f32.gmra.mrb[0].mxu0 %v6937
      %v6939 = vpop.f32.mrb[0].mxu0
      %v6940 = vadd.f32 %v6701, %v6939
      %v6941 = vpop.f32.mrb[0].mxu0
      %6942 = vmatprep.mubr.f32.mxu0 0.0
      %v6943 = vand.u32 %v6525, 4294901760
      %6944 = vmatmul.mubr.f32.gmra.mrb[0].mxu0 %v6943
      %v6945 = vpop.f32.mrb[0].mxu0
      %v6946 = vadd.f32 %v6711, %v6945
      %v6947 = vpop.f32.mrb[0].mxu0
      %6948 = vmatprep.mubr.f32.mxu0 0.0
      %v6949 = vand.u32 %v6527, 4294901760
      %6950 = vmatmul.mubr.f32.gmra.mrb[0].mxu0 %v6949
      %v6951 = vpop.f32.mrb[0].mxu0
      %v6952 = vadd.f32 %v6721, %v6951
      %v6953 = vpop.f32.mrb[0].mxu0
      %6954 = vmatprep.mubr.f32.mxu0 0.0
      %v6955 = vand.u32 %v6529, 4294901760
      %6956 = vmatmul.mubr.f32.gmra.mrb[0].mxu0 %v6955
      %v6957 = vpop.f32.mrb[0].mxu0
      %v6958 = vadd.f32 %v6731, %v6957
      %v6959 = vpop.f32.mrb[0].mxu0
      %6960 = vmatprep.mubr.f32.mxu0 0.0
      %v6961 = vand.u32 %v6531, 4294901760
      %6962 = vmatmul.mubr.f32.gmra.mrb[0].mxu0 %v6961
      %v6963 = vpop.f32.mrb[0].mxu0
      %v6964 = vadd.f32 %v6741, %v6963
      %v6965 = vpop.f32.mrb[0].mxu0
      %6966 = vmatprep.mubr.f32.mxu0 0.0
      %v6967 = vand.u32 %v6533, 4294901760
      %6968 = vmatmul.mubr.f32.gmra.mrb[0].mxu0 %v6967
      %v6969 = vpop.f32.mrb[0].mxu0
      %v6970 = vadd.f32 %v6751, %v6969
      %v6971 = vpop.f32.mrb[0].mxu0
      %6972 = vmatprep.mubr.f32.mxu0 0.0
      %v6973 = vand.u32 %v6535, 4294901760
      %6974 = vmatmul.mubr.f32.gmra.mrb[0].mxu0 %v6973
      %v6975 = vpop.f32.mrb[0].mxu0
      %v6976 = vadd.f32 %v6761, %v6975
      %v6977 = vpop.f32.mrb[0].mxu0
      %6978 = vmatprep.mubr.f32.mxu0 0.0
      %v6979 = vand.u32 %v6537, 4294901760
      %6980 = vmatmul.mubr.f32.gmra.mrb[0].mxu0 %v6979
      %v6981 = vpop.f32.mrb[0].mxu0
      %v6982 = vadd.f32 %v6771, %v6981
      %v6983 = vpop.f32.mrb[0].mxu0
      %6984 = vmatprep.mubr.f32.mxu0 0.0
      %v6985 = vand.u32 %v6539, 4294901760
      %6986 = vmatmul.mubr.f32.gmra.mrb[0].mxu0 %v6985
      %v6987 = vpop.f32.mrb[0].mxu0
      %v6988 = vadd.f32 %v6781, %v6987
      %v6989 = vpop.f32.mrb[0].mxu0
      %6990 = vmatprep.mubr.f32.mxu0 0.0
      %v6991 = vand.u32 %v6541, 4294901760
      %6992 = vmatmul.mubr.f32.gmra.mrb[0].mxu0 %v6991
      %v6993 = vpop.f32.mrb[0].mxu0
      %v6994 = vadd.f32 %v6791, %v6993
      %v6995 = vpop.f32.mrb[0].mxu0
      %6996 = vmatprep.mubr.f32.mxu0 0.0
      %v6997 = vand.u32 %v6543, 4294901760
      %6998 = vmatmul.mubr.f32.gmra.mrb[0].mxu0 %v6997
      %v6999 = vpop.f32.mrb[0].mxu0
      %v7000 = vadd.f32 %v6801, %v6999
      %v7001 = vpop.f32.mrb[0].mxu0
      %7002 = vdwg.mxu0
      %7003 = vmatprep.subr.mxu0 0.0
      %v7004 = vand.u32 %v6446, 4294901760
      %v7005 = vsub.f32 %v6446, %v7004
      %7006 = vmatpush1.msra.mxu0 %v7005
      %7007 = vmatprep.subr.mxu0 0.0
      %v7008 = vand.u32 %v6447, 4294901760
      %v7009 = vsub.f32 %v6447, %v7008
      %7010 = vmatpush1.msra.mxu0 %v7009
      %7011 = vmatprep.subr.mxu0 0.0
      %v7012 = vand.u32 %v6448, 4294901760
      %v7013 = vsub.f32 %v6448, %v7012
      %7014 = vmatpush1.msra.mxu0 %v7013
      %7015 = vmatprep.subr.mxu0 0.0
      %v7016 = vand.u32 %v6449, 4294901760
      %v7017 = vsub.f32 %v6449, %v7016
      %7018 = vmatpush1.msra.mxu0 %v7017
      %7019 = vmatprep.subr.mxu0 0.0
      %7020 = vmatpush1.msra.mxu0 0.0
      %7021 = vmatprep.subr.mxu0 0.0
      %7022 = vmatpush1.msra.mxu0 0.0
      %7023 = vmatprep.subr.mxu0 0.0
      %7024 = vmatpush1.msra.mxu0 0.0
      %7025 = vmatprep.subr.mxu0 0.0
      %7026 = vmatpush1.msra.mxu0 0.0
      %7027 = vmatprep.subr.mxu0 0.0
      %7028 = vmatpush1.msra.mxu0 0.0
      %7029 = vmatprep.subr.mxu0 0.0
      %7030 = vmatpush1.msra.mxu0 0.0
      %7031 = vmatprep.subr.mxu0 0.0
      %7032 = vmatpush1.msra.mxu0 0.0
      %7033 = vmatprep.subr.mxu0 0.0
      %7034 = vmatpush1.msra.mxu0 0.0
      %7035 = vmatprep.subr.mxu0 0.0
      %7036 = vmatpush1.msra.mxu0 0.0
      %7037 = vmatprep.subr.mxu0 0.0
      %7038 = vmatpush1.msra.mxu0 0.0
      %7039 = vmatprep.subr.mxu0 0.0
      %7040 = vmatpush1.msra.mxu0 0.0
      %7041 = vmatprep.subr.mxu0 0.0
      %7042 = vmatpush1.msra.mxu0 0.0
      %7043 = vmatprep.subr.mxu0 0.0
      %7044 = vmatpush1.msra.mxu0 0.0
      %7045 = vmatprep.subr.mxu0 0.0
      %7046 = vmatpush1.msra.mxu0 0.0
      %7047 = vmatprep.subr.mxu0 0.0
      %7048 = vmatpush1.msra.mxu0 0.0
      %7049 = vmatprep.subr.mxu0 0.0
      %7050 = vmatpush1.msra.mxu0 0.0
      %7051 = vmatprep.subr.mxu0 0.0
      %7052 = vmatpush1.msra.mxu0 0.0
      %7053 = vmatprep.subr.mxu0 0.0
      %7054 = vmatpush1.msra.mxu0 0.0
      %7055 = vmatprep.subr.mxu0 0.0
      %7056 = vmatpush1.msra.mxu0 0.0
      %7057 = vmatprep.subr.mxu0 0.0
      %7058 = vmatpush1.msra.mxu0 0.0
      %7059 = vmatprep.subr.mxu0 0.0
      %7060 = vmatpush1.msra.mxu0 0.0
      %7061 = vmatprep.subr.mxu0 0.0
      %7062 = vmatpush1.msra.mxu0 0.0
      %7063 = vmatprep.subr.mxu0 0.0
      %7064 = vmatpush1.msra.mxu0 0.0
      %7065 = vmatprep.subr.mxu0 0.0
      %7066 = vmatpush1.msra.mxu0 0.0
      %7067 = vmatprep.subr.mxu0 0.0
      %7068 = vmatpush1.msra.mxu0 0.0
      %7069 = vmatprep.subr.mxu0 0.0
      %7070 = vmatpush1.msra.mxu0 0.0
      %7071 = vmatprep.subr.mxu0 0.0
      %7072 = vmatpush1.msra.mxu0 0.0
      %7073 = vmatprep.subr.mxu0 0.0
      %7074 = vmatpush1.msra.mxu0 0.0
      %7075 = vmatprep.mubr.f32.mxu0 0.0
      %v7076 = vand.u32 %v6507, 4294901760
      %v7077 = vsub.f32 %v6507, %v7076
      %7078 = vmatmul.mubr.f32.gmra.mrb[0].mxu0 %v7077
      %v7079 = vpop.f32.mrb[0].mxu0
      %v7080 = vadd.f32 %v6892, %v7079
      %v7081 = vpop.f32.mrb[0].mxu0
      %7082 = vmatprep.mubr.f32.mxu0 0.0
      %v7083 = vand.u32 %v6509, 4294901760
      %v7084 = vsub.f32 %v6509, %v7083
      %7085 = vmatmul.mubr.f32.gmra.mrb[0].mxu0 %v7084
      %v7086 = vpop.f32.mrb[0].mxu0
      %v7087 = vadd.f32 %v6898, %v7086
      %v7088 = vpop.f32.mrb[0].mxu0
      %7089 = vmatprep.mubr.f32.mxu0 0.0
      %v7090 = vand.u32 %v6511, 4294901760
      %v7091 = vsub.f32 %v6511, %v7090
      %7092 = vmatmul.mubr.f32.gmra.mrb[0].mxu0 %v7091
      %v7093 = vpop.f32.mrb[0].mxu0
      %v7094 = vadd.f32 %v6904, %v7093
      %v7095 = vpop.f32.mrb[0].mxu0
      %7096 = vmatprep.mubr.f32.mxu0 0.0
      %v7097 = vand.u32 %v6513, 4294901760
      %v7098 = vsub.f32 %v6513, %v7097
      %7099 = vmatmul.mubr.f32.gmra.mrb[0].mxu0 %v7098
      %v7100 = vpop.f32.mrb[0].mxu0
      %v7101 = vadd.f32 %v6910, %v7100
      %v7102 = vpop.f32.mrb[0].mxu0
      %7103 = vmatprep.mubr.f32.mxu0 0.0
      %v7104 = vand.u32 %v6515, 4294901760
      %v7105 = vsub.f32 %v6515, %v7104
      %7106 = vmatmul.mubr.f32.gmra.mrb[0].mxu0 %v7105
      %v7107 = vpop.f32.mrb[0].mxu0
      %v7108 = vadd.f32 %v6916, %v7107
      %v7109 = vpop.f32.mrb[0].mxu0
      %7110 = vmatprep.mubr.f32.mxu0 0.0
      %v7111 = vand.u32 %v6517, 4294901760
      %v7112 = vsub.f32 %v6517, %v7111
      %7113 = vmatmul.mubr.f32.gmra.mrb[0].mxu0 %v7112
      %v7114 = vpop.f32.mrb[0].mxu0
      %v7115 = vadd.f32 %v6922, %v7114
      %v7116 = vpop.f32.mrb[0].mxu0
      %7117 = vmatprep.mubr.f32.mxu0 0.0
      %v7118 = vand.u32 %v6519, 4294901760
      %v7119 = vsub.f32 %v6519, %v7118
      %7120 = vmatmul.mubr.f32.gmra.mrb[0].mxu0 %v7119
      %v7121 = vpop.f32.mrb[0].mxu0
      %v7122 = vadd.f32 %v6928, %v7121
      %v7123 = vpop.f32.mrb[0].mxu0
      %7124 = vmatprep.mubr.f32.mxu0 0.0
      %v7125 = vand.u32 %v6521, 4294901760
      %v7126 = vsub.f32 %v6521, %v7125
      %7127 = vmatmul.mubr.f32.gmra.mrb[0].mxu0 %v7126
      %v7128 = vpop.f32.mrb[0].mxu0
      %v7129 = vadd.f32 %v6934, %v7128
      %v7130 = vpop.f32.mrb[0].mxu0
      %7131 = vmatprep.mubr.f32.mxu0 0.0
      %v7132 = vand.u32 %v6523, 4294901760
      %v7133 = vsub.f32 %v6523, %v7132
      %7134 = vmatmul.mubr.f32.gmra.mrb[0].mxu0 %v7133
      %v7135 = vpop.f32.mrb[0].mxu0
      %v7136 = vadd.f32 %v6940, %v7135
      %v7137 = vpop.f32.mrb[0].mxu0
      %7138 = vmatprep.mubr.f32.mxu0 0.0
      %v7139 = vand.u32 %v6525, 4294901760
      %v7140 = vsub.f32 %v6525, %v7139
      %7141 = vmatmul.mubr.f32.gmra.mrb[0].mxu0 %v7140
      %v7142 = vpop.f32.mrb[0].mxu0
      %v7143 = vadd.f32 %v6946, %v7142
      %v7144 = vpop.f32.mrb[0].mxu0
      %7145 = vmatprep.mubr.f32.mxu0 0.0
      %v7146 = vand.u32 %v6527, 4294901760
      %v7147 = vsub.f32 %v6527, %v7146
      %7148 = vmatmul.mubr.f32.gmra.mrb[0].mxu0 %v7147
      %v7149 = vpop.f32.mrb[0].mxu0
      %v7150 = vadd.f32 %v6952, %v7149
      %v7151 = vpop.f32.mrb[0].mxu0
      %7152 = vmatprep.mubr.f32.mxu0 0.0
      %v7153 = vand.u32 %v6529, 4294901760
      %v7154 = vsub.f32 %v6529, %v7153
      %7155 = vmatmul.mubr.f32.gmra.mrb[0].mxu0 %v7154
      %v7156 = vpop.f32.mrb[0].mxu0
      %v7157 = vadd.f32 %v6958, %v7156
      %v7158 = vpop.f32.mrb[0].mxu0
      %7159 = vmatprep.mubr.f32.mxu0 0.0
      %v7160 = vand.u32 %v6531, 4294901760
      %v7161 = vsub.f32 %v6531, %v7160
      %7162 = vmatmul.mubr.f32.gmra.mrb[0].mxu0 %v7161
      %v7163 = vpop.f32.mrb[0].mxu0
      %v7164 = vadd.f32 %v6964, %v7163
      %v7165 = vpop.f32.mrb[0].mxu0
      %7166 = vmatprep.mubr.f32.mxu0 0.0
      %v7167 = vand.u32 %v6533, 4294901760
      %v7168 = vsub.f32 %v6533, %v7167
      %7169 = vmatmul.mubr.f32.gmra.mrb[0].mxu0 %v7168
      %v7170 = vpop.f32.mrb[0].mxu0
      %v7171 = vadd.f32 %v6970, %v7170
      %v7172 = vpop.f32.mrb[0].mxu0
      %7173 = vmatprep.mubr.f32.mxu0 0.0
      %v7174 = vand.u32 %v6535, 4294901760
      %v7175 = vsub.f32 %v6535, %v7174
      %7176 = vmatmul.mubr.f32.gmra.mrb[0].mxu0 %v7175
      %v7177 = vpop.f32.mrb[0].mxu0
      %v7178 = vadd.f32 %v6976, %v7177
      %v7179 = vpop.f32.mrb[0].mxu0
      %7180 = vmatprep.mubr.f32.mxu0 0.0
      %v7181 = vand.u32 %v6537, 4294901760
      %v7182 = vsub.f32 %v6537, %v7181
      %7183 = vmatmul.mubr.f32.gmra.mrb[0].mxu0 %v7182
      %v7184 = vpop.f32.mrb[0].mxu0
      %v7185 = vadd.f32 %v6982, %v7184
      %v7186 = vpop.f32.mrb[0].mxu0
      %7187 = vmatprep.mubr.f32.mxu0 0.0
      %v7188 = vand.u32 %v6539, 4294901760
      %v7189 = vsub.f32 %v6539, %v7188
      %7190 = vmatmul.mubr.f32.gmra.mrb[0].mxu0 %v7189
      %v7191 = vpop.f32.mrb[0].mxu0
      %v7192 = vadd.f32 %v6988, %v7191
      %v7193 = vpop.f32.mrb[0].mxu0
      %7194 = vmatprep.mubr.f32.mxu0 0.0
      %v7195 = vand.u32 %v6541, 4294901760
      %v7196 = vsub.f32 %v6541, %v7195
      %7197 = vmatmul.mubr.f32.gmra.mrb[0].mxu0 %v7196
      %v7198 = vpop.f32.mrb[0].mxu0
      %v7199 = vadd.f32 %v6994, %v7198
      %v7200 = vpop.f32.mrb[0].mxu0
      %7201 = vmatprep.mubr.f32.mxu0 0.0
      %v7202 = vand.u32 %v6543, 4294901760
      %v7203 = vsub.f32 %v6543, %v7202
      %7204 = vmatmul.mubr.f32.gmra.mrb[0].mxu0 %v7203
      %v7205 = vpop.f32.mrb[0].mxu0
      %v7206 = vadd.f32 %v7000, %v7205
      %v7207 = vpop.f32.mrb[0].mxu0
      %7208 = vdwg.mxu0
      %7209 = vmatprep.subr.mxu0 0.0
      %v7210 = vand.u32 %v6446, 4294901760
      %7211 = vmatpush1.msra.mxu0 %v7210
      %7212 = vmatprep.subr.mxu0 0.0
      %v7213 = vand.u32 %v6447, 4294901760
      %7214 = vmatpush1.msra.mxu0 %v7213
      %7215 = vmatprep.subr.mxu0 0.0
      %v7216 = vand.u32 %v6448, 4294901760
      %7217 = vmatpush1.msra.mxu0 %v7216
      %7218 = vmatprep.subr.mxu0 0.0
      %v7219 = vand.u32 %v6449, 4294901760
      %7220 = vmatpush1.msra.mxu0 %v7219
      %7221 = vmatprep.subr.mxu0 0.0
      %7222 = vmatpush1.msra.mxu0 0.0
      %7223 = vmatprep.subr.mxu0 0.0
      %7224 = vmatpush1.msra.mxu0 0.0
      %7225 = vmatprep.subr.mxu0 0.0
      %7226 = vmatpush1.msra.mxu0 0.0
      %7227 = vmatprep.subr.mxu0 0.0
      %7228 = vmatpush1.msra.mxu0 0.0
      %7229 = vmatprep.subr.mxu0 0.0
      %7230 = vmatpush1.msra.mxu0 0.0
      %7231 = vmatprep.subr.mxu0 0.0
      %7232 = vmatpush1.msra.mxu0 0.0
      %7233 = vmatprep.subr.mxu0 0.0
      %7234 = vmatpush1.msra.mxu0 0.0
      %7235 = vmatprep.subr.mxu0 0.0
      %7236 = vmatpush1.msra.mxu0 0.0
      %7237 = vmatprep.subr.mxu0 0.0
      %7238 = vmatpush1.msra.mxu0 0.0
      %7239 = vmatprep.subr.mxu0 0.0
      %7240 = vmatpush1.msra.mxu0 0.0
      %7241 = vmatprep.subr.mxu0 0.0
      %7242 = vmatpush1.msra.mxu0 0.0
      %7243 = vmatprep.subr.mxu0 0.0
      %7244 = vmatpush1.msra.mxu0 0.0
      %7245 = vmatprep.subr.mxu0 0.0
      %7246 = vmatpush1.msra.mxu0 0.0
      %7247 = vmatprep.subr.mxu0 0.0
      %7248 = vmatpush1.msra.mxu0 0.0
      %7249 = vmatprep.subr.mxu0 0.0
      %7250 = vmatpush1.msra.mxu0 0.0
      %7251 = vmatprep.subr.mxu0 0.0
      %7252 = vmatpush1.msra.mxu0 0.0
      %7253 = vmatprep.subr.mxu0 0.0
      %7254 = vmatpush1.msra.mxu0 0.0
      %7255 = vmatprep.subr.mxu0 0.0
      %7256 = vmatpush1.msra.mxu0 0.0
      %7257 = vmatprep.subr.mxu0 0.0
      %7258 = vmatpush1.msra.mxu0 0.0
      %7259 = vmatprep.subr.mxu0 0.0
      %7260 = vmatpush1.msra.mxu0 0.0
      %7261 = vmatprep.subr.mxu0 0.0
      %7262 = vmatpush1.msra.mxu0 0.0
      %7263 = vmatprep.subr.mxu0 0.0
      %7264 = vmatpush1.msra.mxu0 0.0
      %7265 = vmatprep.subr.mxu0 0.0
      %7266 = vmatpush1.msra.mxu0 0.0
      %7267 = vmatprep.subr.mxu0 0.0
      %7268 = vmatpush1.msra.mxu0 0.0
      %7269 = vmatprep.subr.mxu0 0.0
      %7270 = vmatpush1.msra.mxu0 0.0
      %7271 = vmatprep.subr.mxu0 0.0
      %7272 = vmatpush1.msra.mxu0 0.0
      %7273 = vmatprep.subr.mxu0 0.0
      %7274 = vmatpush1.msra.mxu0 0.0
      %7275 = vmatprep.subr.mxu0 0.0
      %7276 = vmatpush1.msra.mxu0 0.0
      %7277 = vmatprep.mubr.f32.mxu0 0.0
      %v7278 = vand.u32 %v6507, 4294901760
      %v7279 = vsub.f32 %v6507, %v7278
      %v7280 = vand.u32 %v7279, 4294901760
      %7281 = vmatmul.mubr.f32.gmra.mrb[0].mxu0 %v7280
      %v7282 = vpop.f32.mrb[0].mxu0
      %v7283 = vadd.f32 %v7080, %v7282
      %v7284 = vpop.f32.mrb[0].mxu0
      %7285 = vmatprep.mubr.f32.mxu0 0.0
      %v7286 = vand.u32 %v6509, 4294901760
      %v7287 = vsub.f32 %v6509, %v7286
      %v7288 = vand.u32 %v7287, 4294901760
      %7289 = vmatmul.mubr.f32.gmra.mrb[0].mxu0 %v7288
      %v7290 = vpop.f32.mrb[0].mxu0
      %v7291 = vadd.f32 %v7087, %v7290
      %v7292 = vpop.f32.mrb[0].mxu0
      %7293 = vmatprep.mubr.f32.mxu0 0.0
      %v7294 = vand.u32 %v6511, 4294901760
      %v7295 = vsub.f32 %v6511, %v7294
      %v7296 = vand.u32 %v7295, 4294901760
      %7297 = vmatmul.mubr.f32.gmra.mrb[0].mxu0 %v7296
      %v7298 = vpop.f32.mrb[0].mxu0
      %v7299 = vadd.f32 %v7094, %v7298
      %v7300 = vpop.f32.mrb[0].mxu0
      %7301 = vmatprep.mubr.f32.mxu0 0.0
      %v7302 = vand.u32 %v6513, 4294901760
      %v7303 = vsub.f32 %v6513, %v7302
      %v7304 = vand.u32 %v7303, 4294901760
      %7305 = vmatmul.mubr.f32.gmra.mrb[0].mxu0 %v7304
      %v7306 = vpop.f32.mrb[0].mxu0
      %v7307 = vadd.f32 %v7101, %v7306
      %v7308 = vpop.f32.mrb[0].mxu0
      %7309 = vmatprep.mubr.f32.mxu0 0.0
      %v7310 = vand.u32 %v6515, 4294901760
      %v7311 = vsub.f32 %v6515, %v7310
      %v7312 = vand.u32 %v7311, 4294901760
      %7313 = vmatmul.mubr.f32.gmra.mrb[0].mxu0 %v7312
      %v7314 = vpop.f32.mrb[0].mxu0
      %v7315 = vadd.f32 %v7108, %v7314
      %v7316 = vpop.f32.mrb[0].mxu0
      %7317 = vmatprep.mubr.f32.mxu0 0.0
      %v7318 = vand.u32 %v6517, 4294901760
      %v7319 = vsub.f32 %v6517, %v7318
      %v7320 = vand.u32 %v7319, 4294901760
      %7321 = vmatmul.mubr.f32.gmra.mrb[0].mxu0 %v7320
      %v7322 = vpop.f32.mrb[0].mxu0
      %v7323 = vadd.f32 %v7115, %v7322
      %v7324 = vpop.f32.mrb[0].mxu0
      %7325 = vmatprep.mubr.f32.mxu0 0.0
      %v7326 = vand.u32 %v6519, 4294901760
      %v7327 = vsub.f32 %v6519, %v7326
      %v7328 = vand.u32 %v7327, 4294901760
      %7329 = vmatmul.mubr.f32.gmra.mrb[0].mxu0 %v7328
      %v7330 = vpop.f32.mrb[0].mxu0
      %v7331 = vadd.f32 %v7122, %v7330
      %v7332 = vpop.f32.mrb[0].mxu0
      %7333 = vmatprep.mubr.f32.mxu0 0.0
      %v7334 = vand.u32 %v6521, 4294901760
      %v7335 = vsub.f32 %v6521, %v7334
      %v7336 = vand.u32 %v7335, 4294901760
      %7337 = vmatmul.mubr.f32.gmra.mrb[0].mxu0 %v7336
      %v7338 = vpop.f32.mrb[0].mxu0
      %v7339 = vadd.f32 %v7129, %v7338
      %v7340 = vpop.f32.mrb[0].mxu0
      %7341 = vmatprep.mubr.f32.mxu0 0.0
      %v7342 = vand.u32 %v6523, 4294901760
      %v7343 = vsub.f32 %v6523, %v7342
      %v7344 = vand.u32 %v7343, 4294901760
      %7345 = vmatmul.mubr.f32.gmra.mrb[0].mxu0 %v7344
      %v7346 = vpop.f32.mrb[0].mxu0
      %v7347 = vadd.f32 %v7136, %v7346
      %v7348 = vpop.f32.mrb[0].mxu0
      %7349 = vmatprep.mubr.f32.mxu0 0.0
      %v7350 = vand.u32 %v6525, 4294901760
      %v7351 = vsub.f32 %v6525, %v7350
      %v7352 = vand.u32 %v7351, 4294901760
      %7353 = vmatmul.mubr.f32.gmra.mrb[0].mxu0 %v7352
      %v7354 = vpop.f32.mrb[0].mxu0
      %v7355 = vadd.f32 %v7143, %v7354
      %v7356 = vpop.f32.mrb[0].mxu0
      %7357 = vmatprep.mubr.f32.mxu0 0.0
      %v7358 = vand.u32 %v6527, 4294901760
      %v7359 = vsub.f32 %v6527, %v7358
      %v7360 = vand.u32 %v7359, 4294901760
      %7361 = vmatmul.mubr.f32.gmra.mrb[0].mxu0 %v7360
      %v7362 = vpop.f32.mrb[0].mxu0
      %v7363 = vadd.f32 %v7150, %v7362
      %v7364 = vpop.f32.mrb[0].mxu0
      %7365 = vmatprep.mubr.f32.mxu0 0.0
      %v7366 = vand.u32 %v6529, 4294901760
      %v7367 = vsub.f32 %v6529, %v7366
      %v7368 = vand.u32 %v7367, 4294901760
      %7369 = vmatmul.mubr.f32.gmra.mrb[0].mxu0 %v7368
      %v7370 = vpop.f32.mrb[0].mxu0
      %v7371 = vadd.f32 %v7157, %v7370
      %v7372 = vpop.f32.mrb[0].mxu0
      %7373 = vmatprep.mubr.f32.mxu0 0.0
      %v7374 = vand.u32 %v6531, 4294901760
      %v7375 = vsub.f32 %v6531, %v7374
      %v7376 = vand.u32 %v7375, 4294901760
      %7377 = vmatmul.mubr.f32.gmra.mrb[0].mxu0 %v7376
      %v7378 = vpop.f32.mrb[0].mxu0
      %v7379 = vadd.f32 %v7164, %v7378
      %v7380 = vpop.f32.mrb[0].mxu0
      %7381 = vmatprep.mubr.f32.mxu0 0.0
      %v7382 = vand.u32 %v6533, 4294901760
      %v7383 = vsub.f32 %v6533, %v7382
      %v7384 = vand.u32 %v7383, 4294901760
      %7385 = vmatmul.mubr.f32.gmra.mrb[0].mxu0 %v7384
      %v7386 = vpop.f32.mrb[0].mxu0
      %v7387 = vadd.f32 %v7171, %v7386
      %v7388 = vpop.f32.mrb[0].mxu0
      %7389 = vmatprep.mubr.f32.mxu0 0.0
      %v7390 = vand.u32 %v6535, 4294901760
      %v7391 = vsub.f32 %v6535, %v7390
      %v7392 = vand.u32 %v7391, 4294901760
      %7393 = vmatmul.mubr.f32.gmra.mrb[0].mxu0 %v7392
      %v7394 = vpop.f32.mrb[0].mxu0
      %v7395 = vadd.f32 %v7178, %v7394
      %v7396 = vpop.f32.mrb[0].mxu0
      %7397 = vmatprep.mubr.f32.mxu0 0.0
      %v7398 = vand.u32 %v6537, 4294901760
      %v7399 = vsub.f32 %v6537, %v7398
      %v7400 = vand.u32 %v7399, 4294901760
      %7401 = vmatmul.mubr.f32.gmra.mrb[0].mxu0 %v7400
      %v7402 = vpop.f32.mrb[0].mxu0
      %v7403 = vadd.f32 %v7185, %v7402
      %v7404 = vpop.f32.mrb[0].mxu0
      %7405 = vmatprep.mubr.f32.mxu0 0.0
      %v7406 = vand.u32 %v6539, 4294901760
      %v7407 = vsub.f32 %v6539, %v7406
      %v7408 = vand.u32 %v7407, 4294901760
      %7409 = vmatmul.mubr.f32.gmra.mrb[0].mxu0 %v7408
      %v7410 = vpop.f32.mrb[0].mxu0
      %v7411 = vadd.f32 %v7192, %v7410
      %v7412 = vpop.f32.mrb[0].mxu0
      %7413 = vmatprep.mubr.f32.mxu0 0.0
      %v7414 = vand.u32 %v6541, 4294901760
      %v7415 = vsub.f32 %v6541, %v7414
      %v7416 = vand.u32 %v7415, 4294901760
      %7417 = vmatmul.mubr.f32.gmra.mrb[0].mxu0 %v7416
      %v7418 = vpop.f32.mrb[0].mxu0
      %v7419 = vadd.f32 %v7199, %v7418
      %v7420 = vpop.f32.mrb[0].mxu0
      %7421 = vmatprep.mubr.f32.mxu0 0.0
      %v7422 = vand.u32 %v6543, 4294901760
      %v7423 = vsub.f32 %v6543, %v7422
      %v7424 = vand.u32 %v7423, 4294901760
      %7425 = vmatmul.mubr.f32.gmra.mrb[0].mxu0 %v7424
      %v7426 = vpop.f32.mrb[0].mxu0
      %v7427 = vadd.f32 %v7206, %v7426
      %v7428 = vpop.f32.mrb[0].mxu0
      %7429 = vdwg.mxu0
      %7430 = vmatprep.subr.mxu0 0.0
      %v7431 = vand.u32 %v6446, 4294901760
      %v7432 = vsub.f32 %v6446, %v7431
      %v7433 = vand.u32 %v7432, 4294901760
      %7434 = vmatpush1.msra.mxu0 %v7433
      %7435 = vmatprep.subr.mxu0 0.0
      %v7436 = vand.u32 %v6447, 4294901760
      %v7437 = vsub.f32 %v6447, %v7436
      %v7438 = vand.u32 %v7437, 4294901760
      %7439 = vmatpush1.msra.mxu0 %v7438
      %7440 = vmatprep.subr.mxu0 0.0
      %v7441 = vand.u32 %v6448, 4294901760
      %v7442 = vsub.f32 %v6448, %v7441
      %v7443 = vand.u32 %v7442, 4294901760
      %7444 = vmatpush1.msra.mxu0 %v7443
      %7445 = vmatprep.subr.mxu0 0.0
      %v7446 = vand.u32 %v6449, 4294901760
      %v7447 = vsub.f32 %v6449, %v7446
      %v7448 = vand.u32 %v7447, 4294901760
      %7449 = vmatpush1.msra.mxu0 %v7448
      %7450 = vmatprep.subr.mxu0 0.0
      %7451 = vmatpush1.msra.mxu0 0.0
      %7452 = vmatprep.subr.mxu0 0.0
      %7453 = vmatpush1.msra.mxu0 0.0
      %7454 = vmatprep.subr.mxu0 0.0
      %7455 = vmatpush1.msra.mxu0 0.0
      %7456 = vmatprep.subr.mxu0 0.0
      %7457 = vmatpush1.msra.mxu0 0.0
      %7458 = vmatprep.subr.mxu0 0.0
      %7459 = vmatpush1.msra.mxu0 0.0
      %7460 = vmatprep.subr.mxu0 0.0
      %7461 = vmatpush1.msra.mxu0 0.0
      %7462 = vmatprep.subr.mxu0 0.0
      %7463 = vmatpush1.msra.mxu0 0.0
      %7464 = vmatprep.subr.mxu0 0.0
      %7465 = vmatpush1.msra.mxu0 0.0
      %7466 = vmatprep.subr.mxu0 0.0
      %7467 = vmatpush1.msra.mxu0 0.0
      %7468 = vmatprep.subr.mxu0 0.0
      %7469 = vmatpush1.msra.mxu0 0.0
      %7470 = vmatprep.subr.mxu0 0.0
      %7471 = vmatpush1.msra.mxu0 0.0
      %7472 = vmatprep.subr.mxu0 0.0
      %7473 = vmatpush1.msra.mxu0 0.0
      %7474 = vmatprep.subr.mxu0 0.0
      %7475 = vmatpush1.msra.mxu0 0.0
      %7476 = vmatprep.subr.mxu0 0.0
      %7477 = vmatpush1.msra.mxu0 0.0
      %7478 = vmatprep.subr.mxu0 0.0
      %7479 = vmatpush1.msra.mxu0 0.0
      %7480 = vmatprep.subr.mxu0 0.0
      %7481 = vmatpush1.msra.mxu0 0.0
      %7482 = vmatprep.subr.mxu0 0.0
      %7483 = vmatpush1.msra.mxu0 0.0
      %7484 = vmatprep.subr.mxu0 0.0
      %7485 = vmatpush1.msra.mxu0 0.0
      %7486 = vmatprep.subr.mxu0 0.0
      %7487 = vmatpush1.msra.mxu0 0.0
      %7488 = vmatprep.subr.mxu0 0.0
      %7489 = vmatpush1.msra.mxu0 0.0
      %7490 = vmatprep.subr.mxu0 0.0
      %7491 = vmatpush1.msra.mxu0 0.0
      %7492 = vmatprep.subr.mxu0 0.0
      %7493 = vmatpush1.msra.mxu0 0.0
      %7494 = vmatprep.subr.mxu0 0.0
      %7495 = vmatpush1.msra.mxu0 0.0
      %7496 = vmatprep.subr.mxu0 0.0
      %7497 = vmatpush1.msra.mxu0 0.0
      %7498 = vmatprep.subr.mxu0 0.0
      %7499 = vmatpush1.msra.mxu0 0.0
      %7500 = vmatprep.subr.mxu0 0.0
      %7501 = vmatpush1.msra.mxu0 0.0
      %7502 = vmatprep.subr.mxu0 0.0
      %7503 = vmatpush1.msra.mxu0 0.0
      %7504 = vmatprep.subr.mxu0 0.0
      %7505 = vmatpush1.msra.mxu0 0.0
      %7506 = vmatprep.mubr.f32.mxu0 0.0
      %v7507 = vand.u32 %v6507, 4294901760
      %7508 = vmatmul.mubr.f32.gmra.mrb[0].mxu0 %v7507
      %v7509 = vpop.f32.mrb[0].mxu0
      %v7510 = vadd.f32 %v7283, %v7509
      %v7511 = vpop.f32.mrb[0].mxu0
      %7512 = vmatprep.mubr.f32.mxu0 0.0
      %v7513 = vand.u32 %v6509, 4294901760
      %7514 = vmatmul.mubr.f32.gmra.mrb[0].mxu0 %v7513
      %v7515 = vpop.f32.mrb[0].mxu0
      %v7516 = vadd.f32 %v7291, %v7515
      %v7517 = vpop.f32.mrb[0].mxu0
      %7518 = vmatprep.mubr.f32.mxu0 0.0
      %v7519 = vand.u32 %v6511, 4294901760
      %7520 = vmatmul.mubr.f32.gmra.mrb[0].mxu0 %v7519
      %v7521 = vpop.f32.mrb[0].mxu0
      %v7522 = vadd.f32 %v7299, %v7521
      %v7523 = vpop.f32.mrb[0].mxu0
      %7524 = vmatprep.mubr.f32.mxu0 0.0
      %v7525 = vand.u32 %v6513, 4294901760
      %7526 = vmatmul.mubr.f32.gmra.mrb[0].mxu0 %v7525
      %v7527 = vpop.f32.mrb[0].mxu0
      %v7528 = vadd.f32 %v7307, %v7527
      %v7529 = vpop.f32.mrb[0].mxu0
      %7530 = vmatprep.mubr.f32.mxu0 0.0
      %v7531 = vand.u32 %v6515, 4294901760
      %7532 = vmatmul.mubr.f32.gmra.mrb[0].mxu0 %v7531
      %v7533 = vpop.f32.mrb[0].mxu0
      %v7534 = vadd.f32 %v7315, %v7533
      %v7535 = vpop.f32.mrb[0].mxu0
      %7536 = vmatprep.mubr.f32.mxu0 0.0
      %v7537 = vand.u32 %v6517, 4294901760
      %7538 = vmatmul.mubr.f32.gmra.mrb[0].mxu0 %v7537
      %v7539 = vpop.f32.mrb[0].mxu0
      %v7540 = vadd.f32 %v7323, %v7539
      %v7541 = vpop.f32.mrb[0].mxu0
      %7542 = vmatprep.mubr.f32.mxu0 0.0
      %v7543 = vand.u32 %v6519, 4294901760
      %7544 = vmatmul.mubr.f32.gmra.mrb[0].mxu0 %v7543
      %v7545 = vpop.f32.mrb[0].mxu0
      %v7546 = vadd.f32 %v7331, %v7545
      %v7547 = vpop.f32.mrb[0].mxu0
      %7548 = vmatprep.mubr.f32.mxu0 0.0
      %v7549 = vand.u32 %v6521, 4294901760
      %7550 = vmatmul.mubr.f32.gmra.mrb[0].mxu0 %v7549
      %v7551 = vpop.f32.mrb[0].mxu0
      %v7552 = vadd.f32 %v7339, %v7551
      %v7553 = vpop.f32.mrb[0].mxu0
      %7554 = vmatprep.mubr.f32.mxu0 0.0
      %v7555 = vand.u32 %v6523, 4294901760
      %7556 = vmatmul.mubr.f32.gmra.mrb[0].mxu0 %v7555
      %v7557 = vpop.f32.mrb[0].mxu0
      %v7558 = vadd.f32 %v7347, %v7557
      %v7559 = vpop.f32.mrb[0].mxu0
      %7560 = vmatprep.mubr.f32.mxu0 0.0
      %v7561 = vand.u32 %v6525, 4294901760
      %7562 = vmatmul.mubr.f32.gmra.mrb[0].mxu0 %v7561
      %v7563 = vpop.f32.mrb[0].mxu0
      %v7564 = vadd.f32 %v7355, %v7563
      %v7565 = vpop.f32.mrb[0].mxu0
      %7566 = vmatprep.mubr.f32.mxu0 0.0
      %v7567 = vand.u32 %v6527, 4294901760
      %7568 = vmatmul.mubr.f32.gmra.mrb[0].mxu0 %v7567
      %v7569 = vpop.f32.mrb[0].mxu0
      %v7570 = vadd.f32 %v7363, %v7569
      %v7571 = vpop.f32.mrb[0].mxu0
      %7572 = vmatprep.mubr.f32.mxu0 0.0
      %v7573 = vand.u32 %v6529, 4294901760
      %7574 = vmatmul.mubr.f32.gmra.mrb[0].mxu0 %v7573
      %v7575 = vpop.f32.mrb[0].mxu0
      %v7576 = vadd.f32 %v7371, %v7575
      %v7577 = vpop.f32.mrb[0].mxu0
      %7578 = vmatprep.mubr.f32.mxu0 0.0
      %v7579 = vand.u32 %v6531, 4294901760
      %7580 = vmatmul.mubr.f32.gmra.mrb[0].mxu0 %v7579
      %v7581 = vpop.f32.mrb[0].mxu0
      %v7582 = vadd.f32 %v7379, %v7581
      %v7583 = vpop.f32.mrb[0].mxu0
      %7584 = vmatprep.mubr.f32.mxu0 0.0
      %v7585 = vand.u32 %v6533, 4294901760
      %7586 = vmatmul.mubr.f32.gmra.mrb[0].mxu0 %v7585
      %v7587 = vpop.f32.mrb[0].mxu0
      %v7588 = vadd.f32 %v7387, %v7587
      %v7589 = vpop.f32.mrb[0].mxu0
      %7590 = vmatprep.mubr.f32.mxu0 0.0
      %v7591 = vand.u32 %v6535, 4294901760
      %7592 = vmatmul.mubr.f32.gmra.mrb[0].mxu0 %v7591
      %v7593 = vpop.f32.mrb[0].mxu0
      %v7594 = vadd.f32 %v7395, %v7593
      %v7595 = vpop.f32.mrb[0].mxu0
      %7596 = vmatprep.mubr.f32.mxu0 0.0
      %v7597 = vand.u32 %v6537, 4294901760
      %7598 = vmatmul.mubr.f32.gmra.mrb[0].mxu0 %v7597
      %v7599 = vpop.f32.mrb[0].mxu0
      %v7600 = vadd.f32 %v7403, %v7599
      %v7601 = vpop.f32.mrb[0].mxu0
      %7602 = vmatprep.mubr.f32.mxu0 0.0
      %v7603 = vand.u32 %v6539, 4294901760
      %7604 = vmatmul.mubr.f32.gmra.mrb[0].mxu0 %v7603
      %v7605 = vpop.f32.mrb[0].mxu0
      %v7606 = vadd.f32 %v7411, %v7605
      %v7607 = vpop.f32.mrb[0].mxu0
      %7608 = vmatprep.mubr.f32.mxu0 0.0
      %v7609 = vand.u32 %v6541, 4294901760
      %7610 = vmatmul.mubr.f32.gmra.mrb[0].mxu0 %v7609
      %v7611 = vpop.f32.mrb[0].mxu0
      %v7612 = vadd.f32 %v7419, %v7611
      %v7613 = vpop.f32.mrb[0].mxu0
      %7614 = vmatprep.mubr.f32.mxu0 0.0
      %v7615 = vand.u32 %v6543, 4294901760
      %7616 = vmatmul.mubr.f32.gmra.mrb[0].mxu0 %v7615
      %v7617 = vpop.f32.mrb[0].mxu0
      %v7618 = vadd.f32 %v7427, %v7617
      %v7619 = vpop.f32.mrb[0].mxu0
      %7620 = vdwg.mxu0
      %7621 = vmatprep.subr.mxu0 0.0
      %v7622 = vand.u32 %v6446, 4294901760
      %7623 = vmatpush1.msra.mxu0 %v7622
      %7624 = vmatprep.subr.mxu0 0.0
      %v7625 = vand.u32 %v6447, 4294901760
      %7626 = vmatpush1.msra.mxu0 %v7625
      %7627 = vmatprep.subr.mxu0 0.0
      %v7628 = vand.u32 %v6448, 4294901760
      %7629 = vmatpush1.msra.mxu0 %v7628
      %7630 = vmatprep.subr.mxu0 0.0
      %v7631 = vand.u32 %v6449, 4294901760
      %7632 = vmatpush1.msra.mxu0 %v7631
      %7633 = vmatprep.subr.mxu0 0.0
      %7634 = vmatpush1.msra.mxu0 0.0
      %7635 = vmatprep.subr.mxu0 0.0
      %7636 = vmatpush1.msra.mxu0 0.0
      %7637 = vmatprep.subr.mxu0 0.0
      %7638 = vmatpush1.msra.mxu0 0.0
      %7639 = vmatprep.subr.mxu0 0.0
      %7640 = vmatpush1.msra.mxu0 0.0
      %7641 = vmatprep.subr.mxu0 0.0
      %7642 = vmatpush1.msra.mxu0 0.0
      %7643 = vmatprep.subr.mxu0 0.0
      %7644 = vmatpush1.msra.mxu0 0.0
      %7645 = vmatprep.subr.mxu0 0.0
      %7646 = vmatpush1.msra.mxu0 0.0
      %7647 = vmatprep.subr.mxu0 0.0
      %7648 = vmatpush1.msra.mxu0 0.0
      %7649 = vmatprep.subr.mxu0 0.0
      %7650 = vmatpush1.msra.mxu0 0.0
      %7651 = vmatprep.subr.mxu0 0.0
      %7652 = vmatpush1.msra.mxu0 0.0
      %7653 = vmatprep.subr.mxu0 0.0
      %7654 = vmatpush1.msra.mxu0 0.0
      %7655 = vmatprep.subr.mxu0 0.0
      %7656 = vmatpush1.msra.mxu0 0.0
      %7657 = vmatprep.subr.mxu0 0.0
      %7658 = vmatpush1.msra.mxu0 0.0
      %7659 = vmatprep.subr.mxu0 0.0
      %7660 = vmatpush1.msra.mxu0 0.0
      %7661 = vmatprep.subr.mxu0 0.0
      %7662 = vmatpush1.msra.mxu0 0.0
      %7663 = vmatprep.subr.mxu0 0.0
      %7664 = vmatpush1.msra.mxu0 0.0
      %7665 = vmatprep.subr.mxu0 0.0
      %7666 = vmatpush1.msra.mxu0 0.0
      %7667 = vmatprep.subr.mxu0 0.0
      %7668 = vmatpush1.msra.mxu0 0.0
      %7669 = vmatprep.subr.mxu0 0.0
      %7670 = vmatpush1.msra.mxu0 0.0
      %7671 = vmatprep.subr.mxu0 0.0
      %7672 = vmatpush1.msra.mxu0 0.0
      %7673 = vmatprep.subr.mxu0 0.0
      %7674 = vmatpush1.msra.mxu0 0.0
      %7675 = vmatprep.subr.mxu0 0.0
      %7676 = vmatpush1.msra.mxu0 0.0
      %7677 = vmatprep.subr.mxu0 0.0
      %7678 = vmatpush1.msra.mxu0 0.0
      %7679 = vmatprep.subr.mxu0 0.0
      %7680 = vmatpush1.msra.mxu0 0.0
      %7681 = vmatprep.subr.mxu0 0.0
      %7682 = vmatpush1.msra.mxu0 0.0
      %7683 = vmatprep.subr.mxu0 0.0
      %7684 = vmatpush1.msra.mxu0 0.0
      %7685 = vmatprep.subr.mxu0 0.0
      %7686 = vmatpush1.msra.mxu0 0.0
      %7687 = vmatprep.subr.mxu0 0.0
      %7688 = vmatpush1.msra.mxu0 0.0
      %7689 = vmatprep.mubr.f32.mxu0 0.0
      %v7690 = vand.u32 %v6507, 4294901760
      %7691 = vmatmul.mubr.f32.gmra.mrb[0].mxu0 %v7690
      %v7692 = vpop.f32.mrb[0].mxu0
      %v7693 = vadd.f32 %v7510, %v7692
      %v7694 = vpop.f32.mrb[0].mxu0
      %7695 = vmatprep.mubr.f32.mxu0 0.0
      %v7696 = vand.u32 %v6509, 4294901760
      %7697 = vmatmul.mubr.f32.gmra.mrb[0].mxu0 %v7696
      %v7698 = vpop.f32.mrb[0].mxu0
      %v7699 = vadd.f32 %v7516, %v7698
      %v7700 = vpop.f32.mrb[0].mxu0
      %7701 = vmatprep.mubr.f32.mxu0 0.0
      %v7702 = vand.u32 %v6511, 4294901760
      %7703 = vmatmul.mubr.f32.gmra.mrb[0].mxu0 %v7702
      %v7704 = vpop.f32.mrb[0].mxu0
      %v7705 = vadd.f32 %v7522, %v7704
      %v7706 = vpop.f32.mrb[0].mxu0
      %7707 = vmatprep.mubr.f32.mxu0 0.0
      %v7708 = vand.u32 %v6513, 4294901760
      %7709 = vmatmul.mubr.f32.gmra.mrb[0].mxu0 %v7708
      %v7710 = vpop.f32.mrb[0].mxu0
      %v7711 = vadd.f32 %v7528, %v7710
      %v7712 = vpop.f32.mrb[0].mxu0
      %7713 = vmatprep.mubr.f32.mxu0 0.0
      %v7714 = vand.u32 %v6515, 4294901760
      %7715 = vmatmul.mubr.f32.gmra.mrb[0].mxu0 %v7714
      %v7716 = vpop.f32.mrb[0].mxu0
      %v7717 = vadd.f32 %v7534, %v7716
      %v7718 = vpop.f32.mrb[0].mxu0
      %7719 = vmatprep.mubr.f32.mxu0 0.0
      %v7720 = vand.u32 %v6517, 4294901760
      %7721 = vmatmul.mubr.f32.gmra.mrb[0].mxu0 %v7720
      %v7722 = vpop.f32.mrb[0].mxu0
      %v7723 = vadd.f32 %v7540, %v7722
      %v7724 = vpop.f32.mrb[0].mxu0
      %7725 = vmatprep.mubr.f32.mxu0 0.0
      %v7726 = vand.u32 %v6519, 4294901760
      %7727 = vmatmul.mubr.f32.gmra.mrb[0].mxu0 %v7726
      %v7728 = vpop.f32.mrb[0].mxu0
      %v7729 = vadd.f32 %v7546, %v7728
      %v7730 = vpop.f32.mrb[0].mxu0
      %7731 = vmatprep.mubr.f32.mxu0 0.0
      %v7732 = vand.u32 %v6521, 4294901760
      %7733 = vmatmul.mubr.f32.gmra.mrb[0].mxu0 %v7732
      %v7734 = vpop.f32.mrb[0].mxu0
      %v7735 = vadd.f32 %v7552, %v7734
      %v7736 = vpop.f32.mrb[0].mxu0
      %7737 = vmatprep.mubr.f32.mxu0 0.0
      %v7738 = vand.u32 %v6523, 4294901760
      %7739 = vmatmul.mubr.f32.gmra.mrb[0].mxu0 %v7738
      %v7740 = vpop.f32.mrb[0].mxu0
      %v7741 = vadd.f32 %v7558, %v7740
      %v7742 = vpop.f32.mrb[0].mxu0
      %7743 = vmatprep.mubr.f32.mxu0 0.0
      %v7744 = vand.u32 %v6525, 4294901760
      %7745 = vmatmul.mubr.f32.gmra.mrb[0].mxu0 %v7744
      %v7746 = vpop.f32.mrb[0].mxu0
      %v7747 = vadd.f32 %v7564, %v7746
      %v7748 = vpop.f32.mrb[0].mxu0
      %7749 = vmatprep.mubr.f32.mxu0 0.0
      %v7750 = vand.u32 %v6527, 4294901760
      %7751 = vmatmul.mubr.f32.gmra.mrb[0].mxu0 %v7750
      %v7752 = vpop.f32.mrb[0].mxu0
      %v7753 = vadd.f32 %v7570, %v7752
      %v7754 = vpop.f32.mrb[0].mxu0
      %7755 = vmatprep.mubr.f32.mxu0 0.0
      %v7756 = vand.u32 %v6529, 4294901760
      %7757 = vmatmul.mubr.f32.gmra.mrb[0].mxu0 %v7756
      %v7758 = vpop.f32.mrb[0].mxu0
      %v7759 = vadd.f32 %v7576, %v7758
      %v7760 = vpop.f32.mrb[0].mxu0
      %7761 = vmatprep.mubr.f32.mxu0 0.0
      %v7762 = vand.u32 %v6531, 4294901760
      %7763 = vmatmul.mubr.f32.gmra.mrb[0].mxu0 %v7762
      %v7764 = vpop.f32.mrb[0].mxu0
      %v7765 = vadd.f32 %v7582, %v7764
      %v7766 = vpop.f32.mrb[0].mxu0
      %7767 = vmatprep.mubr.f32.mxu0 0.0
      %v7768 = vand.u32 %v6533, 4294901760
      %7769 = vmatmul.mubr.f32.gmra.mrb[0].mxu0 %v7768
      %v7770 = vpop.f32.mrb[0].mxu0
      %v7771 = vadd.f32 %v7588, %v7770
      %v7772 = vpop.f32.mrb[0].mxu0
      %7773 = vmatprep.mubr.f32.mxu0 0.0
      %v7774 = vand.u32 %v6535, 4294901760
      %7775 = vmatmul.mubr.f32.gmra.mrb[0].mxu0 %v7774
      %v7776 = vpop.f32.mrb[0].mxu0
      %v7777 = vadd.f32 %v7594, %v7776
      %v7778 = vpop.f32.mrb[0].mxu0
      %7779 = vmatprep.mubr.f32.mxu0 0.0
      %v7780 = vand.u32 %v6537, 4294901760
      %7781 = vmatmul.mubr.f32.gmra.mrb[0].mxu0 %v7780
      %v7782 = vpop.f32.mrb[0].mxu0
      %v7783 = vadd.f32 %v7600, %v7782
      %v7784 = vpop.f32.mrb[0].mxu0
      %7785 = vmatprep.mubr.f32.mxu0 0.0
      %v7786 = vand.u32 %v6539, 4294901760
      %7787 = vmatmul.mubr.f32.gmra.mrb[0].mxu0 %v7786
      %v7788 = vpop.f32.mrb[0].mxu0
      %v7789 = vadd.f32 %v7606, %v7788
      %v7790 = vpop.f32.mrb[0].mxu0
      %7791 = vmatprep.mubr.f32.mxu0 0.0
      %v7792 = vand.u32 %v6541, 4294901760
      %7793 = vmatmul.mubr.f32.gmra.mrb[0].mxu0 %v7792
      %v7794 = vpop.f32.mrb[0].mxu0
      %v7795 = vadd.f32 %v7612, %v7794
      %v7796 = vpop.f32.mrb[0].mxu0
      %7797 = vmatprep.mubr.f32.mxu0 0.0
      %v7798 = vand.u32 %v6543, 4294901760
      %7799 = vmatmul.mubr.f32.gmra.mrb[0].mxu0 %v7798
      %v7800 = vpop.f32.mrb[0].mxu0
      %v7801 = vadd.f32 %v7618, %v7800
      %v7802 = vpop.f32.mrb[0].mxu0
      %7803 = vdwg.mxu0
      %7804 = vmatprep.subr.mxu0 0.0
      %v7805 = vand.u32 %v6347, 4294901760
      %7806 = vmatpush1.msra.mxu0 %v7805
      %7807 = vmatprep.subr.mxu0 0.0
      %v7808 = vand.u32 %v6348, 4294901760
      %7809 = vmatpush1.msra.mxu0 %v7808
      %7810 = vmatprep.subr.mxu0 0.0
      %v7811 = vand.u32 %v6349, 4294901760
      %7812 = vmatpush1.msra.mxu0 %v7811
      %7813 = vmatprep.subr.mxu0 0.0
      %v7814 = vand.u32 %v6350, 4294901760
      %7815 = vmatpush1.msra.mxu0 %v7814
      %7816 = vmatprep.subr.mxu0 0.0
      %7817 = vmatpush1.msra.mxu0 0.0
      %7818 = vmatprep.subr.mxu0 0.0
      %7819 = vmatpush1.msra.mxu0 0.0
      %7820 = vmatprep.subr.mxu0 0.0
      %7821 = vmatpush1.msra.mxu0 0.0
      %7822 = vmatprep.subr.mxu0 0.0
      %7823 = vmatpush1.msra.mxu0 0.0
      %7824 = vmatprep.subr.mxu0 0.0
      %7825 = vmatpush1.msra.mxu0 0.0
      %7826 = vmatprep.subr.mxu0 0.0
      %7827 = vmatpush1.msra.mxu0 0.0
      %7828 = vmatprep.subr.mxu0 0.0
      %7829 = vmatpush1.msra.mxu0 0.0
      %7830 = vmatprep.subr.mxu0 0.0
      %7831 = vmatpush1.msra.mxu0 0.0
      %7832 = vmatprep.subr.mxu0 0.0
      %7833 = vmatpush1.msra.mxu0 0.0
      %7834 = vmatprep.subr.mxu0 0.0
      %7835 = vmatpush1.msra.mxu0 0.0
      %7836 = vmatprep.subr.mxu0 0.0
      %7837 = vmatpush1.msra.mxu0 0.0
      %7838 = vmatprep.subr.mxu0 0.0
      %7839 = vmatpush1.msra.mxu0 0.0
      %7840 = vmatprep.subr.mxu0 0.0
      %7841 = vmatpush1.msra.mxu0 0.0
      %7842 = vmatprep.subr.mxu0 0.0
      %7843 = vmatpush1.msra.mxu0 0.0
      %7844 = vmatprep.subr.mxu0 0.0
      %7845 = vmatpush1.msra.mxu0 0.0
      %7846 = vmatprep.subr.mxu0 0.0
      %7847 = vmatpush1.msra.mxu0 0.0
      %7848 = vmatprep.subr.mxu0 0.0
      %7849 = vmatpush1.msra.mxu0 0.0
      %7850 = vmatprep.subr.mxu0 0.0
      %7851 = vmatpush1.msra.mxu0 0.0
      %7852 = vmatprep.subr.mxu0 0.0
      %7853 = vmatpush1.msra.mxu0 0.0
      %7854 = vmatprep.subr.mxu0 0.0
      %7855 = vmatpush1.msra.mxu0 0.0
      %7856 = vmatprep.subr.mxu0 0.0
      %7857 = vmatpush1.msra.mxu0 0.0
      %7858 = vmatprep.subr.mxu0 0.0
      %7859 = vmatpush1.msra.mxu0 0.0
      %7860 = vmatprep.subr.mxu0 0.0
      %7861 = vmatpush1.msra.mxu0 0.0
      %7862 = vmatprep.subr.mxu0 0.0
      %7863 = vmatpush1.msra.mxu0 0.0
      %7864 = vmatprep.subr.mxu0 0.0
      %7865 = vmatpush1.msra.mxu0 0.0
      %7866 = vmatprep.subr.mxu0 0.0
      %7867 = vmatpush1.msra.mxu0 0.0
      %7868 = vmatprep.subr.mxu0 0.0
      %7869 = vmatpush1.msra.mxu0 0.0
      %7870 = vmatprep.subr.mxu0 0.0
      %7871 = vmatpush1.msra.mxu0 0.0
      %7872 = vmatprep.mubr.f32.mxu0 0.0
      %v7873 = vand.u32 %v4771, 4294901760
      %v7874 = vsub.f32 %v4771, %v7873
      %v7875 = vand.u32 %v7874, 4294901760
      %v7876 = vsub.f32 %v7874, %v7875
      %v7877 = vand.u32 %v7876, 4294901760
      %7878 = vmatmul.mubr.f32.gmra.mrb[0].mxu0 %v7877
      %v7879 = vpop.f32.mrb[0].mxu0
      %v7880 = vadd.f32 %v7693, %v7879
      %v7881 = vpop.f32.mrb[0].mxu0
      %7882 = vmatprep.mubr.f32.mxu0 0.0
      %v7883 = vand.u32 %v4774, 4294901760
      %v7884 = vsub.f32 %v4774, %v7883
      %v7885 = vand.u32 %v7884, 4294901760
      %v7886 = vsub.f32 %v7884, %v7885
      %v7887 = vand.u32 %v7886, 4294901760
      %7888 = vmatmul.mubr.f32.gmra.mrb[0].mxu0 %v7887
      %v7889 = vpop.f32.mrb[0].mxu0
      %v7890 = vadd.f32 %v7699, %v7889
      %v7891 = vpop.f32.mrb[0].mxu0
      %7892 = vmatprep.mubr.f32.mxu0 0.0
      %v7893 = vand.u32 %v4777, 4294901760
      %v7894 = vsub.f32 %v4777, %v7893
      %v7895 = vand.u32 %v7894, 4294901760
      %v7896 = vsub.f32 %v7894, %v7895
      %v7897 = vand.u32 %v7896, 4294901760
      %7898 = vmatmul.mubr.f32.gmra.mrb[0].mxu0 %v7897
      %v7899 = vpop.f32.mrb[0].mxu0
      %v7900 = vadd.f32 %v7705, %v7899
      %v7901 = vpop.f32.mrb[0].mxu0
      %7902 = vmatprep.mubr.f32.mxu0 0.0
      %v7903 = vand.u32 %v4780, 4294901760
      %v7904 = vsub.f32 %v4780, %v7903
      %v7905 = vand.u32 %v7904, 4294901760
      %v7906 = vsub.f32 %v7904, %v7905
      %v7907 = vand.u32 %v7906, 4294901760
      %7908 = vmatmul.mubr.f32.gmra.mrb[0].mxu0 %v7907
      %v7909 = vpop.f32.mrb[0].mxu0
      %v7910 = vadd.f32 %v7711, %v7909
      %v7911 = vpop.f32.mrb[0].mxu0
      %7912 = vmatprep.mubr.f32.mxu0 0.0
      %v7913 = vand.u32 %v4783, 4294901760
      %v7914 = vsub.f32 %v4783, %v7913
      %v7915 = vand.u32 %v7914, 4294901760
      %v7916 = vsub.f32 %v7914, %v7915
      %v7917 = vand.u32 %v7916, 4294901760
      %7918 = vmatmul.mubr.f32.gmra.mrb[0].mxu0 %v7917
      %v7919 = vpop.f32.mrb[0].mxu0
      %v7920 = vadd.f32 %v7717, %v7919
      %v7921 = vpop.f32.mrb[0].mxu0
      %7922 = vmatprep.mubr.f32.mxu0 0.0
      %v7923 = vand.u32 %v4786, 4294901760
      %v7924 = vsub.f32 %v4786, %v7923
      %v7925 = vand.u32 %v7924, 4294901760
      %v7926 = vsub.f32 %v7924, %v7925
      %v7927 = vand.u32 %v7926, 4294901760
      %7928 = vmatmul.mubr.f32.gmra.mrb[0].mxu0 %v7927
      %v7929 = vpop.f32.mrb[0].mxu0
      %v7930 = vadd.f32 %v7723, %v7929
      %v7931 = vpop.f32.mrb[0].mxu0
      %7932 = vmatprep.mubr.f32.mxu0 0.0
      %v7933 = vand.u32 %v4789, 4294901760
      %v7934 = vsub.f32 %v4789, %v7933
      %v7935 = vand.u32 %v7934, 4294901760
      %v7936 = vsub.f32 %v7934, %v7935
      %v7937 = vand.u32 %v7936, 4294901760
      %7938 = vmatmul.mubr.f32.gmra.mrb[0].mxu0 %v7937
      %v7939 = vpop.f32.mrb[0].mxu0
      %v7940 = vadd.f32 %v7729, %v7939
      %v7941 = vpop.f32.mrb[0].mxu0
      %7942 = vmatprep.mubr.f32.mxu0 0.0
      %v7943 = vand.u32 %v4792, 4294901760
      %v7944 = vsub.f32 %v4792, %v7943
      %v7945 = vand.u32 %v7944, 4294901760
      %v7946 = vsub.f32 %v7944, %v7945
      %v7947 = vand.u32 %v7946, 4294901760
      %7948 = vmatmul.mubr.f32.gmra.mrb[0].mxu0 %v7947
      %v7949 = vpop.f32.mrb[0].mxu0
      %v7950 = vadd.f32 %v7735, %v7949
      %v7951 = vpop.f32.mrb[0].mxu0
      %7952 = vmatprep.mubr.f32.mxu0 0.0
      %v7953 = vand.u32 %v4795, 4294901760
      %v7954 = vsub.f32 %v4795, %v7953
      %v7955 = vand.u32 %v7954, 4294901760
      %v7956 = vsub.f32 %v7954, %v7955
      %v7957 = vand.u32 %v7956, 4294901760
      %7958 = vmatmul.mubr.f32.gmra.mrb[0].mxu0 %v7957
      %v7959 = vpop.f32.mrb[0].mxu0
      %v7960 = vadd.f32 %v7741, %v7959
      %v7961 = vpop.f32.mrb[0].mxu0
      %7962 = vmatprep.mubr.f32.mxu0 0.0
      %v7963 = vand.u32 %v4798, 4294901760
      %v7964 = vsub.f32 %v4798, %v7963
      %v7965 = vand.u32 %v7964, 4294901760
      %v7966 = vsub.f32 %v7964, %v7965
      %v7967 = vand.u32 %v7966, 4294901760
      %7968 = vmatmul.mubr.f32.gmra.mrb[0].mxu0 %v7967
      %v7969 = vpop.f32.mrb[0].mxu0
      %v7970 = vadd.f32 %v7747, %v7969
      %v7971 = vpop.f32.mrb[0].mxu0
      %7972 = vmatprep.mubr.f32.mxu0 0.0
      %v7973 = vand.u32 %v4801, 4294901760
      %v7974 = vsub.f32 %v4801, %v7973
      %v7975 = vand.u32 %v7974, 4294901760
      %v7976 = vsub.f32 %v7974, %v7975
      %v7977 = vand.u32 %v7976, 4294901760
      %7978 = vmatmul.mubr.f32.gmra.mrb[0].mxu0 %v7977
      %v7979 = vpop.f32.mrb[0].mxu0
      %v7980 = vadd.f32 %v7753, %v7979
      %v7981 = vpop.f32.mrb[0].mxu0
      %7982 = vmatprep.mubr.f32.mxu0 0.0
      %v7983 = vand.u32 %v4804, 4294901760
      %v7984 = vsub.f32 %v4804, %v7983
      %v7985 = vand.u32 %v7984, 4294901760
      %v7986 = vsub.f32 %v7984, %v7985
      %v7987 = vand.u32 %v7986, 4294901760
      %7988 = vmatmul.mubr.f32.gmra.mrb[0].mxu0 %v7987
      %v7989 = vpop.f32.mrb[0].mxu0
      %v7990 = vadd.f32 %v7759, %v7989
      %v7991 = vpop.f32.mrb[0].mxu0
      %7992 = vmatprep.mubr.f32.mxu0 0.0
      %v7993 = vand.u32 %v4807, 4294901760
      %v7994 = vsub.f32 %v4807, %v7993
      %v7995 = vand.u32 %v7994, 4294901760
      %v7996 = vsub.f32 %v7994, %v7995
      %v7997 = vand.u32 %v7996, 4294901760
      %7998 = vmatmul.mubr.f32.gmra.mrb[0].mxu0 %v7997
      %v7999 = vpop.f32.mrb[0].mxu0
      %v8000 = vadd.f32 %v7765, %v7999
      %v8001 = vpop.f32.mrb[0].mxu0
      %8002 = vmatprep.mubr.f32.mxu0 0.0
      %v8003 = vand.u32 %v4810, 4294901760
      %v8004 = vsub.f32 %v4810, %v8003
      %v8005 = vand.u32 %v8004, 4294901760
      %v8006 = vsub.f32 %v8004, %v8005
      %v8007 = vand.u32 %v8006, 4294901760
      %8008 = vmatmul.mubr.f32.gmra.mrb[0].mxu0 %v8007
      %v8009 = vpop.f32.mrb[0].mxu0
      %v8010 = vadd.f32 %v7771, %v8009
      %v8011 = vpop.f32.mrb[0].mxu0
      %8012 = vmatprep.mubr.f32.mxu0 0.0
      %v8013 = vand.u32 %v4813, 4294901760
      %v8014 = vsub.f32 %v4813, %v8013
      %v8015 = vand.u32 %v8014, 4294901760
      %v8016 = vsub.f32 %v8014, %v8015
      %v8017 = vand.u32 %v8016, 4294901760
      %8018 = vmatmul.mubr.f32.gmra.mrb[0].mxu0 %v8017
      %v8019 = vpop.f32.mrb[0].mxu0
      %v8020 = vadd.f32 %v7777, %v8019
      %v8021 = vpop.f32.mrb[0].mxu0
      %8022 = vmatprep.mubr.f32.mxu0 0.0
      %v8023 = vand.u32 %v4816, 4294901760
      %v8024 = vsub.f32 %v4816, %v8023
      %v8025 = vand.u32 %v8024, 4294901760
      %v8026 = vsub.f32 %v8024, %v8025
      %v8027 = vand.u32 %v8026, 4294901760
      %8028 = vmatmul.mubr.f32.gmra.mrb[0].mxu0 %v8027
      %v8029 = vpop.f32.mrb[0].mxu0
      %v8030 = vadd.f32 %v7783, %v8029
      %v8031 = vpop.f32.mrb[0].mxu0
      %8032 = vmatprep.mubr.f32.mxu0 0.0
      %v8033 = vand.u32 %v4819, 4294901760
      %v8034 = vsub.f32 %v4819, %v8033
      %v8035 = vand.u32 %v8034, 4294901760
      %v8036 = vsub.f32 %v8034, %v8035
      %v8037 = vand.u32 %v8036, 4294901760
      %8038 = vmatmul.mubr.f32.gmra.mrb[0].mxu0 %v8037
      %v8039 = vpop.f32.mrb[0].mxu0
      %v8040 = vadd.f32 %v7789, %v8039
      %v8041 = vpop.f32.mrb[0].mxu0
      %8042 = vmatprep.mubr.f32.mxu0 0.0
      %v8043 = vand.u32 %v4822, 4294901760
      %v8044 = vsub.f32 %v4822, %v8043
      %v8045 = vand.u32 %v8044, 4294901760
      %v8046 = vsub.f32 %v8044, %v8045
      %v8047 = vand.u32 %v8046, 4294901760
      %8048 = vmatmul.mubr.f32.gmra.mrb[0].mxu0 %v8047
      %v8049 = vpop.f32.mrb[0].mxu0
      %v8050 = vadd.f32 %v7795, %v8049
      %v8051 = vpop.f32.mrb[0].mxu0
      %8052 = vmatprep.mubr.f32.mxu0 0.0
      %v8053 = vand.u32 %v4825, 4294901760
      %v8054 = vsub.f32 %v4825, %v8053
      %v8055 = vand.u32 %v8054, 4294901760
      %v8056 = vsub.f32 %v8054, %v8055
      %v8057 = vand.u32 %v8056, 4294901760
      %8058 = vmatmul.mubr.f32.gmra.mrb[0].mxu0 %v8057
      %v8059 = vpop.f32.mrb[0].mxu0
      %v8060 = vadd.f32 %v7801, %v8059
      %v8061 = vpop.f32.mrb[0].mxu0
      %8062 = vdwg.mxu0
      %8063 = vmatprep.subr.mxu0 0.0
      %v8064 = vand.u32 %v6347, 4294901760
      %v8065 = vsub.f32 %v6347, %v8064
      %v8066 = vand.u32 %v8065, 4294901760
      %v8067 = vsub.f32 %v8065, %v8066
      %v8068 = vand.u32 %v8067, 4294901760
      %8069 = vmatpush1.msra.mxu0 %v8068
      %8070 = vmatprep.subr.mxu0 0.0
      %v8071 = vand.u32 %v6348, 4294901760
      %v8072 = vsub.f32 %v6348, %v8071
      %v8073 = vand.u32 %v8072, 4294901760
      %v8074 = vsub.f32 %v8072, %v8073
      %v8075 = vand.u32 %v8074, 4294901760
      %8076 = vmatpush1.msra.mxu0 %v8075
      %8077 = vmatprep.subr.mxu0 0.0
      %v8078 = vand.u32 %v6349, 4294901760
      %v8079 = vsub.f32 %v6349, %v8078
      %v8080 = vand.u32 %v8079, 4294901760
      %v8081 = vsub.f32 %v8079, %v8080
      %v8082 = vand.u32 %v8081, 4294901760
      %8083 = vmatpush1.msra.mxu0 %v8082
      %8084 = vmatprep.subr.mxu0 0.0
      %v8085 = vand.u32 %v6350, 4294901760
      %v8086 = vsub.f32 %v6350, %v8085
      %v8087 = vand.u32 %v8086, 4294901760
      %v8088 = vsub.f32 %v8086, %v8087
      %v8089 = vand.u32 %v8088, 4294901760
      %8090 = vmatpush1.msra.mxu0 %v8089
      %8091 = vmatprep.subr.mxu0 0.0
      %8092 = vmatpush1.msra.mxu0 0.0
      %8093 = vmatprep.subr.mxu0 0.0
      %8094 = vmatpush1.msra.mxu0 0.0
      %8095 = vmatprep.subr.mxu0 0.0
      %8096 = vmatpush1.msra.mxu0 0.0
      %8097 = vmatprep.subr.mxu0 0.0
      %8098 = vmatpush1.msra.mxu0 0.0
      %8099 = vmatprep.subr.mxu0 0.0
      %8100 = vmatpush1.msra.mxu0 0.0
      %8101 = vmatprep.subr.mxu0 0.0
      %8102 = vmatpush1.msra.mxu0 0.0
      %8103 = vmatprep.subr.mxu0 0.0
      %8104 = vmatpush1.msra.mxu0 0.0
      %8105 = vmatprep.subr.mxu0 0.0
      %8106 = vmatpush1.msra.mxu0 0.0
      %8107 = vmatprep.subr.mxu0 0.0
      %8108 = vmatpush1.msra.mxu0 0.0
      %8109 = vmatprep.subr.mxu0 0.0
      %8110 = vmatpush1.msra.mxu0 0.0
      %8111 = vmatprep.subr.mxu0 0.0
      %8112 = vmatpush1.msra.mxu0 0.0
      %8113 = vmatprep.subr.mxu0 0.0
      %8114 = vmatpush1.msra.mxu0 0.0
      %8115 = vmatprep.subr.mxu0 0.0
      %8116 = vmatpush1.msra.mxu0 0.0
      %8117 = vmatprep.subr.mxu0 0.0
      %8118 = vmatpush1.msra.mxu0 0.0
      %8119 = vmatprep.subr.mxu0 0.0
      %8120 = vmatpush1.msra.mxu0 0.0
      %8121 = vmatprep.subr.mxu0 0.0
      %8122 = vmatpush1.msra.mxu0 0.0
      %8123 = vmatprep.subr.mxu0 0.0
      %8124 = vmatpush1.msra.mxu0 0.0
      %8125 = vmatprep.subr.mxu0 0.0
      %8126 = vmatpush1.msra.mxu0 0.0
      %8127 = vmatprep.subr.mxu0 0.0
      %8128 = vmatpush1.msra.mxu0 0.0
      %8129 = vmatprep.subr.mxu0 0.0
      %8130 = vmatpush1.msra.mxu0 0.0
      %8131 = vmatprep.subr.mxu0 0.0
      %8132 = vmatpush1.msra.mxu0 0.0
      %8133 = vmatprep.subr.mxu0 0.0
      %8134 = vmatpush1.msra.mxu0 0.0
      %8135 = vmatprep.subr.mxu0 0.0
      %8136 = vmatpush1.msra.mxu0 0.0
      %8137 = vmatprep.subr.mxu0 0.0
      %8138 = vmatpush1.msra.mxu0 0.0
      %8139 = vmatprep.subr.mxu0 0.0
      %8140 = vmatpush1.msra.mxu0 0.0
      %8141 = vmatprep.subr.mxu0 0.0
      %8142 = vmatpush1.msra.mxu0 0.0
      %8143 = vmatprep.subr.mxu0 0.0
      %8144 = vmatpush1.msra.mxu0 0.0
      %8145 = vmatprep.subr.mxu0 0.0
      %8146 = vmatpush1.msra.mxu0 0.0
      %8147 = vmatprep.mubr.f32.mxu0 0.0
      %v8148 = vand.u32 %v4771, 4294901760
      %8149 = vmatmul.mubr.f32.gmra.mrb[0].mxu0 %v8148
      %v8150 = vpop.f32.mrb[0].mxu0
      %v8151 = vadd.f32 %v7880, %v8150
      %v8152 = vpop.f32.mrb[0].mxu0
      %8153 = vmatprep.mubr.f32.mxu0 0.0
      %v8154 = vand.u32 %v4774, 4294901760
      %8155 = vmatmul.mubr.f32.gmra.mrb[0].mxu0 %v8154
      %v8156 = vpop.f32.mrb[0].mxu0
      %v8157 = vadd.f32 %v7890, %v8156
      %v8158 = vpop.f32.mrb[0].mxu0
      %8159 = vmatprep.mubr.f32.mxu0 0.0
      %v8160 = vand.u32 %v4777, 4294901760
      %8161 = vmatmul.mubr.f32.gmra.mrb[0].mxu0 %v8160
      %v8162 = vpop.f32.mrb[0].mxu0
      %v8163 = vadd.f32 %v7900, %v8162
      %v8164 = vpop.f32.mrb[0].mxu0
      %8165 = vmatprep.mubr.f32.mxu0 0.0
      %v8166 = vand.u32 %v4780, 4294901760
      %8167 = vmatmul.mubr.f32.gmra.mrb[0].mxu0 %v8166
      %v8168 = vpop.f32.mrb[0].mxu0
      %v8169 = vadd.f32 %v7910, %v8168
      %v8170 = vpop.f32.mrb[0].mxu0
      %8171 = vmatprep.mubr.f32.mxu0 0.0
      %v8172 = vand.u32 %v4783, 4294901760
      %8173 = vmatmul.mubr.f32.gmra.mrb[0].mxu0 %v8172
      %v8174 = vpop.f32.mrb[0].mxu0
      %v8175 = vadd.f32 %v7920, %v8174
      %v8176 = vpop.f32.mrb[0].mxu0
      %8177 = vmatprep.mubr.f32.mxu0 0.0
      %v8178 = vand.u32 %v4786, 4294901760
      %8179 = vmatmul.mubr.f32.gmra.mrb[0].mxu0 %v8178
      %v8180 = vpop.f32.mrb[0].mxu0
      %v8181 = vadd.f32 %v7930, %v8180
      %v8182 = vpop.f32.mrb[0].mxu0
      %8183 = vmatprep.mubr.f32.mxu0 0.0
      %v8184 = vand.u32 %v4789, 4294901760
      %8185 = vmatmul.mubr.f32.gmra.mrb[0].mxu0 %v8184
      %v8186 = vpop.f32.mrb[0].mxu0
      %v8187 = vadd.f32 %v7940, %v8186
      %v8188 = vpop.f32.mrb[0].mxu0
      %8189 = vmatprep.mubr.f32.mxu0 0.0
      %v8190 = vand.u32 %v4792, 4294901760
      %8191 = vmatmul.mubr.f32.gmra.mrb[0].mxu0 %v8190
      %v8192 = vpop.f32.mrb[0].mxu0
      %v8193 = vadd.f32 %v7950, %v8192
      %v8194 = vpop.f32.mrb[0].mxu0
      %8195 = vmatprep.mubr.f32.mxu0 0.0
      %v8196 = vand.u32 %v4795, 4294901760
      %8197 = vmatmul.mubr.f32.gmra.mrb[0].mxu0 %v8196
      %v8198 = vpop.f32.mrb[0].mxu0
      %v8199 = vadd.f32 %v7960, %v8198
      %v8200 = vpop.f32.mrb[0].mxu0
      %8201 = vmatprep.mubr.f32.mxu0 0.0
      %v8202 = vand.u32 %v4798, 4294901760
      %8203 = vmatmul.mubr.f32.gmra.mrb[0].mxu0 %v8202
      %v8204 = vpop.f32.mrb[0].mxu0
      %v8205 = vadd.f32 %v7970, %v8204
      %v8206 = vpop.f32.mrb[0].mxu0
      %8207 = vmatprep.mubr.f32.mxu0 0.0
      %v8208 = vand.u32 %v4801, 4294901760
      %8209 = vmatmul.mubr.f32.gmra.mrb[0].mxu0 %v8208
      %v8210 = vpop.f32.mrb[0].mxu0
      %v8211 = vadd.f32 %v7980, %v8210
      %v8212 = vpop.f32.mrb[0].mxu0
      %8213 = vmatprep.mubr.f32.mxu0 0.0
      %v8214 = vand.u32 %v4804, 4294901760
      %8215 = vmatmul.mubr.f32.gmra.mrb[0].mxu0 %v8214
      %v8216 = vpop.f32.mrb[0].mxu0
      %v8217 = vadd.f32 %v7990, %v8216
      %v8218 = vpop.f32.mrb[0].mxu0
      %8219 = vmatprep.mubr.f32.mxu0 0.0
      %v8220 = vand.u32 %v4807, 4294901760
      %8221 = vmatmul.mubr.f32.gmra.mrb[0].mxu0 %v8220
      %v8222 = vpop.f32.mrb[0].mxu0
      %v8223 = vadd.f32 %v8000, %v8222
      %v8224 = vpop.f32.mrb[0].mxu0
      %8225 = vmatprep.mubr.f32.mxu0 0.0
      %v8226 = vand.u32 %v4810, 4294901760
      %8227 = vmatmul.mubr.f32.gmra.mrb[0].mxu0 %v8226
      %v8228 = vpop.f32.mrb[0].mxu0
      %v8229 = vadd.f32 %v8010, %v8228
      %v8230 = vpop.f32.mrb[0].mxu0
      %8231 = vmatprep.mubr.f32.mxu0 0.0
      %v8232 = vand.u32 %v4813, 4294901760
      %8233 = vmatmul.mubr.f32.gmra.mrb[0].mxu0 %v8232
      %v8234 = vpop.f32.mrb[0].mxu0
      %v8235 = vadd.f32 %v8020, %v8234
      %v8236 = vpop.f32.mrb[0].mxu0
      %8237 = vmatprep.mubr.f32.mxu0 0.0
      %v8238 = vand.u32 %v4816, 4294901760
      %8239 = vmatmul.mubr.f32.gmra.mrb[0].mxu0 %v8238
      %v8240 = vpop.f32.mrb[0].mxu0
      %v8241 = vadd.f32 %v8030, %v8240
      %v8242 = vpop.f32.mrb[0].mxu0
      %8243 = vmatprep.mubr.f32.mxu0 0.0
      %v8244 = vand.u32 %v4819, 4294901760
      %8245 = vmatmul.mubr.f32.gmra.mrb[0].mxu0 %v8244
      %v8246 = vpop.f32.mrb[0].mxu0
      %v8247 = vadd.f32 %v8040, %v8246
      %v8248 = vpop.f32.mrb[0].mxu0
      %8249 = vmatprep.mubr.f32.mxu0 0.0
      %v8250 = vand.u32 %v4822, 4294901760
      %8251 = vmatmul.mubr.f32.gmra.mrb[0].mxu0 %v8250
      %v8252 = vpop.f32.mrb[0].mxu0
      %v8253 = vadd.f32 %v8050, %v8252
      %v8254 = vpop.f32.mrb[0].mxu0
      %8255 = vmatprep.mubr.f32.mxu0 0.0
      %v8256 = vand.u32 %v4825, 4294901760
      %8257 = vmatmul.mubr.f32.gmra.mrb[0].mxu0 %v8256
      %v8258 = vpop.f32.mrb[0].mxu0
      %v8259 = vadd.f32 %v8060, %v8258
      %v8260 = vpop.f32.mrb[0].mxu0
      %8261 = vdwg.mxu0
      %8262 = vmatprep.subr.mxu0 0.0
      %v8263 = vand.u32 %v6347, 4294901760
      %v8264 = vsub.f32 %v6347, %v8263
      %8265 = vmatpush1.msra.mxu0 %v8264
      %8266 = vmatprep.subr.mxu0 0.0
      %v8267 = vand.u32 %v6348, 4294901760
      %v8268 = vsub.f32 %v6348, %v8267
      %8269 = vmatpush1.msra.mxu0 %v8268
      %8270 = vmatprep.subr.mxu0 0.0
      %v8271 = vand.u32 %v6349, 4294901760
      %v8272 = vsub.f32 %v6349, %v8271
      %8273 = vmatpush1.msra.mxu0 %v8272
      %8274 = vmatprep.subr.mxu0 0.0
      %v8275 = vand.u32 %v6350, 4294901760
      %v8276 = vsub.f32 %v6350, %v8275
      %8277 = vmatpush1.msra.mxu0 %v8276
      %8278 = vmatprep.subr.mxu0 0.0
      %8279 = vmatpush1.msra.mxu0 0.0
      %8280 = vmatprep.subr.mxu0 0.0
      %8281 = vmatpush1.msra.mxu0 0.0
      %8282 = vmatprep.subr.mxu0 0.0
      %8283 = vmatpush1.msra.mxu0 0.0
      %8284 = vmatprep.subr.mxu0 0.0
      %8285 = vmatpush1.msra.mxu0 0.0
      %8286 = vmatprep.subr.mxu0 0.0
      %8287 = vmatpush1.msra.mxu0 0.0
      %8288 = vmatprep.subr.mxu0 0.0
      %8289 = vmatpush1.msra.mxu0 0.0
      %8290 = vmatprep.subr.mxu0 0.0
      %8291 = vmatpush1.msra.mxu0 0.0
      %8292 = vmatprep.subr.mxu0 0.0
      %8293 = vmatpush1.msra.mxu0 0.0
      %8294 = vmatprep.subr.mxu0 0.0
      %8295 = vmatpush1.msra.mxu0 0.0
      %8296 = vmatprep.subr.mxu0 0.0
      %8297 = vmatpush1.msra.mxu0 0.0
      %8298 = vmatprep.subr.mxu0 0.0
      %8299 = vmatpush1.msra.mxu0 0.0
      %8300 = vmatprep.subr.mxu0 0.0
      %8301 = vmatpush1.msra.mxu0 0.0
      %8302 = vmatprep.subr.mxu0 0.0
      %8303 = vmatpush1.msra.mxu0 0.0
      %8304 = vmatprep.subr.mxu0 0.0
      %8305 = vmatpush1.msra.mxu0 0.0
      %8306 = vmatprep.subr.mxu0 0.0
      %8307 = vmatpush1.msra.mxu0 0.0
      %8308 = vmatprep.subr.mxu0 0.0
      %8309 = vmatpush1.msra.mxu0 0.0
      %8310 = vmatprep.subr.mxu0 0.0
      %8311 = vmatpush1.msra.mxu0 0.0
      %8312 = vmatprep.subr.mxu0 0.0
      %8313 = vmatpush1.msra.mxu0 0.0
      %8314 = vmatprep.subr.mxu0 0.0
      %8315 = vmatpush1.msra.mxu0 0.0
      %8316 = vmatprep.subr.mxu0 0.0
      %8317 = vmatpush1.msra.mxu0 0.0
      %8318 = vmatprep.subr.mxu0 0.0
      %8319 = vmatpush1.msra.mxu0 0.0
      %8320 = vmatprep.subr.mxu0 0.0
      %8321 = vmatpush1.msra.mxu0 0.0
      %8322 = vmatprep.subr.mxu0 0.0
      %8323 = vmatpush1.msra.mxu0 0.0
      %8324 = vmatprep.subr.mxu0 0.0
      %8325 = vmatpush1.msra.mxu0 0.0
      %8326 = vmatprep.subr.mxu0 0.0
      %8327 = vmatpush1.msra.mxu0 0.0
      %8328 = vmatprep.subr.mxu0 0.0
      %8329 = vmatpush1.msra.mxu0 0.0
      %8330 = vmatprep.subr.mxu0 0.0
      %8331 = vmatpush1.msra.mxu0 0.0
      %8332 = vmatprep.subr.mxu0 0.0
      %8333 = vmatpush1.msra.mxu0 0.0
      %8334 = vmatprep.mubr.f32.mxu0 0.0
      %v8335 = vand.u32 %v4771, 4294901760
      %v8336 = vsub.f32 %v4771, %v8335
      %8337 = vmatmul.mubr.f32.gmra.mrb[0].mxu0 %v8336
      %v8338 = vpop.f32.mrb[0].mxu0
      %v8339 = vadd.f32 %v8151, %v8338
      %v8340 = vpop.f32.mrb[0].mxu0
      %8341 = vmatprep.mubr.f32.mxu0 0.0
      %v8342 = vand.u32 %v4774, 4294901760
      %v8343 = vsub.f32 %v4774, %v8342
      %8344 = vmatmul.mubr.f32.gmra.mrb[0].mxu0 %v8343
      %v8345 = vpop.f32.mrb[0].mxu0
      %v8346 = vadd.f32 %v8157, %v8345
      %v8347 = vpop.f32.mrb[0].mxu0
      %8348 = vmatprep.mubr.f32.mxu0 0.0
      %v8349 = vand.u32 %v4777, 4294901760
      %v8350 = vsub.f32 %v4777, %v8349
      %8351 = vmatmul.mubr.f32.gmra.mrb[0].mxu0 %v8350
      %v8352 = vpop.f32.mrb[0].mxu0
      %v8353 = vadd.f32 %v8163, %v8352
      %v8354 = vpop.f32.mrb[0].mxu0
      %8355 = vmatprep.mubr.f32.mxu0 0.0
      %v8356 = vand.u32 %v4780, 4294901760
      %v8357 = vsub.f32 %v4780, %v8356
      %8358 = vmatmul.mubr.f32.gmra.mrb[0].mxu0 %v8357
      %v8359 = vpop.f32.mrb[0].mxu0
      %v8360 = vadd.f32 %v8169, %v8359
      %v8361 = vpop.f32.mrb[0].mxu0
      %8362 = vmatprep.mubr.f32.mxu0 0.0
      %v8363 = vand.u32 %v4783, 4294901760
      %v8364 = vsub.f32 %v4783, %v8363
      %8365 = vmatmul.mubr.f32.gmra.mrb[0].mxu0 %v8364
      %v8366 = vpop.f32.mrb[0].mxu0
      %v8367 = vadd.f32 %v8175, %v8366
      %v8368 = vpop.f32.mrb[0].mxu0
      %8369 = vmatprep.mubr.f32.mxu0 0.0
      %v8370 = vand.u32 %v4786, 4294901760
      %v8371 = vsub.f32 %v4786, %v8370
      %8372 = vmatmul.mubr.f32.gmra.mrb[0].mxu0 %v8371
      %v8373 = vpop.f32.mrb[0].mxu0
      %v8374 = vadd.f32 %v8181, %v8373
      %v8375 = vpop.f32.mrb[0].mxu0
      %8376 = vmatprep.mubr.f32.mxu0 0.0
      %v8377 = vand.u32 %v4789, 4294901760
      %v8378 = vsub.f32 %v4789, %v8377
      %8379 = vmatmul.mubr.f32.gmra.mrb[0].mxu0 %v8378
      %v8380 = vpop.f32.mrb[0].mxu0
      %v8381 = vadd.f32 %v8187, %v8380
      %v8382 = vpop.f32.mrb[0].mxu0
      %8383 = vmatprep.mubr.f32.mxu0 0.0
      %v8384 = vand.u32 %v4792, 4294901760
      %v8385 = vsub.f32 %v4792, %v8384
      %8386 = vmatmul.mubr.f32.gmra.mrb[0].mxu0 %v8385
      %v8387 = vpop.f32.mrb[0].mxu0
      %v8388 = vadd.f32 %v8193, %v8387
      %v8389 = vpop.f32.mrb[0].mxu0
      %8390 = vmatprep.mubr.f32.mxu0 0.0
      %v8391 = vand.u32 %v4795, 4294901760
      %v8392 = vsub.f32 %v4795, %v8391
      %8393 = vmatmul.mubr.f32.gmra.mrb[0].mxu0 %v8392
      %v8394 = vpop.f32.mrb[0].mxu0
      %v8395 = vadd.f32 %v8199, %v8394
      %v8396 = vpop.f32.mrb[0].mxu0
      %8397 = vmatprep.mubr.f32.mxu0 0.0
      %v8398 = vand.u32 %v4798, 4294901760
      %v8399 = vsub.f32 %v4798, %v8398
      %8400 = vmatmul.mubr.f32.gmra.mrb[0].mxu0 %v8399
      %v8401 = vpop.f32.mrb[0].mxu0
      %v8402 = vadd.f32 %v8205, %v8401
      %v8403 = vpop.f32.mrb[0].mxu0
      %8404 = vmatprep.mubr.f32.mxu0 0.0
      %v8405 = vand.u32 %v4801, 4294901760
      %v8406 = vsub.f32 %v4801, %v8405
      %8407 = vmatmul.mubr.f32.gmra.mrb[0].mxu0 %v8406
      %v8408 = vpop.f32.mrb[0].mxu0
      %v8409 = vadd.f32 %v8211, %v8408
      %v8410 = vpop.f32.mrb[0].mxu0
      %8411 = vmatprep.mubr.f32.mxu0 0.0
      %v8412 = vand.u32 %v4804, 4294901760
      %v8413 = vsub.f32 %v4804, %v8412
      %8414 = vmatmul.mubr.f32.gmra.mrb[0].mxu0 %v8413
      %v8415 = vpop.f32.mrb[0].mxu0
      %v8416 = vadd.f32 %v8217, %v8415
      %v8417 = vpop.f32.mrb[0].mxu0
      %8418 = vmatprep.mubr.f32.mxu0 0.0
      %v8419 = vand.u32 %v4807, 4294901760
      %v8420 = vsub.f32 %v4807, %v8419
      %8421 = vmatmul.mubr.f32.gmra.mrb[0].mxu0 %v8420
      %v8422 = vpop.f32.mrb[0].mxu0
      %v8423 = vadd.f32 %v8223, %v8422
      %v8424 = vpop.f32.mrb[0].mxu0
      %8425 = vmatprep.mubr.f32.mxu0 0.0
      %v8426 = vand.u32 %v4810, 4294901760
      %v8427 = vsub.f32 %v4810, %v8426
      %8428 = vmatmul.mubr.f32.gmra.mrb[0].mxu0 %v8427
      %v8429 = vpop.f32.mrb[0].mxu0
      %v8430 = vadd.f32 %v8229, %v8429
      %v8431 = vpop.f32.mrb[0].mxu0
      %8432 = vmatprep.mubr.f32.mxu0 0.0
      %v8433 = vand.u32 %v4813, 4294901760
      %v8434 = vsub.f32 %v4813, %v8433
      %8435 = vmatmul.mubr.f32.gmra.mrb[0].mxu0 %v8434
      %v8436 = vpop.f32.mrb[0].mxu0
      %v8437 = vadd.f32 %v8235, %v8436
      %v8438 = vpop.f32.mrb[0].mxu0
      %8439 = vmatprep.mubr.f32.mxu0 0.0
      %v8440 = vand.u32 %v4816, 4294901760
      %v8441 = vsub.f32 %v4816, %v8440
      %8442 = vmatmul.mubr.f32.gmra.mrb[0].mxu0 %v8441
      %v8443 = vpop.f32.mrb[0].mxu0
      %v8444 = vadd.f32 %v8241, %v8443
      %v8445 = vpop.f32.mrb[0].mxu0
      %8446 = vmatprep.mubr.f32.mxu0 0.0
      %v8447 = vand.u32 %v4819, 4294901760
      %v8448 = vsub.f32 %v4819, %v8447
      %8449 = vmatmul.mubr.f32.gmra.mrb[0].mxu0 %v8448
      %v8450 = vpop.f32.mrb[0].mxu0
      %v8451 = vadd.f32 %v8247, %v8450
      %v8452 = vpop.f32.mrb[0].mxu0
      %8453 = vmatprep.mubr.f32.mxu0 0.0
      %v8454 = vand.u32 %v4822, 4294901760
      %v8455 = vsub.f32 %v4822, %v8454
      %8456 = vmatmul.mubr.f32.gmra.mrb[0].mxu0 %v8455
      %v8457 = vpop.f32.mrb[0].mxu0
      %v8458 = vadd.f32 %v8253, %v8457
      %v8459 = vpop.f32.mrb[0].mxu0
      %8460 = vmatprep.mubr.f32.mxu0 0.0
      %v8461 = vand.u32 %v4825, 4294901760
      %v8462 = vsub.f32 %v4825, %v8461
      %8463 = vmatmul.mubr.f32.gmra.mrb[0].mxu0 %v8462
      %v8464 = vpop.f32.mrb[0].mxu0
      %v8465 = vadd.f32 %v8259, %v8464
      %v8466 = vpop.f32.mrb[0].mxu0
      %8467 = vdwg.mxu0
      %8468 = vmatprep.subr.mxu0 0.0
      %v8469 = vand.u32 %v6347, 4294901760
      %8470 = vmatpush1.msra.mxu0 %v8469
      %8471 = vmatprep.subr.mxu0 0.0
      %v8472 = vand.u32 %v6348, 4294901760
      %8473 = vmatpush1.msra.mxu0 %v8472
      %8474 = vmatprep.subr.mxu0 0.0
      %v8475 = vand.u32 %v6349, 4294901760
      %8476 = vmatpush1.msra.mxu0 %v8475
      %8477 = vmatprep.subr.mxu0 0.0
      %v8478 = vand.u32 %v6350, 4294901760
      %8479 = vmatpush1.msra.mxu0 %v8478
      %8480 = vmatprep.subr.mxu0 0.0
      %8481 = vmatpush1.msra.mxu0 0.0
      %8482 = vmatprep.subr.mxu0 0.0
      %8483 = vmatpush1.msra.mxu0 0.0
      %8484 = vmatprep.subr.mxu0 0.0
      %8485 = vmatpush1.msra.mxu0 0.0
      %8486 = vmatprep.subr.mxu0 0.0
      %8487 = vmatpush1.msra.mxu0 0.0
      %8488 = vmatprep.subr.mxu0 0.0
      %8489 = vmatpush1.msra.mxu0 0.0
      %8490 = vmatprep.subr.mxu0 0.0
      %8491 = vmatpush1.msra.mxu0 0.0
      %8492 = vmatprep.subr.mxu0 0.0
      %8493 = vmatpush1.msra.mxu0 0.0
      %8494 = vmatprep.subr.mxu0 0.0
      %8495 = vmatpush1.msra.mxu0 0.0
      %8496 = vmatprep.subr.mxu0 0.0
      %8497 = vmatpush1.msra.mxu0 0.0
      %8498 = vmatprep.subr.mxu0 0.0
      %8499 = vmatpush1.msra.mxu0 0.0
      %8500 = vmatprep.subr.mxu0 0.0
      %8501 = vmatpush1.msra.mxu0 0.0
      %8502 = vmatprep.subr.mxu0 0.0
      %8503 = vmatpush1.msra.mxu0 0.0
      %8504 = vmatprep.subr.mxu0 0.0
      %8505 = vmatpush1.msra.mxu0 0.0
      %8506 = vmatprep.subr.mxu0 0.0
      %8507 = vmatpush1.msra.mxu0 0.0
      %8508 = vmatprep.subr.mxu0 0.0
      %8509 = vmatpush1.msra.mxu0 0.0
      %8510 = vmatprep.subr.mxu0 0.0
      %8511 = vmatpush1.msra.mxu0 0.0
      %8512 = vmatprep.subr.mxu0 0.0
      %8513 = vmatpush1.msra.mxu0 0.0
      %8514 = vmatprep.subr.mxu0 0.0
      %8515 = vmatpush1.msra.mxu0 0.0
      %8516 = vmatprep.subr.mxu0 0.0
      %8517 = vmatpush1.msra.mxu0 0.0
      %8518 = vmatprep.subr.mxu0 0.0
      %8519 = vmatpush1.msra.mxu0 0.0
      %8520 = vmatprep.subr.mxu0 0.0
      %8521 = vmatpush1.msra.mxu0 0.0
      %8522 = vmatprep.subr.mxu0 0.0
      %8523 = vmatpush1.msra.mxu0 0.0
      %8524 = vmatprep.subr.mxu0 0.0
      %8525 = vmatpush1.msra.mxu0 0.0
      %8526 = vmatprep.subr.mxu0 0.0
      %8527 = vmatpush1.msra.mxu0 0.0
      %8528 = vmatprep.subr.mxu0 0.0
      %8529 = vmatpush1.msra.mxu0 0.0
      %8530 = vmatprep.subr.mxu0 0.0
      %8531 = vmatpush1.msra.mxu0 0.0
      %8532 = vmatprep.subr.mxu0 0.0
      %8533 = vmatpush1.msra.mxu0 0.0
      %8534 = vmatprep.subr.mxu0 0.0
      %8535 = vmatpush1.msra.mxu0 0.0
      %8536 = vmatprep.mubr.f32.mxu0 0.0
      %v8537 = vand.u32 %v4771, 4294901760
      %v8538 = vsub.f32 %v4771, %v8537
      %v8539 = vand.u32 %v8538, 4294901760
      %8540 = vmatmul.mubr.f32.gmra.mrb[0].mxu0 %v8539
      %v8541 = vpop.f32.mrb[0].mxu0
      %v8542 = vadd.f32 %v8339, %v8541
      %v8543 = vpop.f32.mrb[0].mxu0
      %8544 = vmatprep.mubr.f32.mxu0 0.0
      %v8545 = vand.u32 %v4774, 4294901760
      %v8546 = vsub.f32 %v4774, %v8545
      %v8547 = vand.u32 %v8546, 4294901760
      %8548 = vmatmul.mubr.f32.gmra.mrb[0].mxu0 %v8547
      %v8549 = vpop.f32.mrb[0].mxu0
      %v8550 = vadd.f32 %v8346, %v8549
      %v8551 = vpop.f32.mrb[0].mxu0
      %8552 = vmatprep.mubr.f32.mxu0 0.0
      %v8553 = vand.u32 %v4777, 4294901760
      %v8554 = vsub.f32 %v4777, %v8553
      %v8555 = vand.u32 %v8554, 4294901760
      %8556 = vmatmul.mubr.f32.gmra.mrb[0].mxu0 %v8555
      %v8557 = vpop.f32.mrb[0].mxu0
      %v8558 = vadd.f32 %v8353, %v8557
      %v8559 = vpop.f32.mrb[0].mxu0
      %8560 = vmatprep.mubr.f32.mxu0 0.0
      %v8561 = vand.u32 %v4780, 4294901760
      %v8562 = vsub.f32 %v4780, %v8561
      %v8563 = vand.u32 %v8562, 4294901760
      %8564 = vmatmul.mubr.f32.gmra.mrb[0].mxu0 %v8563
      %v8565 = vpop.f32.mrb[0].mxu0
      %v8566 = vadd.f32 %v8360, %v8565
      %v8567 = vpop.f32.mrb[0].mxu0
      %8568 = vmatprep.mubr.f32.mxu0 0.0
      %v8569 = vand.u32 %v4783, 4294901760
      %v8570 = vsub.f32 %v4783, %v8569
      %v8571 = vand.u32 %v8570, 4294901760
      %8572 = vmatmul.mubr.f32.gmra.mrb[0].mxu0 %v8571
      %v8573 = vpop.f32.mrb[0].mxu0
      %v8574 = vadd.f32 %v8367, %v8573
      %v8575 = vpop.f32.mrb[0].mxu0
      %8576 = vmatprep.mubr.f32.mxu0 0.0
      %v8577 = vand.u32 %v4786, 4294901760
      %v8578 = vsub.f32 %v4786, %v8577
      %v8579 = vand.u32 %v8578, 4294901760
      %8580 = vmatmul.mubr.f32.gmra.mrb[0].mxu0 %v8579
      %v8581 = vpop.f32.mrb[0].mxu0
      %v8582 = vadd.f32 %v8374, %v8581
      %v8583 = vpop.f32.mrb[0].mxu0
      %8584 = vmatprep.mubr.f32.mxu0 0.0
      %v8585 = vand.u32 %v4789, 4294901760
      %v8586 = vsub.f32 %v4789, %v8585
      %v8587 = vand.u32 %v8586, 4294901760
      %8588 = vmatmul.mubr.f32.gmra.mrb[0].mxu0 %v8587
      %v8589 = vpop.f32.mrb[0].mxu0
      %v8590 = vadd.f32 %v8381, %v8589
      %v8591 = vpop.f32.mrb[0].mxu0
      %8592 = vmatprep.mubr.f32.mxu0 0.0
      %v8593 = vand.u32 %v4792, 4294901760
      %v8594 = vsub.f32 %v4792, %v8593
      %v8595 = vand.u32 %v8594, 4294901760
      %8596 = vmatmul.mubr.f32.gmra.mrb[0].mxu0 %v8595
      %v8597 = vpop.f32.mrb[0].mxu0
      %v8598 = vadd.f32 %v8388, %v8597
      %v8599 = vpop.f32.mrb[0].mxu0
      %8600 = vmatprep.mubr.f32.mxu0 0.0
      %v8601 = vand.u32 %v4795, 4294901760
      %v8602 = vsub.f32 %v4795, %v8601
      %v8603 = vand.u32 %v8602, 4294901760
      %8604 = vmatmul.mubr.f32.gmra.mrb[0].mxu0 %v8603
      %v8605 = vpop.f32.mrb[0].mxu0
      %v8606 = vadd.f32 %v8395, %v8605
      %v8607 = vpop.f32.mrb[0].mxu0
      %8608 = vmatprep.mubr.f32.mxu0 0.0
      %v8609 = vand.u32 %v4798, 4294901760
      %v8610 = vsub.f32 %v4798, %v8609
      %v8611 = vand.u32 %v8610, 4294901760
      %8612 = vmatmul.mubr.f32.gmra.mrb[0].mxu0 %v8611
      %v8613 = vpop.f32.mrb[0].mxu0
      %v8614 = vadd.f32 %v8402, %v8613
      %v8615 = vpop.f32.mrb[0].mxu0
      %8616 = vmatprep.mubr.f32.mxu0 0.0
      %v8617 = vand.u32 %v4801, 4294901760
      %v8618 = vsub.f32 %v4801, %v8617
      %v8619 = vand.u32 %v8618, 4294901760
      %8620 = vmatmul.mubr.f32.gmra.mrb[0].mxu0 %v8619
      %v8621 = vpop.f32.mrb[0].mxu0
      %v8622 = vadd.f32 %v8409, %v8621
      %v8623 = vpop.f32.mrb[0].mxu0
      %8624 = vmatprep.mubr.f32.mxu0 0.0
      %v8625 = vand.u32 %v4804, 4294901760
      %v8626 = vsub.f32 %v4804, %v8625
      %v8627 = vand.u32 %v8626, 4294901760
      %8628 = vmatmul.mubr.f32.gmra.mrb[0].mxu0 %v8627
      %v8629 = vpop.f32.mrb[0].mxu0
      %v8630 = vadd.f32 %v8416, %v8629
      %v8631 = vpop.f32.mrb[0].mxu0
      %8632 = vmatprep.mubr.f32.mxu0 0.0
      %v8633 = vand.u32 %v4807, 4294901760
      %v8634 = vsub.f32 %v4807, %v8633
      %v8635 = vand.u32 %v8634, 4294901760
      %8636 = vmatmul.mubr.f32.gmra.mrb[0].mxu0 %v8635
      %v8637 = vpop.f32.mrb[0].mxu0
      %v8638 = vadd.f32 %v8423, %v8637
      %v8639 = vpop.f32.mrb[0].mxu0
      %8640 = vmatprep.mubr.f32.mxu0 0.0
      %v8641 = vand.u32 %v4810, 4294901760
      %v8642 = vsub.f32 %v4810, %v8641
      %v8643 = vand.u32 %v8642, 4294901760
      %8644 = vmatmul.mubr.f32.gmra.mrb[0].mxu0 %v8643
      %v8645 = vpop.f32.mrb[0].mxu0
      %v8646 = vadd.f32 %v8430, %v8645
      %v8647 = vpop.f32.mrb[0].mxu0
      %8648 = vmatprep.mubr.f32.mxu0 0.0
      %v8649 = vand.u32 %v4813, 4294901760
      %v8650 = vsub.f32 %v4813, %v8649
      %v8651 = vand.u32 %v8650, 4294901760
      %8652 = vmatmul.mubr.f32.gmra.mrb[0].mxu0 %v8651
      %v8653 = vpop.f32.mrb[0].mxu0
      %v8654 = vadd.f32 %v8437, %v8653
      %v8655 = vpop.f32.mrb[0].mxu0
      %8656 = vmatprep.mubr.f32.mxu0 0.0
      %v8657 = vand.u32 %v4816, 4294901760
      %v8658 = vsub.f32 %v4816, %v8657
      %v8659 = vand.u32 %v8658, 4294901760
      %8660 = vmatmul.mubr.f32.gmra.mrb[0].mxu0 %v8659
      %v8661 = vpop.f32.mrb[0].mxu0
      %v8662 = vadd.f32 %v8444, %v8661
      %v8663 = vpop.f32.mrb[0].mxu0
      %8664 = vmatprep.mubr.f32.mxu0 0.0
      %v8665 = vand.u32 %v4819, 4294901760
      %v8666 = vsub.f32 %v4819, %v8665
      %v8667 = vand.u32 %v8666, 4294901760
      %8668 = vmatmul.mubr.f32.gmra.mrb[0].mxu0 %v8667
      %v8669 = vpop.f32.mrb[0].mxu0
      %v8670 = vadd.f32 %v8451, %v8669
      %v8671 = vpop.f32.mrb[0].mxu0
      %8672 = vmatprep.mubr.f32.mxu0 0.0
      %v8673 = vand.u32 %v4822, 4294901760
      %v8674 = vsub.f32 %v4822, %v8673
      %v8675 = vand.u32 %v8674, 4294901760
      %8676 = vmatmul.mubr.f32.gmra.mrb[0].mxu0 %v8675
      %v8677 = vpop.f32.mrb[0].mxu0
      %v8678 = vadd.f32 %v8458, %v8677
      %v8679 = vpop.f32.mrb[0].mxu0
      %8680 = vmatprep.mubr.f32.mxu0 0.0
      %v8681 = vand.u32 %v4825, 4294901760
      %v8682 = vsub.f32 %v4825, %v8681
      %v8683 = vand.u32 %v8682, 4294901760
      %8684 = vmatmul.mubr.f32.gmra.mrb[0].mxu0 %v8683
      %v8685 = vpop.f32.mrb[0].mxu0
      %v8686 = vadd.f32 %v8465, %v8685
      %v8687 = vpop.f32.mrb[0].mxu0
      %8688 = vdwg.mxu0
      %8689 = vmatprep.subr.mxu0 0.0
      %v8690 = vand.u32 %v6347, 4294901760
      %v8691 = vsub.f32 %v6347, %v8690
      %v8692 = vand.u32 %v8691, 4294901760
      %8693 = vmatpush1.msra.mxu0 %v8692
      %8694 = vmatprep.subr.mxu0 0.0
      %v8695 = vand.u32 %v6348, 4294901760
      %v8696 = vsub.f32 %v6348, %v8695
      %v8697 = vand.u32 %v8696, 4294901760
      %8698 = vmatpush1.msra.mxu0 %v8697
      %8699 = vmatprep.subr.mxu0 0.0
      %v8700 = vand.u32 %v6349, 4294901760
      %v8701 = vsub.f32 %v6349, %v8700
      %v8702 = vand.u32 %v8701, 4294901760
      %8703 = vmatpush1.msra.mxu0 %v8702
      %8704 = vmatprep.subr.mxu0 0.0
      %v8705 = vand.u32 %v6350, 4294901760
      %v8706 = vsub.f32 %v6350, %v8705
      %v8707 = vand.u32 %v8706, 4294901760
      %8708 = vmatpush1.msra.mxu0 %v8707
      %8709 = vmatprep.subr.mxu0 0.0
      %8710 = vmatpush1.msra.mxu0 0.0
      %8711 = vmatprep.subr.mxu0 0.0
      %8712 = vmatpush1.msra.mxu0 0.0
      %8713 = vmatprep.subr.mxu0 0.0
      %8714 = vmatpush1.msra.mxu0 0.0
      %8715 = vmatprep.subr.mxu0 0.0
      %8716 = vmatpush1.msra.mxu0 0.0
      %8717 = vmatprep.subr.mxu0 0.0
      %8718 = vmatpush1.msra.mxu0 0.0
      %8719 = vmatprep.subr.mxu0 0.0
      %8720 = vmatpush1.msra.mxu0 0.0
      %8721 = vmatprep.subr.mxu0 0.0
      %8722 = vmatpush1.msra.mxu0 0.0
      %8723 = vmatprep.subr.mxu0 0.0
      %8724 = vmatpush1.msra.mxu0 0.0
      %8725 = vmatprep.subr.mxu0 0.0
      %8726 = vmatpush1.msra.mxu0 0.0
      %8727 = vmatprep.subr.mxu0 0.0
      %8728 = vmatpush1.msra.mxu0 0.0
      %8729 = vmatprep.subr.mxu0 0.0
      %8730 = vmatpush1.msra.mxu0 0.0
      %8731 = vmatprep.subr.mxu0 0.0
      %8732 = vmatpush1.msra.mxu0 0.0
      %8733 = vmatprep.subr.mxu0 0.0
      %8734 = vmatpush1.msra.mxu0 0.0
      %8735 = vmatprep.subr.mxu0 0.0
      %8736 = vmatpush1.msra.mxu0 0.0
      %8737 = vmatprep.subr.mxu0 0.0
      %8738 = vmatpush1.msra.mxu0 0.0
      %8739 = vmatprep.subr.mxu0 0.0
      %8740 = vmatpush1.msra.mxu0 0.0
      %8741 = vmatprep.subr.mxu0 0.0
      %8742 = vmatpush1.msra.mxu0 0.0
      %8743 = vmatprep.subr.mxu0 0.0
      %8744 = vmatpush1.msra.mxu0 0.0
      %8745 = vmatprep.subr.mxu0 0.0
      %8746 = vmatpush1.msra.mxu0 0.0
      %8747 = vmatprep.subr.mxu0 0.0
      %8748 = vmatpush1.msra.mxu0 0.0
      %8749 = vmatprep.subr.mxu0 0.0
      %8750 = vmatpush1.msra.mxu0 0.0
      %8751 = vmatprep.subr.mxu0 0.0
      %8752 = vmatpush1.msra.mxu0 0.0
      %8753 = vmatprep.subr.mxu0 0.0
      %8754 = vmatpush1.msra.mxu0 0.0
      %8755 = vmatprep.subr.mxu0 0.0
      %8756 = vmatpush1.msra.mxu0 0.0
      %8757 = vmatprep.subr.mxu0 0.0
      %8758 = vmatpush1.msra.mxu0 0.0
      %8759 = vmatprep.subr.mxu0 0.0
      %8760 = vmatpush1.msra.mxu0 0.0
      %8761 = vmatprep.subr.mxu0 0.0
      %8762 = vmatpush1.msra.mxu0 0.0
      %8763 = vmatprep.subr.mxu0 0.0
      %8764 = vmatpush1.msra.mxu0 0.0
      %8765 = vmatprep.mubr.f32.mxu0 0.0
      %v8766 = vand.u32 %v4771, 4294901760
      %8767 = vmatmul.mubr.f32.gmra.mrb[0].mxu0 %v8766
      %v8768 = vpop.f32.mrb[0].mxu0
      %v8769 = vadd.f32 %v8542, %v8768
      %v8770 = vpop.f32.mrb[0].mxu0
      %8771 = vmatprep.mubr.f32.mxu0 0.0
      %v8772 = vand.u32 %v4774, 4294901760
      %8773 = vmatmul.mubr.f32.gmra.mrb[0].mxu0 %v8772
      %v8774 = vpop.f32.mrb[0].mxu0
      %v8775 = vadd.f32 %v8550, %v8774
      %v8776 = vpop.f32.mrb[0].mxu0
      %8777 = vmatprep.mubr.f32.mxu0 0.0
      %v8778 = vand.u32 %v4777, 4294901760
      %8779 = vmatmul.mubr.f32.gmra.mrb[0].mxu0 %v8778
      %v8780 = vpop.f32.mrb[0].mxu0
      %v8781 = vadd.f32 %v8558, %v8780
      %v8782 = vpop.f32.mrb[0].mxu0
      %8783 = vmatprep.mubr.f32.mxu0 0.0
      %v8784 = vand.u32 %v4780, 4294901760
      %8785 = vmatmul.mubr.f32.gmra.mrb[0].mxu0 %v8784
      %v8786 = vpop.f32.mrb[0].mxu0
      %v8787 = vadd.f32 %v8566, %v8786
      %v8788 = vpop.f32.mrb[0].mxu0
      %8789 = vmatprep.mubr.f32.mxu0 0.0
      %v8790 = vand.u32 %v4783, 4294901760
      %8791 = vmatmul.mubr.f32.gmra.mrb[0].mxu0 %v8790
      %v8792 = vpop.f32.mrb[0].mxu0
      %v8793 = vadd.f32 %v8574, %v8792
      %v8794 = vpop.f32.mrb[0].mxu0
      %8795 = vmatprep.mubr.f32.mxu0 0.0
      %v8796 = vand.u32 %v4786, 4294901760
      %8797 = vmatmul.mubr.f32.gmra.mrb[0].mxu0 %v8796
      %v8798 = vpop.f32.mrb[0].mxu0
      %v8799 = vadd.f32 %v8582, %v8798
      %v8800 = vpop.f32.mrb[0].mxu0
      %8801 = vmatprep.mubr.f32.mxu0 0.0
      %v8802 = vand.u32 %v4789, 4294901760
      %8803 = vmatmul.mubr.f32.gmra.mrb[0].mxu0 %v8802
      %v8804 = vpop.f32.mrb[0].mxu0
      %v8805 = vadd.f32 %v8590, %v8804
      %v8806 = vpop.f32.mrb[0].mxu0
      %8807 = vmatprep.mubr.f32.mxu0 0.0
      %v8808 = vand.u32 %v4792, 4294901760
      %8809 = vmatmul.mubr.f32.gmra.mrb[0].mxu0 %v8808
      %v8810 = vpop.f32.mrb[0].mxu0
      %v8811 = vadd.f32 %v8598, %v8810
      %v8812 = vpop.f32.mrb[0].mxu0
      %8813 = vmatprep.mubr.f32.mxu0 0.0
      %v8814 = vand.u32 %v4795, 4294901760
      %8815 = vmatmul.mubr.f32.gmra.mrb[0].mxu0 %v8814
      %v8816 = vpop.f32.mrb[0].mxu0
      %v8817 = vadd.f32 %v8606, %v8816
      %v8818 = vpop.f32.mrb[0].mxu0
      %8819 = vmatprep.mubr.f32.mxu0 0.0
      %v8820 = vand.u32 %v4798, 4294901760
      %8821 = vmatmul.mubr.f32.gmra.mrb[0].mxu0 %v8820
      %v8822 = vpop.f32.mrb[0].mxu0
      %v8823 = vadd.f32 %v8614, %v8822
      %v8824 = vpop.f32.mrb[0].mxu0
      %8825 = vmatprep.mubr.f32.mxu0 0.0
      %v8826 = vand.u32 %v4801, 4294901760
      %8827 = vmatmul.mubr.f32.gmra.mrb[0].mxu0 %v8826
      %v8828 = vpop.f32.mrb[0].mxu0
      %v8829 = vadd.f32 %v8622, %v8828
      %v8830 = vpop.f32.mrb[0].mxu0
      %8831 = vmatprep.mubr.f32.mxu0 0.0
      %v8832 = vand.u32 %v4804, 4294901760
      %8833 = vmatmul.mubr.f32.gmra.mrb[0].mxu0 %v8832
      %v8834 = vpop.f32.mrb[0].mxu0
      %v8835 = vadd.f32 %v8630, %v8834
      %v8836 = vpop.f32.mrb[0].mxu0
      %8837 = vmatprep.mubr.f32.mxu0 0.0
      %v8838 = vand.u32 %v4807, 4294901760
      %8839 = vmatmul.mubr.f32.gmra.mrb[0].mxu0 %v8838
      %v8840 = vpop.f32.mrb[0].mxu0
      %v8841 = vadd.f32 %v8638, %v8840
      %v8842 = vpop.f32.mrb[0].mxu0
      %8843 = vmatprep.mubr.f32.mxu0 0.0
      %v8844 = vand.u32 %v4810, 4294901760
      %8845 = vmatmul.mubr.f32.gmra.mrb[0].mxu0 %v8844
      %v8846 = vpop.f32.mrb[0].mxu0
      %v8847 = vadd.f32 %v8646, %v8846
      %v8848 = vpop.f32.mrb[0].mxu0
      %8849 = vmatprep.mubr.f32.mxu0 0.0
      %v8850 = vand.u32 %v4813, 4294901760
      %8851 = vmatmul.mubr.f32.gmra.mrb[0].mxu0 %v8850
      %v8852 = vpop.f32.mrb[0].mxu0
      %v8853 = vadd.f32 %v8654, %v8852
      %v8854 = vpop.f32.mrb[0].mxu0
      %8855 = vmatprep.mubr.f32.mxu0 0.0
      %v8856 = vand.u32 %v4816, 4294901760
      %8857 = vmatmul.mubr.f32.gmra.mrb[0].mxu0 %v8856
      %v8858 = vpop.f32.mrb[0].mxu0
      %v8859 = vadd.f32 %v8662, %v8858
      %v8860 = vpop.f32.mrb[0].mxu0
      %8861 = vmatprep.mubr.f32.mxu0 0.0
      %v8862 = vand.u32 %v4819, 4294901760
      %8863 = vmatmul.mubr.f32.gmra.mrb[0].mxu0 %v8862
      %v8864 = vpop.f32.mrb[0].mxu0
      %v8865 = vadd.f32 %v8670, %v8864
      %v8866 = vpop.f32.mrb[0].mxu0
      %8867 = vmatprep.mubr.f32.mxu0 0.0
      %v8868 = vand.u32 %v4822, 4294901760
      %8869 = vmatmul.mubr.f32.gmra.mrb[0].mxu0 %v8868
      %v8870 = vpop.f32.mrb[0].mxu0
      %v8871 = vadd.f32 %v8678, %v8870
      %v8872 = vpop.f32.mrb[0].mxu0
      %8873 = vmatprep.mubr.f32.mxu0 0.0
      %v8874 = vand.u32 %v4825, 4294901760
      %8875 = vmatmul.mubr.f32.gmra.mrb[0].mxu0 %v8874
      %v8876 = vpop.f32.mrb[0].mxu0
      %v8877 = vadd.f32 %v8686, %v8876
      %v8878 = vpop.f32.mrb[0].mxu0
      %8879 = vdwg.mxu0
      %8880 = vmatprep.subr.mxu0 0.0
      %v8881 = vand.u32 %v6347, 4294901760
      %8882 = vmatpush1.msra.mxu0 %v8881
      %8883 = vmatprep.subr.mxu0 0.0
      %v8884 = vand.u32 %v6348, 4294901760
      %8885 = vmatpush1.msra.mxu0 %v8884
      %8886 = vmatprep.subr.mxu0 0.0
      %v8887 = vand.u32 %v6349, 4294901760
      %8888 = vmatpush1.msra.mxu0 %v8887
      %8889 = vmatprep.subr.mxu0 0.0
      %v8890 = vand.u32 %v6350, 4294901760
      %8891 = vmatpush1.msra.mxu0 %v8890
      %8892 = vmatprep.subr.mxu0 0.0
      %8893 = vmatpush1.msra.mxu0 0.0
      %8894 = vmatprep.subr.mxu0 0.0
      %8895 = vmatpush1.msra.mxu0 0.0
      %8896 = vmatprep.subr.mxu0 0.0
      %8897 = vmatpush1.msra.mxu0 0.0
      %8898 = vmatprep.subr.mxu0 0.0
      %8899 = vmatpush1.msra.mxu0 0.0
      %8900 = vmatprep.subr.mxu0 0.0
      %8901 = vmatpush1.msra.mxu0 0.0
      %8902 = vmatprep.subr.mxu0 0.0
      %8903 = vmatpush1.msra.mxu0 0.0
      %8904 = vmatprep.subr.mxu0 0.0
      %8905 = vmatpush1.msra.mxu0 0.0
      %8906 = vmatprep.subr.mxu0 0.0
      %8907 = vmatpush1.msra.mxu0 0.0
      %8908 = vmatprep.subr.mxu0 0.0
      %8909 = vmatpush1.msra.mxu0 0.0
      %8910 = vmatprep.subr.mxu0 0.0
      %8911 = vmatpush1.msra.mxu0 0.0
      %8912 = vmatprep.subr.mxu0 0.0
      %8913 = vmatpush1.msra.mxu0 0.0
      %8914 = vmatprep.subr.mxu0 0.0
      %8915 = vmatpush1.msra.mxu0 0.0
      %8916 = vmatprep.subr.mxu0 0.0
      %8917 = vmatpush1.msra.mxu0 0.0
      %8918 = vmatprep.subr.mxu0 0.0
      %8919 = vmatpush1.msra.mxu0 0.0
      %8920 = vmatprep.subr.mxu0 0.0
      %8921 = vmatpush1.msra.mxu0 0.0
      %8922 = vmatprep.subr.mxu0 0.0
      %8923 = vmatpush1.msra.mxu0 0.0
      %8924 = vmatprep.subr.mxu0 0.0
      %8925 = vmatpush1.msra.mxu0 0.0
      %8926 = vmatprep.subr.mxu0 0.0
      %8927 = vmatpush1.msra.mxu0 0.0
      %8928 = vmatprep.subr.mxu0 0.0
      %8929 = vmatpush1.msra.mxu0 0.0
      %8930 = vmatprep.subr.mxu0 0.0
      %8931 = vmatpush1.msra.mxu0 0.0
      %8932 = vmatprep.subr.mxu0 0.0
      %8933 = vmatpush1.msra.mxu0 0.0
      %8934 = vmatprep.subr.mxu0 0.0
      %8935 = vmatpush1.msra.mxu0 0.0
      %8936 = vmatprep.subr.mxu0 0.0
      %8937 = vmatpush1.msra.mxu0 0.0
      %8938 = vmatprep.subr.mxu0 0.0
      %8939 = vmatpush1.msra.mxu0 0.0
      %8940 = vmatprep.subr.mxu0 0.0
      %8941 = vmatpush1.msra.mxu0 0.0
      %8942 = vmatprep.subr.mxu0 0.0
      %8943 = vmatpush1.msra.mxu0 0.0
      %8944 = vmatprep.subr.mxu0 0.0
      %8945 = vmatpush1.msra.mxu0 0.0
      %8946 = vmatprep.subr.mxu0 0.0
      %8947 = vmatpush1.msra.mxu0 0.0
      %8948 = vmatprep.mubr.f32.mxu0 0.0
      %v8949 = vand.u32 %v4771, 4294901760
      %8950 = vmatmul.mubr.f32.gmra.mrb[0].mxu0 %v8949
      %v8951 = vpop.f32.mrb[0].mxu0
      %v8952 = vadd.f32 %v8769, %v8951
      %v8953 = vpop.f32.mrb[0].mxu0
      %8954 = vmatprep.mubr.f32.mxu0 0.0
      %v8955 = vand.u32 %v4774, 4294901760
      %8956 = vmatmul.mubr.f32.gmra.mrb[0].mxu0 %v8955
      %v8957 = vpop.f32.mrb[0].mxu0
      %v8958 = vadd.f32 %v8775, %v8957
      %v8959 = vpop.f32.mrb[0].mxu0
      %8960 = vmatprep.mubr.f32.mxu0 0.0
      %v8961 = vand.u32 %v4777, 4294901760
      %8962 = vmatmul.mubr.f32.gmra.mrb[0].mxu0 %v8961
      %v8963 = vpop.f32.mrb[0].mxu0
      %v8964 = vadd.f32 %v8781, %v8963
      %v8965 = vpop.f32.mrb[0].mxu0
      %8966 = vmatprep.mubr.f32.mxu0 0.0
      %v8967 = vand.u32 %v4780, 4294901760
      %8968 = vmatmul.mubr.f32.gmra.mrb[0].mxu0 %v8967
      %v8969 = vpop.f32.mrb[0].mxu0
      %v8970 = vadd.f32 %v8787, %v8969
      %v8971 = vpop.f32.mrb[0].mxu0
      %8972 = vmatprep.mubr.f32.mxu0 0.0
      %v8973 = vand.u32 %v4783, 4294901760
      %8974 = vmatmul.mubr.f32.gmra.mrb[0].mxu0 %v8973
      %v8975 = vpop.f32.mrb[0].mxu0
      %v8976 = vadd.f32 %v8793, %v8975
      %v8977 = vpop.f32.mrb[0].mxu0
      %8978 = vmatprep.mubr.f32.mxu0 0.0
      %v8979 = vand.u32 %v4786, 4294901760
      %8980 = vmatmul.mubr.f32.gmra.mrb[0].mxu0 %v8979
      %v8981 = vpop.f32.mrb[0].mxu0
      %v8982 = vadd.f32 %v8799, %v8981
      %v8983 = vpop.f32.mrb[0].mxu0
      %8984 = vmatprep.mubr.f32.mxu0 0.0
      %v8985 = vand.u32 %v4789, 4294901760
      %8986 = vmatmul.mubr.f32.gmra.mrb[0].mxu0 %v8985
      %v8987 = vpop.f32.mrb[0].mxu0
      %v8988 = vadd.f32 %v8805, %v8987
      %v8989 = vpop.f32.mrb[0].mxu0
      %8990 = vmatprep.mubr.f32.mxu0 0.0
      %v8991 = vand.u32 %v4792, 4294901760
      %8992 = vmatmul.mubr.f32.gmra.mrb[0].mxu0 %v8991
      %v8993 = vpop.f32.mrb[0].mxu0
      %v8994 = vadd.f32 %v8811, %v8993
      %v8995 = vpop.f32.mrb[0].mxu0
      %8996 = vmatprep.mubr.f32.mxu0 0.0
      %v8997 = vand.u32 %v4795, 4294901760
      %8998 = vmatmul.mubr.f32.gmra.mrb[0].mxu0 %v8997
      %v8999 = vpop.f32.mrb[0].mxu0
      %v9000 = vadd.f32 %v8817, %v8999
      %v9001 = vpop.f32.mrb[0].mxu0
      %9002 = vmatprep.mubr.f32.mxu0 0.0
      %v9003 = vand.u32 %v4798, 4294901760
      %9004 = vmatmul.mubr.f32.gmra.mrb[0].mxu0 %v9003
      %v9005 = vpop.f32.mrb[0].mxu0
      %v9006 = vadd.f32 %v8823, %v9005
      %v9007 = vpop.f32.mrb[0].mxu0
      %9008 = vmatprep.mubr.f32.mxu0 0.0
      %v9009 = vand.u32 %v4801, 4294901760
      %9010 = vmatmul.mubr.f32.gmra.mrb[0].mxu0 %v9009
      %v9011 = vpop.f32.mrb[0].mxu0
      %v9012 = vadd.f32 %v8829, %v9011
      %v9013 = vpop.f32.mrb[0].mxu0
      %9014 = vmatprep.mubr.f32.mxu0 0.0
      %v9015 = vand.u32 %v4804, 4294901760
      %9016 = vmatmul.mubr.f32.gmra.mrb[0].mxu0 %v9015
      %v9017 = vpop.f32.mrb[0].mxu0
      %v9018 = vadd.f32 %v8835, %v9017
      %v9019 = vpop.f32.mrb[0].mxu0
      %9020 = vmatprep.mubr.f32.mxu0 0.0
      %v9021 = vand.u32 %v4807, 4294901760
      %9022 = vmatmul.mubr.f32.gmra.mrb[0].mxu0 %v9021
      %v9023 = vpop.f32.mrb[0].mxu0
      %v9024 = vadd.f32 %v8841, %v9023
      %v9025 = vpop.f32.mrb[0].mxu0
      %9026 = vmatprep.mubr.f32.mxu0 0.0
      %v9027 = vand.u32 %v4810, 4294901760
      %9028 = vmatmul.mubr.f32.gmra.mrb[0].mxu0 %v9027
      %v9029 = vpop.f32.mrb[0].mxu0
      %v9030 = vadd.f32 %v8847, %v9029
      %v9031 = vpop.f32.mrb[0].mxu0
      %9032 = vmatprep.mubr.f32.mxu0 0.0
      %v9033 = vand.u32 %v4813, 4294901760
      %9034 = vmatmul.mubr.f32.gmra.mrb[0].mxu0 %v9033
      %v9035 = vpop.f32.mrb[0].mxu0
      %v9036 = vadd.f32 %v8853, %v9035
      %v9037 = vpop.f32.mrb[0].mxu0
      %9038 = vmatprep.mubr.f32.mxu0 0.0
      %v9039 = vand.u32 %v4816, 4294901760
      %9040 = vmatmul.mubr.f32.gmra.mrb[0].mxu0 %v9039
      %v9041 = vpop.f32.mrb[0].mxu0
      %v9042 = vadd.f32 %v8859, %v9041
      %v9043 = vpop.f32.mrb[0].mxu0
      %9044 = vmatprep.mubr.f32.mxu0 0.0
      %v9045 = vand.u32 %v4819, 4294901760
      %9046 = vmatmul.mubr.f32.gmra.mrb[0].mxu0 %v9045
      %v9047 = vpop.f32.mrb[0].mxu0
      %v9048 = vadd.f32 %v8865, %v9047
      %v9049 = vpop.f32.mrb[0].mxu0
      %9050 = vmatprep.mubr.f32.mxu0 0.0
      %v9051 = vand.u32 %v4822, 4294901760
      %9052 = vmatmul.mubr.f32.gmra.mrb[0].mxu0 %v9051
      %v9053 = vpop.f32.mrb[0].mxu0
      %v9054 = vadd.f32 %v8871, %v9053
      %v9055 = vpop.f32.mrb[0].mxu0
      %9056 = vmatprep.mubr.f32.mxu0 0.0
      %v9057 = vand.u32 %v4825, 4294901760
      %9058 = vmatmul.mubr.f32.gmra.mrb[0].mxu0 %v9057
      %v9059 = vpop.f32.mrb[0].mxu0
      %v9060 = vadd.f32 %v8877, %v9059
      %v9061 = vpop.f32.mrb[0].mxu0
      %9062 = vdwg.mxu0
      %v9063 = vld [vmem:[%s11] sm:$0x1]
      %v9065 = vlaneseq
      %v9066 = vshrl.u32 %v9065, 7
      %v9067 = vsub.s32 0, %v9066
      %v9068 = vrot.slane %v9063, %v9067
      %v9070 = vadd.f32 %v8952, %v9068
      %v9071 = vadd.f32 %v8958, %v9068
      %v9072 = vadd.f32 %v8964, %v9068
      %v9073 = vadd.f32 %v8970, %v9068
      %v9074 = vadd.f32 %v8976, %v9068
      %v9075 = vadd.f32 %v8982, %v9068
      %v9076 = vadd.f32 %v8988, %v9068
      %v9077 = vadd.f32 %v8994, %v9068
      %v9078 = vadd.f32 %v9000, %v9068
      %v9079 = vadd.f32 %v9006, %v9068
      %v9080 = vadd.f32 %v9012, %v9068
      %v9081 = vadd.f32 %v9018, %v9068
      %v9082 = vadd.f32 %v9024, %v9068
      %v9083 = vadd.f32 %v9030, %v9068
      %v9084 = vadd.f32 %v9036, %v9068
      %v9085 = vadd.f32 %v9042, %v9068
      %v9086 = vadd.f32 %v9048, %v9068
      %v9087 = vadd.f32 %v9054, %v9068
      %v9088 = vadd.f32 %v9060, %v9068
      %v9089 = vtanh.pop %v9070
      %v9090 = vtanh.pop %v9071
      %v9091 = vtanh.pop %v9072
      %v9092 = vtanh.pop %v9073
      %v9093 = vtanh.pop %v9074
      %v9094 = vtanh.pop %v9075
      %v9095 = vtanh.pop %v9076
      %v9096 = vtanh.pop %v9077
      %v9097 = vtanh.pop %v9078
      %v9098 = vtanh.pop %v9079
      %v9099 = vtanh.pop %v9080
      %v9100 = vtanh.pop %v9081
      %v9101 = vtanh.pop %v9082
      %v9102 = vtanh.pop %v9083
      %v9103 = vtanh.pop %v9084
      %v9104 = vtanh.pop %v9085
      %v9105 = vtanh.pop %v9086
      %v9106 = vtanh.pop %v9087
      %v9107 = vtanh.pop %v9088
      %v9108 = vsub.f32 1.0, %v6189
      %v9109 = vsub.f32 1.0, %v6191
      %v9110 = vsub.f32 1.0, %v6193
      %v9111 = vsub.f32 1.0, %v6195
      %v9112 = vsub.f32 1.0, %v6197
      %v9113 = vsub.f32 1.0, %v6199
      %v9114 = vsub.f32 1.0, %v6201
      %v9115 = vsub.f32 1.0, %v6203
      %v9116 = vsub.f32 1.0, %v6205
      %v9117 = vsub.f32 1.0, %v6207
      %v9118 = vsub.f32 1.0, %v6209
      %v9119 = vsub.f32 1.0, %v6211
      %v9120 = vsub.f32 1.0, %v6213
      %v9121 = vsub.f32 1.0, %v6215
      %v9122 = vsub.f32 1.0, %v6217
      %v9123 = vsub.f32 1.0, %v6219
      %v9124 = vsub.f32 1.0, %v6221
      %v9125 = vsub.f32 1.0, %v6223
      %v9126 = vsub.f32 1.0, %v6225
      %9127 = vrot.lane.b32.xlu0 %v417, 32
      %v9128 = vpop.permute.xlu0 %9127
      %9129 = vrot.lane.b32.xlu0 %v418, 32
      %v9130 = vpop.permute.xlu0 %9129
      %9131 = vrot.lane.b32.xlu0 %v419, 32
      %v9132 = vpop.permute.xlu0 %9131
      %9133 = vrot.lane.b32.xlu0 %v420, 32
      %v9134 = vpop.permute.xlu0 %9133
      %9135 = vrot.lane.b32.xlu0 %v421, 32
      %v9136 = vpop.permute.xlu0 %9135
      %9137 = vrot.lane.b32.xlu0 %v422, 32
      %v9138 = vpop.permute.xlu0 %9137
      %9139 = vrot.lane.b32.xlu0 %v423, 32
      %v9140 = vpop.permute.xlu0 %9139
      %9141 = vrot.lane.b32.xlu0 %v424, 32
      %v9142 = vpop.permute.xlu0 %9141
      %9143 = vrot.lane.b32.xlu0 %v425, 32
      %v9144 = vpop.permute.xlu0 %9143
      %9145 = vrot.lane.b32.xlu0 %v426, 32
      %v9146 = vpop.permute.xlu0 %9145
      %9147 = vrot.lane.b32.xlu0 %v427, 32
      %v9148 = vpop.permute.xlu0 %9147
      %9149 = vrot.lane.b32.xlu0 %v428, 32
      %v9150 = vpop.permute.xlu0 %9149
      %9151 = vrot.lane.b32.xlu0 %v429, 32
      %v9152 = vpop.permute.xlu0 %9151
      %9153 = vrot.lane.b32.xlu0 %v430, 32
      %v9154 = vpop.permute.xlu0 %9153
      %9155 = vrot.lane.b32.xlu0 %v431, 32
      %v9156 = vpop.permute.xlu0 %9155
      %9157 = vrot.lane.b32.xlu0 %v432, 32
      %v9158 = vpop.permute.xlu0 %9157
      %9159 = vrot.lane.b32.xlu0 %v433, 32
      %v9160 = vpop.permute.xlu0 %9159
      %9161 = vrot.lane.b32.xlu0 %v434, 32
      %v9162 = vpop.permute.xlu0 %9161
      %9163 = vrot.lane.b32.xlu0 %v435, 32
      %v9164 = vpop.permute.xlu0 %9163
      %v9184 = vmul.f32 %v9108, %v9128
      %v9185 = vmul.f32 %v9109, %v9130
      %v9186 = vmul.f32 %v9110, %v9132
      %v9187 = vmul.f32 %v9111, %v9134
      %v9188 = vmul.f32 %v9112, %v9136
      %v9189 = vmul.f32 %v9113, %v9138
      %v9190 = vmul.f32 %v9114, %v9140
      %v9191 = vmul.f32 %v9115, %v9142
      %v9192 = vmul.f32 %v9116, %v9144
      %v9193 = vmul.f32 %v9117, %v9146
      %v9194 = vmul.f32 %v9118, %v9148
      %v9195 = vmul.f32 %v9119, %v9150
      %v9196 = vmul.f32 %v9120, %v9152
      %v9197 = vmul.f32 %v9121, %v9154
      %v9198 = vmul.f32 %v9122, %v9156
      %v9199 = vmul.f32 %v9123, %v9158
      %v9200 = vmul.f32 %v9124, %v9160
      %v9201 = vmul.f32 %v9125, %v9162
      %v9202 = vmul.f32 %v9126, %v9164
      %v9203 = vmul.f32 %v6189, %v9089
      %v9204 = vmul.f32 %v6191, %v9090
      %v9205 = vmul.f32 %v6193, %v9091
      %v9206 = vmul.f32 %v6195, %v9092
      %v9207 = vmul.f32 %v6197, %v9093
      %v9208 = vmul.f32 %v6199, %v9094
      %v9209 = vmul.f32 %v6201, %v9095
      %v9210 = vmul.f32 %v6203, %v9096
      %v9211 = vmul.f32 %v6205, %v9097
      %v9212 = vmul.f32 %v6207, %v9098
      %v9213 = vmul.f32 %v6209, %v9099
      %v9214 = vmul.f32 %v6211, %v9100
      %v9215 = vmul.f32 %v6213, %v9101
      %v9216 = vmul.f32 %v6215, %v9102
      %v9217 = vmul.f32 %v6217, %v9103
      %v9218 = vmul.f32 %v6219, %v9104
      %v9219 = vmul.f32 %v6221, %v9105
      %v9220 = vmul.f32 %v6223, %v9106
      %v9221 = vmul.f32 %v6225, %v9107
      %v9222 = vadd.f32 %v9184, %v9203
      %v9223 = vadd.f32 %v9185, %v9204
      %v9224 = vadd.f32 %v9186, %v9205
      %v9225 = vadd.f32 %v9187, %v9206
      %v9226 = vadd.f32 %v9188, %v9207
      %v9227 = vadd.f32 %v9189, %v9208
      %v9228 = vadd.f32 %v9190, %v9209
      %v9229 = vadd.f32 %v9191, %v9210
      %v9230 = vadd.f32 %v9192, %v9211
      %v9231 = vadd.f32 %v9193, %v9212
      %v9232 = vadd.f32 %v9194, %v9213
      %v9233 = vadd.f32 %v9195, %v9214
      %v9234 = vadd.f32 %v9196, %v9215
      %v9235 = vadd.f32 %v9197, %v9216
      %v9236 = vadd.f32 %v9198, %v9217
      %v9237 = vadd.f32 %v9199, %v9218
      %v9238 = vadd.f32 %v9200, %v9219
      %v9239 = vadd.f32 %v9201, %v9220
      %v9240 = vadd.f32 %v9202, %v9221
      %v9241 = vxor.u32 %v6310, 2147483648
      %v9242 = vxor.u32 %v6312, 2147483648
      %v9243 = vxor.u32 %v6314, 2147483648
      %v9244 = vxor.u32 %v6316, 2147483648
      %v9245 = vxor.u32 %v6318, 2147483648
      %v9246 = vxor.u32 %v6320, 2147483648
      %v9247 = vxor.u32 %v6322, 2147483648
      %v9248 = vxor.u32 %v6324, 2147483648
      %v9249 = vxor.u32 %v6326, 2147483648
      %v9250 = vxor.u32 %v6328, 2147483648
      %v9251 = vxor.u32 %v6330, 2147483648
      %v9252 = vxor.u32 %v6332, 2147483648
      %v9253 = vxor.u32 %v6334, 2147483648
      %v9254 = vxor.u32 %v6336, 2147483648
      %v9255 = vxor.u32 %v6338, 2147483648
      %v9256 = vxor.u32 %v6340, 2147483648
      %v9257 = vxor.u32 %v6342, 2147483648
      %v9258 = vxor.u32 %v6344, 2147483648
      %v9259 = vxor.u32 %v6346, 2147483648
      %v9260 = vmul.f32 %v9241, 1.442695
      %v9261 = vpow.pop %v9260
      %v9262 = vmul.f32 %v9242, 1.442695
      %v9263 = vpow.pop %v9262
      %v9264 = vmul.f32 %v9243, 1.442695
      %v9265 = vpow.pop %v9264
      %v9266 = vmul.f32 %v9244, 1.442695
      %v9267 = vpow.pop %v9266
      %v9268 = vmul.f32 %v9245, 1.442695
      %v9269 = vpow.pop %v9268
      %v9270 = vmul.f32 %v9246, 1.442695
      %v9271 = vpow.pop %v9270
      %v9272 = vmul.f32 %v9247, 1.442695
      %v9273 = vpow.pop %v9272
      %v9274 = vmul.f32 %v9248, 1.442695
      %v9275 = vpow.pop %v9274
      %v9276 = vmul.f32 %v9249, 1.442695
      %v9277 = vpow.pop %v9276
      %v9278 = vmul.f32 %v9250, 1.442695
      %v9279 = vpow.pop %v9278
      %v9280 = vmul.f32 %v9251, 1.442695
      %v9281 = vpow.pop %v9280
      %v9282 = vmul.f32 %v9252, 1.442695
      %v9283 = vpow.pop %v9282
      %v9284 = vmul.f32 %v9253, 1.442695
      %v9285 = vpow.pop %v9284
      %v9286 = vmul.f32 %v9254, 1.442695
      %v9287 = vpow.pop %v9286
      %v9288 = vmul.f32 %v9255, 1.442695
      %v9289 = vpow.pop %v9288
      %v9290 = vmul.f32 %v9256, 1.442695
      %v9291 = vpow.pop %v9290
      %v9292 = vmul.f32 %v9257, 1.442695
      %v9293 = vpow.pop %v9292
      %v9294 = vmul.f32 %v9258, 1.442695
      %v9295 = vpow.pop %v9294
      %v9296 = vmul.f32 %v9259, 1.442695
      %v9297 = vpow.pop %v9296
      %v9298 = vadd.f32 %v9261, 1.0
      %v9299 = vadd.f32 %v9263, 1.0
      %v9300 = vadd.f32 %v9265, 1.0
      %v9301 = vadd.f32 %v9267, 1.0
      %v9302 = vadd.f32 %v9269, 1.0
      %v9303 = vadd.f32 %v9271, 1.0
      %v9304 = vadd.f32 %v9273, 1.0
      %v9305 = vadd.f32 %v9275, 1.0
      %v9306 = vadd.f32 %v9277, 1.0
      %v9307 = vadd.f32 %v9279, 1.0
      %v9308 = vadd.f32 %v9281, 1.0
      %v9309 = vadd.f32 %v9283, 1.0
      %v9310 = vadd.f32 %v9285, 1.0
      %v9311 = vadd.f32 %v9287, 1.0
      %v9312 = vadd.f32 %v9289, 1.0
      %v9313 = vadd.f32 %v9291, 1.0
      %v9314 = vadd.f32 %v9293, 1.0
      %v9315 = vadd.f32 %v9295, 1.0
      %v9316 = vadd.f32 %v9297, 1.0
      %v9317 = vrcp.pop %v9298
      %v9318 = vmul.f32 1.0, %v9317
      %v9319 = vrcp.pop %v9299
      %v9320 = vmul.f32 1.0, %v9319
      %v9321 = vrcp.pop %v9300
      %v9322 = vmul.f32 1.0, %v9321
      %v9323 = vrcp.pop %v9301
      %v9324 = vmul.f32 1.0, %v9323
      %v9325 = vrcp.pop %v9302
      %v9326 = vmul.f32 1.0, %v9325
      %v9327 = vrcp.pop %v9303
      %v9328 = vmul.f32 1.0, %v9327
      %v9329 = vrcp.pop %v9304
      %v9330 = vmul.f32 1.0, %v9329
      %v9331 = vrcp.pop %v9305
      %v9332 = vmul.f32 1.0, %v9331
      %v9333 = vrcp.pop %v9306
      %v9334 = vmul.f32 1.0, %v9333
      %v9335 = vrcp.pop %v9307
      %v9336 = vmul.f32 1.0, %v9335
      %v9337 = vrcp.pop %v9308
      %v9338 = vmul.f32 1.0, %v9337
      %v9339 = vrcp.pop %v9309
      %v9340 = vmul.f32 1.0, %v9339
      %v9341 = vrcp.pop %v9310
      %v9342 = vmul.f32 1.0, %v9341
      %v9343 = vrcp.pop %v9311
      %v9344 = vmul.f32 1.0, %v9343
      %v9345 = vrcp.pop %v9312
      %v9346 = vmul.f32 1.0, %v9345
      %v9347 = vrcp.pop %v9313
      %v9348 = vmul.f32 1.0, %v9347
      %v9349 = vrcp.pop %v9314
      %v9350 = vmul.f32 1.0, %v9349
      %v9351 = vrcp.pop %v9315
      %v9352 = vmul.f32 1.0, %v9351
      %v9353 = vrcp.pop %v9316
      %v9354 = vmul.f32 1.0, %v9353
      %v9355 = vmul.f32 %v9318, %v9222
      %v9356 = vmul.f32 %v9320, %v9223
      %v9357 = vmul.f32 %v9322, %v9224
      %v9358 = vmul.f32 %v9324, %v9225
      %v9359 = vmul.f32 %v9326, %v9226
      %v9360 = vmul.f32 %v9328, %v9227
      %v9361 = vmul.f32 %v9330, %v9228
      %v9362 = vmul.f32 %v9332, %v9229
      %v9363 = vmul.f32 %v9334, %v9230
      %v9364 = vmul.f32 %v9336, %v9231
      %v9365 = vmul.f32 %v9338, %v9232
      %v9366 = vmul.f32 %v9340, %v9233
      %v9367 = vmul.f32 %v9342, %v9234
      %v9368 = vmul.f32 %v9344, %v9235
      %v9369 = vmul.f32 %v9346, %v9236
      %v9370 = vmul.f32 %v9348, %v9237
      %v9371 = vmul.f32 %v9350, %v9238
      %v9372 = vmul.f32 %v9352, %v9239
      %v9373 = vmul.f32 %v9354, %v9240
      %9374 = vst.msk [vmem:[%s415] sm:$0xff] %vm1942, %v9355
      %9375 = vst.msk [vmem:[%s415 + $0x8] sm:$0xff] %vm1942, %v9356
      %9376 = vst.msk [vmem:[%s415 + $0x10] sm:$0xff] %vm1942, %v9357
      %9377 = vst.msk [vmem:[%s415 + $0x18] sm:$0xff] %vm1942, %v9358
      %9378 = vst.msk [vmem:[%s415 + $0x20] sm:$0xff] %vm1942, %v9359
      %9379 = vst.msk [vmem:[%s415 + $0x28] sm:$0xff] %vm1942, %v9360
      %9380 = vst.msk [vmem:[%s415 + $0x30] sm:$0xff] %vm1942, %v9361
      %9381 = vst.msk [vmem:[%s415 + $0x38] sm:$0xff] %vm1942, %v9362
      %9382 = vst.msk [vmem:[%s415 + $0x40] sm:$0xff] %vm1942, %v9363
      %9383 = vst.msk [vmem:[%s415 + $0x48] sm:$0xff] %vm1942, %v9364
      %9384 = vst.msk [vmem:[%s415 + $0x50] sm:$0xff] %vm1942, %v9365
      %9385 = vst.msk [vmem:[%s415 + $0x58] sm:$0xff] %vm1942, %v9366
      %9386 = vst.msk [vmem:[%s415 + $0x60] sm:$0xff] %vm1942, %v9367
      %9387 = vst.msk [vmem:[%s415 + $0x68] sm:$0xff] %vm1942, %v9368
      %9388 = vst.msk [vmem:[%s415 + $0x70] sm:$0xff] %vm1942, %v9369
      %9389 = vst.msk [vmem:[%s415 + $0x78] sm:$0xff] %vm1942, %v9370
      %9390 = vst.msk [vmem:[%s415 + $0x80] sm:$0xff] %vm1942, %v9371
      %9391 = vst.msk [vmem:[%s415 + $0x88] sm:$0xff] %vm1942, %v9372
      %9392 = vst.msk [vmem:[%s415 + $0x90] sm:$0xff] %vm1942, %v9373
      %s9393 = smul.u32 19, %s23
      %p9394 = scmp.lt.s32.totalorder %s9393, 37
      %s9395 = scalar_select %p9394, %s9393, 37
      %s9396 = smul.addr %s9395, 8
      %s9397 = scalar_lea.vmem %s12, %s9396
      // Predicated region
      $region69: #{timeline_gnn_layer7_forward.1} parent=67 // pred_check
        %p9398 = pneg %p298
      $region70: #{timeline_gnn_layer7_forward.1} parent=67 // pred_check_branch
        %9400 = sbr.rel (%p9398) target = $region72
      $region71: #{timeline_gnn_layer7_forward.1} parent=67 // pred_region
        %s9401 = smul.u32 19, %s23
      $region72: #{timeline_gnn_layer7_forward.1} parent=67 // pred_fallthru
        _
    $region68: #{timeline_gnn_layer7_forward.1} parent=5 // pred_fallthru
      _
    %p9402 = scmp.le.s32.totalorder 2, %s18
    // Predicated region
    $region73: #{timeline_gnn_layer7_forward.1} parent=5 // pred_check
      %p9403 = pneg %p9402
    $region74: #{timeline_gnn_layer7_forward.1} parent=5 // pred_check_branch
      %9405 = sbr.rel (%p9403) target = $region76
    $region75: #{timeline_gnn_layer7_forward.1} parent=5 // pred_region
      %s9406 = ssub.s32 %s18, 2
      // Predicated region
      $region77: #{timeline_gnn_layer7_forward.1} parent=75 // pred_check
        %p9407 = pneg %p304
      $region78: #{timeline_gnn_layer7_forward.1} parent=75 // pred_check_branch
        %9409 = sbr.rel (%p9407) target = $region80
      $region79: #{timeline_gnn_layer7_forward.1} parent=75 // pred_region
        %s9410 = smul.u32 19, %s24
        %p9411 = scmp.lt.s32.totalorder %s9410, 37
        %s9412 = scalar_select %p9411, %s9410, 37
        %s9413 = smul.addr %s9412, 8
        %s9414 = scalar_lea.vmem %s12, %s9413
      $region80: #{timeline_gnn_layer7_forward.1} parent=75 // pred_fallthru
        _
    $region76: #{timeline_gnn_layer7_forward.1} parent=5 // pred_fallthru
      _
  $region6: #{timeline_gnn_layer7_forward.1} parent=0 // loop_footer
    %s22 = sadd.s32 1, %s18
  $region7: #{timeline_gnn_layer7_forward.1} parent=0 // loop_footer_branch
    %17 = sbr.rel target = $region3
  $region8: #{timeline_gnn_layer7_forward.1} parent=0 // loop_exit
    _

</llo_original>
